<compile_context>
chip_gen: v7x
topology: tpu7x:2x2x1
jax: 0.10.0
libtpu: 0.0.40
codegen_flags: <defaults>
</compile_context>

<pallas_src>
import jax
import jax.numpy as jnp
from jax import lax
from jax.experimental import pallas as pl
from jax.experimental.pallas import tpu as pltpu


def _sig(x):
    # sigmoid via tanh identity: one EUP op + FMA instead of exp + divide.
    return 0.5 * jnp.tanh(0.5 * x) + 0.5


def _round_up(x, m):
    return ((x + m - 1) // m) * m


def _pad_gates_cols(w, hs, gp):
    """[rows, 4*hs] -> [rows, 4*gp]; gate k lands at columns [k*gp, k*gp+hs)."""
    rows = w.shape[0]
    out = jnp.zeros((rows, 4 * gp), w.dtype)
    for k in range(4):
        out = out.at[:, k * gp:k * gp + hs].set(w[:, k * hs:(k + 1) * hs])
    return out


def _interleave_gates(w, hs, gp, offset):
    """[rows, 4*hs] -> [rows, 8*gp]; gate k at cols [(2k+offset)*gp, ... + hs).
    offset=0 -> forward-direction slots, offset=1 -> backward-direction slots,
    giving the gate-interleaved layout [i_f,i_b,f_f,f_b,g_f,g_b,o_f,o_b]."""
    rows = w.shape[0]
    out = jnp.zeros((rows, 8 * gp), w.dtype)
    for k in range(4):
        c0 = (2 * k + offset) * gp
        out = out.at[:, c0:c0 + hs].set(w[:, k * hs:(k + 1) * hs])
    return out


def _pad_rows(w, rp):
    rows, cols = w.shape
    if rows == rp:
        return w
    return jnp.zeros((rp, cols), w.dtype).at[:rows, :].set(w)


def _make_kernel(H, S, TB):
    """Kernel closure over the true encoder hidden size H, seq len S, batch tile TB."""

    def kernel(tf_ref, x_ref, w_in_ref, b_in_ref, whh_ref, trg_ref,
               dproj_ref, b_d_ref, wdf_ref, fcb_ref, out_ref, gates_ref):
        T = trg_ref.shape[0]
        VP = out_ref.shape[2]
        GP = whh_ref.shape[0] // 2        # padded per-direction encoder width
        GP2 = wdf_ref.shape[0]            # padded decoder hidden width
        W2 = 2 * GP                       # fused encoder carry width
        G4 = 4 * GP2                      # decoder gate width
        K = x_ref.shape[2]

        def lstm_gates(g, c, w):
            i_g = _sig(g[:, 0:w])
            f_g = _sig(g[:, w:2 * w])
            g_g = jnp.tanh(g[:, 2 * w:3 * w])
            o_g = _sig(g[:, 3 * w:4 * w])
            c_new = f_g * c + i_g * g_g
            return o_g * jnp.tanh(c_new), c_new

        # ---- hoisted encoder input projection (both directions; backward
        #      input already time-reversed in the wrapper) -> one MXU pass,
        #      bias folded in, stored in VMEM scratch.
        # TODO(synk): at realistic S*B store this scratch bf16 / compute it in
        #             S-chunks (emit_pipeline) to respect v7x's 64 MiB VMEM.
        x2d = x_ref[...].reshape(S * TB, K)
        gates_ref[...] = (jnp.dot(x2d, w_in_ref[...],
                                  preferred_element_type=jnp.float32)
                          + b_in_ref[...])

        # ---- encoder: fwd+bwd fused into ONE recurrent matmul per step via a
        #      block-diagonal, gate-interleaved W_hh (carry = [h_fwd | h_bwd]).
        h = jnp.zeros((TB, W2), jnp.float32)
        c = jnp.zeros((TB, W2), jnp.float32)
        for t in range(S):
            gx = gates_ref[t * TB:(t + 1) * TB, :]
            hh = jnp.dot(h.astype(jnp.bfloat16), whh_ref[...],
                         preferred_element_type=jnp.float32)
            h, c = lstm_gates(gx + hh, c, W2)

        # ---- decoder init: cat(h_fwd_final, h_bwd_final), zero-padded to GP2
        pad = GP2 - 2 * H
        zc = [jnp.zeros((TB, pad), jnp.float32)] if pad > 0 else []
        hd = jnp.concatenate([h[:, 0:H], h[:, GP:GP + H]] + zc, axis=1)
        cd = jnp.concatenate([c[:, 0:H], c[:, GP:GP + H]] + zc, axis=1)

        # outputs[:, 0, :] stays zero (matches torch.zeros init).
        out_ref[0:1, :, :] = jnp.zeros((1, TB, VP), jnp.float32)

        lane = lax.broadcasted_iota(jnp.int32, (TB, VP), 1)  # hoisted iota
        tid = trg_ref[0:1, :, :].reshape(TB, 1)              # trg[:, 0] ids
        oh = (lane == tid).astype(jnp.bfloat16)

        # Decoder software pipeline: ONE fused matmul h_t @ [W_hh_dec | W_fc]
        # yields next-step gate projection AND this step's logits; the prologue
        # computes the very first gate projection from the encoder state.
        hh = jnp.dot(hd.astype(jnp.bfloat16), wdf_ref[...],
                     preferred_element_type=jnp.float32)[:, 0:G4]

        # TODO(synk): at realistic T/V stream out_ref per step (pl.ANY +
        #             double-buffered DMA), keep dproj/wdf tiled in HBM, and
        #             switch these unrolled loops to lax.fori_loop.
        for t in range(1, T):
            # embedding lookup + input projection fused: one-hot @ (E @ W_ih^T)
            gx = (jnp.dot(oh, dproj_ref[...],
                          preferred_element_type=jnp.float32) + b_d_ref[...])
            hd, cd = lstm_gates(gx + hh, cd, GP2)
            fused = jnp.dot(hd.astype(jnp.bfloat16), wdf_ref[...],
                            preferred_element_type=jnp.float32)
            hh = fused[:, 0:G4]
            pred = fused[:, G4:G4 + VP] + fcb_ref[...]
            # lane-dense (VP = multiple of 128) whole-vreg store
            out_ref[t:t + 1, :, :] = pred.reshape(1, TB, VP)
            # first-occurrence argmax as a lane-dense one-hot; padded logit
            # lanes carry a -1e30 bias so they can never win.
            maxv = jnp.max(pred, axis=1, keepdims=True)
            amax = jnp.min(jnp.where(pred == maxv, lane, VP), axis=1,
                           keepdims=True)
            pred_oh = (lane == amax).astype(jnp.float32)
            tid = trg_ref[t:t + 1, :, :].reshape(TB, 1)
            teach_oh = (lane == tid).astype(jnp.float32)
            oh = jnp.where(tf_ref[t] != 0, teach_oh,
                           pred_oh).astype(jnp.bfloat16)

    return kernel


def init_params(key, input_size, output_size, embed_size, hidden_size):
    ks = jax.random.split(key, 16)
    H, E = hidden_size, embed_size
    H2 = 2 * hidden_size

    def u(k, shape, scale):
        return jax.random.uniform(k, shape, jnp.float32, -scale, scale)

    s = float(1.0 / (H ** 0.5))
    s2 = float(1.0 / (H2 ** 0.5))
    return {
        'enc_emb': jax.random.normal(ks[0], (input_size, E), jnp.float32),
        'dec_emb': jax.random.normal(ks[1], (output_size, E), jnp.float32),
        'ef_wih': u(ks[2], (4 * H, E), s), 'ef_whh': u(ks[3], (4 * H, H), s),
        'ef_bih': u(ks[4], (4 * H,), s), 'ef_bhh': u(ks[5], (4 * H,), s),
        'eb_wih': u(ks[6], (4 * H, E), s), 'eb_whh': u(ks[7], (4 * H, H), s),
        'eb_bih': u(ks[8], (4 * H,), s), 'eb_bhh': u(ks[9], (4 * H,), s),
        'd_wih': u(ks[10], (4 * H2, E), s2), 'd_whh': u(ks[11], (4 * H2, H2), s2),
        'd_bih': u(ks[12], (4 * H2,), s2), 'd_bhh': u(ks[13], (4 * H2,), s2),
        'fc_w': u(ks[14], (output_size, H2), s2),
        'fc_b': u(ks[15], (output_size,), s2),
    }


def s2s_forward(params, src, trg, tf_mask):
    B, S = src.shape
    _, T = trg.shape
    E = params['enc_emb'].shape[1]
    H = params['ef_whh'].shape[1]          # encoder hidden
    H2 = params['d_whh'].shape[1]          # decoder hidden (= 2*H)
    V = params['fc_w'].shape[0]            # output vocab (= decoder emb vocab)

    GP = _round_up(H, 128)                 # padded per-direction gate width
    GP2 = _round_up(H2, 128)               # padded decoder gate/hidden width
    VP = _round_up(V, 128)                 # padded vocab (lane-dense output)
    Ep = _round_up(E, 128)                 # padded embedding dim (lane-dense)
    Bp = _round_up(B, 16)                  # bf16-friendly sublane count
    TB = Bp if Bp <= 128 else 128          # batch tile per grid program
    Bp = _round_up(Bp, TB)
    n_tiles = Bp // TB
    bf16 = jnp.bfloat16

    # ---- batch padding (sliced off after the call) --------------------------
    srcp = jnp.zeros((Bp, S), jnp.int32).at[:B].set(src.astype(jnp.int32))
    trgp = jnp.zeros((Bp, T), jnp.int32).at[:B].set(trg.astype(jnp.int32))

    # ---- glue: encoder embeddings, seq-major; fwd + time-reversed bwd stacked
    #      on the lane axis so one hoisted matmul yields fused per-step gates.
    x = jnp.take(params['enc_emb'], srcp, axis=0)            # [Bp, S, E]
    x = jnp.transpose(x, (1, 0, 2))                          # [S, Bp, E]
    x_f = jnp.zeros((S, Bp, Ep), jnp.float32).at[:, :, :E].set(x)
    xcat = jnp.concatenate([x_f, x_f[::-1]], axis=-1).astype(bf16)

    # ---- fused encoder weights (gate-interleaved [i_f,i_b,f_f,f_b,...]) -----
    w_in = jnp.zeros((2 * Ep, 8 * GP), jnp.float32)
    w_in = w_in.at[0:E, :].set(_interleave_gates(params['ef_wih'].T, H, GP, 0))
    w_in = w_in.at[Ep:Ep + E, :].set(
        _interleave_gates(params['eb_wih'].T, H, GP, 1))
    w_in = w_in.astype(bf16)
    b_in = (_interleave_gates((params['ef_bih'] + params['ef_bhh'])[None, :],
                              H, GP, 0)
            + _interleave_gates((params['eb_bih'] + params['eb_bhh'])[None, :],
                                H, GP, 1))                   # [1, 8*GP] f32
    whh = jnp.zeros((2 * GP, 8 * GP), jnp.float32)           # block-diagonal
    whh = whh.at[0:H, :].set(_interleave_gates(params['ef_whh'].T, H, GP, 0))
    whh = whh.at[GP:GP + H, :].set(
        _interleave_gates(params['eb_whh'].T, H, GP, 1))
    whh = whh.astype(bf16)

    # ---- decoder: embedding folded into input proj; recurrent + FC fused ----
    dproj = params['dec_emb'] @ params['d_wih'].T            # [V, 4*H2] f32
    dproj = _pad_rows(_pad_gates_cols(dproj, H2, GP2), VP).astype(bf16)
    b_d = _pad_gates_cols((params['d_bih'] + params['d_bhh'])[None, :], H2, GP2)
    whh_d = _pad_rows(_pad_gates_cols(params['d_whh'].T, H2, GP2), GP2)
    fcw = jnp.zeros((GP2, VP), jnp.float32).at[:H2, :V].set(params['fc_w'].T)
    wdf = jnp.concatenate([whh_d, fcw], axis=1).astype(bf16)  # [GP2, 4*GP2+VP]
    # padded logit lanes get a huge negative bias so argmax never selects them
    fcb = jnp.full((1, VP), -1e30, jnp.float32).at[0, :V].set(params['fc_b'])

    # ---- teacher tokens as raw ids (one-hots built in-kernel from lane iota)
    trg_ids = jnp.transpose(trgp, (1, 0))[:, :, None]        # [T, Bp, 1] int32

    kernel = _make_kernel(H, S, TB)

    flops = (2 * S * Bp * 2 * Ep * 8 * GP
             + S * 2 * Bp * 2 * GP * 8 * GP
             + (T - 1) * 2 * Bp * VP * 4 * GP2
             + T * 2 * Bp * GP2 * (4 * GP2 + VP))
    transc = S * Bp * 5 * 2 * GP + (T - 1) * Bp * 5 * GP2
    bytes_acc = (xcat.size * 2 + w_in.size * 2 + whh.size * 2 + dproj.size * 2
                 + wdf.size * 2 + (b_in.size + b_d.size + fcb.size) * 4
                 + trg_ids.size * 4 + T * Bp * VP * 4)

    out_tbv = pl.pallas_call(
        kernel,
        out_shape=jax.ShapeDtypeStruct((T, Bp, VP), jnp.float32),
        grid_spec=pltpu.PrefetchScalarGridSpec(
            num_scalar_prefetch=1,
            grid=(n_tiles,),
            in_specs=[
                pl.BlockSpec((S, TB, 2 * Ep), lambda i, tf: (0, i, 0)),   # x
                pl.BlockSpec((2 * Ep, 8 * GP), lambda i, tf: (0, 0)),     # w_in
                pl.BlockSpec((1, 8 * GP), lambda i, tf: (0, 0)),          # b_in
                pl.BlockSpec((2 * GP, 8 * GP), lambda i, tf: (0, 0)),     # whh
                pl.BlockSpec((T, TB, 1), lambda i, tf: (0, i, 0)),        # trg
                pl.BlockSpec((VP, 4 * GP2), lambda i, tf: (0, 0)),        # dproj
                pl.BlockSpec((1, 4 * GP2), lambda i, tf: (0, 0)),         # b_d
                pl.BlockSpec((GP2, 4 * GP2 + VP), lambda i, tf: (0, 0)),  # wdf
                pl.BlockSpec((1, VP), lambda i, tf: (0, 0)),              # fcb
            ],
            out_specs=pl.BlockSpec((T, TB, VP), lambda i, tf: (0, i, 0)),
            scratch_shapes=[pltpu.VMEM((S * TB, 8 * GP), jnp.float32)],
        ),
        compiler_params=pltpu.CompilerParams(
            dimension_semantics=("parallel",),
            vmem_limit_bytes=32 * 1024 * 1024),
        cost_estimate=pl.CostEstimate(flops=int(flops),
                                      transcendentals=int(transc),
                                      bytes_accessed=int(bytes_acc)),
    )(tf_mask.astype(jnp.int32), xcat, w_in, b_in, whh, trg_ids,
      dproj, b_d, wdf, fcb)

    # NOTE: padded vocab lanes hold -1e30 and padded batch rows hold garbage;
    # the slice below defines the output contract.
    return jnp.transpose(out_tbv, (1, 0, 2))[:B, :, :V]       # [B, T, V]


def s2s_forward_ref(params, src, trg, tf_mask):
    """Pure-JAX mirror of the PyTorch forward (same teacher-forcing decisions).
    Matmul operands are cast to bfloat16 (f32 accumulation) to mirror the
    kernel's MXU numerics; all other math is f32."""
    B, S = src.shape
    _, T = trg.shape
    H = params['ef_whh'].shape[1]
    H2 = params['d_whh'].shape[1]
    V = params['fc_w'].shape[0]
    bf16 = jnp.bfloat16

    def mm(a, b):
        return jnp.dot(a.astype(bf16), b.astype(bf16),
                       preferred_element_type=jnp.float32)

    def cell(gx, h, c, whh, hs):
        g = gx + mm(h, whh.T)
        i = _sig(g[:, 0:hs])
        f = _sig(g[:, hs:2 * hs])
        gg = jnp.tanh(g[:, 2 * hs:3 * hs])
        o = _sig(g[:, 3 * hs:4 * hs])
        c = f * c + i * gg
        return o * jnp.tanh(c), c

    emb = params['enc_emb'][src]                              # [B, S, E]
    b_f = (params['ef_bih'] + params['ef_bhh'])[None, :]
    b_b = (params['eb_bih'] + params['eb_bhh'])[None, :]
    h_f = c_f = h_b = c_b = jnp.zeros((B, H), jnp.float32)
    for t in range(S):
        h_f, c_f = cell(mm(emb[:, t], params['ef_wih'].T) + b_f,
                        h_f, c_f, params['ef_whh'], H)
        h_b, c_b = cell(mm(emb[:, S - 1 - t], params['eb_wih'].T) + b_b,
                        h_b, c_b, params['eb_whh'], H)
    h = jnp.concatenate([h_f, h_b], axis=1)
    c = jnp.concatenate([c_f, c_b], axis=1)

    dproj = (params['dec_emb'] @ params['d_wih'].T
             ).astype(bf16).astype(jnp.float32)
    b_d = (params['d_bih'] + params['d_bhh'])[None, :]

    outputs = jnp.zeros((B, T, V), jnp.float32)
    ids = trg[:, 0]
    for t in range(1, T):
        gx = dproj[ids] + b_d
        h, c = cell(gx, h, c, params['d_whh'], H2)
        pred = mm(h, params['fc_w'].T) + params['fc_b'][None, :]
        outputs = outputs.at[:, t].set(pred)
        ids = jnp.where(tf_mask[t] != 0, trg[:, t], jnp.argmax(pred, axis=1))
    return outputs


if __name__ == "__main__":
    key = jax.random.PRNGKey(0)
    kp, ks, kt, ktf = jax.random.split(key, 4)

    input_size, output_size = 24, 32
    embed_size, hidden_size = 16, 32
    B, S, T = 2, 8, 8

    params = init_params(kp, input_size, output_size, embed_size, hidden_size)
    src = jax.random.randint(ks, (B, S), 0, input_size, dtype=jnp.int32)
    trg = jax.random.randint(kt, (B, T), 0, output_size, dtype=jnp.int32)
    # Deterministic stand-in for per-step torch.rand(1) < teacher_forcing_ratio.
    tf_mask = (jax.random.uniform(ktf, (T,)) < 0.5).astype(jnp.int32)

    out = s2s_forward(params, src, trg, tf_mask)
    out = jax.block_until_ready(out)

    ref = s2s_forward_ref(params, src, trg, tf_mask)
    assert out.shape == (B, T, output_size)
    assert bool(jnp.allclose(out, ref, atol=1e-3, rtol=1e-3)), \
        "mismatch vs reference"
    print("KERNEL_OK")
</pallas_src>

<mosaic_0001>
module attributes {stable_mosaic.version = 11 : i64} {
  func.func @kernel(%arg0: i32, %arg1: memref<8xi32, #tpu.memory_space<smem>>, %arg2: memref<8x16x256xbf16, #tpu.memory_space<vmem>>, %arg3: memref<256x1024xbf16, #tpu.memory_space<vmem>>, %arg4: memref<1x1024xf32, #tpu.memory_space<vmem>>, %arg5: memref<256x1024xbf16, #tpu.memory_space<vmem>>, %arg6: memref<8x16x1xi32, #tpu.memory_space<vmem>>, %arg7: memref<128x512xbf16, #tpu.memory_space<vmem>>, %arg8: memref<1x512xf32, #tpu.memory_space<vmem>>, %arg9: memref<128x640xbf16, #tpu.memory_space<vmem>>, %arg10: memref<1x128xf32, #tpu.memory_space<vmem>>, %arg11: memref<8x16x128xf32, #tpu.memory_space<vmem>>, %arg12: memref<128x1024xf32, #tpu.memory_space<vmem>>) attributes {dimension_semantics = [#tpu.dimension_semantics<parallel>], iteration_bounds = array<i64: 1>, scalar_prefetch = 1 : i64, scratch_operands = 1 : i64, tpu.core_type = #tpu.core_type<tc>, window_params = [{transform_indices = @transform_0, window_bounds = array<i64: 8, 16, 256>}, {pipeline_mode = #tpu.pipeline_mode<synchronous>, transform_indices = @transform_1, window_bounds = array<i64: 256, 1024>}, {pipeline_mode = #tpu.pipeline_mode<synchronous>, transform_indices = @transform_2, window_bounds = array<i64: 1, 1024>}, {pipeline_mode = #tpu.pipeline_mode<synchronous>, transform_indices = @transform_3, window_bounds = array<i64: 256, 1024>}, {transform_indices = @transform_4, window_bounds = array<i64: 8, 16, 1>}, {pipeline_mode = #tpu.pipeline_mode<synchronous>, transform_indices = @transform_5, window_bounds = array<i64: 128, 512>}, {pipeline_mode = #tpu.pipeline_mode<synchronous>, transform_indices = @transform_6, window_bounds = array<i64: 1, 512>}, {pipeline_mode = #tpu.pipeline_mode<synchronous>, transform_indices = @transform_7, window_bounds = array<i64: 128, 640>}, {pipeline_mode = #tpu.pipeline_mode<synchronous>, transform_indices = @transform_8, window_bounds = array<i64: 1, 128>}, {transform_indices = @transform_9, window_bounds = array<i64: 8, 16, 128>}]} {
    %c0 = arith.constant 0 : index
    %c0_0 = arith.constant 0 : index
    %c0_1 = arith.constant 0 : index
    %0 = vector.load %arg2[%c0, %c0_0, %c0_1] : memref<8x16x256xbf16, #tpu.memory_space<vmem>>, vector<8x16x256xbf16>
    %1 = vector.shape_cast %0 : vector<8x16x256xbf16> to vector<128x256xbf16>
    %c0_2 = arith.constant 0 : index
    %c0_3 = arith.constant 0 : index
    %2 = vector.load %arg3[%c0_2, %c0_3] : memref<256x1024xbf16, #tpu.memory_space<vmem>>, vector<256x1024xbf16>
    %cst = arith.constant dense<0.000000e+00> : vector<128x1024xf32>
    %3 = tpu.matmul %1, %2, %cst {dimension_numbers = #tpu.dot_dimension_numbers<[1], [0], [0], [1], [0, 0, 1, 1], [], []>} : vector<128x256xbf16>, vector<256x1024xbf16>, vector<128x1024xf32> -> vector<128x1024xf32>
    %c0_4 = arith.constant 0 : index
    %c0_5 = arith.constant 0 : index
    %4 = vector.load %arg4[%c0_4, %c0_5] : memref<1x1024xf32, #tpu.memory_space<vmem>>, vector<1x1024xf32>
    %5 = vector.broadcast %4 : vector<1x1024xf32> to vector<128x1024xf32>
    %6 = arith.addf %3, %5 : vector<128x1024xf32>
    %c0_6 = arith.constant 0 : index
    %c0_7 = arith.constant 0 : index
    %7 = vector.load %arg12[%c0_6, %c0_7] : memref<128x1024xf32, #tpu.memory_space<vmem>>, vector<128x1024xf32>
    tpu.vector_store %arg12[%c0_6, %c0_7], %6 {strides = array<i32>} : memref<128x1024xf32, #tpu.memory_space<vmem>>, vector<128x1024xf32>,
    %cst_8 = arith.constant 0.000000e+00 : f32
    %8 = vector.broadcast %cst_8 : f32 to vector<16x256xf32>
    %cst_9 = arith.constant 0.000000e+00 : f32
    %9 = vector.broadcast %cst_9 : f32 to vector<16x256xf32>
    %c0_10 = arith.constant 0 : index
    %c0_11 = arith.constant 0 : index
    %10 = vector.load %arg12[%c0_10, %c0_11] : memref<128x1024xf32, #tpu.memory_space<vmem>>, vector<16x1024xf32>
    %11 = arith.truncf %8 : vector<16x256xf32> to vector<16x256xbf16>
    %c0_12 = arith.constant 0 : index
    %c0_13 = arith.constant 0 : index
    %12 = vector.load %arg5[%c0_12, %c0_13] : memref<256x1024xbf16, #tpu.memory_space<vmem>>, vector<256x1024xbf16>
    %cst_14 = arith.constant dense<0.000000e+00> : vector<16x1024xf32>
    %13 = tpu.matmul %11, %12, %cst_14 {dimension_numbers = #tpu.dot_dimension_numbers<[1], [0], [0], [1], [0, 0, 1, 1], [], []>} : vector<16x256xbf16>, vector<256x1024xbf16>, vector<16x1024xf32> -> vector<16x1024xf32>
    %14 = arith.addf %10, %13 : vector<16x1024xf32>
    %15 = vector.extract_strided_slice %14 {offsets = [0, 0], sizes = [16, 256], strides = [1, 1]} : vector<16x1024xf32> to vector<16x256xf32>
    %cst_15 = arith.constant 5.000000e-01 : f32
    %16 = vector.broadcast %cst_15 : f32 to vector<16x256xf32>
    %17 = arith.mulf %16, %15 : vector<16x256xf32>
    %18 = math.tanh %17 : vector<16x256xf32>
    %cst_16 = arith.constant 5.000000e-01 : f32
    %19 = vector.broadcast %cst_16 : f32 to vector<16x256xf32>
    %20 = arith.mulf %19, %18 : vector<16x256xf32>
    %cst_17 = arith.constant 5.000000e-01 : f32
    %21 = vector.broadcast %cst_17 : f32 to vector<16x256xf32>
    %22 = arith.addf %20, %21 : vector<16x256xf32>
    %23 = vector.extract_strided_slice %14 {offsets = [0, 256], sizes = [16, 256], strides = [1, 1]} : vector<16x1024xf32> to vector<16x256xf32>
    %cst_18 = arith.constant 5.000000e-01 : f32
    %24 = vector.broadcast %cst_18 : f32 to vector<16x256xf32>
    %25 = arith.mulf %24, %23 : vector<16x256xf32>
    %26 = math.tanh %25 : vector<16x256xf32>
    %cst_19 = arith.constant 5.000000e-01 : f32
    %27 = vector.broadcast %cst_19 : f32 to vector<16x256xf32>
    %28 = arith.mulf %27, %26 : vector<16x256xf32>
    %cst_20 = arith.constant 5.000000e-01 : f32
    %29 = vector.broadcast %cst_20 : f32 to vector<16x256xf32>
    %30 = arith.addf %28, %29 : vector<16x256xf32>
    %31 = vector.extract_strided_slice %14 {offsets = [0, 512], sizes = [16, 256], strides = [1, 1]} : vector<16x1024xf32> to vector<16x256xf32>
    %32 = math.tanh %31 : vector<16x256xf32>
    %33 = vector.extract_strided_slice %14 {offsets = [0, 768], sizes = [16, 256], strides = [1, 1]} : vector<16x1024xf32> to vector<16x256xf32>
    %cst_21 = arith.constant 5.000000e-01 : f32
    %34 = vector.broadcast %cst_21 : f32 to vector<16x256xf32>
    %35 = arith.mulf %34, %33 : vector<16x256xf32>
    %36 = math.tanh %35 : vector<16x256xf32>
    %cst_22 = arith.constant 5.000000e-01 : f32
    %37 = vector.broadcast %cst_22 : f32 to vector<16x256xf32>
    %38 = arith.mulf %37, %36 : vector<16x256xf32>
    %cst_23 = arith.constant 5.000000e-01 : f32
    %39 = vector.broadcast %cst_23 : f32 to vector<16x256xf32>
    %40 = arith.addf %38, %39 : vector<16x256xf32>
    %41 = arith.mulf %30, %9 : vector<16x256xf32>
    %42 = arith.mulf %22, %32 : vector<16x256xf32>
    %43 = arith.addf %41, %42 : vector<16x256xf32>
    %44 = math.tanh %43 : vector<16x256xf32>
    %45 = arith.mulf %40, %44 : vector<16x256xf32>
    %c16 = arith.constant 16 : index
    %c0_24 = arith.constant 0 : index
    %46 = vector.load %arg12[%c16, %c0_24] : memref<128x1024xf32, #tpu.memory_space<vmem>>, vector<16x1024xf32>
    %47 = arith.truncf %45 : vector<16x256xf32> to vector<16x256xbf16>
    %c0_25 = arith.constant 0 : index
    %c0_26 = arith.constant 0 : index
    %48 = vector.load %arg5[%c0_25, %c0_26] : memref<256x1024xbf16, #tpu.memory_space<vmem>>, vector<256x1024xbf16>
    %cst_27 = arith.constant dense<0.000000e+00> : vector<16x1024xf32>
    %49 = tpu.matmul %47, %48, %cst_27 {dimension_numbers = #tpu.dot_dimension_numbers<[1], [0], [0], [1], [0, 0, 1, 1], [], []>} : vector<16x256xbf16>, vector<256x1024xbf16>, vector<16x1024xf32> -> vector<16x1024xf32>
    %50 = arith.addf %46, %49 : vector<16x1024xf32>
    %51 = vector.extract_strided_slice %50 {offsets = [0, 0], sizes = [16, 256], strides = [1, 1]} : vector<16x1024xf32> to vector<16x256xf32>
    %cst_28 = arith.constant 5.000000e-01 : f32
    %52 = vector.broadcast %cst_28 : f32 to vector<16x256xf32>
    %53 = arith.mulf %52, %51 : vector<16x256xf32>
    %54 = math.tanh %53 : vector<16x256xf32>
    %cst_29 = arith.constant 5.000000e-01 : f32
    %55 = vector.broadcast %cst_29 : f32 to vector<16x256xf32>
    %56 = arith.mulf %55, %54 : vector<16x256xf32>
    %cst_30 = arith.constant 5.000000e-01 : f32
    %57 = vector.broadcast %cst_30 : f32 to vector<16x256xf32>
    %58 = arith.addf %56, %57 : vector<16x256xf32>
    %59 = vector.extract_strided_slice %50 {offsets = [0, 256], sizes = [16, 256], strides = [1, 1]} : vector<16x1024xf32> to vector<16x256xf32>
    %cst_31 = arith.constant 5.000000e-01 : f32
    %60 = vector.broadcast %cst_31 : f32 to vector<16x256xf32>
    %61 = arith.mulf %60, %59 : vector<16x256xf32>
    %62 = math.tanh %61 : vector<16x256xf32>
    %cst_32 = arith.constant 5.000000e-01 : f32
    %63 = vector.broadcast %cst_32 : f32 to vector<16x256xf32>
    %64 = arith.mulf %63, %62 : vector<16x256xf32>
    %cst_33 = arith.constant 5.000000e-01 : f32
    %65 = vector.broadcast %cst_33 : f32 to vector<16x256xf32>
    %66 = arith.addf %64, %65 : vector<16x256xf32>
    %67 = vector.extract_strided_slice %50 {offsets = [0, 512], sizes = [16, 256], strides = [1, 1]} : vector<16x1024xf32> to vector<16x256xf32>
    %68 = math.tanh %67 : vector<16x256xf32>
    %69 = vector.extract_strided_slice %50 {offsets = [0, 768], sizes = [16, 256], strides = [1, 1]} : vector<16x1024xf32> to vector<16x256xf32>
    %cst_34 = arith.constant 5.000000e-01 : f32
    %70 = vector.broadcast %cst_34 : f32 to vector<16x256xf32>
    %71 = arith.mulf %70, %69 : vector<16x256xf32>
    %72 = math.tanh %71 : vector<16x256xf32>
    %cst_35 = arith.constant 5.000000e-01 : f32
    %73 = vector.broadcast %cst_35 : f32 to vector<16x256xf32>
    %74 = arith.mulf %73, %72 : vector<16x256xf32>
    %cst_36 = arith.constant 5.000000e-01 : f32
    %75 = vector.broadcast %cst_36 : f32 to vector<16x256xf32>
    %76 = arith.addf %74, %75 : vector<16x256xf32>
    %77 = arith.mulf %66, %43 : vector<16x256xf32>
    %78 = arith.mulf %58, %68 : vector<16x256xf32>
    %79 = arith.addf %77, %78 : vector<16x256xf32>
    %80 = math.tanh %79 : vector<16x256xf32>
    %81 = arith.mulf %76, %80 : vector<16x256xf32>
    %c32 = arith.constant 32 : index
    %c0_37 = arith.constant 0 : index
    %82 = vector.load %arg12[%c32, %c0_37] : memref<128x1024xf32, #tpu.memory_space<vmem>>, vector<16x1024xf32>
    %83 = arith.truncf %81 : vector<16x256xf32> to vector<16x256xbf16>
    %c0_38 = arith.constant 0 : index
    %c0_39 = arith.constant 0 : index
    %84 = vector.load %arg5[%c0_38, %c0_39] : memref<256x1024xbf16, #tpu.memory_space<vmem>>, vector<256x1024xbf16>
    %cst_40 = arith.constant dense<0.000000e+00> : vector<16x1024xf32>
    %85 = tpu.matmul %83, %84, %cst_40 {dimension_numbers = #tpu.dot_dimension_numbers<[1], [0], [0], [1], [0, 0, 1, 1], [], []>} : vector<16x256xbf16>, vector<256x1024xbf16>, vector<16x1024xf32> -> vector<16x1024xf32>
    %86 = arith.addf %82, %85 : vector<16x1024xf32>
    %87 = vector.extract_strided_slice %86 {offsets = [0, 0], sizes = [16, 256], strides = [1, 1]} : vector<16x1024xf32> to vector<16x256xf32>
    %cst_41 = arith.constant 5.000000e-01 : f32
    %88 = vector.broadcast %cst_41 : f32 to vector<16x256xf32>
    %89 = arith.mulf %88, %87 : vector<16x256xf32>
    %90 = math.tanh %89 : vector<16x256xf32>
    %cst_42 = arith.constant 5.000000e-01 : f32
    %91 = vector.broadcast %cst_42 : f32 to vector<16x256xf32>
    %92 = arith.mulf %91, %90 : vector<16x256xf32>
    %cst_43 = arith.constant 5.000000e-01 : f32
    %93 = vector.broadcast %cst_43 : f32 to vector<16x256xf32>
    %94 = arith.addf %92, %93 : vector<16x256xf32>
    %95 = vector.extract_strided_slice %86 {offsets = [0, 256], sizes = [16, 256], strides = [1, 1]} : vector<16x1024xf32> to vector<16x256xf32>
    %cst_44 = arith.constant 5.000000e-01 : f32
    %96 = vector.broadcast %cst_44 : f32 to vector<16x256xf32>
    %97 = arith.mulf %96, %95 : vector<16x256xf32>
    %98 = math.tanh %97 : vector<16x256xf32>
    %cst_45 = arith.constant 5.000000e-01 : f32
    %99 = vector.broadcast %cst_45 : f32 to vector<16x256xf32>
    %100 = arith.mulf %99, %98 : vector<16x256xf32>
    %cst_46 = arith.constant 5.000000e-01 : f32
    %101 = vector.broadcast %cst_46 : f32 to vector<16x256xf32>
    %102 = arith.addf %100, %101 : vector<16x256xf32>
    %103 = vector.extract_strided_slice %86 {offsets = [0, 512], sizes = [16, 256], strides = [1, 1]} : vector<16x1024xf32> to vector<16x256xf32>
    %104 = math.tanh %103 : vector<16x256xf32>
    %105 = vector.extract_strided_slice %86 {offsets = [0, 768], sizes = [16, 256], strides = [1, 1]} : vector<16x1024xf32> to vector<16x256xf32>
    %cst_47 = arith.constant 5.000000e-01 : f32
    %106 = vector.broadcast %cst_47 : f32 to vector<16x256xf32>
    %107 = arith.mulf %106, %105 : vector<16x256xf32>
    %108 = math.tanh %107 : vector<16x256xf32>
    %cst_48 = arith.constant 5.000000e-01 : f32
    %109 = vector.broadcast %cst_48 : f32 to vector<16x256xf32>
    %110 = arith.mulf %109, %108 : vector<16x256xf32>
    %cst_49 = arith.constant 5.000000e-01 : f32
    %111 = vector.broadcast %cst_49 : f32 to vector<16x256xf32>
    %112 = arith.addf %110, %111 : vector<16x256xf32>
    %113 = arith.mulf %102, %79 : vector<16x256xf32>
    %114 = arith.mulf %94, %104 : vector<16x256xf32>
    %115 = arith.addf %113, %114 : vector<16x256xf32>
    %116 = math.tanh %115 : vector<16x256xf32>
    %117 = arith.mulf %112, %116 : vector<16x256xf32>
    %c48 = arith.constant 48 : index
    %c0_50 = arith.constant 0 : index
    %118 = vector.load %arg12[%c48, %c0_50] : memref<128x1024xf32, #tpu.memory_space<vmem>>, vector<16x1024xf32>
    %119 = arith.truncf %117 : vector<16x256xf32> to vector<16x256xbf16>
    %c0_51 = arith.constant 0 : index
    %c0_52 = arith.constant 0 : index
    %120 = vector.load %arg5[%c0_51, %c0_52] : memref<256x1024xbf16, #tpu.memory_space<vmem>>, vector<256x1024xbf16>
    %cst_53 = arith.constant dense<0.000000e+00> : vector<16x1024xf32>
    %121 = tpu.matmul %119, %120, %cst_53 {dimension_numbers = #tpu.dot_dimension_numbers<[1], [0], [0], [1], [0, 0, 1, 1], [], []>} : vector<16x256xbf16>, vector<256x1024xbf16>, vector<16x1024xf32> -> vector<16x1024xf32>
    %122 = arith.addf %118, %121 : vector<16x1024xf32>
    %123 = vector.extract_strided_slice %122 {offsets = [0, 0], sizes = [16, 256], strides = [1, 1]} : vector<16x1024xf32> to vector<16x256xf32>
    %cst_54 = arith.constant 5.000000e-01 : f32
    %124 = vector.broadcast %cst_54 : f32 to vector<16x256xf32>
    %125 = arith.mulf %124, %123 : vector<16x256xf32>
    %126 = math.tanh %125 : vector<16x256xf32>
    %cst_55 = arith.constant 5.000000e-01 : f32
    %127 = vector.broadcast %cst_55 : f32 to vector<16x256xf32>
    %128 = arith.mulf %127, %126 : vector<16x256xf32>
    %cst_56 = arith.constant 5.000000e-01 : f32
    %129 = vector.broadcast %cst_56 : f32 to vector<16x256xf32>
    %130 = arith.addf %128, %129 : vector<16x256xf32>
    %131 = vector.extract_strided_slice %122 {offsets = [0, 256], sizes = [16, 256], strides = [1, 1]} : vector<16x1024xf32> to vector<16x256xf32>
    %cst_57 = arith.constant 5.000000e-01 : f32
    %132 = vector.broadcast %cst_57 : f32 to vector<16x256xf32>
    %133 = arith.mulf %132, %131 : vector<16x256xf32>
    %134 = math.tanh %133 : vector<16x256xf32>
    %cst_58 = arith.constant 5.000000e-01 : f32
    %135 = vector.broadcast %cst_58 : f32 to vector<16x256xf32>
    %136 = arith.mulf %135, %134 : vector<16x256xf32>
    %cst_59 = arith.constant 5.000000e-01 : f32
    %137 = vector.broadcast %cst_59 : f32 to vector<16x256xf32>
    %138 = arith.addf %136, %137 : vector<16x256xf32>
    %139 = vector.extract_strided_slice %122 {offsets = [0, 512], sizes = [16, 256], strides = [1, 1]} : vector<16x1024xf32> to vector<16x256xf32>
    %140 = math.tanh %139 : vector<16x256xf32>
    %141 = vector.extract_strided_slice %122 {offsets = [0, 768], sizes = [16, 256], strides = [1, 1]} : vector<16x1024xf32> to vector<16x256xf32>
    %cst_60 = arith.constant 5.000000e-01 : f32
    %142 = vector.broadcast %cst_60 : f32 to vector<16x256xf32>
    %143 = arith.mulf %142, %141 : vector<16x256xf32>
    %144 = math.tanh %143 : vector<16x256xf32>
    %cst_61 = arith.constant 5.000000e-01 : f32
    %145 = vector.broadcast %cst_61 : f32 to vector<16x256xf32>
    %146 = arith.mulf %145, %144 : vector<16x256xf32>
    %cst_62 = arith.constant 5.000000e-01 : f32
    %147 = vector.broadcast %cst_62 : f32 to vector<16x256xf32>
    %148 = arith.addf %146, %147 : vector<16x256xf32>
    %149 = arith.mulf %138, %115 : vector<16x256xf32>
    %150 = arith.mulf %130, %140 : vector<16x256xf32>
    %151 = arith.addf %149, %150 : vector<16x256xf32>
    %152 = math.tanh %151 : vector<16x256xf32>
    %153 = arith.mulf %148, %152 : vector<16x256xf32>
    %c64 = arith.constant 64 : index
    %c0_63 = arith.constant 0 : index
    %154 = vector.load %arg12[%c64, %c0_63] : memref<128x1024xf32, #tpu.memory_space<vmem>>, vector<16x1024xf32>
    %155 = arith.truncf %153 : vector<16x256xf32> to vector<16x256xbf16>
    %c0_64 = arith.constant 0 : index
    %c0_65 = arith.constant 0 : index
    %156 = vector.load %arg5[%c0_64, %c0_65] : memref<256x1024xbf16, #tpu.memory_space<vmem>>, vector<256x1024xbf16>
    %cst_66 = arith.constant dense<0.000000e+00> : vector<16x1024xf32>
    %157 = tpu.matmul %155, %156, %cst_66 {dimension_numbers = #tpu.dot_dimension_numbers<[1], [0], [0], [1], [0, 0, 1, 1], [], []>} : vector<16x256xbf16>, vector<256x1024xbf16>, vector<16x1024xf32> -> vector<16x1024xf32>
    %158 = arith.addf %154, %157 : vector<16x1024xf32>
    %159 = vector.extract_strided_slice %158 {offsets = [0, 0], sizes = [16, 256], strides = [1, 1]} : vector<16x1024xf32> to vector<16x256xf32>
    %cst_67 = arith.constant 5.000000e-01 : f32
    %160 = vector.broadcast %cst_67 : f32 to vector<16x256xf32>
    %161 = arith.mulf %160, %159 : vector<16x256xf32>
    %162 = math.tanh %161 : vector<16x256xf32>
    %cst_68 = arith.constant 5.000000e-01 : f32
    %163 = vector.broadcast %cst_68 : f32 to vector<16x256xf32>
    %164 = arith.mulf %163, %162 : vector<16x256xf32>
    %cst_69 = arith.constant 5.000000e-01 : f32
    %165 = vector.broadcast %cst_69 : f32 to vector<16x256xf32>
    %166 = arith.addf %164, %165 : vector<16x256xf32>
    %167 = vector.extract_strided_slice %158 {offsets = [0, 256], sizes = [16, 256], strides = [1, 1]} : vector<16x1024xf32> to vector<16x256xf32>
    %cst_70 = arith.constant 5.000000e-01 : f32
    %168 = vector.broadcast %cst_70 : f32 to vector<16x256xf32>
    %169 = arith.mulf %168, %167 : vector<16x256xf32>
    %170 = math.tanh %169 : vector<16x256xf32>
    %cst_71 = arith.constant 5.000000e-01 : f32
    %171 = vector.broadcast %cst_71 : f32 to vector<16x256xf32>
    %172 = arith.mulf %171, %170 : vector<16x256xf32>
    %cst_72 = arith.constant 5.000000e-01 : f32
    %173 = vector.broadcast %cst_72 : f32 to vector<16x256xf32>
    %174 = arith.addf %172, %173 : vector<16x256xf32>
    %175 = vector.extract_strided_slice %158 {offsets = [0, 512], sizes = [16, 256], strides = [1, 1]} : vector<16x1024xf32> to vector<16x256xf32>
    %176 = math.tanh %175 : vector<16x256xf32>
    %177 = vector.extract_strided_slice %158 {offsets = [0, 768], sizes = [16, 256], strides = [1, 1]} : vector<16x1024xf32> to vector<16x256xf32>
    %cst_73 = arith.constant 5.000000e-01 : f32
    %178 = vector.broadcast %cst_73 : f32 to vector<16x256xf32>
    %179 = arith.mulf %178, %177 : vector<16x256xf32>
    %180 = math.tanh %179 : vector<16x256xf32>
    %cst_74 = arith.constant 5.000000e-01 : f32
    %181 = vector.broadcast %cst_74 : f32 to vector<16x256xf32>
    %182 = arith.mulf %181, %180 : vector<16x256xf32>
    %cst_75 = arith.constant 5.000000e-01 : f32
    %183 = vector.broadcast %cst_75 : f32 to vector<16x256xf32>
    %184 = arith.addf %182, %183 : vector<16x256xf32>
    %185 = arith.mulf %174, %151 : vector<16x256xf32>
    %186 = arith.mulf %166, %176 : vector<16x256xf32>
    %187 = arith.addf %185, %186 : vector<16x256xf32>
    %188 = math.tanh %187 : vector<16x256xf32>
    %189 = arith.mulf %184, %188 : vector<16x256xf32>
    %c80 = arith.constant 80 : index
    %c0_76 = arith.constant 0 : index
    %190 = vector.load %arg12[%c80, %c0_76] : memref<128x1024xf32, #tpu.memory_space<vmem>>, vector<16x1024xf32>
    %191 = arith.truncf %189 : vector<16x256xf32> to vector<16x256xbf16>
    %c0_77 = arith.constant 0 : index
    %c0_78 = arith.constant 0 : index
    %192 = vector.load %arg5[%c0_77, %c0_78] : memref<256x1024xbf16, #tpu.memory_space<vmem>>, vector<256x1024xbf16>
    %cst_79 = arith.constant dense<0.000000e+00> : vector<16x1024xf32>
    %193 = tpu.matmul %191, %192, %cst_79 {dimension_numbers = #tpu.dot_dimension_numbers<[1], [0], [0], [1], [0, 0, 1, 1], [], []>} : vector<16x256xbf16>, vector<256x1024xbf16>, vector<16x1024xf32> -> vector<16x1024xf32>
    %194 = arith.addf %190, %193 : vector<16x1024xf32>
    %195 = vector.extract_strided_slice %194 {offsets = [0, 0], sizes = [16, 256], strides = [1, 1]} : vector<16x1024xf32> to vector<16x256xf32>
    %cst_80 = arith.constant 5.000000e-01 : f32
    %196 = vector.broadcast %cst_80 : f32 to vector<16x256xf32>
    %197 = arith.mulf %196, %195 : vector<16x256xf32>
    %198 = math.tanh %197 : vector<16x256xf32>
    %cst_81 = arith.constant 5.000000e-01 : f32
    %199 = vector.broadcast %cst_81 : f32 to vector<16x256xf32>
    %200 = arith.mulf %199, %198 : vector<16x256xf32>
    %cst_82 = arith.constant 5.000000e-01 : f32
    %201 = vector.broadcast %cst_82 : f32 to vector<16x256xf32>
    %202 = arith.addf %200, %201 : vector<16x256xf32>
    %203 = vector.extract_strided_slice %194 {offsets = [0, 256], sizes = [16, 256], strides = [1, 1]} : vector<16x1024xf32> to vector<16x256xf32>
    %cst_83 = arith.constant 5.000000e-01 : f32
    %204 = vector.broadcast %cst_83 : f32 to vector<16x256xf32>
    %205 = arith.mulf %204, %203 : vector<16x256xf32>
    %206 = math.tanh %205 : vector<16x256xf32>
    %cst_84 = arith.constant 5.000000e-01 : f32
    %207 = vector.broadcast %cst_84 : f32 to vector<16x256xf32>
    %208 = arith.mulf %207, %206 : vector<16x256xf32>
    %cst_85 = arith.constant 5.000000e-01 : f32
    %209 = vector.broadcast %cst_85 : f32 to vector<16x256xf32>
    %210 = arith.addf %208, %209 : vector<16x256xf32>
    %211 = vector.extract_strided_slice %194 {offsets = [0, 512], sizes = [16, 256], strides = [1, 1]} : vector<16x1024xf32> to vector<16x256xf32>
    %212 = math.tanh %211 : vector<16x256xf32>
    %213 = vector.extract_strided_slice %194 {offsets = [0, 768], sizes = [16, 256], strides = [1, 1]} : vector<16x1024xf32> to vector<16x256xf32>
    %cst_86 = arith.constant 5.000000e-01 : f32
    %214 = vector.broadcast %cst_86 : f32 to vector<16x256xf32>
    %215 = arith.mulf %214, %213 : vector<16x256xf32>
    %216 = math.tanh %215 : vector<16x256xf32>
    %cst_87 = arith.constant 5.000000e-01 : f32
    %217 = vector.broadcast %cst_87 : f32 to vector<16x256xf32>
    %218 = arith.mulf %217, %216 : vector<16x256xf32>
    %cst_88 = arith.constant 5.000000e-01 : f32
    %219 = vector.broadcast %cst_88 : f32 to vector<16x256xf32>
    %220 = arith.addf %218, %219 : vector<16x256xf32>
    %221 = arith.mulf %210, %187 : vector<16x256xf32>
    %222 = arith.mulf %202, %212 : vector<16x256xf32>
    %223 = arith.addf %221, %222 : vector<16x256xf32>
    %224 = math.tanh %223 : vector<16x256xf32>
    %225 = arith.mulf %220, %224 : vector<16x256xf32>
    %c96 = arith.constant 96 : index
    %c0_89 = arith.constant 0 : index
    %226 = vector.load %arg12[%c96, %c0_89] : memref<128x1024xf32, #tpu.memory_space<vmem>>, vector<16x1024xf32>
    %227 = arith.truncf %225 : vector<16x256xf32> to vector<16x256xbf16>
    %c0_90 = arith.constant 0 : index
    %c0_91 = arith.constant 0 : index
    %228 = vector.load %arg5[%c0_90, %c0_91] : memref<256x1024xbf16, #tpu.memory_space<vmem>>, vector<256x1024xbf16>
    %cst_92 = arith.constant dense<0.000000e+00> : vector<16x1024xf32>
    %229 = tpu.matmul %227, %228, %cst_92 {dimension_numbers = #tpu.dot_dimension_numbers<[1], [0], [0], [1], [0, 0, 1, 1], [], []>} : vector<16x256xbf16>, vector<256x1024xbf16>, vector<16x1024xf32> -> vector<16x1024xf32>
    %230 = arith.addf %226, %229 : vector<16x1024xf32>
    %231 = vector.extract_strided_slice %230 {offsets = [0, 0], sizes = [16, 256], strides = [1, 1]} : vector<16x1024xf32> to vector<16x256xf32>
    %cst_93 = arith.constant 5.000000e-01 : f32
    %232 = vector.broadcast %cst_93 : f32 to vector<16x256xf32>
    %233 = arith.mulf %232, %231 : vector<16x256xf32>
    %234 = math.tanh %233 : vector<16x256xf32>
    %cst_94 = arith.constant 5.000000e-01 : f32
    %235 = vector.broadcast %cst_94 : f32 to vector<16x256xf32>
    %236 = arith.mulf %235, %234 : vector<16x256xf32>
    %cst_95 = arith.constant 5.000000e-01 : f32
    %237 = vector.broadcast %cst_95 : f32 to vector<16x256xf32>
    %238 = arith.addf %236, %237 : vector<16x256xf32>
    %239 = vector.extract_strided_slice %230 {offsets = [0, 256], sizes = [16, 256], strides = [1, 1]} : vector<16x1024xf32> to vector<16x256xf32>
    %cst_96 = arith.constant 5.000000e-01 : f32
    %240 = vector.broadcast %cst_96 : f32 to vector<16x256xf32>
    %241 = arith.mulf %240, %239 : vector<16x256xf32>
    %242 = math.tanh %241 : vector<16x256xf32>
    %cst_97 = arith.constant 5.000000e-01 : f32
    %243 = vector.broadcast %cst_97 : f32 to vector<16x256xf32>
    %244 = arith.mulf %243, %242 : vector<16x256xf32>
    %cst_98 = arith.constant 5.000000e-01 : f32
    %245 = vector.broadcast %cst_98 : f32 to vector<16x256xf32>
    %246 = arith.addf %244, %245 : vector<16x256xf32>
    %247 = vector.extract_strided_slice %230 {offsets = [0, 512], sizes = [16, 256], strides = [1, 1]} : vector<16x1024xf32> to vector<16x256xf32>
    %248 = math.tanh %247 : vector<16x256xf32>
    %249 = vector.extract_strided_slice %230 {offsets = [0, 768], sizes = [16, 256], strides = [1, 1]} : vector<16x1024xf32> to vector<16x256xf32>
    %cst_99 = arith.constant 5.000000e-01 : f32
    %250 = vector.broadcast %cst_99 : f32 to vector<16x256xf32>
    %251 = arith.mulf %250, %249 : vector<16x256xf32>
    %252 = math.tanh %251 : vector<16x256xf32>
    %cst_100 = arith.constant 5.000000e-01 : f32
    %253 = vector.broadcast %cst_100 : f32 to vector<16x256xf32>
    %254 = arith.mulf %253, %252 : vector<16x256xf32>
    %cst_101 = arith.constant 5.000000e-01 : f32
    %255 = vector.broadcast %cst_101 : f32 to vector<16x256xf32>
    %256 = arith.addf %254, %255 : vector<16x256xf32>
    %257 = arith.mulf %246, %223 : vector<16x256xf32>
    %258 = arith.mulf %238, %248 : vector<16x256xf32>
    %259 = arith.addf %257, %258 : vector<16x256xf32>
    %260 = math.tanh %259 : vector<16x256xf32>
    %261 = arith.mulf %256, %260 : vector<16x256xf32>
    %c112 = arith.constant 112 : index
    %c0_102 = arith.constant 0 : index
    %262 = vector.load %arg12[%c112, %c0_102] : memref<128x1024xf32, #tpu.memory_space<vmem>>, vector<16x1024xf32>
    %263 = arith.truncf %261 : vector<16x256xf32> to vector<16x256xbf16>
    %c0_103 = arith.constant 0 : index
    %c0_104 = arith.constant 0 : index
    %264 = vector.load %arg5[%c0_103, %c0_104] : memref<256x1024xbf16, #tpu.memory_space<vmem>>, vector<256x1024xbf16>
    %cst_105 = arith.constant dense<0.000000e+00> : vector<16x1024xf32>
    %265 = tpu.matmul %263, %264, %cst_105 {dimension_numbers = #tpu.dot_dimension_numbers<[1], [0], [0], [1], [0, 0, 1, 1], [], []>} : vector<16x256xbf16>, vector<256x1024xbf16>, vector<16x1024xf32> -> vector<16x1024xf32>
    %266 = arith.addf %262, %265 : vector<16x1024xf32>
    %267 = vector.extract_strided_slice %266 {offsets = [0, 0], sizes = [16, 256], strides = [1, 1]} : vector<16x1024xf32> to vector<16x256xf32>
    %cst_106 = arith.constant 5.000000e-01 : f32
    %268 = vector.broadcast %cst_106 : f32 to vector<16x256xf32>
    %269 = arith.mulf %268, %267 : vector<16x256xf32>
    %270 = math.tanh %269 : vector<16x256xf32>
    %cst_107 = arith.constant 5.000000e-01 : f32
    %271 = vector.broadcast %cst_107 : f32 to vector<16x256xf32>
    %272 = arith.mulf %271, %270 : vector<16x256xf32>
    %cst_108 = arith.constant 5.000000e-01 : f32
    %273 = vector.broadcast %cst_108 : f32 to vector<16x256xf32>
    %274 = arith.addf %272, %273 : vector<16x256xf32>
    %275 = vector.extract_strided_slice %266 {offsets = [0, 256], sizes = [16, 256], strides = [1, 1]} : vector<16x1024xf32> to vector<16x256xf32>
    %cst_109 = arith.constant 5.000000e-01 : f32
    %276 = vector.broadcast %cst_109 : f32 to vector<16x256xf32>
    %277 = arith.mulf %276, %275 : vector<16x256xf32>
    %278 = math.tanh %277 : vector<16x256xf32>
    %cst_110 = arith.constant 5.000000e-01 : f32
    %279 = vector.broadcast %cst_110 : f32 to vector<16x256xf32>
    %280 = arith.mulf %279, %278 : vector<16x256xf32>
    %cst_111 = arith.constant 5.000000e-01 : f32
    %281 = vector.broadcast %cst_111 : f32 to vector<16x256xf32>
    %282 = arith.addf %280, %281 : vector<16x256xf32>
    %283 = vector.extract_strided_slice %266 {offsets = [0, 512], sizes = [16, 256], strides = [1, 1]} : vector<16x1024xf32> to vector<16x256xf32>
    %284 = math.tanh %283 : vector<16x256xf32>
    %285 = vector.extract_strided_slice %266 {offsets = [0, 768], sizes = [16, 256], strides = [1, 1]} : vector<16x1024xf32> to vector<16x256xf32>
    %cst_112 = arith.constant 5.000000e-01 : f32
    %286 = vector.broadcast %cst_112 : f32 to vector<16x256xf32>
    %287 = arith.mulf %286, %285 : vector<16x256xf32>
    %288 = math.tanh %287 : vector<16x256xf32>
    %cst_113 = arith.constant 5.000000e-01 : f32
    %289 = vector.broadcast %cst_113 : f32 to vector<16x256xf32>
    %290 = arith.mulf %289, %288 : vector<16x256xf32>
    %cst_114 = arith.constant 5.000000e-01 : f32
    %291 = vector.broadcast %cst_114 : f32 to vector<16x256xf32>
    %292 = arith.addf %290, %291 : vector<16x256xf32>
    %293 = arith.mulf %282, %259 : vector<16x256xf32>
    %294 = arith.mulf %274, %284 : vector<16x256xf32>
    %295 = arith.addf %293, %294 : vector<16x256xf32>
    %296 = math.tanh %295 : vector<16x256xf32>
    %297 = arith.mulf %292, %296 : vector<16x256xf32>
    %cst_115 = arith.constant 0.000000e+00 : f32
    %298 = vector.broadcast %cst_115 : f32 to vector<16x64xf32>
    %299 = vector.extract_strided_slice %297 {offsets = [0, 0], sizes = [16, 32], strides = [1, 1]} : vector<16x256xf32> to vector<16x32xf32>
    %300 = vector.extract_strided_slice %297 {offsets = [0, 128], sizes = [16, 32], strides = [1, 1]} : vector<16x256xf32> to vector<16x32xf32>
    %301 = tpu.concatenate %299, %300, %298 in 1 : vector<16x32xf32>, vector<16x32xf32>, vector<16x64xf32> -> vector<16x128xf32>
    %302 = vector.extract_strided_slice %295 {offsets = [0, 0], sizes = [16, 32], strides = [1, 1]} : vector<16x256xf32> to vector<16x32xf32>
    %303 = vector.extract_strided_slice %295 {offsets = [0, 128], sizes = [16, 32], strides = [1, 1]} : vector<16x256xf32> to vector<16x32xf32>
    %304 = tpu.concatenate %302, %303, %298 in 1 : vector<16x32xf32>, vector<16x32xf32>, vector<16x64xf32> -> vector<16x128xf32>
    %cst_116 = arith.constant 0.000000e+00 : f32
    %305 = vector.broadcast %cst_116 : f32 to vector<1x16x128xf32>
    %c0_117 = arith.constant 0 : index
    %c0_118 = arith.constant 0 : index
    %c0_119 = arith.constant 0 : index
    %306 = vector.load %arg11[%c0_117, %c0_118, %c0_119] : memref<8x16x128xf32, #tpu.memory_space<vmem>>, vector<1x16x128xf32>
    tpu.vector_store %arg11[%c0_117, %c0_118, %c0_119], %305 {strides = array<i32>} : memref<8x16x128xf32, #tpu.memory_space<vmem>>, vector<1x16x128xf32>,
    %307 = tpu.iota {dimensions = array<i32: 1>} : vector<16x128xi32>
    %c0_120 = arith.constant 0 : index
    %c0_121 = arith.constant 0 : index
    %c0_122 = arith.constant 0 : index
    %308 = vector.load %arg6[%c0_120, %c0_121, %c0_122] : memref<8x16x1xi32, #tpu.memory_space<vmem>>, vector<1x16x1xi32>
    %309 = vector.shape_cast %308 : vector<1x16x1xi32> to vector<16x1xi32>
    %310 = vector.broadcast %309 : vector<16x1xi32> to vector<16x128xi32>
    %311 = arith.cmpi eq, %307, %310 : vector<16x128xi32>
    %312 = arith.extui %311 : vector<16x128xi1> to vector<16x128xi32>
    %313 = arith.sitofp %312 : vector<16x128xi32> to vector<16x128xf32>
    %314 = arith.truncf %313 : vector<16x128xf32> to vector<16x128xbf16>
    %315 = arith.truncf %301 : vector<16x128xf32> to vector<16x128xbf16>
    %c0_123 = arith.constant 0 : index
    %c0_124 = arith.constant 0 : index
    %316 = vector.load %arg9[%c0_123, %c0_124] : memref<128x640xbf16, #tpu.memory_space<vmem>>, vector<128x640xbf16>
    %cst_125 = arith.constant dense<0.000000e+00> : vector<16x640xf32>
    %317 = tpu.matmul %315, %316, %cst_125 {dimension_numbers = #tpu.dot_dimension_numbers<[1], [0], [0], [1], [0, 0, 1, 1], [], []>} : vector<16x128xbf16>, vector<128x640xbf16>, vector<16x640xf32> -> vector<16x640xf32>
    %318 = vector.extract_strided_slice %317 {offsets = [0, 0], sizes = [16, 512], strides = [1, 1]} : vector<16x640xf32> to vector<16x512xf32>
    %c0_126 = arith.constant 0 : index
    %c0_127 = arith.constant 0 : index
    %319 = vector.load %arg7[%c0_126, %c0_127] : memref<128x512xbf16, #tpu.memory_space<vmem>>, vector<128x512xbf16>
    %cst_128 = arith.constant dense<0.000000e+00> : vector<16x512xf32>
    %320 = tpu.matmul %314, %319, %cst_128 {dimension_numbers = #tpu.dot_dimension_numbers<[1], [0], [0], [1], [0, 0, 1, 1], [], []>} : vector<16x128xbf16>, vector<128x512xbf16>, vector<16x512xf32> -> vector<16x512xf32>
    %c0_129 = arith.constant 0 : index
    %c0_130 = arith.constant 0 : index
    %321 = vector.load %arg8[%c0_129, %c0_130] : memref<1x512xf32, #tpu.memory_space<vmem>>, vector<1x512xf32>
    %322 = vector.broadcast %321 : vector<1x512xf32> to vector<16x512xf32>
    %323 = arith.addf %320, %322 : vector<16x512xf32>
    %324 = arith.addf %323, %318 : vector<16x512xf32>
    %325 = vector.extract_strided_slice %324 {offsets = [0, 0], sizes = [16, 128], strides = [1, 1]} : vector<16x512xf32> to vector<16x128xf32>
    %cst_131 = arith.constant 5.000000e-01 : f32
    %326 = vector.broadcast %cst_131 : f32 to vector<16x128xf32>
    %327 = arith.mulf %326, %325 : vector<16x128xf32>
    %328 = math.tanh %327 : vector<16x128xf32>
    %cst_132 = arith.constant 5.000000e-01 : f32
    %329 = vector.broadcast %cst_132 : f32 to vector<16x128xf32>
    %330 = arith.mulf %329, %328 : vector<16x128xf32>
    %cst_133 = arith.constant 5.000000e-01 : f32
    %331 = vector.broadcast %cst_133 : f32 to vector<16x128xf32>
    %332 = arith.addf %330, %331 : vector<16x128xf32>
    %333 = vector.extract_strided_slice %324 {offsets = [0, 128], sizes = [16, 128], strides = [1, 1]} : vector<16x512xf32> to vector<16x128xf32>
    %cst_134 = arith.constant 5.000000e-01 : f32
    %334 = vector.broadcast %cst_134 : f32 to vector<16x128xf32>
    %335 = arith.mulf %334, %333 : vector<16x128xf32>
    %336 = math.tanh %335 : vector<16x128xf32>
    %cst_135 = arith.constant 5.000000e-01 : f32
    %337 = vector.broadcast %cst_135 : f32 to vector<16x128xf32>
    %338 = arith.mulf %337, %336 : vector<16x128xf32>
    %cst_136 = arith.constant 5.000000e-01 : f32
    %339 = vector.broadcast %cst_136 : f32 to vector<16x128xf32>
    %340 = arith.addf %338, %339 : vector<16x128xf32>
    %341 = vector.extract_strided_slice %324 {offsets = [0, 256], sizes = [16, 128], strides = [1, 1]} : vector<16x512xf32> to vector<16x128xf32>
    %342 = math.tanh %341 : vector<16x128xf32>
    %343 = vector.extract_strided_slice %324 {offsets = [0, 384], sizes = [16, 128], strides = [1, 1]} : vector<16x512xf32> to vector<16x128xf32>
    %cst_137 = arith.constant 5.000000e-01 : f32
    %344 = vector.broadcast %cst_137 : f32 to vector<16x128xf32>
    %345 = arith.mulf %344, %343 : vector<16x128xf32>
    %346 = math.tanh %345 : vector<16x128xf32>
    %cst_138 = arith.constant 5.000000e-01 : f32
    %347 = vector.broadcast %cst_138 : f32 to vector<16x128xf32>
    %348 = arith.mulf %347, %346 : vector<16x128xf32>
    %cst_139 = arith.constant 5.000000e-01 : f32
    %349 = vector.broadcast %cst_139 : f32 to vector<16x128xf32>
    %350 = arith.addf %348, %349 : vector<16x128xf32>
    %351 = arith.mulf %340, %304 : vector<16x128xf32>
    %352 = arith.mulf %332, %342 : vector<16x128xf32>
    %353 = arith.addf %351, %352 : vector<16x128xf32>
    %354 = math.tanh %353 : vector<16x128xf32>
    %355 = arith.mulf %350, %354 : vector<16x128xf32>
    %356 = arith.truncf %355 : vector<16x128xf32> to vector<16x128xbf16>
    %c0_140 = arith.constant 0 : index
    %c0_141 = arith.constant 0 : index
    %357 = vector.load %arg9[%c0_140, %c0_141] : memref<128x640xbf16, #tpu.memory_space<vmem>>, vector<128x640xbf16>
    %cst_142 = arith.constant dense<0.000000e+00> : vector<16x640xf32>
    %358 = tpu.matmul %356, %357, %cst_142 {dimension_numbers = #tpu.dot_dimension_numbers<[1], [0], [0], [1], [0, 0, 1, 1], [], []>} : vector<16x128xbf16>, vector<128x640xbf16>, vector<16x640xf32> -> vector<16x640xf32>
    %359 = vector.extract_strided_slice %358 {offsets = [0, 0], sizes = [16, 512], strides = [1, 1]} : vector<16x640xf32> to vector<16x512xf32>
    %360 = vector.extract_strided_slice %358 {offsets = [0, 512], sizes = [16, 128], strides = [1, 1]} : vector<16x640xf32> to vector<16x128xf32>
    %c0_143 = arith.constant 0 : index
    %c0_144 = arith.constant 0 : index
    %361 = vector.load %arg10[%c0_143, %c0_144] : memref<1x128xf32, #tpu.memory_space<vmem>>, vector<1x128xf32>
    %362 = vector.broadcast %361 : vector<1x128xf32> to vector<16x128xf32>
    %363 = arith.addf %360, %362 : vector<16x128xf32>
    %364 = vector.shape_cast %363 : vector<16x128xf32> to vector<1x16x128xf32>
    %c1 = arith.constant 1 : index
    %c0_145 = arith.constant 0 : index
    %c0_146 = arith.constant 0 : index
    %365 = vector.load %arg11[%c1, %c0_145, %c0_146] : memref<8x16x128xf32, #tpu.memory_space<vmem>>, vector<1x16x128xf32>
    tpu.vector_store %arg11[%c1, %c0_145, %c0_146], %364 {strides = array<i32>} : memref<8x16x128xf32, #tpu.memory_space<vmem>>, vector<1x16x128xf32>,
    %cst_147 = arith.constant dense<0xFF800000> : vector<16xf32>
    %366 = vector.multi_reduction <maximumf>, %363, %cst_147 [1] : vector<16x128xf32> to vector<16xf32>
    %367 = vector.shape_cast %366 : vector<16xf32> to vector<16x1xf32>
    %368 = vector.broadcast %367 : vector<16x1xf32> to vector<16x128xf32>
    %369 = arith.cmpf oeq, %363, %368 : vector<16x128xf32>
    %c128_i32 = arith.constant 128 : i32
    %370 = vector.broadcast %c128_i32 : i32 to vector<16x128xi32>
    %371 = arith.select %369, %307, %370 : vector<16x128xi1>, vector<16x128xi32>
    %cst_148 = arith.constant dense<2147483647> : vector<16xi32>
    %372 = vector.multi_reduction <minsi>, %371, %cst_148 [1] : vector<16x128xi32> to vector<16xi32>
    %373 = vector.shape_cast %372 : vector<16xi32> to vector<16x1xi32>
    %374 = vector.broadcast %373 : vector<16x1xi32> to vector<16x128xi32>
    %375 = arith.cmpi eq, %307, %374 : vector<16x128xi32>
    %376 = arith.extui %375 : vector<16x128xi1> to vector<16x128xi32>
    %377 = arith.sitofp %376 : vector<16x128xi32> to vector<16x128xf32>
    %c1_149 = arith.constant 1 : index
    %c0_150 = arith.constant 0 : index
    %c0_151 = arith.constant 0 : index
    %378 = vector.load %arg6[%c1_149, %c0_150, %c0_151] : memref<8x16x1xi32, #tpu.memory_space<vmem>>, vector<1x16x1xi32>
    %379 = vector.shape_cast %378 : vector<1x16x1xi32> to vector<16x1xi32>
    %380 = vector.broadcast %379 : vector<16x1xi32> to vector<16x128xi32>
    %381 = arith.cmpi eq, %307, %380 : vector<16x128xi32>
    %382 = arith.extui %381 : vector<16x128xi1> to vector<16x128xi32>
    %383 = arith.sitofp %382 : vector<16x128xi32> to vector<16x128xf32>
    %c1_152 = arith.constant 1 : index
    %384 = memref.load %arg1[%c1_152] : memref<8xi32, #tpu.memory_space<smem>>
    %c0_i32 = arith.constant 0 : i32
    %385 = arith.cmpi ne, %384, %c0_i32 : i32
    %386 = arith.select %385, %383, %377 : vector<16x128xf32>
    %387 = arith.truncf %386 : vector<16x128xf32> to vector<16x128xbf16>
    %c0_153 = arith.constant 0 : index
    %c0_154 = arith.constant 0 : index
    %388 = vector.load %arg7[%c0_153, %c0_154] : memref<128x512xbf16, #tpu.memory_space<vmem>>, vector<128x512xbf16>
    %cst_155 = arith.constant dense<0.000000e+00> : vector<16x512xf32>
    %389 = tpu.matmul %387, %388, %cst_155 {dimension_numbers = #tpu.dot_dimension_numbers<[1], [0], [0], [1], [0, 0, 1, 1], [], []>} : vector<16x128xbf16>, vector<128x512xbf16>, vector<16x512xf32> -> vector<16x512xf32>
    %c0_156 = arith.constant 0 : index
    %c0_157 = arith.constant 0 : index
    %390 = vector.load %arg8[%c0_156, %c0_157] : memref<1x512xf32, #tpu.memory_space<vmem>>, vector<1x512xf32>
    %391 = vector.broadcast %390 : vector<1x512xf32> to vector<16x512xf32>
    %392 = arith.addf %389, %391 : vector<16x512xf32>
    %393 = arith.addf %392, %359 : vector<16x512xf32>
    %394 = vector.extract_strided_slice %393 {offsets = [0, 0], sizes = [16, 128], strides = [1, 1]} : vector<16x512xf32> to vector<16x128xf32>
    %cst_158 = arith.constant 5.000000e-01 : f32
    %395 = vector.broadcast %cst_158 : f32 to vector<16x128xf32>
    %396 = arith.mulf %395, %394 : vector<16x128xf32>
    %397 = math.tanh %396 : vector<16x128xf32>
    %cst_159 = arith.constant 5.000000e-01 : f32
    %398 = vector.broadcast %cst_159 : f32 to vector<16x128xf32>
    %399 = arith.mulf %398, %397 : vector<16x128xf32>
    %cst_160 = arith.constant 5.000000e-01 : f32
    %400 = vector.broadcast %cst_160 : f32 to vector<16x128xf32>
    %401 = arith.addf %399, %400 : vector<16x128xf32>
    %402 = vector.extract_strided_slice %393 {offsets = [0, 128], sizes = [16, 128], strides = [1, 1]} : vector<16x512xf32> to vector<16x128xf32>
    %cst_161 = arith.constant 5.000000e-01 : f32
    %403 = vector.broadcast %cst_161 : f32 to vector<16x128xf32>
    %404 = arith.mulf %403, %402 : vector<16x128xf32>
    %405 = math.tanh %404 : vector<16x128xf32>
    %cst_162 = arith.constant 5.000000e-01 : f32
    %406 = vector.broadcast %cst_162 : f32 to vector<16x128xf32>
    %407 = arith.mulf %406, %405 : vector<16x128xf32>
    %cst_163 = arith.constant 5.000000e-01 : f32
    %408 = vector.broadcast %cst_163 : f32 to vector<16x128xf32>
    %409 = arith.addf %407, %408 : vector<16x128xf32>
    %410 = vector.extract_strided_slice %393 {offsets = [0, 256], sizes = [16, 128], strides = [1, 1]} : vector<16x512xf32> to vector<16x128xf32>
    %411 = math.tanh %410 : vector<16x128xf32>
    %412 = vector.extract_strided_slice %393 {offsets = [0, 384], sizes = [16, 128], strides = [1, 1]} : vector<16x512xf32> to vector<16x128xf32>
    %cst_164 = arith.constant 5.000000e-01 : f32
    %413 = vector.broadcast %cst_164 : f32 to vector<16x128xf32>
    %414 = arith.mulf %413, %412 : vector<16x128xf32>
    %415 = math.tanh %414 : vector<16x128xf32>
    %cst_165 = arith.constant 5.000000e-01 : f32
    %416 = vector.broadcast %cst_165 : f32 to vector<16x128xf32>
    %417 = arith.mulf %416, %415 : vector<16x128xf32>
    %cst_166 = arith.constant 5.000000e-01 : f32
    %418 = vector.broadcast %cst_166 : f32 to vector<16x128xf32>
    %419 = arith.addf %417, %418 : vector<16x128xf32>
    %420 = arith.mulf %409, %353 : vector<16x128xf32>
    %421 = arith.mulf %401, %411 : vector<16x128xf32>
    %422 = arith.addf %420, %421 : vector<16x128xf32>
    %423 = math.tanh %422 : vector<16x128xf32>
    %424 = arith.mulf %419, %423 : vector<16x128xf32>
    %425 = arith.truncf %424 : vector<16x128xf32> to vector<16x128xbf16>
    %c0_167 = arith.constant 0 : index
    %c0_168 = arith.constant 0 : index
    %426 = vector.load %arg9[%c0_167, %c0_168] : memref<128x640xbf16, #tpu.memory_space<vmem>>, vector<128x640xbf16>
    %cst_169 = arith.constant dense<0.000000e+00> : vector<16x640xf32>
    %427 = tpu.matmul %425, %426, %cst_169 {dimension_numbers = #tpu.dot_dimension_numbers<[1], [0], [0], [1], [0, 0, 1, 1], [], []>} : vector<16x128xbf16>, vector<128x640xbf16>, vector<16x640xf32> -> vector<16x640xf32>
    %428 = vector.extract_strided_slice %427 {offsets = [0, 0], sizes = [16, 512], strides = [1, 1]} : vector<16x640xf32> to vector<16x512xf32>
    %429 = vector.extract_strided_slice %427 {offsets = [0, 512], sizes = [16, 128], strides = [1, 1]} : vector<16x640xf32> to vector<16x128xf32>
    %c0_170 = arith.constant 0 : index
    %c0_171 = arith.constant 0 : index
    %430 = vector.load %arg10[%c0_170, %c0_171] : memref<1x128xf32, #tpu.memory_space<vmem>>, vector<1x128xf32>
    %431 = vector.broadcast %430 : vector<1x128xf32> to vector<16x128xf32>
    %432 = arith.addf %429, %431 : vector<16x128xf32>
    %433 = vector.shape_cast %432 : vector<16x128xf32> to vector<1x16x128xf32>
    %c2 = arith.constant 2 : index
    %c0_172 = arith.constant 0 : index
    %c0_173 = arith.constant 0 : index
    %434 = vector.load %arg11[%c2, %c0_172, %c0_173] : memref<8x16x128xf32, #tpu.memory_space<vmem>>, vector<1x16x128xf32>
    tpu.vector_store %arg11[%c2, %c0_172, %c0_173], %433 {strides = array<i32>} : memref<8x16x128xf32, #tpu.memory_space<vmem>>, vector<1x16x128xf32>,
    %cst_174 = arith.constant dense<0xFF800000> : vector<16xf32>
    %435 = vector.multi_reduction <maximumf>, %432, %cst_174 [1] : vector<16x128xf32> to vector<16xf32>
    %436 = vector.shape_cast %435 : vector<16xf32> to vector<16x1xf32>
    %437 = vector.broadcast %436 : vector<16x1xf32> to vector<16x128xf32>
    %438 = arith.cmpf oeq, %432, %437 : vector<16x128xf32>
    %c128_i32_175 = arith.constant 128 : i32
    %439 = vector.broadcast %c128_i32_175 : i32 to vector<16x128xi32>
    %440 = arith.select %438, %307, %439 : vector<16x128xi1>, vector<16x128xi32>
    %cst_176 = arith.constant dense<2147483647> : vector<16xi32>
    %441 = vector.multi_reduction <minsi>, %440, %cst_176 [1] : vector<16x128xi32> to vector<16xi32>
    %442 = vector.shape_cast %441 : vector<16xi32> to vector<16x1xi32>
    %443 = vector.broadcast %442 : vector<16x1xi32> to vector<16x128xi32>
    %444 = arith.cmpi eq, %307, %443 : vector<16x128xi32>
    %445 = arith.extui %444 : vector<16x128xi1> to vector<16x128xi32>
    %446 = arith.sitofp %445 : vector<16x128xi32> to vector<16x128xf32>
    %c2_177 = arith.constant 2 : index
    %c0_178 = arith.constant 0 : index
    %c0_179 = arith.constant 0 : index
    %447 = vector.load %arg6[%c2_177, %c0_178, %c0_179] : memref<8x16x1xi32, #tpu.memory_space<vmem>>, vector<1x16x1xi32>
    %448 = vector.shape_cast %447 : vector<1x16x1xi32> to vector<16x1xi32>
    %449 = vector.broadcast %448 : vector<16x1xi32> to vector<16x128xi32>
    %450 = arith.cmpi eq, %307, %449 : vector<16x128xi32>
    %451 = arith.extui %450 : vector<16x128xi1> to vector<16x128xi32>
    %452 = arith.sitofp %451 : vector<16x128xi32> to vector<16x128xf32>
    %c2_180 = arith.constant 2 : index
    %453 = memref.load %arg1[%c2_180] : memref<8xi32, #tpu.memory_space<smem>>
    %c0_i32_181 = arith.constant 0 : i32
    %454 = arith.cmpi ne, %453, %c0_i32_181 : i32
    %455 = arith.select %454, %452, %446 : vector<16x128xf32>
    %456 = arith.truncf %455 : vector<16x128xf32> to vector<16x128xbf16>
    %c0_182 = arith.constant 0 : index
    %c0_183 = arith.constant 0 : index
    %457 = vector.load %arg7[%c0_182, %c0_183] : memref<128x512xbf16, #tpu.memory_space<vmem>>, vector<128x512xbf16>
    %cst_184 = arith.constant dense<0.000000e+00> : vector<16x512xf32>
    %458 = tpu.matmul %456, %457, %cst_184 {dimension_numbers = #tpu.dot_dimension_numbers<[1], [0], [0], [1], [0, 0, 1, 1], [], []>} : vector<16x128xbf16>, vector<128x512xbf16>, vector<16x512xf32> -> vector<16x512xf32>
    %c0_185 = arith.constant 0 : index
    %c0_186 = arith.constant 0 : index
    %459 = vector.load %arg8[%c0_185, %c0_186] : memref<1x512xf32, #tpu.memory_space<vmem>>, vector<1x512xf32>
    %460 = vector.broadcast %459 : vector<1x512xf32> to vector<16x512xf32>
    %461 = arith.addf %458, %460 : vector<16x512xf32>
    %462 = arith.addf %461, %428 : vector<16x512xf32>
    %463 = vector.extract_strided_slice %462 {offsets = [0, 0], sizes = [16, 128], strides = [1, 1]} : vector<16x512xf32> to vector<16x128xf32>
    %cst_187 = arith.constant 5.000000e-01 : f32
    %464 = vector.broadcast %cst_187 : f32 to vector<16x128xf32>
    %465 = arith.mulf %464, %463 : vector<16x128xf32>
    %466 = math.tanh %465 : vector<16x128xf32>
    %cst_188 = arith.constant 5.000000e-01 : f32
    %467 = vector.broadcast %cst_188 : f32 to vector<16x128xf32>
    %468 = arith.mulf %467, %466 : vector<16x128xf32>
    %cst_189 = arith.constant 5.000000e-01 : f32
    %469 = vector.broadcast %cst_189 : f32 to vector<16x128xf32>
    %470 = arith.addf %468, %469 : vector<16x128xf32>
    %471 = vector.extract_strided_slice %462 {offsets = [0, 128], sizes = [16, 128], strides = [1, 1]} : vector<16x512xf32> to vector<16x128xf32>
    %cst_190 = arith.constant 5.000000e-01 : f32
    %472 = vector.broadcast %cst_190 : f32 to vector<16x128xf32>
    %473 = arith.mulf %472, %471 : vector<16x128xf32>
    %474 = math.tanh %473 : vector<16x128xf32>
    %cst_191 = arith.constant 5.000000e-01 : f32
    %475 = vector.broadcast %cst_191 : f32 to vector<16x128xf32>
    %476 = arith.mulf %475, %474 : vector<16x128xf32>
    %cst_192 = arith.constant 5.000000e-01 : f32
    %477 = vector.broadcast %cst_192 : f32 to vector<16x128xf32>
    %478 = arith.addf %476, %477 : vector<16x128xf32>
    %479 = vector.extract_strided_slice %462 {offsets = [0, 256], sizes = [16, 128], strides = [1, 1]} : vector<16x512xf32> to vector<16x128xf32>
    %480 = math.tanh %479 : vector<16x128xf32>
    %481 = vector.extract_strided_slice %462 {offsets = [0, 384], sizes = [16, 128], strides = [1, 1]} : vector<16x512xf32> to vector<16x128xf32>
    %cst_193 = arith.constant 5.000000e-01 : f32
    %482 = vector.broadcast %cst_193 : f32 to vector<16x128xf32>
    %483 = arith.mulf %482, %481 : vector<16x128xf32>
    %484 = math.tanh %483 : vector<16x128xf32>
    %cst_194 = arith.constant 5.000000e-01 : f32
    %485 = vector.broadcast %cst_194 : f32 to vector<16x128xf32>
    %486 = arith.mulf %485, %484 : vector<16x128xf32>
    %cst_195 = arith.constant 5.000000e-01 : f32
    %487 = vector.broadcast %cst_195 : f32 to vector<16x128xf32>
    %488 = arith.addf %486, %487 : vector<16x128xf32>
    %489 = arith.mulf %478, %422 : vector<16x128xf32>
    %490 = arith.mulf %470, %480 : vector<16x128xf32>
    %491 = arith.addf %489, %490 : vector<16x128xf32>
    %492 = math.tanh %491 : vector<16x128xf32>
    %493 = arith.mulf %488, %492 : vector<16x128xf32>
    %494 = arith.truncf %493 : vector<16x128xf32> to vector<16x128xbf16>
    %c0_196 = arith.constant 0 : index
    %c0_197 = arith.constant 0 : index
    %495 = vector.load %arg9[%c0_196, %c0_197] : memref<128x640xbf16, #tpu.memory_space<vmem>>, vector<128x640xbf16>
    %cst_198 = arith.constant dense<0.000000e+00> : vector<16x640xf32>
    %496 = tpu.matmul %494, %495, %cst_198 {dimension_numbers = #tpu.dot_dimension_numbers<[1], [0], [0], [1], [0, 0, 1, 1], [], []>} : vector<16x128xbf16>, vector<128x640xbf16>, vector<16x640xf32> -> vector<16x640xf32>
    %497 = vector.extract_strided_slice %496 {offsets = [0, 0], sizes = [16, 512], strides = [1, 1]} : vector<16x640xf32> to vector<16x512xf32>
    %498 = vector.extract_strided_slice %496 {offsets = [0, 512], sizes = [16, 128], strides = [1, 1]} : vector<16x640xf32> to vector<16x128xf32>
    %c0_199 = arith.constant 0 : index
    %c0_200 = arith.constant 0 : index
    %499 = vector.load %arg10[%c0_199, %c0_200] : memref<1x128xf32, #tpu.memory_space<vmem>>, vector<1x128xf32>
    %500 = vector.broadcast %499 : vector<1x128xf32> to vector<16x128xf32>
    %501 = arith.addf %498, %500 : vector<16x128xf32>
    %502 = vector.shape_cast %501 : vector<16x128xf32> to vector<1x16x128xf32>
    %c3 = arith.constant 3 : index
    %c0_201 = arith.constant 0 : index
    %c0_202 = arith.constant 0 : index
    %503 = vector.load %arg11[%c3, %c0_201, %c0_202] : memref<8x16x128xf32, #tpu.memory_space<vmem>>, vector<1x16x128xf32>
    tpu.vector_store %arg11[%c3, %c0_201, %c0_202], %502 {strides = array<i32>} : memref<8x16x128xf32, #tpu.memory_space<vmem>>, vector<1x16x128xf32>,
    %cst_203 = arith.constant dense<0xFF800000> : vector<16xf32>
    %504 = vector.multi_reduction <maximumf>, %501, %cst_203 [1] : vector<16x128xf32> to vector<16xf32>
    %505 = vector.shape_cast %504 : vector<16xf32> to vector<16x1xf32>
    %506 = vector.broadcast %505 : vector<16x1xf32> to vector<16x128xf32>
    %507 = arith.cmpf oeq, %501, %506 : vector<16x128xf32>
    %c128_i32_204 = arith.constant 128 : i32
    %508 = vector.broadcast %c128_i32_204 : i32 to vector<16x128xi32>
    %509 = arith.select %507, %307, %508 : vector<16x128xi1>, vector<16x128xi32>
    %cst_205 = arith.constant dense<2147483647> : vector<16xi32>
    %510 = vector.multi_reduction <minsi>, %509, %cst_205 [1] : vector<16x128xi32> to vector<16xi32>
    %511 = vector.shape_cast %510 : vector<16xi32> to vector<16x1xi32>
    %512 = vector.broadcast %511 : vector<16x1xi32> to vector<16x128xi32>
    %513 = arith.cmpi eq, %307, %512 : vector<16x128xi32>
    %514 = arith.extui %513 : vector<16x128xi1> to vector<16x128xi32>
    %515 = arith.sitofp %514 : vector<16x128xi32> to vector<16x128xf32>
    %c3_206 = arith.constant 3 : index
    %c0_207 = arith.constant 0 : index
    %c0_208 = arith.constant 0 : index
    %516 = vector.load %arg6[%c3_206, %c0_207, %c0_208] : memref<8x16x1xi32, #tpu.memory_space<vmem>>, vector<1x16x1xi32>
    %517 = vector.shape_cast %516 : vector<1x16x1xi32> to vector<16x1xi32>
    %518 = vector.broadcast %517 : vector<16x1xi32> to vector<16x128xi32>
    %519 = arith.cmpi eq, %307, %518 : vector<16x128xi32>
    %520 = arith.extui %519 : vector<16x128xi1> to vector<16x128xi32>
    %521 = arith.sitofp %520 : vector<16x128xi32> to vector<16x128xf32>
    %c3_209 = arith.constant 3 : index
    %522 = memref.load %arg1[%c3_209] : memref<8xi32, #tpu.memory_space<smem>>
    %c0_i32_210 = arith.constant 0 : i32
    %523 = arith.cmpi ne, %522, %c0_i32_210 : i32
    %524 = arith.select %523, %521, %515 : vector<16x128xf32>
    %525 = arith.truncf %524 : vector<16x128xf32> to vector<16x128xbf16>
    %c0_211 = arith.constant 0 : index
    %c0_212 = arith.constant 0 : index
    %526 = vector.load %arg7[%c0_211, %c0_212] : memref<128x512xbf16, #tpu.memory_space<vmem>>, vector<128x512xbf16>
    %cst_213 = arith.constant dense<0.000000e+00> : vector<16x512xf32>
    %527 = tpu.matmul %525, %526, %cst_213 {dimension_numbers = #tpu.dot_dimension_numbers<[1], [0], [0], [1], [0, 0, 1, 1], [], []>} : vector<16x128xbf16>, vector<128x512xbf16>, vector<16x512xf32> -> vector<16x512xf32>
    %c0_214 = arith.constant 0 : index
    %c0_215 = arith.constant 0 : index
    %528 = vector.load %arg8[%c0_214, %c0_215] : memref<1x512xf32, #tpu.memory_space<vmem>>, vector<1x512xf32>
    %529 = vector.broadcast %528 : vector<1x512xf32> to vector<16x512xf32>
    %530 = arith.addf %527, %529 : vector<16x512xf32>
    %531 = arith.addf %530, %497 : vector<16x512xf32>
    %532 = vector.extract_strided_slice %531 {offsets = [0, 0], sizes = [16, 128], strides = [1, 1]} : vector<16x512xf32> to vector<16x128xf32>
    %cst_216 = arith.constant 5.000000e-01 : f32
    %533 = vector.broadcast %cst_216 : f32 to vector<16x128xf32>
    %534 = arith.mulf %533, %532 : vector<16x128xf32>
    %535 = math.tanh %534 : vector<16x128xf32>
    %cst_217 = arith.constant 5.000000e-01 : f32
    %536 = vector.broadcast %cst_217 : f32 to vector<16x128xf32>
    %537 = arith.mulf %536, %535 : vector<16x128xf32>
    %cst_218 = arith.constant 5.000000e-01 : f32
    %538 = vector.broadcast %cst_218 : f32 to vector<16x128xf32>
    %539 = arith.addf %537, %538 : vector<16x128xf32>
    %540 = vector.extract_strided_slice %531 {offsets = [0, 128], sizes = [16, 128], strides = [1, 1]} : vector<16x512xf32> to vector<16x128xf32>
    %cst_219 = arith.constant 5.000000e-01 : f32
    %541 = vector.broadcast %cst_219 : f32 to vector<16x128xf32>
    %542 = arith.mulf %541, %540 : vector<16x128xf32>
    %543 = math.tanh %542 : vector<16x128xf32>
    %cst_220 = arith.constant 5.000000e-01 : f32
    %544 = vector.broadcast %cst_220 : f32 to vector<16x128xf32>
    %545 = arith.mulf %544, %543 : vector<16x128xf32>
    %cst_221 = arith.constant 5.000000e-01 : f32
    %546 = vector.broadcast %cst_221 : f32 to vector<16x128xf32>
    %547 = arith.addf %545, %546 : vector<16x128xf32>
    %548 = vector.extract_strided_slice %531 {offsets = [0, 256], sizes = [16, 128], strides = [1, 1]} : vector<16x512xf32> to vector<16x128xf32>
    %549 = math.tanh %548 : vector<16x128xf32>
    %550 = vector.extract_strided_slice %531 {offsets = [0, 384], sizes = [16, 128], strides = [1, 1]} : vector<16x512xf32> to vector<16x128xf32>
    %cst_222 = arith.constant 5.000000e-01 : f32
    %551 = vector.broadcast %cst_222 : f32 to vector<16x128xf32>
    %552 = arith.mulf %551, %550 : vector<16x128xf32>
    %553 = math.tanh %552 : vector<16x128xf32>
    %cst_223 = arith.constant 5.000000e-01 : f32
    %554 = vector.broadcast %cst_223 : f32 to vector<16x128xf32>
    %555 = arith.mulf %554, %553 : vector<16x128xf32>
    %cst_224 = arith.constant 5.000000e-01 : f32
    %556 = vector.broadcast %cst_224 : f32 to vector<16x128xf32>
    %557 = arith.addf %555, %556 : vector<16x128xf32>
    %558 = arith.mulf %547, %491 : vector<16x128xf32>
    %559 = arith.mulf %539, %549 : vector<16x128xf32>
    %560 = arith.addf %558, %559 : vector<16x128xf32>
    %561 = math.tanh %560 : vector<16x128xf32>
    %562 = arith.mulf %557, %561 : vector<16x128xf32>
    %563 = arith.truncf %562 : vector<16x128xf32> to vector<16x128xbf16>
    %c0_225 = arith.constant 0 : index
    %c0_226 = arith.constant 0 : index
    %564 = vector.load %arg9[%c0_225, %c0_226] : memref<128x640xbf16, #tpu.memory_space<vmem>>, vector<128x640xbf16>
    %cst_227 = arith.constant dense<0.000000e+00> : vector<16x640xf32>
    %565 = tpu.matmul %563, %564, %cst_227 {dimension_numbers = #tpu.dot_dimension_numbers<[1], [0], [0], [1], [0, 0, 1, 1], [], []>} : vector<16x128xbf16>, vector<128x640xbf16>, vector<16x640xf32> -> vector<16x640xf32>
    %566 = vector.extract_strided_slice %565 {offsets = [0, 0], sizes = [16, 512], strides = [1, 1]} : vector<16x640xf32> to vector<16x512xf32>
    %567 = vector.extract_strided_slice %565 {offsets = [0, 512], sizes = [16, 128], strides = [1, 1]} : vector<16x640xf32> to vector<16x128xf32>
    %c0_228 = arith.constant 0 : index
    %c0_229 = arith.constant 0 : index
    %568 = vector.load %arg10[%c0_228, %c0_229] : memref<1x128xf32, #tpu.memory_space<vmem>>, vector<1x128xf32>
    %569 = vector.broadcast %568 : vector<1x128xf32> to vector<16x128xf32>
    %570 = arith.addf %567, %569 : vector<16x128xf32>
    %571 = vector.shape_cast %570 : vector<16x128xf32> to vector<1x16x128xf32>
    %c4 = arith.constant 4 : index
    %c0_230 = arith.constant 0 : index
    %c0_231 = arith.constant 0 : index
    %572 = vector.load %arg11[%c4, %c0_230, %c0_231] : memref<8x16x128xf32, #tpu.memory_space<vmem>>, vector<1x16x128xf32>
    tpu.vector_store %arg11[%c4, %c0_230, %c0_231], %571 {strides = array<i32>} : memref<8x16x128xf32, #tpu.memory_space<vmem>>, vector<1x16x128xf32>,
    %cst_232 = arith.constant dense<0xFF800000> : vector<16xf32>
    %573 = vector.multi_reduction <maximumf>, %570, %cst_232 [1] : vector<16x128xf32> to vector<16xf32>
    %574 = vector.shape_cast %573 : vector<16xf32> to vector<16x1xf32>
    %575 = vector.broadcast %574 : vector<16x1xf32> to vector<16x128xf32>
    %576 = arith.cmpf oeq, %570, %575 : vector<16x128xf32>
    %c128_i32_233 = arith.constant 128 : i32
    %577 = vector.broadcast %c128_i32_233 : i32 to vector<16x128xi32>
    %578 = arith.select %576, %307, %577 : vector<16x128xi1>, vector<16x128xi32>
    %cst_234 = arith.constant dense<2147483647> : vector<16xi32>
    %579 = vector.multi_reduction <minsi>, %578, %cst_234 [1] : vector<16x128xi32> to vector<16xi32>
    %580 = vector.shape_cast %579 : vector<16xi32> to vector<16x1xi32>
    %581 = vector.broadcast %580 : vector<16x1xi32> to vector<16x128xi32>
    %582 = arith.cmpi eq, %307, %581 : vector<16x128xi32>
    %583 = arith.extui %582 : vector<16x128xi1> to vector<16x128xi32>
    %584 = arith.sitofp %583 : vector<16x128xi32> to vector<16x128xf32>
    %c4_235 = arith.constant 4 : index
    %c0_236 = arith.constant 0 : index
    %c0_237 = arith.constant 0 : index
    %585 = vector.load %arg6[%c4_235, %c0_236, %c0_237] : memref<8x16x1xi32, #tpu.memory_space<vmem>>, vector<1x16x1xi32>
    %586 = vector.shape_cast %585 : vector<1x16x1xi32> to vector<16x1xi32>
    %587 = vector.broadcast %586 : vector<16x1xi32> to vector<16x128xi32>
    %588 = arith.cmpi eq, %307, %587 : vector<16x128xi32>
    %589 = arith.extui %588 : vector<16x128xi1> to vector<16x128xi32>
    %590 = arith.sitofp %589 : vector<16x128xi32> to vector<16x128xf32>
    %c4_238 = arith.constant 4 : index
    %591 = memref.load %arg1[%c4_238] : memref<8xi32, #tpu.memory_space<smem>>
    %c0_i32_239 = arith.constant 0 : i32
    %592 = arith.cmpi ne, %591, %c0_i32_239 : i32
    %593 = arith.select %592, %590, %584 : vector<16x128xf32>
    %594 = arith.truncf %593 : vector<16x128xf32> to vector<16x128xbf16>
    %c0_240 = arith.constant 0 : index
    %c0_241 = arith.constant 0 : index
    %595 = vector.load %arg7[%c0_240, %c0_241] : memref<128x512xbf16, #tpu.memory_space<vmem>>, vector<128x512xbf16>
    %cst_242 = arith.constant dense<0.000000e+00> : vector<16x512xf32>
    %596 = tpu.matmul %594, %595, %cst_242 {dimension_numbers = #tpu.dot_dimension_numbers<[1], [0], [0], [1], [0, 0, 1, 1], [], []>} : vector<16x128xbf16>, vector<128x512xbf16>, vector<16x512xf32> -> vector<16x512xf32>
    %c0_243 = arith.constant 0 : index
    %c0_244 = arith.constant 0 : index
    %597 = vector.load %arg8[%c0_243, %c0_244] : memref<1x512xf32, #tpu.memory_space<vmem>>, vector<1x512xf32>
    %598 = vector.broadcast %597 : vector<1x512xf32> to vector<16x512xf32>
    %599 = arith.addf %596, %598 : vector<16x512xf32>
    %600 = arith.addf %599, %566 : vector<16x512xf32>
    %601 = vector.extract_strided_slice %600 {offsets = [0, 0], sizes = [16, 128], strides = [1, 1]} : vector<16x512xf32> to vector<16x128xf32>
    %cst_245 = arith.constant 5.000000e-01 : f32
    %602 = vector.broadcast %cst_245 : f32 to vector<16x128xf32>
    %603 = arith.mulf %602, %601 : vector<16x128xf32>
    %604 = math.tanh %603 : vector<16x128xf32>
    %cst_246 = arith.constant 5.000000e-01 : f32
    %605 = vector.broadcast %cst_246 : f32 to vector<16x128xf32>
    %606 = arith.mulf %605, %604 : vector<16x128xf32>
    %cst_247 = arith.constant 5.000000e-01 : f32
    %607 = vector.broadcast %cst_247 : f32 to vector<16x128xf32>
    %608 = arith.addf %606, %607 : vector<16x128xf32>
    %609 = vector.extract_strided_slice %600 {offsets = [0, 128], sizes = [16, 128], strides = [1, 1]} : vector<16x512xf32> to vector<16x128xf32>
    %cst_248 = arith.constant 5.000000e-01 : f32
    %610 = vector.broadcast %cst_248 : f32 to vector<16x128xf32>
    %611 = arith.mulf %610, %609 : vector<16x128xf32>
    %612 = math.tanh %611 : vector<16x128xf32>
    %cst_249 = arith.constant 5.000000e-01 : f32
    %613 = vector.broadcast %cst_249 : f32 to vector<16x128xf32>
    %614 = arith.mulf %613, %612 : vector<16x128xf32>
    %cst_250 = arith.constant 5.000000e-01 : f32
    %615 = vector.broadcast %cst_250 : f32 to vector<16x128xf32>
    %616 = arith.addf %614, %615 : vector<16x128xf32>
    %617 = vector.extract_strided_slice %600 {offsets = [0, 256], sizes = [16, 128], strides = [1, 1]} : vector<16x512xf32> to vector<16x128xf32>
    %618 = math.tanh %617 : vector<16x128xf32>
    %619 = vector.extract_strided_slice %600 {offsets = [0, 384], sizes = [16, 128], strides = [1, 1]} : vector<16x512xf32> to vector<16x128xf32>
    %cst_251 = arith.constant 5.000000e-01 : f32
    %620 = vector.broadcast %cst_251 : f32 to vector<16x128xf32>
    %621 = arith.mulf %620, %619 : vector<16x128xf32>
    %622 = math.tanh %621 : vector<16x128xf32>
    %cst_252 = arith.constant 5.000000e-01 : f32
    %623 = vector.broadcast %cst_252 : f32 to vector<16x128xf32>
    %624 = arith.mulf %623, %622 : vector<16x128xf32>
    %cst_253 = arith.constant 5.000000e-01 : f32
    %625 = vector.broadcast %cst_253 : f32 to vector<16x128xf32>
    %626 = arith.addf %624, %625 : vector<16x128xf32>
    %627 = arith.mulf %616, %560 : vector<16x128xf32>
    %628 = arith.mulf %608, %618 : vector<16x128xf32>
    %629 = arith.addf %627, %628 : vector<16x128xf32>
    %630 = math.tanh %629 : vector<16x128xf32>
    %631 = arith.mulf %626, %630 : vector<16x128xf32>
    %632 = arith.truncf %631 : vector<16x128xf32> to vector<16x128xbf16>
    %c0_254 = arith.constant 0 : index
    %c0_255 = arith.constant 0 : index
    %633 = vector.load %arg9[%c0_254, %c0_255] : memref<128x640xbf16, #tpu.memory_space<vmem>>, vector<128x640xbf16>
    %cst_256 = arith.constant dense<0.000000e+00> : vector<16x640xf32>
    %634 = tpu.matmul %632, %633, %cst_256 {dimension_numbers = #tpu.dot_dimension_numbers<[1], [0], [0], [1], [0, 0, 1, 1], [], []>} : vector<16x128xbf16>, vector<128x640xbf16>, vector<16x640xf32> -> vector<16x640xf32>
    %635 = vector.extract_strided_slice %634 {offsets = [0, 0], sizes = [16, 512], strides = [1, 1]} : vector<16x640xf32> to vector<16x512xf32>
    %636 = vector.extract_strided_slice %634 {offsets = [0, 512], sizes = [16, 128], strides = [1, 1]} : vector<16x640xf32> to vector<16x128xf32>
    %c0_257 = arith.constant 0 : index
    %c0_258 = arith.constant 0 : index
    %637 = vector.load %arg10[%c0_257, %c0_258] : memref<1x128xf32, #tpu.memory_space<vmem>>, vector<1x128xf32>
    %638 = vector.broadcast %637 : vector<1x128xf32> to vector<16x128xf32>
    %639 = arith.addf %636, %638 : vector<16x128xf32>
    %640 = vector.shape_cast %639 : vector<16x128xf32> to vector<1x16x128xf32>
    %c5 = arith.constant 5 : index
    %c0_259 = arith.constant 0 : index
    %c0_260 = arith.constant 0 : index
    %641 = vector.load %arg11[%c5, %c0_259, %c0_260] : memref<8x16x128xf32, #tpu.memory_space<vmem>>, vector<1x16x128xf32>
    tpu.vector_store %arg11[%c5, %c0_259, %c0_260], %640 {strides = array<i32>} : memref<8x16x128xf32, #tpu.memory_space<vmem>>, vector<1x16x128xf32>,
    %cst_261 = arith.constant dense<0xFF800000> : vector<16xf32>
    %642 = vector.multi_reduction <maximumf>, %639, %cst_261 [1] : vector<16x128xf32> to vector<16xf32>
    %643 = vector.shape_cast %642 : vector<16xf32> to vector<16x1xf32>
    %644 = vector.broadcast %643 : vector<16x1xf32> to vector<16x128xf32>
    %645 = arith.cmpf oeq, %639, %644 : vector<16x128xf32>
    %c128_i32_262 = arith.constant 128 : i32
    %646 = vector.broadcast %c128_i32_262 : i32 to vector<16x128xi32>
    %647 = arith.select %645, %307, %646 : vector<16x128xi1>, vector<16x128xi32>
    %cst_263 = arith.constant dense<2147483647> : vector<16xi32>
    %648 = vector.multi_reduction <minsi>, %647, %cst_263 [1] : vector<16x128xi32> to vector<16xi32>
    %649 = vector.shape_cast %648 : vector<16xi32> to vector<16x1xi32>
    %650 = vector.broadcast %649 : vector<16x1xi32> to vector<16x128xi32>
    %651 = arith.cmpi eq, %307, %650 : vector<16x128xi32>
    %652 = arith.extui %651 : vector<16x128xi1> to vector<16x128xi32>
    %653 = arith.sitofp %652 : vector<16x128xi32> to vector<16x128xf32>
    %c5_264 = arith.constant 5 : index
    %c0_265 = arith.constant 0 : index
    %c0_266 = arith.constant 0 : index
    %654 = vector.load %arg6[%c5_264, %c0_265, %c0_266] : memref<8x16x1xi32, #tpu.memory_space<vmem>>, vector<1x16x1xi32>
    %655 = vector.shape_cast %654 : vector<1x16x1xi32> to vector<16x1xi32>
    %656 = vector.broadcast %655 : vector<16x1xi32> to vector<16x128xi32>
    %657 = arith.cmpi eq, %307, %656 : vector<16x128xi32>
    %658 = arith.extui %657 : vector<16x128xi1> to vector<16x128xi32>
    %659 = arith.sitofp %658 : vector<16x128xi32> to vector<16x128xf32>
    %c5_267 = arith.constant 5 : index
    %660 = memref.load %arg1[%c5_267] : memref<8xi32, #tpu.memory_space<smem>>
    %c0_i32_268 = arith.constant 0 : i32
    %661 = arith.cmpi ne, %660, %c0_i32_268 : i32
    %662 = arith.select %661, %659, %653 : vector<16x128xf32>
    %663 = arith.truncf %662 : vector<16x128xf32> to vector<16x128xbf16>
    %c0_269 = arith.constant 0 : index
    %c0_270 = arith.constant 0 : index
    %664 = vector.load %arg7[%c0_269, %c0_270] : memref<128x512xbf16, #tpu.memory_space<vmem>>, vector<128x512xbf16>
    %cst_271 = arith.constant dense<0.000000e+00> : vector<16x512xf32>
    %665 = tpu.matmul %663, %664, %cst_271 {dimension_numbers = #tpu.dot_dimension_numbers<[1], [0], [0], [1], [0, 0, 1, 1], [], []>} : vector<16x128xbf16>, vector<128x512xbf16>, vector<16x512xf32> -> vector<16x512xf32>
    %c0_272 = arith.constant 0 : index
    %c0_273 = arith.constant 0 : index
    %666 = vector.load %arg8[%c0_272, %c0_273] : memref<1x512xf32, #tpu.memory_space<vmem>>, vector<1x512xf32>
    %667 = vector.broadcast %666 : vector<1x512xf32> to vector<16x512xf32>
    %668 = arith.addf %665, %667 : vector<16x512xf32>
    %669 = arith.addf %668, %635 : vector<16x512xf32>
    %670 = vector.extract_strided_slice %669 {offsets = [0, 0], sizes = [16, 128], strides = [1, 1]} : vector<16x512xf32> to vector<16x128xf32>
    %cst_274 = arith.constant 5.000000e-01 : f32
    %671 = vector.broadcast %cst_274 : f32 to vector<16x128xf32>
    %672 = arith.mulf %671, %670 : vector<16x128xf32>
    %673 = math.tanh %672 : vector<16x128xf32>
    %cst_275 = arith.constant 5.000000e-01 : f32
    %674 = vector.broadcast %cst_275 : f32 to vector<16x128xf32>
    %675 = arith.mulf %674, %673 : vector<16x128xf32>
    %cst_276 = arith.constant 5.000000e-01 : f32
    %676 = vector.broadcast %cst_276 : f32 to vector<16x128xf32>
    %677 = arith.addf %675, %676 : vector<16x128xf32>
    %678 = vector.extract_strided_slice %669 {offsets = [0, 128], sizes = [16, 128], strides = [1, 1]} : vector<16x512xf32> to vector<16x128xf32>
    %cst_277 = arith.constant 5.000000e-01 : f32
    %679 = vector.broadcast %cst_277 : f32 to vector<16x128xf32>
    %680 = arith.mulf %679, %678 : vector<16x128xf32>
    %681 = math.tanh %680 : vector<16x128xf32>
    %cst_278 = arith.constant 5.000000e-01 : f32
    %682 = vector.broadcast %cst_278 : f32 to vector<16x128xf32>
    %683 = arith.mulf %682, %681 : vector<16x128xf32>
    %cst_279 = arith.constant 5.000000e-01 : f32
    %684 = vector.broadcast %cst_279 : f32 to vector<16x128xf32>
    %685 = arith.addf %683, %684 : vector<16x128xf32>
    %686 = vector.extract_strided_slice %669 {offsets = [0, 256], sizes = [16, 128], strides = [1, 1]} : vector<16x512xf32> to vector<16x128xf32>
    %687 = math.tanh %686 : vector<16x128xf32>
    %688 = vector.extract_strided_slice %669 {offsets = [0, 384], sizes = [16, 128], strides = [1, 1]} : vector<16x512xf32> to vector<16x128xf32>
    %cst_280 = arith.constant 5.000000e-01 : f32
    %689 = vector.broadcast %cst_280 : f32 to vector<16x128xf32>
    %690 = arith.mulf %689, %688 : vector<16x128xf32>
    %691 = math.tanh %690 : vector<16x128xf32>
    %cst_281 = arith.constant 5.000000e-01 : f32
    %692 = vector.broadcast %cst_281 : f32 to vector<16x128xf32>
    %693 = arith.mulf %692, %691 : vector<16x128xf32>
    %cst_282 = arith.constant 5.000000e-01 : f32
    %694 = vector.broadcast %cst_282 : f32 to vector<16x128xf32>
    %695 = arith.addf %693, %694 : vector<16x128xf32>
    %696 = arith.mulf %685, %629 : vector<16x128xf32>
    %697 = arith.mulf %677, %687 : vector<16x128xf32>
    %698 = arith.addf %696, %697 : vector<16x128xf32>
    %699 = math.tanh %698 : vector<16x128xf32>
    %700 = arith.mulf %695, %699 : vector<16x128xf32>
    %701 = arith.truncf %700 : vector<16x128xf32> to vector<16x128xbf16>
    %c0_283 = arith.constant 0 : index
    %c0_284 = arith.constant 0 : index
    %702 = vector.load %arg9[%c0_283, %c0_284] : memref<128x640xbf16, #tpu.memory_space<vmem>>, vector<128x640xbf16>
    %cst_285 = arith.constant dense<0.000000e+00> : vector<16x640xf32>
    %703 = tpu.matmul %701, %702, %cst_285 {dimension_numbers = #tpu.dot_dimension_numbers<[1], [0], [0], [1], [0, 0, 1, 1], [], []>} : vector<16x128xbf16>, vector<128x640xbf16>, vector<16x640xf32> -> vector<16x640xf32>
    %704 = vector.extract_strided_slice %703 {offsets = [0, 0], sizes = [16, 512], strides = [1, 1]} : vector<16x640xf32> to vector<16x512xf32>
    %705 = vector.extract_strided_slice %703 {offsets = [0, 512], sizes = [16, 128], strides = [1, 1]} : vector<16x640xf32> to vector<16x128xf32>
    %c0_286 = arith.constant 0 : index
    %c0_287 = arith.constant 0 : index
    %706 = vector.load %arg10[%c0_286, %c0_287] : memref<1x128xf32, #tpu.memory_space<vmem>>, vector<1x128xf32>
    %707 = vector.broadcast %706 : vector<1x128xf32> to vector<16x128xf32>
    %708 = arith.addf %705, %707 : vector<16x128xf32>
    %709 = vector.shape_cast %708 : vector<16x128xf32> to vector<1x16x128xf32>
    %c6 = arith.constant 6 : index
    %c0_288 = arith.constant 0 : index
    %c0_289 = arith.constant 0 : index
    %710 = vector.load %arg11[%c6, %c0_288, %c0_289] : memref<8x16x128xf32, #tpu.memory_space<vmem>>, vector<1x16x128xf32>
    tpu.vector_store %arg11[%c6, %c0_288, %c0_289], %709 {strides = array<i32>} : memref<8x16x128xf32, #tpu.memory_space<vmem>>, vector<1x16x128xf32>,
    %cst_290 = arith.constant dense<0xFF800000> : vector<16xf32>
    %711 = vector.multi_reduction <maximumf>, %708, %cst_290 [1] : vector<16x128xf32> to vector<16xf32>
    %712 = vector.shape_cast %711 : vector<16xf32> to vector<16x1xf32>
    %713 = vector.broadcast %712 : vector<16x1xf32> to vector<16x128xf32>
    %714 = arith.cmpf oeq, %708, %713 : vector<16x128xf32>
    %c128_i32_291 = arith.constant 128 : i32
    %715 = vector.broadcast %c128_i32_291 : i32 to vector<16x128xi32>
    %716 = arith.select %714, %307, %715 : vector<16x128xi1>, vector<16x128xi32>
    %cst_292 = arith.constant dense<2147483647> : vector<16xi32>
    %717 = vector.multi_reduction <minsi>, %716, %cst_292 [1] : vector<16x128xi32> to vector<16xi32>
    %718 = vector.shape_cast %717 : vector<16xi32> to vector<16x1xi32>
    %719 = vector.broadcast %718 : vector<16x1xi32> to vector<16x128xi32>
    %720 = arith.cmpi eq, %307, %719 : vector<16x128xi32>
    %721 = arith.extui %720 : vector<16x128xi1> to vector<16x128xi32>
    %722 = arith.sitofp %721 : vector<16x128xi32> to vector<16x128xf32>
    %c6_293 = arith.constant 6 : index
    %c0_294 = arith.constant 0 : index
    %c0_295 = arith.constant 0 : index
    %723 = vector.load %arg6[%c6_293, %c0_294, %c0_295] : memref<8x16x1xi32, #tpu.memory_space<vmem>>, vector<1x16x1xi32>
    %724 = vector.shape_cast %723 : vector<1x16x1xi32> to vector<16x1xi32>
    %725 = vector.broadcast %724 : vector<16x1xi32> to vector<16x128xi32>
    %726 = arith.cmpi eq, %307, %725 : vector<16x128xi32>
    %727 = arith.extui %726 : vector<16x128xi1> to vector<16x128xi32>
    %728 = arith.sitofp %727 : vector<16x128xi32> to vector<16x128xf32>
    %c6_296 = arith.constant 6 : index
    %729 = memref.load %arg1[%c6_296] : memref<8xi32, #tpu.memory_space<smem>>
    %c0_i32_297 = arith.constant 0 : i32
    %730 = arith.cmpi ne, %729, %c0_i32_297 : i32
    %731 = arith.select %730, %728, %722 : vector<16x128xf32>
    %732 = arith.truncf %731 : vector<16x128xf32> to vector<16x128xbf16>
    %c0_298 = arith.constant 0 : index
    %c0_299 = arith.constant 0 : index
    %733 = vector.load %arg7[%c0_298, %c0_299] : memref<128x512xbf16, #tpu.memory_space<vmem>>, vector<128x512xbf16>
    %cst_300 = arith.constant dense<0.000000e+00> : vector<16x512xf32>
    %734 = tpu.matmul %732, %733, %cst_300 {dimension_numbers = #tpu.dot_dimension_numbers<[1], [0], [0], [1], [0, 0, 1, 1], [], []>} : vector<16x128xbf16>, vector<128x512xbf16>, vector<16x512xf32> -> vector<16x512xf32>
    %c0_301 = arith.constant 0 : index
    %c0_302 = arith.constant 0 : index
    %735 = vector.load %arg8[%c0_301, %c0_302] : memref<1x512xf32, #tpu.memory_space<vmem>>, vector<1x512xf32>
    %736 = vector.broadcast %735 : vector<1x512xf32> to vector<16x512xf32>
    %737 = arith.addf %734, %736 : vector<16x512xf32>
    %738 = arith.addf %737, %704 : vector<16x512xf32>
    %739 = vector.extract_strided_slice %738 {offsets = [0, 0], sizes = [16, 128], strides = [1, 1]} : vector<16x512xf32> to vector<16x128xf32>
    %cst_303 = arith.constant 5.000000e-01 : f32
    %740 = vector.broadcast %cst_303 : f32 to vector<16x128xf32>
    %741 = arith.mulf %740, %739 : vector<16x128xf32>
    %742 = math.tanh %741 : vector<16x128xf32>
    %cst_304 = arith.constant 5.000000e-01 : f32
    %743 = vector.broadcast %cst_304 : f32 to vector<16x128xf32>
    %744 = arith.mulf %743, %742 : vector<16x128xf32>
    %cst_305 = arith.constant 5.000000e-01 : f32
    %745 = vector.broadcast %cst_305 : f32 to vector<16x128xf32>
    %746 = arith.addf %744, %745 : vector<16x128xf32>
    %747 = vector.extract_strided_slice %738 {offsets = [0, 128], sizes = [16, 128], strides = [1, 1]} : vector<16x512xf32> to vector<16x128xf32>
    %cst_306 = arith.constant 5.000000e-01 : f32
    %748 = vector.broadcast %cst_306 : f32 to vector<16x128xf32>
    %749 = arith.mulf %748, %747 : vector<16x128xf32>
    %750 = math.tanh %749 : vector<16x128xf32>
    %cst_307 = arith.constant 5.000000e-01 : f32
    %751 = vector.broadcast %cst_307 : f32 to vector<16x128xf32>
    %752 = arith.mulf %751, %750 : vector<16x128xf32>
    %cst_308 = arith.constant 5.000000e-01 : f32
    %753 = vector.broadcast %cst_308 : f32 to vector<16x128xf32>
    %754 = arith.addf %752, %753 : vector<16x128xf32>
    %755 = vector.extract_strided_slice %738 {offsets = [0, 256], sizes = [16, 128], strides = [1, 1]} : vector<16x512xf32> to vector<16x128xf32>
    %756 = math.tanh %755 : vector<16x128xf32>
    %757 = vector.extract_strided_slice %738 {offsets = [0, 384], sizes = [16, 128], strides = [1, 1]} : vector<16x512xf32> to vector<16x128xf32>
    %cst_309 = arith.constant 5.000000e-01 : f32
    %758 = vector.broadcast %cst_309 : f32 to vector<16x128xf32>
    %759 = arith.mulf %758, %757 : vector<16x128xf32>
    %760 = math.tanh %759 : vector<16x128xf32>
    %cst_310 = arith.constant 5.000000e-01 : f32
    %761 = vector.broadcast %cst_310 : f32 to vector<16x128xf32>
    %762 = arith.mulf %761, %760 : vector<16x128xf32>
    %cst_311 = arith.constant 5.000000e-01 : f32
    %763 = vector.broadcast %cst_311 : f32 to vector<16x128xf32>
    %764 = arith.addf %762, %763 : vector<16x128xf32>
    %765 = arith.mulf %754, %698 : vector<16x128xf32>
    %766 = arith.mulf %746, %756 : vector<16x128xf32>
    %767 = arith.addf %765, %766 : vector<16x128xf32>
    %768 = math.tanh %767 : vector<16x128xf32>
    %769 = arith.mulf %764, %768 : vector<16x128xf32>
    %770 = arith.truncf %769 : vector<16x128xf32> to vector<16x128xbf16>
    %c0_312 = arith.constant 0 : index
    %c0_313 = arith.constant 0 : index
    %771 = vector.load %arg9[%c0_312, %c0_313] : memref<128x640xbf16, #tpu.memory_space<vmem>>, vector<128x640xbf16>
    %cst_314 = arith.constant dense<0.000000e+00> : vector<16x640xf32>
    %772 = tpu.matmul %770, %771, %cst_314 {dimension_numbers = #tpu.dot_dimension_numbers<[1], [0], [0], [1], [0, 0, 1, 1], [], []>} : vector<16x128xbf16>, vector<128x640xbf16>, vector<16x640xf32> -> vector<16x640xf32>
    %773 = vector.extract_strided_slice %772 {offsets = [0, 512], sizes = [16, 128], strides = [1, 1]} : vector<16x640xf32> to vector<16x128xf32>
    %c0_315 = arith.constant 0 : index
    %c0_316 = arith.constant 0 : index
    %774 = vector.load %arg10[%c0_315, %c0_316] : memref<1x128xf32, #tpu.memory_space<vmem>>, vector<1x128xf32>
    %775 = vector.broadcast %774 : vector<1x128xf32> to vector<16x128xf32>
    %776 = arith.addf %773, %775 : vector<16x128xf32>
    %777 = vector.shape_cast %776 : vector<16x128xf32> to vector<1x16x128xf32>
    %c7 = arith.constant 7 : index
    %c0_317 = arith.constant 0 : index
    %c0_318 = arith.constant 0 : index
    %778 = vector.load %arg11[%c7, %c0_317, %c0_318] : memref<8x16x128xf32, #tpu.memory_space<vmem>>, vector<1x16x128xf32>
    tpu.vector_store %arg11[%c7, %c0_317, %c0_318], %777 {strides = array<i32>} : memref<8x16x128xf32, #tpu.memory_space<vmem>>, vector<1x16x128xf32>,
    return
  }
  func.func @transform_0(%arg0: i32, %arg1: memref<8xi32, #tpu.memory_space<smem>>) -> (i32, i32, i32) {
    %c0_i32 = arith.constant 0 : i32
    %c0_i32_0 = arith.constant 0 : i32
    %c0_i32_1 = arith.constant 0 : i32
    return %c0_i32, %arg0, %c0_i32_0 : i32, i32, i32
  }
  func.func @transform_1(%arg0: i32, %arg1: memref<8xi32, #tpu.memory_space<smem>>) -> (i32, i32) {
    %c0_i32 = arith.constant 0 : i32
    %c0_i32_0 = arith.constant 0 : i32
    %c0_i32_1 = arith.constant 0 : i32
    return %c0_i32, %c0_i32_0 : i32, i32
  }
  func.func @transform_2(%arg0: i32, %arg1: memref<8xi32, #tpu.memory_space<smem>>) -> (i32, i32) {
    %c0_i32 = arith.constant 0 : i32
    %c0_i32_0 = arith.constant 0 : i32
    %c0_i32_1 = arith.constant 0 : i32
    return %c0_i32, %c0_i32_0 : i32, i32
  }
  func.func @transform_3(%arg0: i32, %arg1: memref<8xi32, #tpu.memory_space<smem>>) -> (i32, i32) {
    %c0_i32 = arith.constant 0 : i32
    %c0_i32_0 = arith.constant 0 : i32
    %c0_i32_1 = arith.constant 0 : i32
    return %c0_i32, %c0_i32_0 : i32, i32
  }
  func.func @transform_4(%arg0: i32, %arg1: memref<8xi32, #tpu.memory_space<smem>>) -> (i32, i32, i32) {
    %c0_i32 = arith.constant 0 : i32
    %c0_i32_0 = arith.constant 0 : i32
    %c0_i32_1 = arith.constant 0 : i32
    return %c0_i32, %arg0, %c0_i32_0 : i32, i32, i32
  }
  func.func @transform_5(%arg0: i32, %arg1: memref<8xi32, #tpu.memory_space<smem>>) -> (i32, i32) {
    %c0_i32 = arith.constant 0 : i32
    %c0_i32_0 = arith.constant 0 : i32
    %c0_i32_1 = arith.constant 0 : i32
    return %c0_i32, %c0_i32_0 : i32, i32
  }
  func.func @transform_6(%arg0: i32, %arg1: memref<8xi32, #tpu.memory_space<smem>>) -> (i32, i32) {
    %c0_i32 = arith.constant 0 : i32
    %c0_i32_0 = arith.constant 0 : i32
    %c0_i32_1 = arith.constant 0 : i32
    return %c0_i32, %c0_i32_0 : i32, i32
  }
  func.func @transform_7(%arg0: i32, %arg1: memref<8xi32, #tpu.memory_space<smem>>) -> (i32, i32) {
    %c0_i32 = arith.constant 0 : i32
    %c0_i32_0 = arith.constant 0 : i32
    %c0_i32_1 = arith.constant 0 : i32
    return %c0_i32, %c0_i32_0 : i32, i32
  }
  func.func @transform_8(%arg0: i32, %arg1: memref<8xi32, #tpu.memory_space<smem>>) -> (i32, i32) {
    %c0_i32 = arith.constant 0 : i32
    %c0_i32_0 = arith.constant 0 : i32
    %c0_i32_1 = arith.constant 0 : i32
    return %c0_i32, %c0_i32_0 : i32, i32
  }
  func.func @transform_9(%arg0: i32, %arg1: memref<8xi32, #tpu.memory_space<smem>>) -> (i32, i32, i32) {
    %c0_i32 = arith.constant 0 : i32
    %c0_i32_0 = arith.constant 0 : i32
    %c0_i32_1 = arith.constant 0 : i32
    return %c0_i32, %arg0, %c0_i32_0 : i32, i32, i32
  }
}

</mosaic_0001>

<llo_original>
// kernel: tpu_custom_call.1
$region0: #{tpu_custom_call.1}
  #allocation0 [shape = 'u32[]', space=smem, size = 0x4, offset = 0x4, fixed_abs, tag = 'smem constant byte address 0x4 - core index']
  #allocation1 [shape = 'u32[144,128]{1,0:T(1,128)}', space=vmem, size = 0x12000, scoped, tag = 'internal scratch']
  #allocation2 [shape = 'f32[128,1024]{1,0:T(8,128)}', space=vmem, size = 0x80000, scoped, tag = 'scratch operand']
  #allocation3 [shape = 's32[1]{0}', space=sflag, size = 0x4, scoped, tag = 'scoped memory for tpu_custom_call.1']
  #allocation4 [shape = 'u8[512]{0}', space=smem, size = 0x200, scoped, tag = 'prefetched SMEM operand 0']
  %s0 = inlined_call_operand.vmem [shape: s32[8], index: 0, kind: input, shape index: {}]
  %s1 = inlined_call_operand.vmem [shape: bf16[8,16,256], index: 1, kind: input, shape index: {}]
  %s2 = inlined_call_operand.hbm [shape: bf16[256,1024], index: 2, kind: input, shape index: {}]
  %s3 = inlined_call_operand.vmem [shape: f32[1,1024], index: 3, kind: input, shape index: {}]
  %s4 = inlined_call_operand.hbm [shape: bf16[256,1024], index: 4, kind: input, shape index: {}]
  %s5 = inlined_call_operand.vmem [shape: s32[8,16,1], index: 5, kind: input, shape index: {}]
  %s6 = inlined_call_operand.hbm [shape: bf16[128,512], index: 6, kind: input, shape index: {}]
  %s7 = inlined_call_operand.vmem [shape: f32[1,512], index: 7, kind: input, shape index: {}]
  %s8 = inlined_call_operand.hbm [shape: bf16[128,640], index: 8, kind: input, shape index: {}]
  %s9 = inlined_call_operand.vmem [shape: f32[1,128], index: 9, kind: input, shape index: {}]
  %s10 = inlined_call_operand.hbm [shape: f32[8,16,128], index: 10, kind: output, shape index: {}]
  %s11 = sld [smem:[#allocation0]]
  $region62: #{tpu_custom_call.1} parent=0
    _
  %s13 = ssub.s32 1, %s11
  %s14 = scalar_select 0, %s13, %s11
  %s15 = sshll.u32 %s0, 4
  %s16 = int_to_ptr.vmem [resolvable:$true] %s15
  %18 = dma.vmem_to_smem %s16, 16, [#allocation4], [#allocation3]
  %19 = dma.done [#allocation3], 16
  %20 = sfence
  $region1: #{tpu_custom_call.1} parent=0
    #allocation5 [shape = 'u8[524288]{0}', space=vmem, size = 0x80000, scoped, tag = 'input window, operand 2, single buffered']
    #allocation6 [shape = 's32[1]{0}', space=sflag, size = 0x4, scoped, tag = 'scoped memory for tpu_custom_call.1']
    #allocation7 [shape = 's32[1]{0}', space=sflag, size = 0x4, scoped, tag = 'scoped memory for tpu_custom_call.1']
    #allocation8 [shape = 'u8[524288]{0}', space=vmem, size = 0x80000, scoped, tag = 'input window, operand 4, single buffered']
    #allocation9 [shape = 's32[1]{0}', space=sflag, size = 0x4, scoped, tag = 'scoped memory for tpu_custom_call.1']
    #allocation10 [shape = 'u8[131072]{0}', space=vmem, size = 0x20000, scoped, tag = 'input window, operand 6, single buffered']
    #allocation11 [shape = 'u8[163840]{0}', space=vmem, size = 0x28000, scoped, tag = 'input window, operand 8, single buffered']
    #allocation12 [shape = 's32[1]{0}', space=sflag, size = 0x4, scoped, tag = 'scoped memory for tpu_custom_call.1']
    #allocation13 [shape = 'u8[65536]{0}', space=vmem, size = 0x10000, scoped, tag = 'output window, operand 0, single buffered']
    %21 = vsyncpa [#allocation6], 0
    %22 = vsyncpa [#allocation9], 0
    %23 = vsyncpa [#allocation12], 0
    %24 = vsyncpa [#allocation7], 0
    // Predicated region
    $region2: #{tpu_custom_call.1} parent=1 // pred_check
      _
    $region3: #{tpu_custom_call.1} parent=1 // pred_check_branch
      %26 = sbr.rel (0) target = $region5
    $region4: #{tpu_custom_call.1} parent=1 // pred_region
      _
    $region5: #{tpu_custom_call.1} parent=1 // pred_fallthru
      _
    // Predicated region
    $region6: #{tpu_custom_call.1} parent=1 // pred_check
      _
    $region7: #{tpu_custom_call.1} parent=1 // pred_check_branch
      %28 = sbr.rel (0) target = $region9
    $region8: #{tpu_custom_call.1} parent=1 // pred_region
      %s30 = ssub.s32 16384, 16384
      %31 = vsyncadd [#allocation6], %s30
      %s32 = sshll.u32 [#allocation5], 4
      %s33 = int_to_ptr.vmem [resolvable:$true] %s32
      %38 = dma.hbm_to_vmem [thread:$0]  %s2, 16384, %s33, [#allocation6], 512, 512, 32
    $region9: #{tpu_custom_call.1} parent=1 // pred_fallthru
      _
    // Predicated region
    $region10: #{tpu_custom_call.1} parent=1 // pred_check
      _
    $region11: #{tpu_custom_call.1} parent=1 // pred_check_branch
      %40 = sbr.rel (0) target = $region13
    $region12: #{tpu_custom_call.1} parent=1 // pred_region
      _
    $region13: #{tpu_custom_call.1} parent=1 // pred_fallthru
      _
    // Predicated region
    $region14: #{tpu_custom_call.1} parent=1 // pred_check
      _
    $region15: #{tpu_custom_call.1} parent=1 // pred_check_branch
      %42 = sbr.rel (0) target = $region17
    $region16: #{tpu_custom_call.1} parent=1 // pred_region
      %s44 = ssub.s32 16384, 16384
      %45 = vsyncadd [#allocation9], %s44
      %s46 = sshll.u32 [#allocation8], 4
      %s47 = int_to_ptr.vmem [resolvable:$true] %s46
      %52 = dma.hbm_to_vmem [thread:$0]  %s4, 16384, %s47, [#allocation9], 512, 512, 32
    $region17: #{tpu_custom_call.1} parent=1 // pred_fallthru
      _
    // Predicated region
    $region18: #{tpu_custom_call.1} parent=1 // pred_check
      _
    $region19: #{tpu_custom_call.1} parent=1 // pred_check_branch
      %54 = sbr.rel (0) target = $region21
    $region20: #{tpu_custom_call.1} parent=1 // pred_region
      _
    $region21: #{tpu_custom_call.1} parent=1 // pred_fallthru
      _
    // Predicated region
    $region22: #{tpu_custom_call.1} parent=1 // pred_check
      _
    $region23: #{tpu_custom_call.1} parent=1 // pred_check_branch
      %56 = sbr.rel (0) target = $region25
    $region24: #{tpu_custom_call.1} parent=1 // pred_region
      %s58 = ssub.s32 4096, 4096
      %59 = vsyncadd [#allocation9], %s58
      %s60 = sshll.u32 [#allocation10], 4
      %s61 = int_to_ptr.vmem [resolvable:$true] %s60
      %66 = dma.hbm_to_vmem [thread:$0]  %s6, 4096, %s61, [#allocation9], 256, 256, 16
    $region25: #{tpu_custom_call.1} parent=1 // pred_fallthru
      _
    // Predicated region
    $region26: #{tpu_custom_call.1} parent=1 // pred_check
      _
    $region27: #{tpu_custom_call.1} parent=1 // pred_check_branch
      %68 = sbr.rel (0) target = $region29
    $region28: #{tpu_custom_call.1} parent=1 // pred_region
      _
    $region29: #{tpu_custom_call.1} parent=1 // pred_fallthru
      _
    // Predicated region
    $region30: #{tpu_custom_call.1} parent=1 // pred_check
      _
    $region31: #{tpu_custom_call.1} parent=1 // pred_check_branch
      %70 = sbr.rel (0) target = $region33
    $region32: #{tpu_custom_call.1} parent=1 // pred_region
      %s72 = ssub.s32 5120, 5120
      %73 = vsyncadd [#allocation12], %s72
      %s74 = sshll.u32 [#allocation11], 4
      %s75 = int_to_ptr.vmem [resolvable:$true] %s74
      %80 = dma.hbm_to_vmem [thread:$0]  %s8, 5120, %s75, [#allocation12], 320, 320, 20
    $region33: #{tpu_custom_call.1} parent=1 // pred_fallthru
      _
    // Predicated region
    $region34: #{tpu_custom_call.1} parent=1 // pred_check
      _
    $region35: #{tpu_custom_call.1} parent=1 // pred_check_branch
      %82 = sbr.rel (0) target = $region37
    $region36: #{tpu_custom_call.1} parent=1 // pred_region
      _
    $region37: #{tpu_custom_call.1} parent=1 // pred_fallthru
      _
    // Predicated region
    $region38: #{tpu_custom_call.1} parent=1 // pred_check
      _
    $region39: #{tpu_custom_call.1} parent=1 // pred_check_branch
      %84 = sbr.rel (0) target = $region41
    $region40: #{tpu_custom_call.1} parent=1 // pred_region
      %85 = dma.done [#allocation6], 16384
    $region41: #{tpu_custom_call.1} parent=1 // pred_fallthru
      _
    // Predicated region
    $region42: #{tpu_custom_call.1} parent=1 // pred_check
      _
    $region43: #{tpu_custom_call.1} parent=1 // pred_check_branch
      %87 = sbr.rel (0) target = $region45
    $region44: #{tpu_custom_call.1} parent=1 // pred_region
      %88 = dma.done [#allocation9], 16384
    $region45: #{tpu_custom_call.1} parent=1 // pred_fallthru
      _
    // Predicated region
    $region46: #{tpu_custom_call.1} parent=1 // pred_check
      _
    $region47: #{tpu_custom_call.1} parent=1 // pred_check_branch
      %90 = sbr.rel (0) target = $region49
    $region48: #{tpu_custom_call.1} parent=1 // pred_region
      %91 = dma.done [#allocation9], 4096
    $region49: #{tpu_custom_call.1} parent=1 // pred_fallthru
      _
    // Predicated region
    $region50: #{tpu_custom_call.1} parent=1 // pred_check
      _
    $region51: #{tpu_custom_call.1} parent=1 // pred_check_branch
      %93 = sbr.rel (0) target = $region53
    $region52: #{tpu_custom_call.1} parent=1 // pred_region
      %94 = dma.done [#allocation12], 5120
    $region53: #{tpu_custom_call.1} parent=1 // pred_fallthru
      _
    %v96 = vld [vmem:[%s1] sm:$0xff]
    %v97 = vld [vmem:[%s1 + $0x8] sm:$0xff]
    %v98 = vld [vmem:[%s1 + $0x10] sm:$0xff]
    %v99 = vld [vmem:[%s1 + $0x18] sm:$0xff]
    %v100 = vld [vmem:[%s1 + $0x20] sm:$0xff]
    %v101 = vld [vmem:[%s1 + $0x28] sm:$0xff]
    %v102 = vld [vmem:[%s1 + $0x30] sm:$0xff]
    %v103 = vld [vmem:[%s1 + $0x38] sm:$0xff]
    %v104 = vld [vmem:[%s1 + $0x40] sm:$0xff]
    %v105 = vld [vmem:[%s1 + $0x48] sm:$0xff]
    %v106 = vld [vmem:[%s1 + $0x50] sm:$0xff]
    %v107 = vld [vmem:[%s1 + $0x58] sm:$0xff]
    %v108 = vld [vmem:[%s1 + $0x60] sm:$0xff]
    %v109 = vld [vmem:[%s1 + $0x68] sm:$0xff]
    %v110 = vld [vmem:[%s1 + $0x70] sm:$0xff]
    %v111 = vld [vmem:[%s1 + $0x78] sm:$0xff]
    %v112 = vld [vmem:[#allocation5] sm:$0xff]
    %v113 = vld [vmem:[#allocation5 + $0x8] sm:$0xff]
    %v114 = vld [vmem:[#allocation5 + $0x10] sm:$0xff]
    %v115 = vld [vmem:[#allocation5 + $0x18] sm:$0xff]
    %v116 = vld [vmem:[#allocation5 + $0x20] sm:$0xff]
    %v117 = vld [vmem:[#allocation5 + $0x28] sm:$0xff]
    %v118 = vld [vmem:[#allocation5 + $0x30] sm:$0xff]
    %v119 = vld [vmem:[#allocation5 + $0x38] sm:$0xff]
    %v120 = vld [vmem:[#allocation5 + $0x40] sm:$0xff]
    %v121 = vld [vmem:[#allocation5 + $0x48] sm:$0xff]
    %v122 = vld [vmem:[#allocation5 + $0x50] sm:$0xff]
    %v123 = vld [vmem:[#allocation5 + $0x58] sm:$0xff]
    %v124 = vld [vmem:[#allocation5 + $0x60] sm:$0xff]
    %v125 = vld [vmem:[#allocation5 + $0x68] sm:$0xff]
    %v126 = vld [vmem:[#allocation5 + $0x70] sm:$0xff]
    %v127 = vld [vmem:[#allocation5 + $0x78] sm:$0xff]
    %v128 = vld [vmem:[#allocation5 + $0x80] sm:$0xff]
    %v129 = vld [vmem:[#allocation5 + $0x88] sm:$0xff]
    %v130 = vld [vmem:[#allocation5 + $0x90] sm:$0xff]
    %v131 = vld [vmem:[#allocation5 + $0x98] sm:$0xff]
    %v132 = vld [vmem:[#allocation5 + $0xa0] sm:$0xff]
    %v133 = vld [vmem:[#allocation5 + $0xa8] sm:$0xff]
    %v134 = vld [vmem:[#allocation5 + $0xb0] sm:$0xff]
    %v135 = vld [vmem:[#allocation5 + $0xb8] sm:$0xff]
    %v136 = vld [vmem:[#allocation5 + $0xc0] sm:$0xff]
    %v137 = vld [vmem:[#allocation5 + $0xc8] sm:$0xff]
    %v138 = vld [vmem:[#allocation5 + $0xd0] sm:$0xff]
    %v139 = vld [vmem:[#allocation5 + $0xd8] sm:$0xff]
    %v140 = vld [vmem:[#allocation5 + $0xe0] sm:$0xff]
    %v141 = vld [vmem:[#allocation5 + $0xe8] sm:$0xff]
    %v142 = vld [vmem:[#allocation5 + $0xf0] sm:$0xff]
    %v143 = vld [vmem:[#allocation5 + $0xf8] sm:$0xff]
    %v144 = vld [vmem:[#allocation5 + $0x100] sm:$0xff]
    %v145 = vld [vmem:[#allocation5 + $0x108] sm:$0xff]
    %v146 = vld [vmem:[#allocation5 + $0x110] sm:$0xff]
    %v147 = vld [vmem:[#allocation5 + $0x118] sm:$0xff]
    %v148 = vld [vmem:[#allocation5 + $0x120] sm:$0xff]
    %v149 = vld [vmem:[#allocation5 + $0x128] sm:$0xff]
    %v150 = vld [vmem:[#allocation5 + $0x130] sm:$0xff]
    %v151 = vld [vmem:[#allocation5 + $0x138] sm:$0xff]
    %v152 = vld [vmem:[#allocation5 + $0x140] sm:$0xff]
    %v153 = vld [vmem:[#allocation5 + $0x148] sm:$0xff]
    %v154 = vld [vmem:[#allocation5 + $0x150] sm:$0xff]
    %v155 = vld [vmem:[#allocation5 + $0x158] sm:$0xff]
    %v156 = vld [vmem:[#allocation5 + $0x160] sm:$0xff]
    %v157 = vld [vmem:[#allocation5 + $0x168] sm:$0xff]
    %v158 = vld [vmem:[#allocation5 + $0x170] sm:$0xff]
    %v159 = vld [vmem:[#allocation5 + $0x178] sm:$0xff]
    %v160 = vld [vmem:[#allocation5 + $0x180] sm:$0xff]
    %v161 = vld [vmem:[#allocation5 + $0x188] sm:$0xff]
    %v162 = vld [vmem:[#allocation5 + $0x190] sm:$0xff]
    %v163 = vld [vmem:[#allocation5 + $0x198] sm:$0xff]
    %v164 = vld [vmem:[#allocation5 + $0x1a0] sm:$0xff]
    %v165 = vld [vmem:[#allocation5 + $0x1a8] sm:$0xff]
    %v166 = vld [vmem:[#allocation5 + $0x1b0] sm:$0xff]
    %v167 = vld [vmem:[#allocation5 + $0x1b8] sm:$0xff]
    %v168 = vld [vmem:[#allocation5 + $0x1c0] sm:$0xff]
    %v169 = vld [vmem:[#allocation5 + $0x1c8] sm:$0xff]
    %v170 = vld [vmem:[#allocation5 + $0x1d0] sm:$0xff]
    %v171 = vld [vmem:[#allocation5 + $0x1d8] sm:$0xff]
    %v172 = vld [vmem:[#allocation5 + $0x1e0] sm:$0xff]
    %v173 = vld [vmem:[#allocation5 + $0x1e8] sm:$0xff]
    %v174 = vld [vmem:[#allocation5 + $0x1f0] sm:$0xff]
    %v175 = vld [vmem:[#allocation5 + $0x1f8] sm:$0xff]
    %v176 = vld [vmem:[#allocation5 + $0x200] sm:$0xff]
    %v177 = vld [vmem:[#allocation5 + $0x208] sm:$0xff]
    %v178 = vld [vmem:[#allocation5 + $0x210] sm:$0xff]
    %v179 = vld [vmem:[#allocation5 + $0x218] sm:$0xff]
    %v180 = vld [vmem:[#allocation5 + $0x220] sm:$0xff]
    %v181 = vld [vmem:[#allocation5 + $0x228] sm:$0xff]
    %v182 = vld [vmem:[#allocation5 + $0x230] sm:$0xff]
    %v183 = vld [vmem:[#allocation5 + $0x238] sm:$0xff]
    %v184 = vld [vmem:[#allocation5 + $0x240] sm:$0xff]
    %v185 = vld [vmem:[#allocation5 + $0x248] sm:$0xff]
    %v186 = vld [vmem:[#allocation5 + $0x250] sm:$0xff]
    %v187 = vld [vmem:[#allocation5 + $0x258] sm:$0xff]
    %v188 = vld [vmem:[#allocation5 + $0x260] sm:$0xff]
    %v189 = vld [vmem:[#allocation5 + $0x268] sm:$0xff]
    %v190 = vld [vmem:[#allocation5 + $0x270] sm:$0xff]
    %v191 = vld [vmem:[#allocation5 + $0x278] sm:$0xff]
    %v192 = vld [vmem:[#allocation5 + $0x280] sm:$0xff]
    %v193 = vld [vmem:[#allocation5 + $0x288] sm:$0xff]
    %v194 = vld [vmem:[#allocation5 + $0x290] sm:$0xff]
    %v195 = vld [vmem:[#allocation5 + $0x298] sm:$0xff]
    %v196 = vld [vmem:[#allocation5 + $0x2a0] sm:$0xff]
    %v197 = vld [vmem:[#allocation5 + $0x2a8] sm:$0xff]
    %v198 = vld [vmem:[#allocation5 + $0x2b0] sm:$0xff]
    %v199 = vld [vmem:[#allocation5 + $0x2b8] sm:$0xff]
    %v200 = vld [vmem:[#allocation5 + $0x2c0] sm:$0xff]
    %v201 = vld [vmem:[#allocation5 + $0x2c8] sm:$0xff]
    %v202 = vld [vmem:[#allocation5 + $0x2d0] sm:$0xff]
    %v203 = vld [vmem:[#allocation5 + $0x2d8] sm:$0xff]
    %v204 = vld [vmem:[#allocation5 + $0x2e0] sm:$0xff]
    %v205 = vld [vmem:[#allocation5 + $0x2e8] sm:$0xff]
    %v206 = vld [vmem:[#allocation5 + $0x2f0] sm:$0xff]
    %v207 = vld [vmem:[#allocation5 + $0x2f8] sm:$0xff]
    %v208 = vld [vmem:[#allocation5 + $0x300] sm:$0xff]
    %v209 = vld [vmem:[#allocation5 + $0x308] sm:$0xff]
    %v210 = vld [vmem:[#allocation5 + $0x310] sm:$0xff]
    %v211 = vld [vmem:[#allocation5 + $0x318] sm:$0xff]
    %v212 = vld [vmem:[#allocation5 + $0x320] sm:$0xff]
    %v213 = vld [vmem:[#allocation5 + $0x328] sm:$0xff]
    %v214 = vld [vmem:[#allocation5 + $0x330] sm:$0xff]
    %v215 = vld [vmem:[#allocation5 + $0x338] sm:$0xff]
    %v216 = vld [vmem:[#allocation5 + $0x340] sm:$0xff]
    %v217 = vld [vmem:[#allocation5 + $0x348] sm:$0xff]
    %v218 = vld [vmem:[#allocation5 + $0x350] sm:$0xff]
    %v219 = vld [vmem:[#allocation5 + $0x358] sm:$0xff]
    %v220 = vld [vmem:[#allocation5 + $0x360] sm:$0xff]
    %v221 = vld [vmem:[#allocation5 + $0x368] sm:$0xff]
    %v222 = vld [vmem:[#allocation5 + $0x370] sm:$0xff]
    %v223 = vld [vmem:[#allocation5 + $0x378] sm:$0xff]
    %v224 = vld [vmem:[#allocation5 + $0x380] sm:$0xff]
    %v225 = vld [vmem:[#allocation5 + $0x388] sm:$0xff]
    %v226 = vld [vmem:[#allocation5 + $0x390] sm:$0xff]
    %v227 = vld [vmem:[#allocation5 + $0x398] sm:$0xff]
    %v228 = vld [vmem:[#allocation5 + $0x3a0] sm:$0xff]
    %v229 = vld [vmem:[#allocation5 + $0x3a8] sm:$0xff]
    %v230 = vld [vmem:[#allocation5 + $0x3b0] sm:$0xff]
    %v231 = vld [vmem:[#allocation5 + $0x3b8] sm:$0xff]
    %v232 = vld [vmem:[#allocation5 + $0x3c0] sm:$0xff]
    %v233 = vld [vmem:[#allocation5 + $0x3c8] sm:$0xff]
    %v234 = vld [vmem:[#allocation5 + $0x3d0] sm:$0xff]
    %v235 = vld [vmem:[#allocation5 + $0x3d8] sm:$0xff]
    %v236 = vld [vmem:[#allocation5 + $0x3e0] sm:$0xff]
    %v237 = vld [vmem:[#allocation5 + $0x3e8] sm:$0xff]
    %v238 = vld [vmem:[#allocation5 + $0x3f0] sm:$0xff]
    %v239 = vld [vmem:[#allocation5 + $0x3f8] sm:$0xff]
    %v240 = vld [vmem:[%s3] sm:$0xff]
    %v242 = vlaneseq
    %v243 = vshrl.u32 %v242, 7
    %v244 = vsub.s32 0, %v243
    %v245 = vrot.slane %v240, %v244
    %v246 = vlaneseq
    %v247 = vshrl.u32 %v246, 7
    %v248 = vsub.s32 1, %v247
    %v249 = vrot.slane %v240, %v248
    %v250 = vlaneseq
    %v251 = vshrl.u32 %v250, 7
    %v252 = vsub.s32 2, %v251
    %v253 = vrot.slane %v240, %v252
    %v254 = vlaneseq
    %v255 = vshrl.u32 %v254, 7
    %v256 = vsub.s32 3, %v255
    %v257 = vrot.slane %v240, %v256
    %v258 = vlaneseq
    %v259 = vshrl.u32 %v258, 7
    %v260 = vsub.s32 4, %v259
    %v261 = vrot.slane %v240, %v260
    %v262 = vlaneseq
    %v263 = vshrl.u32 %v262, 7
    %v264 = vsub.s32 5, %v263
    %v265 = vrot.slane %v240, %v264
    %v266 = vlaneseq
    %v267 = vshrl.u32 %v266, 7
    %v268 = vsub.s32 6, %v267
    %v269 = vrot.slane %v240, %v268
    %v270 = vlaneseq
    %v271 = vshrl.u32 %v270, 7
    %v272 = vsub.s32 7, %v271
    %v273 = vrot.slane %v240, %v272
    %v298 = vunpack.c.l.b16 %v96
    %v299 = vunpack.c.h.b16 %v96
    %v300 = vunpack.c.l.b16 %v97
    %v301 = vunpack.c.h.b16 %v97
    %v302 = vunpack.c.l.b16 %v98
    %v303 = vunpack.c.h.b16 %v98
    %v304 = vunpack.c.l.b16 %v99
    %v305 = vunpack.c.h.b16 %v99
    %v306 = vunpack.c.l.b16 %v100
    %v307 = vunpack.c.h.b16 %v100
    %v308 = vunpack.c.l.b16 %v101
    %v309 = vunpack.c.h.b16 %v101
    %v310 = vunpack.c.l.b16 %v102
    %v311 = vunpack.c.h.b16 %v102
    %v312 = vunpack.c.l.b16 %v103
    %v313 = vunpack.c.h.b16 %v103
    %v314 = vunpack.c.l.b16 %v104
    %v315 = vunpack.c.h.b16 %v104
    %v316 = vunpack.c.l.b16 %v105
    %v317 = vunpack.c.h.b16 %v105
    %v318 = vunpack.c.l.b16 %v106
    %v319 = vunpack.c.h.b16 %v106
    %v320 = vunpack.c.l.b16 %v107
    %v321 = vunpack.c.h.b16 %v107
    %v322 = vunpack.c.l.b16 %v108
    %v323 = vunpack.c.h.b16 %v108
    %v324 = vunpack.c.l.b16 %v109
    %v325 = vunpack.c.h.b16 %v109
    %v326 = vunpack.c.l.b16 %v110
    %v327 = vunpack.c.h.b16 %v110
    %v328 = vunpack.c.l.b16 %v111
    %v329 = vunpack.c.h.b16 %v111
    %v330 = vpack.c.b16 %v300, %v298
    %v331 = vpack.c.b16 %v301, %v299
    %v332 = vpack.c.b16 %v304, %v302
    %v333 = vpack.c.b16 %v305, %v303
    %v334 = vpack.c.b16 %v308, %v306
    %v335 = vpack.c.b16 %v309, %v307
    %v336 = vpack.c.b16 %v312, %v310
    %v337 = vpack.c.b16 %v313, %v311
    %v338 = vpack.c.b16 %v316, %v314
    %v339 = vpack.c.b16 %v317, %v315
    %v340 = vpack.c.b16 %v320, %v318
    %v341 = vpack.c.b16 %v321, %v319
    %v342 = vpack.c.b16 %v324, %v322
    %v343 = vpack.c.b16 %v325, %v323
    %v344 = vpack.c.b16 %v328, %v326
    %v345 = vpack.c.b16 %v329, %v327
    %v490 = vunpack.c.l.b16 %v112
    %v491 = vunpack.c.h.b16 %v112
    %v492 = vunpack.c.l.b16 %v113
    %v493 = vunpack.c.h.b16 %v113
    %v494 = vunpack.c.l.b16 %v114
    %v495 = vunpack.c.h.b16 %v114
    %v496 = vunpack.c.l.b16 %v115
    %v497 = vunpack.c.h.b16 %v115
    %v498 = vunpack.c.l.b16 %v116
    %v499 = vunpack.c.h.b16 %v116
    %v500 = vunpack.c.l.b16 %v117
    %v501 = vunpack.c.h.b16 %v117
    %v502 = vunpack.c.l.b16 %v118
    %v503 = vunpack.c.h.b16 %v118
    %v504 = vunpack.c.l.b16 %v119
    %v505 = vunpack.c.h.b16 %v119
    %v506 = vunpack.c.l.b16 %v120
    %v507 = vunpack.c.h.b16 %v120
    %v508 = vunpack.c.l.b16 %v121
    %v509 = vunpack.c.h.b16 %v121
    %v510 = vunpack.c.l.b16 %v122
    %v511 = vunpack.c.h.b16 %v122
    %v512 = vunpack.c.l.b16 %v123
    %v513 = vunpack.c.h.b16 %v123
    %v514 = vunpack.c.l.b16 %v124
    %v515 = vunpack.c.h.b16 %v124
    %v516 = vunpack.c.l.b16 %v125
    %v517 = vunpack.c.h.b16 %v125
    %v518 = vunpack.c.l.b16 %v126
    %v519 = vunpack.c.h.b16 %v126
    %v520 = vunpack.c.l.b16 %v127
    %v521 = vunpack.c.h.b16 %v127
    %v522 = vunpack.c.l.b16 %v128
    %v523 = vunpack.c.h.b16 %v128
    %v524 = vunpack.c.l.b16 %v129
    %v525 = vunpack.c.h.b16 %v129
    %v526 = vunpack.c.l.b16 %v130
    %v527 = vunpack.c.h.b16 %v130
    %v528 = vunpack.c.l.b16 %v131
    %v529 = vunpack.c.h.b16 %v131
    %v530 = vunpack.c.l.b16 %v132
    %v531 = vunpack.c.h.b16 %v132
    %v532 = vunpack.c.l.b16 %v133
    %v533 = vunpack.c.h.b16 %v133
    %v534 = vunpack.c.l.b16 %v134
    %v535 = vunpack.c.h.b16 %v134
    %v536 = vunpack.c.l.b16 %v135
    %v537 = vunpack.c.h.b16 %v135
    %v538 = vunpack.c.l.b16 %v136
    %v539 = vunpack.c.h.b16 %v136
    %v540 = vunpack.c.l.b16 %v137
    %v541 = vunpack.c.h.b16 %v137
    %v542 = vunpack.c.l.b16 %v138
    %v543 = vunpack.c.h.b16 %v138
    %v544 = vunpack.c.l.b16 %v139
    %v545 = vunpack.c.h.b16 %v139
    %v546 = vunpack.c.l.b16 %v140
    %v547 = vunpack.c.h.b16 %v140
    %v548 = vunpack.c.l.b16 %v141
    %v549 = vunpack.c.h.b16 %v141
    %v550 = vunpack.c.l.b16 %v142
    %v551 = vunpack.c.h.b16 %v142
    %v552 = vunpack.c.l.b16 %v143
    %v553 = vunpack.c.h.b16 %v143
    %v554 = vunpack.c.l.b16 %v144
    %v555 = vunpack.c.h.b16 %v144
    %v556 = vunpack.c.l.b16 %v145
    %v557 = vunpack.c.h.b16 %v145
    %v558 = vunpack.c.l.b16 %v146
    %v559 = vunpack.c.h.b16 %v146
    %v560 = vunpack.c.l.b16 %v147
    %v561 = vunpack.c.h.b16 %v147
    %v562 = vunpack.c.l.b16 %v148
    %v563 = vunpack.c.h.b16 %v148
    %v564 = vunpack.c.l.b16 %v149
    %v565 = vunpack.c.h.b16 %v149
    %v566 = vunpack.c.l.b16 %v150
    %v567 = vunpack.c.h.b16 %v150
    %v568 = vunpack.c.l.b16 %v151
    %v569 = vunpack.c.h.b16 %v151
    %v570 = vunpack.c.l.b16 %v152
    %v571 = vunpack.c.h.b16 %v152
    %v572 = vunpack.c.l.b16 %v153
    %v573 = vunpack.c.h.b16 %v153
    %v574 = vunpack.c.l.b16 %v154
    %v575 = vunpack.c.h.b16 %v154
    %v576 = vunpack.c.l.b16 %v155
    %v577 = vunpack.c.h.b16 %v155
    %v578 = vunpack.c.l.b16 %v156
    %v579 = vunpack.c.h.b16 %v156
    %v580 = vunpack.c.l.b16 %v157
    %v581 = vunpack.c.h.b16 %v157
    %v582 = vunpack.c.l.b16 %v158
    %v583 = vunpack.c.h.b16 %v158
    %v584 = vunpack.c.l.b16 %v159
    %v585 = vunpack.c.h.b16 %v159
    %v586 = vunpack.c.l.b16 %v160
    %v587 = vunpack.c.h.b16 %v160
    %v588 = vunpack.c.l.b16 %v161
    %v589 = vunpack.c.h.b16 %v161
    %v590 = vunpack.c.l.b16 %v162
    %v591 = vunpack.c.h.b16 %v162
    %v592 = vunpack.c.l.b16 %v163
    %v593 = vunpack.c.h.b16 %v163
    %v594 = vunpack.c.l.b16 %v164
    %v595 = vunpack.c.h.b16 %v164
    %v596 = vunpack.c.l.b16 %v165
    %v597 = vunpack.c.h.b16 %v165
    %v598 = vunpack.c.l.b16 %v166
    %v599 = vunpack.c.h.b16 %v166
    %v600 = vunpack.c.l.b16 %v167
    %v601 = vunpack.c.h.b16 %v167
    %v602 = vunpack.c.l.b16 %v168
    %v603 = vunpack.c.h.b16 %v168
    %v604 = vunpack.c.l.b16 %v169
    %v605 = vunpack.c.h.b16 %v169
    %v606 = vunpack.c.l.b16 %v170
    %v607 = vunpack.c.h.b16 %v170
    %v608 = vunpack.c.l.b16 %v171
    %v609 = vunpack.c.h.b16 %v171
    %v610 = vunpack.c.l.b16 %v172
    %v611 = vunpack.c.h.b16 %v172
    %v612 = vunpack.c.l.b16 %v173
    %v613 = vunpack.c.h.b16 %v173
    %v614 = vunpack.c.l.b16 %v174
    %v615 = vunpack.c.h.b16 %v174
    %v616 = vunpack.c.l.b16 %v175
    %v617 = vunpack.c.h.b16 %v175
    %v618 = vunpack.c.l.b16 %v176
    %v619 = vunpack.c.h.b16 %v176
    %v620 = vunpack.c.l.b16 %v177
    %v621 = vunpack.c.h.b16 %v177
    %v622 = vunpack.c.l.b16 %v178
    %v623 = vunpack.c.h.b16 %v178
    %v624 = vunpack.c.l.b16 %v179
    %v625 = vunpack.c.h.b16 %v179
    %v626 = vunpack.c.l.b16 %v180
    %v627 = vunpack.c.h.b16 %v180
    %v628 = vunpack.c.l.b16 %v181
    %v629 = vunpack.c.h.b16 %v181
    %v630 = vunpack.c.l.b16 %v182
    %v631 = vunpack.c.h.b16 %v182
    %v632 = vunpack.c.l.b16 %v183
    %v633 = vunpack.c.h.b16 %v183
    %v634 = vunpack.c.l.b16 %v184
    %v635 = vunpack.c.h.b16 %v184
    %v636 = vunpack.c.l.b16 %v185
    %v637 = vunpack.c.h.b16 %v185
    %v638 = vunpack.c.l.b16 %v186
    %v639 = vunpack.c.h.b16 %v186
    %v640 = vunpack.c.l.b16 %v187
    %v641 = vunpack.c.h.b16 %v187
    %v642 = vunpack.c.l.b16 %v188
    %v643 = vunpack.c.h.b16 %v188
    %v644 = vunpack.c.l.b16 %v189
    %v645 = vunpack.c.h.b16 %v189
    %v646 = vunpack.c.l.b16 %v190
    %v647 = vunpack.c.h.b16 %v190
    %v648 = vunpack.c.l.b16 %v191
    %v649 = vunpack.c.h.b16 %v191
    %v650 = vunpack.c.l.b16 %v192
    %v651 = vunpack.c.h.b16 %v192
    %v652 = vunpack.c.l.b16 %v193
    %v653 = vunpack.c.h.b16 %v193
    %v654 = vunpack.c.l.b16 %v194
    %v655 = vunpack.c.h.b16 %v194
    %v656 = vunpack.c.l.b16 %v195
    %v657 = vunpack.c.h.b16 %v195
    %v658 = vunpack.c.l.b16 %v196
    %v659 = vunpack.c.h.b16 %v196
    %v660 = vunpack.c.l.b16 %v197
    %v661 = vunpack.c.h.b16 %v197
    %v662 = vunpack.c.l.b16 %v198
    %v663 = vunpack.c.h.b16 %v198
    %v664 = vunpack.c.l.b16 %v199
    %v665 = vunpack.c.h.b16 %v199
    %v666 = vunpack.c.l.b16 %v200
    %v667 = vunpack.c.h.b16 %v200
    %v668 = vunpack.c.l.b16 %v201
    %v669 = vunpack.c.h.b16 %v201
    %v670 = vunpack.c.l.b16 %v202
    %v671 = vunpack.c.h.b16 %v202
    %v672 = vunpack.c.l.b16 %v203
    %v673 = vunpack.c.h.b16 %v203
    %v674 = vunpack.c.l.b16 %v204
    %v675 = vunpack.c.h.b16 %v204
    %v676 = vunpack.c.l.b16 %v205
    %v677 = vunpack.c.h.b16 %v205
    %v678 = vunpack.c.l.b16 %v206
    %v679 = vunpack.c.h.b16 %v206
    %v680 = vunpack.c.l.b16 %v207
    %v681 = vunpack.c.h.b16 %v207
    %v682 = vunpack.c.l.b16 %v208
    %v683 = vunpack.c.h.b16 %v208
    %v684 = vunpack.c.l.b16 %v209
    %v685 = vunpack.c.h.b16 %v209
    %v686 = vunpack.c.l.b16 %v210
    %v687 = vunpack.c.h.b16 %v210
    %v688 = vunpack.c.l.b16 %v211
    %v689 = vunpack.c.h.b16 %v211
    %v690 = vunpack.c.l.b16 %v212
    %v691 = vunpack.c.h.b16 %v212
    %v692 = vunpack.c.l.b16 %v213
    %v693 = vunpack.c.h.b16 %v213
    %v694 = vunpack.c.l.b16 %v214
    %v695 = vunpack.c.h.b16 %v214
    %v696 = vunpack.c.l.b16 %v215
    %v697 = vunpack.c.h.b16 %v215
    %v698 = vunpack.c.l.b16 %v216
    %v699 = vunpack.c.h.b16 %v216
    %v700 = vunpack.c.l.b16 %v217
    %v701 = vunpack.c.h.b16 %v217
    %v702 = vunpack.c.l.b16 %v218
    %v703 = vunpack.c.h.b16 %v218
    %v704 = vunpack.c.l.b16 %v219
    %v705 = vunpack.c.h.b16 %v219
    %v706 = vunpack.c.l.b16 %v220
    %v707 = vunpack.c.h.b16 %v220
    %v708 = vunpack.c.l.b16 %v221
    %v709 = vunpack.c.h.b16 %v221
    %v710 = vunpack.c.l.b16 %v222
    %v711 = vunpack.c.h.b16 %v222
    %v712 = vunpack.c.l.b16 %v223
    %v713 = vunpack.c.h.b16 %v223
    %v714 = vunpack.c.l.b16 %v224
    %v715 = vunpack.c.h.b16 %v224
    %v716 = vunpack.c.l.b16 %v225
    %v717 = vunpack.c.h.b16 %v225
    %v718 = vunpack.c.l.b16 %v226
    %v719 = vunpack.c.h.b16 %v226
    %v720 = vunpack.c.l.b16 %v227
    %v721 = vunpack.c.h.b16 %v227
    %v722 = vunpack.c.l.b16 %v228
    %v723 = vunpack.c.h.b16 %v228
    %v724 = vunpack.c.l.b16 %v229
    %v725 = vunpack.c.h.b16 %v229
    %v726 = vunpack.c.l.b16 %v230
    %v727 = vunpack.c.h.b16 %v230
    %v728 = vunpack.c.l.b16 %v231
    %v729 = vunpack.c.h.b16 %v231
    %v730 = vunpack.c.l.b16 %v232
    %v731 = vunpack.c.h.b16 %v232
    %v732 = vunpack.c.l.b16 %v233
    %v733 = vunpack.c.h.b16 %v233
    %v734 = vunpack.c.l.b16 %v234
    %v735 = vunpack.c.h.b16 %v234
    %v736 = vunpack.c.l.b16 %v235
    %v737 = vunpack.c.h.b16 %v235
    %v738 = vunpack.c.l.b16 %v236
    %v739 = vunpack.c.h.b16 %v236
    %v740 = vunpack.c.l.b16 %v237
    %v741 = vunpack.c.h.b16 %v237
    %v742 = vunpack.c.l.b16 %v238
    %v743 = vunpack.c.h.b16 %v238
    %v744 = vunpack.c.l.b16 %v239
    %v745 = vunpack.c.h.b16 %v239
    %v746 = vpack.c.b16 %v498, %v490
    %v747 = vpack.c.b16 %v499, %v491
    %v748 = vpack.c.b16 %v500, %v492
    %v749 = vpack.c.b16 %v501, %v493
    %v750 = vpack.c.b16 %v502, %v494
    %v751 = vpack.c.b16 %v503, %v495
    %v752 = vpack.c.b16 %v504, %v496
    %v753 = vpack.c.b16 %v505, %v497
    %v754 = vpack.c.b16 %v514, %v506
    %v755 = vpack.c.b16 %v515, %v507
    %v756 = vpack.c.b16 %v516, %v508
    %v757 = vpack.c.b16 %v517, %v509
    %v758 = vpack.c.b16 %v518, %v510
    %v759 = vpack.c.b16 %v519, %v511
    %v760 = vpack.c.b16 %v520, %v512
    %v761 = vpack.c.b16 %v521, %v513
    %v762 = vpack.c.b16 %v530, %v522
    %v763 = vpack.c.b16 %v531, %v523
    %v764 = vpack.c.b16 %v532, %v524
    %v765 = vpack.c.b16 %v533, %v525
    %v766 = vpack.c.b16 %v534, %v526
    %v767 = vpack.c.b16 %v535, %v527
    %v768 = vpack.c.b16 %v536, %v528
    %v769 = vpack.c.b16 %v537, %v529
    %v770 = vpack.c.b16 %v546, %v538
    %v771 = vpack.c.b16 %v547, %v539
    %v772 = vpack.c.b16 %v548, %v540
    %v773 = vpack.c.b16 %v549, %v541
    %v774 = vpack.c.b16 %v550, %v542
    %v775 = vpack.c.b16 %v551, %v543
    %v776 = vpack.c.b16 %v552, %v544
    %v777 = vpack.c.b16 %v553, %v545
    %v778 = vpack.c.b16 %v562, %v554
    %v779 = vpack.c.b16 %v563, %v555
    %v780 = vpack.c.b16 %v564, %v556
    %v781 = vpack.c.b16 %v565, %v557
    %v782 = vpack.c.b16 %v566, %v558
    %v783 = vpack.c.b16 %v567, %v559
    %v784 = vpack.c.b16 %v568, %v560
    %v785 = vpack.c.b16 %v569, %v561
    %v786 = vpack.c.b16 %v578, %v570
    %v787 = vpack.c.b16 %v579, %v571
    %v788 = vpack.c.b16 %v580, %v572
    %v789 = vpack.c.b16 %v581, %v573
    %v790 = vpack.c.b16 %v582, %v574
    %v791 = vpack.c.b16 %v583, %v575
    %v792 = vpack.c.b16 %v584, %v576
    %v793 = vpack.c.b16 %v585, %v577
    %v794 = vpack.c.b16 %v594, %v586
    %v795 = vpack.c.b16 %v595, %v587
    %v796 = vpack.c.b16 %v596, %v588
    %v797 = vpack.c.b16 %v597, %v589
    %v798 = vpack.c.b16 %v598, %v590
    %v799 = vpack.c.b16 %v599, %v591
    %v800 = vpack.c.b16 %v600, %v592
    %v801 = vpack.c.b16 %v601, %v593
    %v802 = vpack.c.b16 %v610, %v602
    %v803 = vpack.c.b16 %v611, %v603
    %v804 = vpack.c.b16 %v612, %v604
    %v805 = vpack.c.b16 %v613, %v605
    %v806 = vpack.c.b16 %v614, %v606
    %v807 = vpack.c.b16 %v615, %v607
    %v808 = vpack.c.b16 %v616, %v608
    %v809 = vpack.c.b16 %v617, %v609
    %v810 = vpack.c.b16 %v626, %v618
    %v811 = vpack.c.b16 %v627, %v619
    %v812 = vpack.c.b16 %v628, %v620
    %v813 = vpack.c.b16 %v629, %v621
    %v814 = vpack.c.b16 %v630, %v622
    %v815 = vpack.c.b16 %v631, %v623
    %v816 = vpack.c.b16 %v632, %v624
    %v817 = vpack.c.b16 %v633, %v625
    %v818 = vpack.c.b16 %v642, %v634
    %v819 = vpack.c.b16 %v643, %v635
    %v820 = vpack.c.b16 %v644, %v636
    %v821 = vpack.c.b16 %v645, %v637
    %v822 = vpack.c.b16 %v646, %v638
    %v823 = vpack.c.b16 %v647, %v639
    %v824 = vpack.c.b16 %v648, %v640
    %v825 = vpack.c.b16 %v649, %v641
    %v826 = vpack.c.b16 %v658, %v650
    %v827 = vpack.c.b16 %v659, %v651
    %v828 = vpack.c.b16 %v660, %v652
    %v829 = vpack.c.b16 %v661, %v653
    %v830 = vpack.c.b16 %v662, %v654
    %v831 = vpack.c.b16 %v663, %v655
    %v832 = vpack.c.b16 %v664, %v656
    %v833 = vpack.c.b16 %v665, %v657
    %v834 = vpack.c.b16 %v674, %v666
    %v835 = vpack.c.b16 %v675, %v667
    %v836 = vpack.c.b16 %v676, %v668
    %v837 = vpack.c.b16 %v677, %v669
    %v838 = vpack.c.b16 %v678, %v670
    %v839 = vpack.c.b16 %v679, %v671
    %v840 = vpack.c.b16 %v680, %v672
    %v841 = vpack.c.b16 %v681, %v673
    %v842 = vpack.c.b16 %v690, %v682
    %v843 = vpack.c.b16 %v691, %v683
    %v844 = vpack.c.b16 %v692, %v684
    %v845 = vpack.c.b16 %v693, %v685
    %v846 = vpack.c.b16 %v694, %v686
    %v847 = vpack.c.b16 %v695, %v687
    %v848 = vpack.c.b16 %v696, %v688
    %v849 = vpack.c.b16 %v697, %v689
    %v850 = vpack.c.b16 %v706, %v698
    %v851 = vpack.c.b16 %v707, %v699
    %v852 = vpack.c.b16 %v708, %v700
    %v853 = vpack.c.b16 %v709, %v701
    %v854 = vpack.c.b16 %v710, %v702
    %v855 = vpack.c.b16 %v711, %v703
    %v856 = vpack.c.b16 %v712, %v704
    %v857 = vpack.c.b16 %v713, %v705
    %v858 = vpack.c.b16 %v722, %v714
    %v859 = vpack.c.b16 %v723, %v715
    %v860 = vpack.c.b16 %v724, %v716
    %v861 = vpack.c.b16 %v725, %v717
    %v862 = vpack.c.b16 %v726, %v718
    %v863 = vpack.c.b16 %v727, %v719
    %v864 = vpack.c.b16 %v728, %v720
    %v865 = vpack.c.b16 %v729, %v721
    %v866 = vpack.c.b16 %v738, %v730
    %v867 = vpack.c.b16 %v739, %v731
    %v868 = vpack.c.b16 %v740, %v732
    %v869 = vpack.c.b16 %v741, %v733
    %v870 = vpack.c.b16 %v742, %v734
    %v871 = vpack.c.b16 %v743, %v735
    %v872 = vpack.c.b16 %v744, %v736
    %v873 = vpack.c.b16 %v745, %v737
    %1002 = vmatprep.subr.bf16.mxu0 %v747
    %1003 = vmatpush1.bf16.msra.mxu0 %v746
    %1004 = vmatprep.subr.bf16.mxu0 %v755
    %1005 = vmatpush1.bf16.msra.mxu0 %v754
    %1006 = vmatprep.subr.bf16.mxu0 %v763
    %1007 = vmatpush1.bf16.msra.mxu0 %v762
    %1008 = vmatprep.subr.bf16.mxu0 %v771
    %1009 = vmatpush1.bf16.msra.mxu0 %v770
    %1010 = vmatprep.subr.bf16.mxu0 %v779
    %1011 = vmatpush1.bf16.msra.mxu0 %v778
    %1012 = vmatprep.subr.bf16.mxu0 %v787
    %1013 = vmatpush1.bf16.msra.mxu0 %v786
    %1014 = vmatprep.subr.bf16.mxu0 %v795
    %1015 = vmatpush1.bf16.msra.mxu0 %v794
    %1016 = vmatprep.subr.bf16.mxu0 %v803
    %1017 = vmatpush1.bf16.msra.mxu0 %v802
    %1018 = vmatprep.subr.bf16.mxu0 %v811
    %1019 = vmatpush1.bf16.msra.mxu0 %v810
    %1020 = vmatprep.subr.bf16.mxu0 %v819
    %1021 = vmatpush1.bf16.msra.mxu0 %v818
    %1022 = vmatprep.subr.bf16.mxu0 %v827
    %1023 = vmatpush1.bf16.msra.mxu0 %v826
    %1024 = vmatprep.subr.bf16.mxu0 %v835
    %1025 = vmatpush1.bf16.msra.mxu0 %v834
    %1026 = vmatprep.subr.bf16.mxu0 %v843
    %1027 = vmatpush1.bf16.msra.mxu0 %v842
    %1028 = vmatprep.subr.bf16.mxu0 %v851
    %1029 = vmatpush1.bf16.msra.mxu0 %v850
    %1030 = vmatprep.subr.bf16.mxu0 %v859
    %1031 = vmatpush1.bf16.msra.mxu0 %v858
    %1032 = vmatprep.subr.bf16.mxu0 %v867
    %1033 = vmatpush1.bf16.msra.mxu0 %v866
    %1034 = vmatprep.mubr.bf16.mxu0 %v331
    %1035 = vmatmul.mubr.bf16.gmra.mrb[0].mxu0 %v330
    %v1036 = vpop.f32.mrb[0].mxu0
    %v1037 = vadd.f32 %v245, %v1036
    %v1038 = vpop.f32.mrb[0].mxu0
    %v1039 = vadd.f32 %v249, %v1038
    %v1040 = vpop.f32.mrb[0].mxu0
    %v1041 = vadd.f32 %v245, %v1040
    %v1042 = vpop.f32.mrb[0].mxu0
    %v1043 = vadd.f32 %v249, %v1042
    %1044 = vmatprep.mubr.bf16.mxu0 %v333
    %1045 = vmatmul.mubr.bf16.gmra.mrb[0].mxu0 %v332
    %v1046 = vpop.f32.mrb[0].mxu0
    %v1047 = vadd.f32 %v245, %v1046
    %v1048 = vpop.f32.mrb[0].mxu0
    %v1049 = vadd.f32 %v249, %v1048
    %v1050 = vpop.f32.mrb[0].mxu0
    %v1051 = vadd.f32 %v245, %v1050
    %v1052 = vpop.f32.mrb[0].mxu0
    %v1053 = vadd.f32 %v249, %v1052
    %1054 = vmatprep.mubr.bf16.mxu0 %v335
    %1055 = vmatmul.mubr.bf16.gmra.mrb[0].mxu0 %v334
    %v1056 = vpop.f32.mrb[0].mxu0
    %v1057 = vadd.f32 %v245, %v1056
    %v1058 = vpop.f32.mrb[0].mxu0
    %v1059 = vadd.f32 %v249, %v1058
    %v1060 = vpop.f32.mrb[0].mxu0
    %v1061 = vadd.f32 %v245, %v1060
    %v1062 = vpop.f32.mrb[0].mxu0
    %v1063 = vadd.f32 %v249, %v1062
    %1064 = vmatprep.mubr.bf16.mxu0 %v337
    %1065 = vmatmul.mubr.bf16.gmra.mrb[0].mxu0 %v336
    %v1066 = vpop.f32.mrb[0].mxu0
    %v1067 = vadd.f32 %v245, %v1066
    %v1068 = vpop.f32.mrb[0].mxu0
    %v1069 = vadd.f32 %v249, %v1068
    %v1070 = vpop.f32.mrb[0].mxu0
    %v1071 = vadd.f32 %v245, %v1070
    %v1072 = vpop.f32.mrb[0].mxu0
    %v1073 = vadd.f32 %v249, %v1072
    %1074 = vmatprep.mubr.bf16.mxu0 %v339
    %1075 = vmatmul.mubr.bf16.gmra.mrb[0].mxu0 %v338
    %v1076 = vpop.f32.mrb[0].mxu0
    %v1077 = vadd.f32 %v245, %v1076
    %v1078 = vpop.f32.mrb[0].mxu0
    %v1079 = vadd.f32 %v249, %v1078
    %v1080 = vpop.f32.mrb[0].mxu0
    %v1081 = vadd.f32 %v245, %v1080
    %v1082 = vpop.f32.mrb[0].mxu0
    %v1083 = vadd.f32 %v249, %v1082
    %1084 = vmatprep.mubr.bf16.mxu0 %v341
    %1085 = vmatmul.mubr.bf16.gmra.mrb[0].mxu0 %v340
    %v1086 = vpop.f32.mrb[0].mxu0
    %v1087 = vadd.f32 %v245, %v1086
    %v1088 = vpop.f32.mrb[0].mxu0
    %v1089 = vadd.f32 %v249, %v1088
    %v1090 = vpop.f32.mrb[0].mxu0
    %v1091 = vadd.f32 %v245, %v1090
    %v1092 = vpop.f32.mrb[0].mxu0
    %v1093 = vadd.f32 %v249, %v1092
    %1094 = vmatprep.mubr.bf16.mxu0 %v343
    %1095 = vmatmul.mubr.bf16.gmra.mrb[0].mxu0 %v342
    %v1096 = vpop.f32.mrb[0].mxu0
    %v1097 = vadd.f32 %v245, %v1096
    %v1098 = vpop.f32.mrb[0].mxu0
    %v1099 = vadd.f32 %v249, %v1098
    %v1100 = vpop.f32.mrb[0].mxu0
    %v1101 = vadd.f32 %v245, %v1100
    %v1102 = vpop.f32.mrb[0].mxu0
    %v1103 = vadd.f32 %v249, %v1102
    %1104 = vmatprep.mubr.bf16.mxu0 %v345
    %1105 = vmatmul.mubr.bf16.gmra.mrb[0].mxu0 %v344
    %v1106 = vpop.f32.mrb[0].mxu0
    %v1107 = vadd.f32 %v245, %v1106
    %v1108 = vpop.f32.mrb[0].mxu0
    %v1109 = vadd.f32 %v249, %v1108
    %v1110 = vpop.f32.mrb[0].mxu0
    %v1111 = vadd.f32 %v245, %v1110
    %v1112 = vpop.f32.mrb[0].mxu0
    %v1113 = vadd.f32 %v249, %v1112
    %1114 = vdwg.mxu0
    %1115 = vmatprep.subr.bf16.mxu0 %v749
    %1116 = vmatpush1.bf16.msra.mxu0 %v748
    %1117 = vmatprep.subr.bf16.mxu0 %v757
    %1118 = vmatpush1.bf16.msra.mxu0 %v756
    %1119 = vmatprep.subr.bf16.mxu0 %v765
    %1120 = vmatpush1.bf16.msra.mxu0 %v764
    %1121 = vmatprep.subr.bf16.mxu0 %v773
    %1122 = vmatpush1.bf16.msra.mxu0 %v772
    %1123 = vmatprep.subr.bf16.mxu0 %v781
    %1124 = vmatpush1.bf16.msra.mxu0 %v780
    %1125 = vmatprep.subr.bf16.mxu0 %v789
    %1126 = vmatpush1.bf16.msra.mxu0 %v788
    %1127 = vmatprep.subr.bf16.mxu0 %v797
    %1128 = vmatpush1.bf16.msra.mxu0 %v796
    %1129 = vmatprep.subr.bf16.mxu0 %v805
    %1130 = vmatpush1.bf16.msra.mxu0 %v804
    %1131 = vmatprep.subr.bf16.mxu0 %v813
    %1132 = vmatpush1.bf16.msra.mxu0 %v812
    %1133 = vmatprep.subr.bf16.mxu0 %v821
    %1134 = vmatpush1.bf16.msra.mxu0 %v820
    %1135 = vmatprep.subr.bf16.mxu0 %v829
    %1136 = vmatpush1.bf16.msra.mxu0 %v828
    %1137 = vmatprep.subr.bf16.mxu0 %v837
    %1138 = vmatpush1.bf16.msra.mxu0 %v836
    %1139 = vmatprep.subr.bf16.mxu0 %v845
    %1140 = vmatpush1.bf16.msra.mxu0 %v844
    %1141 = vmatprep.subr.bf16.mxu0 %v853
    %1142 = vmatpush1.bf16.msra.mxu0 %v852
    %1143 = vmatprep.subr.bf16.mxu0 %v861
    %1144 = vmatpush1.bf16.msra.mxu0 %v860
    %1145 = vmatprep.subr.bf16.mxu0 %v869
    %1146 = vmatpush1.bf16.msra.mxu0 %v868
    %1147 = vmatprep.mubr.bf16.mxu0 %v331
    %1148 = vmatmul.mubr.bf16.gmra.mrb[0].mxu0 %v330
    %v1149 = vpop.f32.mrb[0].mxu0
    %v1150 = vadd.f32 %v253, %v1149
    %v1151 = vpop.f32.mrb[0].mxu0
    %v1152 = vadd.f32 %v257, %v1151
    %v1153 = vpop.f32.mrb[0].mxu0
    %v1154 = vadd.f32 %v253, %v1153
    %v1155 = vpop.f32.mrb[0].mxu0
    %v1156 = vadd.f32 %v257, %v1155
    %1157 = vmatprep.mubr.bf16.mxu0 %v333
    %1158 = vmatmul.mubr.bf16.gmra.mrb[0].mxu0 %v332
    %v1159 = vpop.f32.mrb[0].mxu0
    %v1160 = vadd.f32 %v253, %v1159
    %v1161 = vpop.f32.mrb[0].mxu0
    %v1162 = vadd.f32 %v257, %v1161
    %v1163 = vpop.f32.mrb[0].mxu0
    %v1164 = vadd.f32 %v253, %v1163
    %v1165 = vpop.f32.mrb[0].mxu0
    %v1166 = vadd.f32 %v257, %v1165
    %1167 = vmatprep.mubr.bf16.mxu0 %v335
    %1168 = vmatmul.mubr.bf16.gmra.mrb[0].mxu0 %v334
    %v1169 = vpop.f32.mrb[0].mxu0
    %v1170 = vadd.f32 %v253, %v1169
    %v1171 = vpop.f32.mrb[0].mxu0
    %v1172 = vadd.f32 %v257, %v1171
    %v1173 = vpop.f32.mrb[0].mxu0
    %v1174 = vadd.f32 %v253, %v1173
    %v1175 = vpop.f32.mrb[0].mxu0
    %v1176 = vadd.f32 %v257, %v1175
    %1177 = vmatprep.mubr.bf16.mxu0 %v337
    %1178 = vmatmul.mubr.bf16.gmra.mrb[0].mxu0 %v336
    %v1179 = vpop.f32.mrb[0].mxu0
    %v1180 = vadd.f32 %v253, %v1179
    %v1181 = vpop.f32.mrb[0].mxu0
    %v1182 = vadd.f32 %v257, %v1181
    %v1183 = vpop.f32.mrb[0].mxu0
    %v1184 = vadd.f32 %v253, %v1183
    %v1185 = vpop.f32.mrb[0].mxu0
    %v1186 = vadd.f32 %v257, %v1185
    %1187 = vmatprep.mubr.bf16.mxu0 %v339
    %1188 = vmatmul.mubr.bf16.gmra.mrb[0].mxu0 %v338
    %v1189 = vpop.f32.mrb[0].mxu0
    %v1190 = vadd.f32 %v253, %v1189
    %v1191 = vpop.f32.mrb[0].mxu0
    %v1192 = vadd.f32 %v257, %v1191
    %v1193 = vpop.f32.mrb[0].mxu0
    %v1194 = vadd.f32 %v253, %v1193
    %v1195 = vpop.f32.mrb[0].mxu0
    %v1196 = vadd.f32 %v257, %v1195
    %1197 = vmatprep.mubr.bf16.mxu0 %v341
    %1198 = vmatmul.mubr.bf16.gmra.mrb[0].mxu0 %v340
    %v1199 = vpop.f32.mrb[0].mxu0
    %v1200 = vadd.f32 %v253, %v1199
    %v1201 = vpop.f32.mrb[0].mxu0
    %v1202 = vadd.f32 %v257, %v1201
    %v1203 = vpop.f32.mrb[0].mxu0
    %v1204 = vadd.f32 %v253, %v1203
    %v1205 = vpop.f32.mrb[0].mxu0
    %v1206 = vadd.f32 %v257, %v1205
    %1207 = vmatprep.mubr.bf16.mxu0 %v343
    %1208 = vmatmul.mubr.bf16.gmra.mrb[0].mxu0 %v342
    %v1209 = vpop.f32.mrb[0].mxu0
    %v1210 = vadd.f32 %v253, %v1209
    %v1211 = vpop.f32.mrb[0].mxu0
    %v1212 = vadd.f32 %v257, %v1211
    %v1213 = vpop.f32.mrb[0].mxu0
    %v1214 = vadd.f32 %v253, %v1213
    %v1215 = vpop.f32.mrb[0].mxu0
    %v1216 = vadd.f32 %v257, %v1215
    %1217 = vmatprep.mubr.bf16.mxu0 %v345
    %1218 = vmatmul.mubr.bf16.gmra.mrb[0].mxu0 %v344
    %v1219 = vpop.f32.mrb[0].mxu0
    %v1220 = vadd.f32 %v253, %v1219
    %v1221 = vpop.f32.mrb[0].mxu0
    %v1222 = vadd.f32 %v257, %v1221
    %v1223 = vpop.f32.mrb[0].mxu0
    %v1224 = vadd.f32 %v253, %v1223
    %v1225 = vpop.f32.mrb[0].mxu0
    %v1226 = vadd.f32 %v257, %v1225
    %1227 = vdwg.mxu0
    %1228 = vmatprep.subr.bf16.mxu0 %v751
    %1229 = vmatpush1.bf16.msra.mxu0 %v750
    %1230 = vmatprep.subr.bf16.mxu0 %v759
    %1231 = vmatpush1.bf16.msra.mxu0 %v758
    %1232 = vmatprep.subr.bf16.mxu0 %v767
    %1233 = vmatpush1.bf16.msra.mxu0 %v766
    %1234 = vmatprep.subr.bf16.mxu0 %v775
    %1235 = vmatpush1.bf16.msra.mxu0 %v774
    %1236 = vmatprep.subr.bf16.mxu0 %v783
    %1237 = vmatpush1.bf16.msra.mxu0 %v782
    %1238 = vmatprep.subr.bf16.mxu0 %v791
    %1239 = vmatpush1.bf16.msra.mxu0 %v790
    %1240 = vmatprep.subr.bf16.mxu0 %v799
    %1241 = vmatpush1.bf16.msra.mxu0 %v798
    %1242 = vmatprep.subr.bf16.mxu0 %v807
    %1243 = vmatpush1.bf16.msra.mxu0 %v806
    %1244 = vmatprep.subr.bf16.mxu0 %v815
    %1245 = vmatpush1.bf16.msra.mxu0 %v814
    %1246 = vmatprep.subr.bf16.mxu0 %v823
    %1247 = vmatpush1.bf16.msra.mxu0 %v822
    %1248 = vmatprep.subr.bf16.mxu0 %v831
    %1249 = vmatpush1.bf16.msra.mxu0 %v830
    %1250 = vmatprep.subr.bf16.mxu0 %v839
    %1251 = vmatpush1.bf16.msra.mxu0 %v838
    %1252 = vmatprep.subr.bf16.mxu0 %v847
    %1253 = vmatpush1.bf16.msra.mxu0 %v846
    %1254 = vmatprep.subr.bf16.mxu0 %v855
    %1255 = vmatpush1.bf16.msra.mxu0 %v854
    %1256 = vmatprep.subr.bf16.mxu0 %v863
    %1257 = vmatpush1.bf16.msra.mxu0 %v862
    %1258 = vmatprep.subr.bf16.mxu0 %v871
    %1259 = vmatpush1.bf16.msra.mxu0 %v870
    %1260 = vmatprep.mubr.bf16.mxu0 %v331
    %1261 = vmatmul.mubr.bf16.gmra.mrb[0].mxu0 %v330
    %v1262 = vpop.f32.mrb[0].mxu0
    %v1263 = vadd.f32 %v261, %v1262
    %v1264 = vpop.f32.mrb[0].mxu0
    %v1265 = vadd.f32 %v265, %v1264
    %v1266 = vpop.f32.mrb[0].mxu0
    %v1267 = vadd.f32 %v261, %v1266
    %v1268 = vpop.f32.mrb[0].mxu0
    %v1269 = vadd.f32 %v265, %v1268
    %1270 = vmatprep.mubr.bf16.mxu0 %v333
    %1271 = vmatmul.mubr.bf16.gmra.mrb[0].mxu0 %v332
    %v1272 = vpop.f32.mrb[0].mxu0
    %v1273 = vadd.f32 %v261, %v1272
    %v1274 = vpop.f32.mrb[0].mxu0
    %v1275 = vadd.f32 %v265, %v1274
    %v1276 = vpop.f32.mrb[0].mxu0
    %v1277 = vadd.f32 %v261, %v1276
    %v1278 = vpop.f32.mrb[0].mxu0
    %v1279 = vadd.f32 %v265, %v1278
    %1280 = vmatprep.mubr.bf16.mxu0 %v335
    %1281 = vmatmul.mubr.bf16.gmra.mrb[0].mxu0 %v334
    %v1282 = vpop.f32.mrb[0].mxu0
    %v1283 = vadd.f32 %v261, %v1282
    %v1284 = vpop.f32.mrb[0].mxu0
    %v1285 = vadd.f32 %v265, %v1284
    %v1286 = vpop.f32.mrb[0].mxu0
    %v1287 = vadd.f32 %v261, %v1286
    %v1288 = vpop.f32.mrb[0].mxu0
    %v1289 = vadd.f32 %v265, %v1288
    %1290 = vmatprep.mubr.bf16.mxu0 %v337
    %1291 = vmatmul.mubr.bf16.gmra.mrb[0].mxu0 %v336
    %v1292 = vpop.f32.mrb[0].mxu0
    %v1293 = vadd.f32 %v261, %v1292
    %v1294 = vpop.f32.mrb[0].mxu0
    %v1295 = vadd.f32 %v265, %v1294
    %v1296 = vpop.f32.mrb[0].mxu0
    %v1297 = vadd.f32 %v261, %v1296
    %v1298 = vpop.f32.mrb[0].mxu0
    %v1299 = vadd.f32 %v265, %v1298
    %1300 = vmatprep.mubr.bf16.mxu0 %v339
    %1301 = vmatmul.mubr.bf16.gmra.mrb[0].mxu0 %v338
    %v1302 = vpop.f32.mrb[0].mxu0
    %v1303 = vadd.f32 %v261, %v1302
    %v1304 = vpop.f32.mrb[0].mxu0
    %v1305 = vadd.f32 %v265, %v1304
    %v1306 = vpop.f32.mrb[0].mxu0
    %v1307 = vadd.f32 %v261, %v1306
    %v1308 = vpop.f32.mrb[0].mxu0
    %v1309 = vadd.f32 %v265, %v1308
    %1310 = vmatprep.mubr.bf16.mxu0 %v341
    %1311 = vmatmul.mubr.bf16.gmra.mrb[0].mxu0 %v340
    %v1312 = vpop.f32.mrb[0].mxu0
    %v1313 = vadd.f32 %v261, %v1312
    %v1314 = vpop.f32.mrb[0].mxu0
    %v1315 = vadd.f32 %v265, %v1314
    %v1316 = vpop.f32.mrb[0].mxu0
    %v1317 = vadd.f32 %v261, %v1316
    %v1318 = vpop.f32.mrb[0].mxu0
    %v1319 = vadd.f32 %v265, %v1318
    %1320 = vmatprep.mubr.bf16.mxu0 %v343
    %1321 = vmatmul.mubr.bf16.gmra.mrb[0].mxu0 %v342
    %v1322 = vpop.f32.mrb[0].mxu0
    %v1323 = vadd.f32 %v261, %v1322
    %v1324 = vpop.f32.mrb[0].mxu0
    %v1325 = vadd.f32 %v265, %v1324
    %v1326 = vpop.f32.mrb[0].mxu0
    %v1327 = vadd.f32 %v261, %v1326
    %v1328 = vpop.f32.mrb[0].mxu0
    %v1329 = vadd.f32 %v265, %v1328
    %1330 = vmatprep.mubr.bf16.mxu0 %v345
    %1331 = vmatmul.mubr.bf16.gmra.mrb[0].mxu0 %v344
    %v1332 = vpop.f32.mrb[0].mxu0
    %v1333 = vadd.f32 %v261, %v1332
    %v1334 = vpop.f32.mrb[0].mxu0
    %v1335 = vadd.f32 %v265, %v1334
    %v1336 = vpop.f32.mrb[0].mxu0
    %v1337 = vadd.f32 %v261, %v1336
    %v1338 = vpop.f32.mrb[0].mxu0
    %v1339 = vadd.f32 %v265, %v1338
    %1340 = vdwg.mxu0
    %1341 = vmatprep.subr.bf16.mxu0 %v753
    %1342 = vmatpush1.bf16.msra.mxu0 %v752
    %1343 = vmatprep.subr.bf16.mxu0 %v761
    %1344 = vmatpush1.bf16.msra.mxu0 %v760
    %1345 = vmatprep.subr.bf16.mxu0 %v769
    %1346 = vmatpush1.bf16.msra.mxu0 %v768
    %1347 = vmatprep.subr.bf16.mxu0 %v777
    %1348 = vmatpush1.bf16.msra.mxu0 %v776
    %1349 = vmatprep.subr.bf16.mxu0 %v785
    %1350 = vmatpush1.bf16.msra.mxu0 %v784
    %1351 = vmatprep.subr.bf16.mxu0 %v793
    %1352 = vmatpush1.bf16.msra.mxu0 %v792
    %1353 = vmatprep.subr.bf16.mxu0 %v801
    %1354 = vmatpush1.bf16.msra.mxu0 %v800
    %1355 = vmatprep.subr.bf16.mxu0 %v809
    %1356 = vmatpush1.bf16.msra.mxu0 %v808
    %1357 = vmatprep.subr.bf16.mxu0 %v817
    %1358 = vmatpush1.bf16.msra.mxu0 %v816
    %1359 = vmatprep.subr.bf16.mxu0 %v825
    %1360 = vmatpush1.bf16.msra.mxu0 %v824
    %1361 = vmatprep.subr.bf16.mxu0 %v833
    %1362 = vmatpush1.bf16.msra.mxu0 %v832
    %1363 = vmatprep.subr.bf16.mxu0 %v841
    %1364 = vmatpush1.bf16.msra.mxu0 %v840
    %1365 = vmatprep.subr.bf16.mxu0 %v849
    %1366 = vmatpush1.bf16.msra.mxu0 %v848
    %1367 = vmatprep.subr.bf16.mxu0 %v857
    %1368 = vmatpush1.bf16.msra.mxu0 %v856
    %1369 = vmatprep.subr.bf16.mxu0 %v865
    %1370 = vmatpush1.bf16.msra.mxu0 %v864
    %1371 = vmatprep.subr.bf16.mxu0 %v873
    %1372 = vmatpush1.bf16.msra.mxu0 %v872
    %1373 = vmatprep.mubr.bf16.mxu0 %v331
    %1374 = vmatmul.mubr.bf16.gmra.mrb[0].mxu0 %v330
    %v1375 = vpop.f32.mrb[0].mxu0
    %v1376 = vadd.f32 %v269, %v1375
    %v1377 = vpop.f32.mrb[0].mxu0
    %v1378 = vadd.f32 %v273, %v1377
    %v1379 = vpop.f32.mrb[0].mxu0
    %v1380 = vadd.f32 %v269, %v1379
    %v1381 = vpop.f32.mrb[0].mxu0
    %v1382 = vadd.f32 %v273, %v1381
    %1383 = vmatprep.mubr.bf16.mxu0 %v333
    %1384 = vmatmul.mubr.bf16.gmra.mrb[0].mxu0 %v332
    %v1385 = vpop.f32.mrb[0].mxu0
    %v1386 = vadd.f32 %v269, %v1385
    %v1387 = vpop.f32.mrb[0].mxu0
    %v1388 = vadd.f32 %v273, %v1387
    %v1389 = vpop.f32.mrb[0].mxu0
    %v1390 = vadd.f32 %v269, %v1389
    %v1391 = vpop.f32.mrb[0].mxu0
    %v1392 = vadd.f32 %v273, %v1391
    %1393 = vmatprep.mubr.bf16.mxu0 %v335
    %1394 = vmatmul.mubr.bf16.gmra.mrb[0].mxu0 %v334
    %v1395 = vpop.f32.mrb[0].mxu0
    %v1396 = vadd.f32 %v269, %v1395
    %v1397 = vpop.f32.mrb[0].mxu0
    %v1398 = vadd.f32 %v273, %v1397
    %v1399 = vpop.f32.mrb[0].mxu0
    %v1400 = vadd.f32 %v269, %v1399
    %v1401 = vpop.f32.mrb[0].mxu0
    %v1402 = vadd.f32 %v273, %v1401
    %1403 = vmatprep.mubr.bf16.mxu0 %v337
    %1404 = vmatmul.mubr.bf16.gmra.mrb[0].mxu0 %v336
    %v1405 = vpop.f32.mrb[0].mxu0
    %v1406 = vadd.f32 %v269, %v1405
    %v1407 = vpop.f32.mrb[0].mxu0
    %v1408 = vadd.f32 %v273, %v1407
    %v1409 = vpop.f32.mrb[0].mxu0
    %v1410 = vadd.f32 %v269, %v1409
    %v1411 = vpop.f32.mrb[0].mxu0
    %v1412 = vadd.f32 %v273, %v1411
    %1413 = vmatprep.mubr.bf16.mxu0 %v339
    %1414 = vmatmul.mubr.bf16.gmra.mrb[0].mxu0 %v338
    %v1415 = vpop.f32.mrb[0].mxu0
    %v1416 = vadd.f32 %v269, %v1415
    %v1417 = vpop.f32.mrb[0].mxu0
    %v1418 = vadd.f32 %v273, %v1417
    %v1419 = vpop.f32.mrb[0].mxu0
    %v1420 = vadd.f32 %v269, %v1419
    %v1421 = vpop.f32.mrb[0].mxu0
    %v1422 = vadd.f32 %v273, %v1421
    %1423 = vmatprep.mubr.bf16.mxu0 %v341
    %1424 = vmatmul.mubr.bf16.gmra.mrb[0].mxu0 %v340
    %v1425 = vpop.f32.mrb[0].mxu0
    %v1426 = vadd.f32 %v269, %v1425
    %v1427 = vpop.f32.mrb[0].mxu0
    %v1428 = vadd.f32 %v273, %v1427
    %v1429 = vpop.f32.mrb[0].mxu0
    %v1430 = vadd.f32 %v269, %v1429
    %v1431 = vpop.f32.mrb[0].mxu0
    %v1432 = vadd.f32 %v273, %v1431
    %1433 = vmatprep.mubr.bf16.mxu0 %v343
    %1434 = vmatmul.mubr.bf16.gmra.mrb[0].mxu0 %v342
    %v1435 = vpop.f32.mrb[0].mxu0
    %v1436 = vadd.f32 %v269, %v1435
    %v1437 = vpop.f32.mrb[0].mxu0
    %v1438 = vadd.f32 %v273, %v1437
    %v1439 = vpop.f32.mrb[0].mxu0
    %v1440 = vadd.f32 %v269, %v1439
    %v1441 = vpop.f32.mrb[0].mxu0
    %v1442 = vadd.f32 %v273, %v1441
    %1443 = vmatprep.mubr.bf16.mxu0 %v345
    %1444 = vmatmul.mubr.bf16.gmra.mrb[0].mxu0 %v344
    %v1445 = vpop.f32.mrb[0].mxu0
    %v1446 = vadd.f32 %v269, %v1445
    %v1447 = vpop.f32.mrb[0].mxu0
    %v1448 = vadd.f32 %v273, %v1447
    %v1449 = vpop.f32.mrb[0].mxu0
    %v1450 = vadd.f32 %v269, %v1449
    %v1451 = vpop.f32.mrb[0].mxu0
    %v1452 = vadd.f32 %v273, %v1451
    %1453 = vdwg.mxu0
    %1454 = vst [vmem:[#allocation2] sm:$0xff] %v1037
    %1455 = vst [vmem:[#allocation2 + $0x8] sm:$0xff] %v1039
    %1456 = vst [vmem:[#allocation2 + $0x10] sm:$0xff] %v1150
    %1457 = vst [vmem:[#allocation2 + $0x18] sm:$0xff] %v1152
    %1458 = vst [vmem:[#allocation2 + $0x20] sm:$0xff] %v1263
    %1459 = vst [vmem:[#allocation2 + $0x28] sm:$0xff] %v1265
    %1460 = vst [vmem:[#allocation2 + $0x30] sm:$0xff] %v1376
    %1461 = vst [vmem:[#allocation2 + $0x38] sm:$0xff] %v1378
    %1462 = vst [vmem:[#allocation2 + $0x40] sm:$0xff] %v1041
    %1463 = vst [vmem:[#allocation2 + $0x48] sm:$0xff] %v1043
    %1464 = vst [vmem:[#allocation2 + $0x50] sm:$0xff] %v1154
    %1465 = vst [vmem:[#allocation2 + $0x58] sm:$0xff] %v1156
    %1466 = vst [vmem:[#allocation2 + $0x60] sm:$0xff] %v1267
    %1467 = vst [vmem:[#allocation2 + $0x68] sm:$0xff] %v1269
    %1468 = vst [vmem:[#allocation2 + $0x70] sm:$0xff] %v1380
    %1469 = vst [vmem:[#allocation2 + $0x78] sm:$0xff] %v1382
    %1470 = vst [vmem:[#allocation2 + $0x80] sm:$0xff] %v1047
    %1471 = vst [vmem:[#allocation2 + $0x88] sm:$0xff] %v1049
    %1472 = vst [vmem:[#allocation2 + $0x90] sm:$0xff] %v1160
    %1473 = vst [vmem:[#allocation2 + $0x98] sm:$0xff] %v1162
    %1474 = vst [vmem:[#allocation2 + $0xa0] sm:$0xff] %v1273
    %1475 = vst [vmem:[#allocation2 + $0xa8] sm:$0xff] %v1275
    %1476 = vst [vmem:[#allocation2 + $0xb0] sm:$0xff] %v1386
    %1477 = vst [vmem:[#allocation2 + $0xb8] sm:$0xff] %v1388
    %1478 = vst [vmem:[#allocation2 + $0xc0] sm:$0xff] %v1051
    %1479 = vst [vmem:[#allocation2 + $0xc8] sm:$0xff] %v1053
    %1480 = vst [vmem:[#allocation2 + $0xd0] sm:$0xff] %v1164
    %1481 = vst [vmem:[#allocation2 + $0xd8] sm:$0xff] %v1166
    %1482 = vst [vmem:[#allocation2 + $0xe0] sm:$0xff] %v1277
    %1483 = vst [vmem:[#allocation2 + $0xe8] sm:$0xff] %v1279
    %1484 = vst [vmem:[#allocation2 + $0xf0] sm:$0xff] %v1390
    %1485 = vst [vmem:[#allocation2 + $0xf8] sm:$0xff] %v1392
    %1486 = vst [vmem:[#allocation2 + $0x100] sm:$0xff] %v1057
    %1487 = vst [vmem:[#allocation2 + $0x108] sm:$0xff] %v1059
    %1488 = vst [vmem:[#allocation2 + $0x110] sm:$0xff] %v1170
    %1489 = vst [vmem:[#allocation2 + $0x118] sm:$0xff] %v1172
    %1490 = vst [vmem:[#allocation2 + $0x120] sm:$0xff] %v1283
    %1491 = vst [vmem:[#allocation2 + $0x128] sm:$0xff] %v1285
    %1492 = vst [vmem:[#allocation2 + $0x130] sm:$0xff] %v1396
    %1493 = vst [vmem:[#allocation2 + $0x138] sm:$0xff] %v1398
    %1494 = vst [vmem:[#allocation2 + $0x140] sm:$0xff] %v1061
    %1495 = vst [vmem:[#allocation2 + $0x148] sm:$0xff] %v1063
    %1496 = vst [vmem:[#allocation2 + $0x150] sm:$0xff] %v1174
    %1497 = vst [vmem:[#allocation2 + $0x158] sm:$0xff] %v1176
    %1498 = vst [vmem:[#allocation2 + $0x160] sm:$0xff] %v1287
    %1499 = vst [vmem:[#allocation2 + $0x168] sm:$0xff] %v1289
    %1500 = vst [vmem:[#allocation2 + $0x170] sm:$0xff] %v1400
    %1501 = vst [vmem:[#allocation2 + $0x178] sm:$0xff] %v1402
    %1502 = vst [vmem:[#allocation2 + $0x180] sm:$0xff] %v1067
    %1503 = vst [vmem:[#allocation2 + $0x188] sm:$0xff] %v1069
    %1504 = vst [vmem:[#allocation2 + $0x190] sm:$0xff] %v1180
    %1505 = vst [vmem:[#allocation2 + $0x198] sm:$0xff] %v1182
    %1506 = vst [vmem:[#allocation2 + $0x1a0] sm:$0xff] %v1293
    %1507 = vst [vmem:[#allocation2 + $0x1a8] sm:$0xff] %v1295
    %1508 = vst [vmem:[#allocation2 + $0x1b0] sm:$0xff] %v1406
    %1509 = vst [vmem:[#allocation2 + $0x1b8] sm:$0xff] %v1408
    %1510 = vst [vmem:[#allocation2 + $0x1c0] sm:$0xff] %v1071
    %1511 = vst [vmem:[#allocation2 + $0x1c8] sm:$0xff] %v1073
    %1512 = vst [vmem:[#allocation2 + $0x1d0] sm:$0xff] %v1184
    %1513 = vst [vmem:[#allocation2 + $0x1d8] sm:$0xff] %v1186
    %1514 = vst [vmem:[#allocation2 + $0x1e0] sm:$0xff] %v1297
    %1515 = vst [vmem:[#allocation2 + $0x1e8] sm:$0xff] %v1299
    %1516 = vst [vmem:[#allocation2 + $0x1f0] sm:$0xff] %v1410
    %1517 = vst [vmem:[#allocation2 + $0x1f8] sm:$0xff] %v1412
    %1518 = vst [vmem:[#allocation2 + $0x200] sm:$0xff] %v1077
    %1519 = vst [vmem:[#allocation2 + $0x208] sm:$0xff] %v1079
    %1520 = vst [vmem:[#allocation2 + $0x210] sm:$0xff] %v1190
    %1521 = vst [vmem:[#allocation2 + $0x218] sm:$0xff] %v1192
    %1522 = vst [vmem:[#allocation2 + $0x220] sm:$0xff] %v1303
    %1523 = vst [vmem:[#allocation2 + $0x228] sm:$0xff] %v1305
    %1524 = vst [vmem:[#allocation2 + $0x230] sm:$0xff] %v1416
    %1525 = vst [vmem:[#allocation2 + $0x238] sm:$0xff] %v1418
    %1526 = vst [vmem:[#allocation2 + $0x240] sm:$0xff] %v1081
    %1527 = vst [vmem:[#allocation2 + $0x248] sm:$0xff] %v1083
    %1528 = vst [vmem:[#allocation2 + $0x250] sm:$0xff] %v1194
    %1529 = vst [vmem:[#allocation2 + $0x258] sm:$0xff] %v1196
    %1530 = vst [vmem:[#allocation2 + $0x260] sm:$0xff] %v1307
    %1531 = vst [vmem:[#allocation2 + $0x268] sm:$0xff] %v1309
    %1532 = vst [vmem:[#allocation2 + $0x270] sm:$0xff] %v1420
    %1533 = vst [vmem:[#allocation2 + $0x278] sm:$0xff] %v1422
    %1534 = vst [vmem:[#allocation2 + $0x280] sm:$0xff] %v1087
    %1535 = vst [vmem:[#allocation2 + $0x288] sm:$0xff] %v1089
    %1536 = vst [vmem:[#allocation2 + $0x290] sm:$0xff] %v1200
    %1537 = vst [vmem:[#allocation2 + $0x298] sm:$0xff] %v1202
    %1538 = vst [vmem:[#allocation2 + $0x2a0] sm:$0xff] %v1313
    %1539 = vst [vmem:[#allocation2 + $0x2a8] sm:$0xff] %v1315
    %1540 = vst [vmem:[#allocation2 + $0x2b0] sm:$0xff] %v1426
    %1541 = vst [vmem:[#allocation2 + $0x2b8] sm:$0xff] %v1428
    %1542 = vst [vmem:[#allocation2 + $0x2c0] sm:$0xff] %v1091
    %1543 = vst [vmem:[#allocation2 + $0x2c8] sm:$0xff] %v1093
    %1544 = vst [vmem:[#allocation2 + $0x2d0] sm:$0xff] %v1204
    %1545 = vst [vmem:[#allocation2 + $0x2d8] sm:$0xff] %v1206
    %1546 = vst [vmem:[#allocation2 + $0x2e0] sm:$0xff] %v1317
    %1547 = vst [vmem:[#allocation2 + $0x2e8] sm:$0xff] %v1319
    %1548 = vst [vmem:[#allocation2 + $0x2f0] sm:$0xff] %v1430
    %1549 = vst [vmem:[#allocation2 + $0x2f8] sm:$0xff] %v1432
    %1550 = vst [vmem:[#allocation2 + $0x300] sm:$0xff] %v1097
    %1551 = vst [vmem:[#allocation2 + $0x308] sm:$0xff] %v1099
    %1552 = vst [vmem:[#allocation2 + $0x310] sm:$0xff] %v1210
    %1553 = vst [vmem:[#allocation2 + $0x318] sm:$0xff] %v1212
    %1554 = vst [vmem:[#allocation2 + $0x320] sm:$0xff] %v1323
    %1555 = vst [vmem:[#allocation2 + $0x328] sm:$0xff] %v1325
    %1556 = vst [vmem:[#allocation2 + $0x330] sm:$0xff] %v1436
    %1557 = vst [vmem:[#allocation2 + $0x338] sm:$0xff] %v1438
    %1558 = vst [vmem:[#allocation2 + $0x340] sm:$0xff] %v1101
    %1559 = vst [vmem:[#allocation2 + $0x348] sm:$0xff] %v1103
    %1560 = vst [vmem:[#allocation2 + $0x350] sm:$0xff] %v1214
    %1561 = vst [vmem:[#allocation2 + $0x358] sm:$0xff] %v1216
    %1562 = vst [vmem:[#allocation2 + $0x360] sm:$0xff] %v1327
    %1563 = vst [vmem:[#allocation2 + $0x368] sm:$0xff] %v1329
    %1564 = vst [vmem:[#allocation2 + $0x370] sm:$0xff] %v1440
    %1565 = vst [vmem:[#allocation2 + $0x378] sm:$0xff] %v1442
    %1566 = vst [vmem:[#allocation2 + $0x380] sm:$0xff] %v1107
    %1567 = vst [vmem:[#allocation2 + $0x388] sm:$0xff] %v1109
    %1568 = vst [vmem:[#allocation2 + $0x390] sm:$0xff] %v1220
    %1569 = vst [vmem:[#allocation2 + $0x398] sm:$0xff] %v1222
    %1570 = vst [vmem:[#allocation2 + $0x3a0] sm:$0xff] %v1333
    %1571 = vst [vmem:[#allocation2 + $0x3a8] sm:$0xff] %v1335
    %1572 = vst [vmem:[#allocation2 + $0x3b0] sm:$0xff] %v1446
    %1573 = vst [vmem:[#allocation2 + $0x3b8] sm:$0xff] %v1448
    %1574 = vst [vmem:[#allocation2 + $0x3c0] sm:$0xff] %v1111
    %1575 = vst [vmem:[#allocation2 + $0x3c8] sm:$0xff] %v1113
    %1576 = vst [vmem:[#allocation2 + $0x3d0] sm:$0xff] %v1224
    %1577 = vst [vmem:[#allocation2 + $0x3d8] sm:$0xff] %v1226
    %1578 = vst [vmem:[#allocation2 + $0x3e0] sm:$0xff] %v1337
    %1579 = vst [vmem:[#allocation2 + $0x3e8] sm:$0xff] %v1339
    %1580 = vst [vmem:[#allocation2 + $0x3f0] sm:$0xff] %v1450
    %1581 = vst [vmem:[#allocation2 + $0x3f8] sm:$0xff] %v1452
    %v1582 = vld [vmem:[#allocation2] sm:$0xff]
    %v1583 = vld [vmem:[#allocation2 + $0x8] sm:$0xff]
    %v1584 = vld [vmem:[#allocation2 + $0x10] sm:$0xff]
    %v1585 = vld [vmem:[#allocation2 + $0x18] sm:$0xff]
    %v1586 = vld [vmem:[#allocation2 + $0x20] sm:$0xff]
    %v1587 = vld [vmem:[#allocation2 + $0x28] sm:$0xff]
    %v1588 = vld [vmem:[#allocation2 + $0x30] sm:$0xff]
    %v1589 = vld [vmem:[#allocation2 + $0x38] sm:$0xff]
    %v1590 = vld [vmem:[#allocation2 + $0x40] sm:$0xff]
    %v1591 = vld [vmem:[#allocation2 + $0x48] sm:$0xff]
    %v1592 = vld [vmem:[#allocation2 + $0x50] sm:$0xff]
    %v1593 = vld [vmem:[#allocation2 + $0x58] sm:$0xff]
    %v1594 = vld [vmem:[#allocation2 + $0x60] sm:$0xff]
    %v1595 = vld [vmem:[#allocation2 + $0x68] sm:$0xff]
    %v1596 = vld [vmem:[#allocation2 + $0x70] sm:$0xff]
    %v1597 = vld [vmem:[#allocation2 + $0x78] sm:$0xff]
    %v1598 = vld [vmem:[#allocation8] sm:$0xff]
    %v1599 = vld [vmem:[#allocation8 + $0x8] sm:$0xff]
    %v1600 = vld [vmem:[#allocation8 + $0x10] sm:$0xff]
    %v1601 = vld [vmem:[#allocation8 + $0x18] sm:$0xff]
    %v1602 = vld [vmem:[#allocation8 + $0x20] sm:$0xff]
    %v1603 = vld [vmem:[#allocation8 + $0x28] sm:$0xff]
    %v1604 = vld [vmem:[#allocation8 + $0x30] sm:$0xff]
    %v1605 = vld [vmem:[#allocation8 + $0x38] sm:$0xff]
    %v1606 = vld [vmem:[#allocation8 + $0x40] sm:$0xff]
    %v1607 = vld [vmem:[#allocation8 + $0x48] sm:$0xff]
    %v1608 = vld [vmem:[#allocation8 + $0x50] sm:$0xff]
    %v1609 = vld [vmem:[#allocation8 + $0x58] sm:$0xff]
    %v1610 = vld [vmem:[#allocation8 + $0x60] sm:$0xff]
    %v1611 = vld [vmem:[#allocation8 + $0x68] sm:$0xff]
    %v1612 = vld [vmem:[#allocation8 + $0x70] sm:$0xff]
    %v1613 = vld [vmem:[#allocation8 + $0x78] sm:$0xff]
    %v1614 = vld [vmem:[#allocation8 + $0x80] sm:$0xff]
    %v1615 = vld [vmem:[#allocation8 + $0x88] sm:$0xff]
    %v1616 = vld [vmem:[#allocation8 + $0x90] sm:$0xff]
    %v1617 = vld [vmem:[#allocation8 + $0x98] sm:$0xff]
    %v1618 = vld [vmem:[#allocation8 + $0xa0] sm:$0xff]
    %v1619 = vld [vmem:[#allocation8 + $0xa8] sm:$0xff]
    %v1620 = vld [vmem:[#allocation8 + $0xb0] sm:$0xff]
    %v1621 = vld [vmem:[#allocation8 + $0xb8] sm:$0xff]
    %v1622 = vld [vmem:[#allocation8 + $0xc0] sm:$0xff]
    %v1623 = vld [vmem:[#allocation8 + $0xc8] sm:$0xff]
    %v1624 = vld [vmem:[#allocation8 + $0xd0] sm:$0xff]
    %v1625 = vld [vmem:[#allocation8 + $0xd8] sm:$0xff]
    %v1626 = vld [vmem:[#allocation8 + $0xe0] sm:$0xff]
    %v1627 = vld [vmem:[#allocation8 + $0xe8] sm:$0xff]
    %v1628 = vld [vmem:[#allocation8 + $0xf0] sm:$0xff]
    %v1629 = vld [vmem:[#allocation8 + $0xf8] sm:$0xff]
    %v1630 = vld [vmem:[#allocation8 + $0x100] sm:$0xff]
    %v1631 = vld [vmem:[#allocation8 + $0x108] sm:$0xff]
    %v1632 = vld [vmem:[#allocation8 + $0x110] sm:$0xff]
    %v1633 = vld [vmem:[#allocation8 + $0x118] sm:$0xff]
    %v1634 = vld [vmem:[#allocation8 + $0x120] sm:$0xff]
    %v1635 = vld [vmem:[#allocation8 + $0x128] sm:$0xff]
    %v1636 = vld [vmem:[#allocation8 + $0x130] sm:$0xff]
    %v1637 = vld [vmem:[#allocation8 + $0x138] sm:$0xff]
    %v1638 = vld [vmem:[#allocation8 + $0x140] sm:$0xff]
    %v1639 = vld [vmem:[#allocation8 + $0x148] sm:$0xff]
    %v1640 = vld [vmem:[#allocation8 + $0x150] sm:$0xff]
    %v1641 = vld [vmem:[#allocation8 + $0x158] sm:$0xff]
    %v1642 = vld [vmem:[#allocation8 + $0x160] sm:$0xff]
    %v1643 = vld [vmem:[#allocation8 + $0x168] sm:$0xff]
    %v1644 = vld [vmem:[#allocation8 + $0x170] sm:$0xff]
    %v1645 = vld [vmem:[#allocation8 + $0x178] sm:$0xff]
    %v1646 = vld [vmem:[#allocation8 + $0x180] sm:$0xff]
    %v1647 = vld [vmem:[#allocation8 + $0x188] sm:$0xff]
    %v1648 = vld [vmem:[#allocation8 + $0x190] sm:$0xff]
    %v1649 = vld [vmem:[#allocation8 + $0x198] sm:$0xff]
    %v1650 = vld [vmem:[#allocation8 + $0x1a0] sm:$0xff]
    %v1651 = vld [vmem:[#allocation8 + $0x1a8] sm:$0xff]
    %v1652 = vld [vmem:[#allocation8 + $0x1b0] sm:$0xff]
    %v1653 = vld [vmem:[#allocation8 + $0x1b8] sm:$0xff]
    %v1654 = vld [vmem:[#allocation8 + $0x1c0] sm:$0xff]
    %v1655 = vld [vmem:[#allocation8 + $0x1c8] sm:$0xff]
    %v1656 = vld [vmem:[#allocation8 + $0x1d0] sm:$0xff]
    %v1657 = vld [vmem:[#allocation8 + $0x1d8] sm:$0xff]
    %v1658 = vld [vmem:[#allocation8 + $0x1e0] sm:$0xff]
    %v1659 = vld [vmem:[#allocation8 + $0x1e8] sm:$0xff]
    %v1660 = vld [vmem:[#allocation8 + $0x1f0] sm:$0xff]
    %v1661 = vld [vmem:[#allocation8 + $0x1f8] sm:$0xff]
    %v1662 = vld [vmem:[#allocation8 + $0x200] sm:$0xff]
    %v1663 = vld [vmem:[#allocation8 + $0x208] sm:$0xff]
    %v1664 = vld [vmem:[#allocation8 + $0x210] sm:$0xff]
    %v1665 = vld [vmem:[#allocation8 + $0x218] sm:$0xff]
    %v1666 = vld [vmem:[#allocation8 + $0x220] sm:$0xff]
    %v1667 = vld [vmem:[#allocation8 + $0x228] sm:$0xff]
    %v1668 = vld [vmem:[#allocation8 + $0x230] sm:$0xff]
    %v1669 = vld [vmem:[#allocation8 + $0x238] sm:$0xff]
    %v1670 = vld [vmem:[#allocation8 + $0x240] sm:$0xff]
    %v1671 = vld [vmem:[#allocation8 + $0x248] sm:$0xff]
    %v1672 = vld [vmem:[#allocation8 + $0x250] sm:$0xff]
    %v1673 = vld [vmem:[#allocation8 + $0x258] sm:$0xff]
    %v1674 = vld [vmem:[#allocation8 + $0x260] sm:$0xff]
    %v1675 = vld [vmem:[#allocation8 + $0x268] sm:$0xff]
    %v1676 = vld [vmem:[#allocation8 + $0x270] sm:$0xff]
    %v1677 = vld [vmem:[#allocation8 + $0x278] sm:$0xff]
    %v1678 = vld [vmem:[#allocation8 + $0x280] sm:$0xff]
    %v1679 = vld [vmem:[#allocation8 + $0x288] sm:$0xff]
    %v1680 = vld [vmem:[#allocation8 + $0x290] sm:$0xff]
    %v1681 = vld [vmem:[#allocation8 + $0x298] sm:$0xff]
    %v1682 = vld [vmem:[#allocation8 + $0x2a0] sm:$0xff]
    %v1683 = vld [vmem:[#allocation8 + $0x2a8] sm:$0xff]
    %v1684 = vld [vmem:[#allocation8 + $0x2b0] sm:$0xff]
    %v1685 = vld [vmem:[#allocation8 + $0x2b8] sm:$0xff]
    %v1686 = vld [vmem:[#allocation8 + $0x2c0] sm:$0xff]
    %v1687 = vld [vmem:[#allocation8 + $0x2c8] sm:$0xff]
    %v1688 = vld [vmem:[#allocation8 + $0x2d0] sm:$0xff]
    %v1689 = vld [vmem:[#allocation8 + $0x2d8] sm:$0xff]
    %v1690 = vld [vmem:[#allocation8 + $0x2e0] sm:$0xff]
    %v1691 = vld [vmem:[#allocation8 + $0x2e8] sm:$0xff]
    %v1692 = vld [vmem:[#allocation8 + $0x2f0] sm:$0xff]
    %v1693 = vld [vmem:[#allocation8 + $0x2f8] sm:$0xff]
    %v1694 = vld [vmem:[#allocation8 + $0x300] sm:$0xff]
    %v1695 = vld [vmem:[#allocation8 + $0x308] sm:$0xff]
    %v1696 = vld [vmem:[#allocation8 + $0x310] sm:$0xff]
    %v1697 = vld [vmem:[#allocation8 + $0x318] sm:$0xff]
    %v1698 = vld [vmem:[#allocation8 + $0x320] sm:$0xff]
    %v1699 = vld [vmem:[#allocation8 + $0x328] sm:$0xff]
    %v1700 = vld [vmem:[#allocation8 + $0x330] sm:$0xff]
    %v1701 = vld [vmem:[#allocation8 + $0x338] sm:$0xff]
    %v1702 = vld [vmem:[#allocation8 + $0x340] sm:$0xff]
    %v1703 = vld [vmem:[#allocation8 + $0x348] sm:$0xff]
    %v1704 = vld [vmem:[#allocation8 + $0x350] sm:$0xff]
    %v1705 = vld [vmem:[#allocation8 + $0x358] sm:$0xff]
    %v1706 = vld [vmem:[#allocation8 + $0x360] sm:$0xff]
    %v1707 = vld [vmem:[#allocation8 + $0x368] sm:$0xff]
    %v1708 = vld [vmem:[#allocation8 + $0x370] sm:$0xff]
    %v1709 = vld [vmem:[#allocation8 + $0x378] sm:$0xff]
    %v1710 = vld [vmem:[#allocation8 + $0x380] sm:$0xff]
    %v1711 = vld [vmem:[#allocation8 + $0x388] sm:$0xff]
    %v1712 = vld [vmem:[#allocation8 + $0x390] sm:$0xff]
    %v1713 = vld [vmem:[#allocation8 + $0x398] sm:$0xff]
    %v1714 = vld [vmem:[#allocation8 + $0x3a0] sm:$0xff]
    %v1715 = vld [vmem:[#allocation8 + $0x3a8] sm:$0xff]
    %v1716 = vld [vmem:[#allocation8 + $0x3b0] sm:$0xff]
    %v1717 = vld [vmem:[#allocation8 + $0x3b8] sm:$0xff]
    %v1718 = vld [vmem:[#allocation8 + $0x3c0] sm:$0xff]
    %v1719 = vld [vmem:[#allocation8 + $0x3c8] sm:$0xff]
    %v1720 = vld [vmem:[#allocation8 + $0x3d0] sm:$0xff]
    %v1721 = vld [vmem:[#allocation8 + $0x3d8] sm:$0xff]
    %v1722 = vld [vmem:[#allocation8 + $0x3e0] sm:$0xff]
    %v1723 = vld [vmem:[#allocation8 + $0x3e8] sm:$0xff]
    %v1724 = vld [vmem:[#allocation8 + $0x3f0] sm:$0xff]
    %v1725 = vld [vmem:[#allocation8 + $0x3f8] sm:$0xff]
    %v1854 = vunpack.c.l.b16 %v1598
    %v1855 = vunpack.c.h.b16 %v1598
    %v1856 = vunpack.c.l.b16 %v1599
    %v1857 = vunpack.c.h.b16 %v1599
    %v1858 = vunpack.c.l.b16 %v1600
    %v1859 = vunpack.c.h.b16 %v1600
    %v1860 = vunpack.c.l.b16 %v1601
    %v1861 = vunpack.c.h.b16 %v1601
    %v1862 = vunpack.c.l.b16 %v1602
    %v1863 = vunpack.c.h.b16 %v1602
    %v1864 = vunpack.c.l.b16 %v1603
    %v1865 = vunpack.c.h.b16 %v1603
    %v1866 = vunpack.c.l.b16 %v1604
    %v1867 = vunpack.c.h.b16 %v1604
    %v1868 = vunpack.c.l.b16 %v1605
    %v1869 = vunpack.c.h.b16 %v1605
    %v1870 = vunpack.c.l.b16 %v1606
    %v1871 = vunpack.c.h.b16 %v1606
    %v1872 = vunpack.c.l.b16 %v1607
    %v1873 = vunpack.c.h.b16 %v1607
    %v1874 = vunpack.c.l.b16 %v1608
    %v1875 = vunpack.c.h.b16 %v1608
    %v1876 = vunpack.c.l.b16 %v1609
    %v1877 = vunpack.c.h.b16 %v1609
    %v1878 = vunpack.c.l.b16 %v1610
    %v1879 = vunpack.c.h.b16 %v1610
    %v1880 = vunpack.c.l.b16 %v1611
    %v1881 = vunpack.c.h.b16 %v1611
    %v1882 = vunpack.c.l.b16 %v1612
    %v1883 = vunpack.c.h.b16 %v1612
    %v1884 = vunpack.c.l.b16 %v1613
    %v1885 = vunpack.c.h.b16 %v1613
    %v1886 = vunpack.c.l.b16 %v1614
    %v1887 = vunpack.c.h.b16 %v1614
    %v1888 = vunpack.c.l.b16 %v1615
    %v1889 = vunpack.c.h.b16 %v1615
    %v1890 = vunpack.c.l.b16 %v1616
    %v1891 = vunpack.c.h.b16 %v1616
    %v1892 = vunpack.c.l.b16 %v1617
    %v1893 = vunpack.c.h.b16 %v1617
    %v1894 = vunpack.c.l.b16 %v1618
    %v1895 = vunpack.c.h.b16 %v1618
    %v1896 = vunpack.c.l.b16 %v1619
    %v1897 = vunpack.c.h.b16 %v1619
    %v1898 = vunpack.c.l.b16 %v1620
    %v1899 = vunpack.c.h.b16 %v1620
    %v1900 = vunpack.c.l.b16 %v1621
    %v1901 = vunpack.c.h.b16 %v1621
    %v1902 = vunpack.c.l.b16 %v1622
    %v1903 = vunpack.c.h.b16 %v1622
    %v1904 = vunpack.c.l.b16 %v1623
    %v1905 = vunpack.c.h.b16 %v1623
    %v1906 = vunpack.c.l.b16 %v1624
    %v1907 = vunpack.c.h.b16 %v1624
    %v1908 = vunpack.c.l.b16 %v1625
    %v1909 = vunpack.c.h.b16 %v1625
    %v1910 = vunpack.c.l.b16 %v1626
    %v1911 = vunpack.c.h.b16 %v1626
    %v1912 = vunpack.c.l.b16 %v1627
    %v1913 = vunpack.c.h.b16 %v1627
    %v1914 = vunpack.c.l.b16 %v1628
    %v1915 = vunpack.c.h.b16 %v1628
    %v1916 = vunpack.c.l.b16 %v1629
    %v1917 = vunpack.c.h.b16 %v1629
    %v1918 = vunpack.c.l.b16 %v1630
    %v1919 = vunpack.c.h.b16 %v1630
    %v1920 = vunpack.c.l.b16 %v1631
    %v1921 = vunpack.c.h.b16 %v1631
    %v1922 = vunpack.c.l.b16 %v1632
    %v1923 = vunpack.c.h.b16 %v1632
    %v1924 = vunpack.c.l.b16 %v1633
    %v1925 = vunpack.c.h.b16 %v1633
    %v1926 = vunpack.c.l.b16 %v1634
    %v1927 = vunpack.c.h.b16 %v1634
    %v1928 = vunpack.c.l.b16 %v1635
    %v1929 = vunpack.c.h.b16 %v1635
    %v1930 = vunpack.c.l.b16 %v1636
    %v1931 = vunpack.c.h.b16 %v1636
    %v1932 = vunpack.c.l.b16 %v1637
    %v1933 = vunpack.c.h.b16 %v1637
    %v1934 = vunpack.c.l.b16 %v1638
    %v1935 = vunpack.c.h.b16 %v1638
    %v1936 = vunpack.c.l.b16 %v1639
    %v1937 = vunpack.c.h.b16 %v1639
    %v1938 = vunpack.c.l.b16 %v1640
    %v1939 = vunpack.c.h.b16 %v1640
    %v1940 = vunpack.c.l.b16 %v1641
    %v1941 = vunpack.c.h.b16 %v1641
    %v1942 = vunpack.c.l.b16 %v1642
    %v1943 = vunpack.c.h.b16 %v1642
    %v1944 = vunpack.c.l.b16 %v1643
    %v1945 = vunpack.c.h.b16 %v1643
    %v1946 = vunpack.c.l.b16 %v1644
    %v1947 = vunpack.c.h.b16 %v1644
    %v1948 = vunpack.c.l.b16 %v1645
    %v1949 = vunpack.c.h.b16 %v1645
    %v1950 = vunpack.c.l.b16 %v1646
    %v1951 = vunpack.c.h.b16 %v1646
    %v1952 = vunpack.c.l.b16 %v1647
    %v1953 = vunpack.c.h.b16 %v1647
    %v1954 = vunpack.c.l.b16 %v1648
    %v1955 = vunpack.c.h.b16 %v1648
    %v1956 = vunpack.c.l.b16 %v1649
    %v1957 = vunpack.c.h.b16 %v1649
    %v1958 = vunpack.c.l.b16 %v1650
    %v1959 = vunpack.c.h.b16 %v1650
    %v1960 = vunpack.c.l.b16 %v1651
    %v1961 = vunpack.c.h.b16 %v1651
    %v1962 = vunpack.c.l.b16 %v1652
    %v1963 = vunpack.c.h.b16 %v1652
    %v1964 = vunpack.c.l.b16 %v1653
    %v1965 = vunpack.c.h.b16 %v1653
    %v1966 = vunpack.c.l.b16 %v1654
    %v1967 = vunpack.c.h.b16 %v1654
    %v1968 = vunpack.c.l.b16 %v1655
    %v1969 = vunpack.c.h.b16 %v1655
    %v1970 = vunpack.c.l.b16 %v1656
    %v1971 = vunpack.c.h.b16 %v1656
    %v1972 = vunpack.c.l.b16 %v1657
    %v1973 = vunpack.c.h.b16 %v1657
    %v1974 = vunpack.c.l.b16 %v1658
    %v1975 = vunpack.c.h.b16 %v1658
    %v1976 = vunpack.c.l.b16 %v1659
    %v1977 = vunpack.c.h.b16 %v1659
    %v1978 = vunpack.c.l.b16 %v1660
    %v1979 = vunpack.c.h.b16 %v1660
    %v1980 = vunpack.c.l.b16 %v1661
    %v1981 = vunpack.c.h.b16 %v1661
    %v1982 = vunpack.c.l.b16 %v1662
    %v1983 = vunpack.c.h.b16 %v1662
    %v1984 = vunpack.c.l.b16 %v1663
    %v1985 = vunpack.c.h.b16 %v1663
    %v1986 = vunpack.c.l.b16 %v1664
    %v1987 = vunpack.c.h.b16 %v1664
    %v1988 = vunpack.c.l.b16 %v1665
    %v1989 = vunpack.c.h.b16 %v1665
    %v1990 = vunpack.c.l.b16 %v1666
    %v1991 = vunpack.c.h.b16 %v1666
    %v1992 = vunpack.c.l.b16 %v1667
    %v1993 = vunpack.c.h.b16 %v1667
    %v1994 = vunpack.c.l.b16 %v1668
    %v1995 = vunpack.c.h.b16 %v1668
    %v1996 = vunpack.c.l.b16 %v1669
    %v1997 = vunpack.c.h.b16 %v1669
    %v1998 = vunpack.c.l.b16 %v1670
    %v1999 = vunpack.c.h.b16 %v1670
    %v2000 = vunpack.c.l.b16 %v1671
    %v2001 = vunpack.c.h.b16 %v1671
    %v2002 = vunpack.c.l.b16 %v1672
    %v2003 = vunpack.c.h.b16 %v1672
    %v2004 = vunpack.c.l.b16 %v1673
    %v2005 = vunpack.c.h.b16 %v1673
    %v2006 = vunpack.c.l.b16 %v1674
    %v2007 = vunpack.c.h.b16 %v1674
    %v2008 = vunpack.c.l.b16 %v1675
    %v2009 = vunpack.c.h.b16 %v1675
    %v2010 = vunpack.c.l.b16 %v1676
    %v2011 = vunpack.c.h.b16 %v1676
    %v2012 = vunpack.c.l.b16 %v1677
    %v2013 = vunpack.c.h.b16 %v1677
    %v2014 = vunpack.c.l.b16 %v1678
    %v2015 = vunpack.c.h.b16 %v1678
    %v2016 = vunpack.c.l.b16 %v1679
    %v2017 = vunpack.c.h.b16 %v1679
    %v2018 = vunpack.c.l.b16 %v1680
    %v2019 = vunpack.c.h.b16 %v1680
    %v2020 = vunpack.c.l.b16 %v1681
    %v2021 = vunpack.c.h.b16 %v1681
    %v2022 = vunpack.c.l.b16 %v1682
    %v2023 = vunpack.c.h.b16 %v1682
    %v2024 = vunpack.c.l.b16 %v1683
    %v2025 = vunpack.c.h.b16 %v1683
    %v2026 = vunpack.c.l.b16 %v1684
    %v2027 = vunpack.c.h.b16 %v1684
    %v2028 = vunpack.c.l.b16 %v1685
    %v2029 = vunpack.c.h.b16 %v1685
    %v2030 = vunpack.c.l.b16 %v1686
    %v2031 = vunpack.c.h.b16 %v1686
    %v2032 = vunpack.c.l.b16 %v1687
    %v2033 = vunpack.c.h.b16 %v1687
    %v2034 = vunpack.c.l.b16 %v1688
    %v2035 = vunpack.c.h.b16 %v1688
    %v2036 = vunpack.c.l.b16 %v1689
    %v2037 = vunpack.c.h.b16 %v1689
    %v2038 = vunpack.c.l.b16 %v1690
    %v2039 = vunpack.c.h.b16 %v1690
    %v2040 = vunpack.c.l.b16 %v1691
    %v2041 = vunpack.c.h.b16 %v1691
    %v2042 = vunpack.c.l.b16 %v1692
    %v2043 = vunpack.c.h.b16 %v1692
    %v2044 = vunpack.c.l.b16 %v1693
    %v2045 = vunpack.c.h.b16 %v1693
    %v2046 = vunpack.c.l.b16 %v1694
    %v2047 = vunpack.c.h.b16 %v1694
    %v2048 = vunpack.c.l.b16 %v1695
    %v2049 = vunpack.c.h.b16 %v1695
    %v2050 = vunpack.c.l.b16 %v1696
    %v2051 = vunpack.c.h.b16 %v1696
    %v2052 = vunpack.c.l.b16 %v1697
    %v2053 = vunpack.c.h.b16 %v1697
    %v2054 = vunpack.c.l.b16 %v1698
    %v2055 = vunpack.c.h.b16 %v1698
    %v2056 = vunpack.c.l.b16 %v1699
    %v2057 = vunpack.c.h.b16 %v1699
    %v2058 = vunpack.c.l.b16 %v1700
    %v2059 = vunpack.c.h.b16 %v1700
    %v2060 = vunpack.c.l.b16 %v1701
    %v2061 = vunpack.c.h.b16 %v1701
    %v2062 = vunpack.c.l.b16 %v1702
    %v2063 = vunpack.c.h.b16 %v1702
    %v2064 = vunpack.c.l.b16 %v1703
    %v2065 = vunpack.c.h.b16 %v1703
    %v2066 = vunpack.c.l.b16 %v1704
    %v2067 = vunpack.c.h.b16 %v1704
    %v2068 = vunpack.c.l.b16 %v1705
    %v2069 = vunpack.c.h.b16 %v1705
    %v2070 = vunpack.c.l.b16 %v1706
    %v2071 = vunpack.c.h.b16 %v1706
    %v2072 = vunpack.c.l.b16 %v1707
    %v2073 = vunpack.c.h.b16 %v1707
    %v2074 = vunpack.c.l.b16 %v1708
    %v2075 = vunpack.c.h.b16 %v1708
    %v2076 = vunpack.c.l.b16 %v1709
    %v2077 = vunpack.c.h.b16 %v1709
    %v2078 = vunpack.c.l.b16 %v1710
    %v2079 = vunpack.c.h.b16 %v1710
    %v2080 = vunpack.c.l.b16 %v1711
    %v2081 = vunpack.c.h.b16 %v1711
    %v2082 = vunpack.c.l.b16 %v1712
    %v2083 = vunpack.c.h.b16 %v1712
    %v2084 = vunpack.c.l.b16 %v1713
    %v2085 = vunpack.c.h.b16 %v1713
    %v2086 = vunpack.c.l.b16 %v1714
    %v2087 = vunpack.c.h.b16 %v1714
    %v2088 = vunpack.c.l.b16 %v1715
    %v2089 = vunpack.c.h.b16 %v1715
    %v2090 = vunpack.c.l.b16 %v1716
    %v2091 = vunpack.c.h.b16 %v1716
    %v2092 = vunpack.c.l.b16 %v1717
    %v2093 = vunpack.c.h.b16 %v1717
    %v2094 = vunpack.c.l.b16 %v1718
    %v2095 = vunpack.c.h.b16 %v1718
    %v2096 = vunpack.c.l.b16 %v1719
    %v2097 = vunpack.c.h.b16 %v1719
    %v2098 = vunpack.c.l.b16 %v1720
    %v2099 = vunpack.c.h.b16 %v1720
    %v2100 = vunpack.c.l.b16 %v1721
    %v2101 = vunpack.c.h.b16 %v1721
    %v2102 = vunpack.c.l.b16 %v1722
    %v2103 = vunpack.c.h.b16 %v1722
    %v2104 = vunpack.c.l.b16 %v1723
    %v2105 = vunpack.c.h.b16 %v1723
    %v2106 = vunpack.c.l.b16 %v1724
    %v2107 = vunpack.c.h.b16 %v1724
    %v2108 = vunpack.c.l.b16 %v1725
    %v2109 = vunpack.c.h.b16 %v1725
    %v2110 = vpack.c.b16 %v1862, %v1854
    %v2111 = vpack.c.b16 %v1863, %v1855
    %v2112 = vpack.c.b16 %v1864, %v1856
    %v2113 = vpack.c.b16 %v1865, %v1857
    %v2114 = vpack.c.b16 %v1866, %v1858
    %v2115 = vpack.c.b16 %v1867, %v1859
    %v2116 = vpack.c.b16 %v1868, %v1860
    %v2117 = vpack.c.b16 %v1869, %v1861
    %v2118 = vpack.c.b16 %v1878, %v1870
    %v2119 = vpack.c.b16 %v1879, %v1871
    %v2120 = vpack.c.b16 %v1880, %v1872
    %v2121 = vpack.c.b16 %v1881, %v1873
    %v2122 = vpack.c.b16 %v1882, %v1874
    %v2123 = vpack.c.b16 %v1883, %v1875
    %v2124 = vpack.c.b16 %v1884, %v1876
    %v2125 = vpack.c.b16 %v1885, %v1877
    %v2126 = vpack.c.b16 %v1894, %v1886
    %v2127 = vpack.c.b16 %v1895, %v1887
    %v2128 = vpack.c.b16 %v1896, %v1888
    %v2129 = vpack.c.b16 %v1897, %v1889
    %v2130 = vpack.c.b16 %v1898, %v1890
    %v2131 = vpack.c.b16 %v1899, %v1891
    %v2132 = vpack.c.b16 %v1900, %v1892
    %v2133 = vpack.c.b16 %v1901, %v1893
    %v2134 = vpack.c.b16 %v1910, %v1902
    %v2135 = vpack.c.b16 %v1911, %v1903
    %v2136 = vpack.c.b16 %v1912, %v1904
    %v2137 = vpack.c.b16 %v1913, %v1905
    %v2138 = vpack.c.b16 %v1914, %v1906
    %v2139 = vpack.c.b16 %v1915, %v1907
    %v2140 = vpack.c.b16 %v1916, %v1908
    %v2141 = vpack.c.b16 %v1917, %v1909
    %v2142 = vpack.c.b16 %v1926, %v1918
    %v2143 = vpack.c.b16 %v1927, %v1919
    %v2144 = vpack.c.b16 %v1928, %v1920
    %v2145 = vpack.c.b16 %v1929, %v1921
    %v2146 = vpack.c.b16 %v1930, %v1922
    %v2147 = vpack.c.b16 %v1931, %v1923
    %v2148 = vpack.c.b16 %v1932, %v1924
    %v2149 = vpack.c.b16 %v1933, %v1925
    %v2150 = vpack.c.b16 %v1942, %v1934
    %v2151 = vpack.c.b16 %v1943, %v1935
    %v2152 = vpack.c.b16 %v1944, %v1936
    %v2153 = vpack.c.b16 %v1945, %v1937
    %v2154 = vpack.c.b16 %v1946, %v1938
    %v2155 = vpack.c.b16 %v1947, %v1939
    %v2156 = vpack.c.b16 %v1948, %v1940
    %v2157 = vpack.c.b16 %v1949, %v1941
    %v2158 = vpack.c.b16 %v1958, %v1950
    %v2159 = vpack.c.b16 %v1959, %v1951
    %v2160 = vpack.c.b16 %v1960, %v1952
    %v2161 = vpack.c.b16 %v1961, %v1953
    %v2162 = vpack.c.b16 %v1962, %v1954
    %v2163 = vpack.c.b16 %v1963, %v1955
    %v2164 = vpack.c.b16 %v1964, %v1956
    %v2165 = vpack.c.b16 %v1965, %v1957
    %v2166 = vpack.c.b16 %v1974, %v1966
    %v2167 = vpack.c.b16 %v1975, %v1967
    %v2168 = vpack.c.b16 %v1976, %v1968
    %v2169 = vpack.c.b16 %v1977, %v1969
    %v2170 = vpack.c.b16 %v1978, %v1970
    %v2171 = vpack.c.b16 %v1979, %v1971
    %v2172 = vpack.c.b16 %v1980, %v1972
    %v2173 = vpack.c.b16 %v1981, %v1973
    %v2174 = vpack.c.b16 %v1990, %v1982
    %v2175 = vpack.c.b16 %v1991, %v1983
    %v2176 = vpack.c.b16 %v1992, %v1984
    %v2177 = vpack.c.b16 %v1993, %v1985
    %v2178 = vpack.c.b16 %v1994, %v1986
    %v2179 = vpack.c.b16 %v1995, %v1987
    %v2180 = vpack.c.b16 %v1996, %v1988
    %v2181 = vpack.c.b16 %v1997, %v1989
    %v2182 = vpack.c.b16 %v2006, %v1998
    %v2183 = vpack.c.b16 %v2007, %v1999
    %v2184 = vpack.c.b16 %v2008, %v2000
    %v2185 = vpack.c.b16 %v2009, %v2001
    %v2186 = vpack.c.b16 %v2010, %v2002
    %v2187 = vpack.c.b16 %v2011, %v2003
    %v2188 = vpack.c.b16 %v2012, %v2004
    %v2189 = vpack.c.b16 %v2013, %v2005
    %v2190 = vpack.c.b16 %v2022, %v2014
    %v2191 = vpack.c.b16 %v2023, %v2015
    %v2192 = vpack.c.b16 %v2024, %v2016
    %v2193 = vpack.c.b16 %v2025, %v2017
    %v2194 = vpack.c.b16 %v2026, %v2018
    %v2195 = vpack.c.b16 %v2027, %v2019
    %v2196 = vpack.c.b16 %v2028, %v2020
    %v2197 = vpack.c.b16 %v2029, %v2021
    %v2198 = vpack.c.b16 %v2038, %v2030
    %v2199 = vpack.c.b16 %v2039, %v2031
    %v2200 = vpack.c.b16 %v2040, %v2032
    %v2201 = vpack.c.b16 %v2041, %v2033
    %v2202 = vpack.c.b16 %v2042, %v2034
    %v2203 = vpack.c.b16 %v2043, %v2035
    %v2204 = vpack.c.b16 %v2044, %v2036
    %v2205 = vpack.c.b16 %v2045, %v2037
    %v2206 = vpack.c.b16 %v2054, %v2046
    %v2207 = vpack.c.b16 %v2055, %v2047
    %v2208 = vpack.c.b16 %v2056, %v2048
    %v2209 = vpack.c.b16 %v2057, %v2049
    %v2210 = vpack.c.b16 %v2058, %v2050
    %v2211 = vpack.c.b16 %v2059, %v2051
    %v2212 = vpack.c.b16 %v2060, %v2052
    %v2213 = vpack.c.b16 %v2061, %v2053
    %v2214 = vpack.c.b16 %v2070, %v2062
    %v2215 = vpack.c.b16 %v2071, %v2063
    %v2216 = vpack.c.b16 %v2072, %v2064
    %v2217 = vpack.c.b16 %v2073, %v2065
    %v2218 = vpack.c.b16 %v2074, %v2066
    %v2219 = vpack.c.b16 %v2075, %v2067
    %v2220 = vpack.c.b16 %v2076, %v2068
    %v2221 = vpack.c.b16 %v2077, %v2069
    %v2222 = vpack.c.b16 %v2086, %v2078
    %v2223 = vpack.c.b16 %v2087, %v2079
    %v2224 = vpack.c.b16 %v2088, %v2080
    %v2225 = vpack.c.b16 %v2089, %v2081
    %v2226 = vpack.c.b16 %v2090, %v2082
    %v2227 = vpack.c.b16 %v2091, %v2083
    %v2228 = vpack.c.b16 %v2092, %v2084
    %v2229 = vpack.c.b16 %v2093, %v2085
    %v2230 = vpack.c.b16 %v2102, %v2094
    %v2231 = vpack.c.b16 %v2103, %v2095
    %v2232 = vpack.c.b16 %v2104, %v2096
    %v2233 = vpack.c.b16 %v2105, %v2097
    %v2234 = vpack.c.b16 %v2106, %v2098
    %v2235 = vpack.c.b16 %v2107, %v2099
    %v2236 = vpack.c.b16 %v2108, %v2100
    %v2237 = vpack.c.b16 %v2109, %v2101
    %2366 = vmatprep.subr.bf16.mxu0 %v2111
    %2367 = vmatpush1.bf16.msra.mxu0 %v2110
    %2368 = vmatprep.subr.bf16.mxu0 %v2119
    %2369 = vmatpush1.bf16.msra.mxu0 %v2118
    %2370 = vmatprep.subr.bf16.mxu0 %v2127
    %2371 = vmatpush1.bf16.msra.mxu0 %v2126
    %2372 = vmatprep.subr.bf16.mxu0 %v2135
    %2373 = vmatpush1.bf16.msra.mxu0 %v2134
    %2374 = vmatprep.subr.bf16.mxu0 %v2143
    %2375 = vmatpush1.bf16.msra.mxu0 %v2142
    %2376 = vmatprep.subr.bf16.mxu0 %v2151
    %2377 = vmatpush1.bf16.msra.mxu0 %v2150
    %2378 = vmatprep.subr.bf16.mxu0 %v2159
    %2379 = vmatpush1.bf16.msra.mxu0 %v2158
    %2380 = vmatprep.subr.bf16.mxu0 %v2167
    %2381 = vmatpush1.bf16.msra.mxu0 %v2166
    %2382 = vmatprep.subr.bf16.mxu0 %v2175
    %2383 = vmatpush1.bf16.msra.mxu0 %v2174
    %2384 = vmatprep.subr.bf16.mxu0 %v2183
    %2385 = vmatpush1.bf16.msra.mxu0 %v2182
    %2386 = vmatprep.subr.bf16.mxu0 %v2191
    %2387 = vmatpush1.bf16.msra.mxu0 %v2190
    %2388 = vmatprep.subr.bf16.mxu0 %v2199
    %2389 = vmatpush1.bf16.msra.mxu0 %v2198
    %2390 = vmatprep.subr.bf16.mxu0 %v2207
    %2391 = vmatpush1.bf16.msra.mxu0 %v2206
    %2392 = vmatprep.subr.bf16.mxu0 %v2215
    %2393 = vmatpush1.bf16.msra.mxu0 %v2214
    %2394 = vmatprep.subr.bf16.mxu0 %v2223
    %2395 = vmatpush1.bf16.msra.mxu0 %v2222
    %2396 = vmatprep.subr.bf16.mxu0 %v2231
    %2397 = vmatpush1.bf16.msra.mxu0 %v2230
    %2398 = vmatprep.mubr.bf16.mxu0 0
    %2399 = vmatmul.mubr.bf16.gmra.mrb[0].mxu0 0
    %v2400 = vpop.f32.mrb[0].mxu0
    %v2401 = vadd.f32 0.0, %v2400
    %v2402 = vpop.f32.mrb[0].mxu0
    %v2403 = vadd.f32 0.0, %v2402
    %v2404 = vpop.f32.mrb[0].mxu0
    %v2405 = vadd.f32 0.0, %v2404
    %v2406 = vpop.f32.mrb[0].mxu0
    %v2407 = vadd.f32 0.0, %v2406
    %2408 = vdwg.mxu0
    %2409 = vmatprep.subr.bf16.mxu0 %v2113
    %2410 = vmatpush1.bf16.msra.mxu0 %v2112
    %2411 = vmatprep.subr.bf16.mxu0 %v2121
    %2412 = vmatpush1.bf16.msra.mxu0 %v2120
    %2413 = vmatprep.subr.bf16.mxu0 %v2129
    %2414 = vmatpush1.bf16.msra.mxu0 %v2128
    %2415 = vmatprep.subr.bf16.mxu0 %v2137
    %2416 = vmatpush1.bf16.msra.mxu0 %v2136
    %2417 = vmatprep.subr.bf16.mxu0 %v2145
    %2418 = vmatpush1.bf16.msra.mxu0 %v2144
    %2419 = vmatprep.subr.bf16.mxu0 %v2153
    %2420 = vmatpush1.bf16.msra.mxu0 %v2152
    %2421 = vmatprep.subr.bf16.mxu0 %v2161
    %2422 = vmatpush1.bf16.msra.mxu0 %v2160
    %2423 = vmatprep.subr.bf16.mxu0 %v2169
    %2424 = vmatpush1.bf16.msra.mxu0 %v2168
    %2425 = vmatprep.subr.bf16.mxu0 %v2177
    %2426 = vmatpush1.bf16.msra.mxu0 %v2176
    %2427 = vmatprep.subr.bf16.mxu0 %v2185
    %2428 = vmatpush1.bf16.msra.mxu0 %v2184
    %2429 = vmatprep.subr.bf16.mxu0 %v2193
    %2430 = vmatpush1.bf16.msra.mxu0 %v2192
    %2431 = vmatprep.subr.bf16.mxu0 %v2201
    %2432 = vmatpush1.bf16.msra.mxu0 %v2200
    %2433 = vmatprep.subr.bf16.mxu0 %v2209
    %2434 = vmatpush1.bf16.msra.mxu0 %v2208
    %2435 = vmatprep.subr.bf16.mxu0 %v2217
    %2436 = vmatpush1.bf16.msra.mxu0 %v2216
    %2437 = vmatprep.subr.bf16.mxu0 %v2225
    %2438 = vmatpush1.bf16.msra.mxu0 %v2224
    %2439 = vmatprep.subr.bf16.mxu0 %v2233
    %2440 = vmatpush1.bf16.msra.mxu0 %v2232
    %2441 = vmatprep.mubr.bf16.mxu0 0
    %2442 = vmatmul.mubr.bf16.gmra.mrb[0].mxu0 0
    %v2443 = vpop.f32.mrb[0].mxu0
    %v2444 = vadd.f32 0.0, %v2443
    %v2445 = vpop.f32.mrb[0].mxu0
    %v2446 = vadd.f32 0.0, %v2445
    %v2447 = vpop.f32.mrb[0].mxu0
    %v2448 = vadd.f32 0.0, %v2447
    %v2449 = vpop.f32.mrb[0].mxu0
    %v2450 = vadd.f32 0.0, %v2449
    %2451 = vdwg.mxu0
    %2452 = vmatprep.subr.bf16.mxu0 %v2115
    %2453 = vmatpush1.bf16.msra.mxu0 %v2114
    %2454 = vmatprep.subr.bf16.mxu0 %v2123
    %2455 = vmatpush1.bf16.msra.mxu0 %v2122
    %2456 = vmatprep.subr.bf16.mxu0 %v2131
    %2457 = vmatpush1.bf16.msra.mxu0 %v2130
    %2458 = vmatprep.subr.bf16.mxu0 %v2139
    %2459 = vmatpush1.bf16.msra.mxu0 %v2138
    %2460 = vmatprep.subr.bf16.mxu0 %v2147
    %2461 = vmatpush1.bf16.msra.mxu0 %v2146
    %2462 = vmatprep.subr.bf16.mxu0 %v2155
    %2463 = vmatpush1.bf16.msra.mxu0 %v2154
    %2464 = vmatprep.subr.bf16.mxu0 %v2163
    %2465 = vmatpush1.bf16.msra.mxu0 %v2162
    %2466 = vmatprep.subr.bf16.mxu0 %v2171
    %2467 = vmatpush1.bf16.msra.mxu0 %v2170
    %2468 = vmatprep.subr.bf16.mxu0 %v2179
    %2469 = vmatpush1.bf16.msra.mxu0 %v2178
    %2470 = vmatprep.subr.bf16.mxu0 %v2187
    %2471 = vmatpush1.bf16.msra.mxu0 %v2186
    %2472 = vmatprep.subr.bf16.mxu0 %v2195
    %2473 = vmatpush1.bf16.msra.mxu0 %v2194
    %2474 = vmatprep.subr.bf16.mxu0 %v2203
    %2475 = vmatpush1.bf16.msra.mxu0 %v2202
    %2476 = vmatprep.subr.bf16.mxu0 %v2211
    %2477 = vmatpush1.bf16.msra.mxu0 %v2210
    %2478 = vmatprep.subr.bf16.mxu0 %v2219
    %2479 = vmatpush1.bf16.msra.mxu0 %v2218
    %2480 = vmatprep.subr.bf16.mxu0 %v2227
    %2481 = vmatpush1.bf16.msra.mxu0 %v2226
    %2482 = vmatprep.subr.bf16.mxu0 %v2235
    %2483 = vmatpush1.bf16.msra.mxu0 %v2234
    %2484 = vmatprep.mubr.bf16.mxu0 0
    %2485 = vmatmul.mubr.bf16.gmra.mrb[0].mxu0 0
    %v2486 = vpop.f32.mrb[0].mxu0
    %v2487 = vadd.f32 0.0, %v2486
    %v2488 = vpop.f32.mrb[0].mxu0
    %v2489 = vadd.f32 0.0, %v2488
    %v2490 = vpop.f32.mrb[0].mxu0
    %v2491 = vadd.f32 0.0, %v2490
    %v2492 = vpop.f32.mrb[0].mxu0
    %v2493 = vadd.f32 0.0, %v2492
    %2494 = vdwg.mxu0
    %2495 = vmatprep.subr.bf16.mxu0 %v2117
    %2496 = vmatpush1.bf16.msra.mxu0 %v2116
    %2497 = vmatprep.subr.bf16.mxu0 %v2125
    %2498 = vmatpush1.bf16.msra.mxu0 %v2124
    %2499 = vmatprep.subr.bf16.mxu0 %v2133
    %2500 = vmatpush1.bf16.msra.mxu0 %v2132
    %2501 = vmatprep.subr.bf16.mxu0 %v2141
    %2502 = vmatpush1.bf16.msra.mxu0 %v2140
    %2503 = vmatprep.subr.bf16.mxu0 %v2149
    %2504 = vmatpush1.bf16.msra.mxu0 %v2148
    %2505 = vmatprep.subr.bf16.mxu0 %v2157
    %2506 = vmatpush1.bf16.msra.mxu0 %v2156
    %2507 = vmatprep.subr.bf16.mxu0 %v2165
    %2508 = vmatpush1.bf16.msra.mxu0 %v2164
    %2509 = vmatprep.subr.bf16.mxu0 %v2173
    %2510 = vmatpush1.bf16.msra.mxu0 %v2172
    %2511 = vmatprep.subr.bf16.mxu0 %v2181
    %2512 = vmatpush1.bf16.msra.mxu0 %v2180
    %2513 = vmatprep.subr.bf16.mxu0 %v2189
    %2514 = vmatpush1.bf16.msra.mxu0 %v2188
    %2515 = vmatprep.subr.bf16.mxu0 %v2197
    %2516 = vmatpush1.bf16.msra.mxu0 %v2196
    %2517 = vmatprep.subr.bf16.mxu0 %v2205
    %2518 = vmatpush1.bf16.msra.mxu0 %v2204
    %2519 = vmatprep.subr.bf16.mxu0 %v2213
    %2520 = vmatpush1.bf16.msra.mxu0 %v2212
    %2521 = vmatprep.subr.bf16.mxu0 %v2221
    %2522 = vmatpush1.bf16.msra.mxu0 %v2220
    %2523 = vmatprep.subr.bf16.mxu0 %v2229
    %2524 = vmatpush1.bf16.msra.mxu0 %v2228
    %2525 = vmatprep.subr.bf16.mxu0 %v2237
    %2526 = vmatpush1.bf16.msra.mxu0 %v2236
    %2527 = vmatprep.mubr.bf16.mxu0 0
    %2528 = vmatmul.mubr.bf16.gmra.mrb[0].mxu0 0
    %v2529 = vpop.f32.mrb[0].mxu0
    %v2530 = vadd.f32 0.0, %v2529
    %v2531 = vpop.f32.mrb[0].mxu0
    %v2532 = vadd.f32 0.0, %v2531
    %v2533 = vpop.f32.mrb[0].mxu0
    %v2534 = vadd.f32 0.0, %v2533
    %v2535 = vpop.f32.mrb[0].mxu0
    %v2536 = vadd.f32 0.0, %v2535
    %2537 = vdwg.mxu0
    %v2538 = vadd.f32 %v1582, %v2401
    %v2539 = vadd.f32 %v1583, %v2403
    %v2540 = vadd.f32 %v1584, %v2444
    %v2541 = vadd.f32 %v1585, %v2446
    %v2542 = vadd.f32 %v1586, %v2487
    %v2543 = vadd.f32 %v1587, %v2489
    %v2544 = vadd.f32 %v1588, %v2530
    %v2545 = vadd.f32 %v1589, %v2532
    %v2546 = vadd.f32 %v1590, %v2405
    %v2547 = vadd.f32 %v1591, %v2407
    %v2548 = vadd.f32 %v1592, %v2448
    %v2549 = vadd.f32 %v1593, %v2450
    %v2550 = vadd.f32 %v1594, %v2491
    %v2551 = vadd.f32 %v1595, %v2493
    %v2552 = vadd.f32 %v1596, %v2534
    %v2553 = vadd.f32 %v1597, %v2536
    %v2554 = vmul.f32 %v2538, 0.5
    %v2555 = vmul.f32 %v2539, 0.5
    %v2556 = vmul.f32 %v2546, 0.5
    %v2557 = vmul.f32 %v2547, 0.5
    %v2558 = vtanh.pop %v2554
    %v2559 = vtanh.pop %v2555
    %v2560 = vtanh.pop %v2556
    %v2561 = vtanh.pop %v2557
    %v2562 = vmul.f32 %v2558, 0.5
    %v2563 = vmul.f32 %v2559, 0.5
    %v2564 = vmul.f32 %v2560, 0.5
    %v2565 = vmul.f32 %v2561, 0.5
    %v2566 = vadd.f32 %v2562, 0.5
    %v2567 = vadd.f32 %v2563, 0.5
    %v2568 = vadd.f32 %v2564, 0.5
    %v2569 = vadd.f32 %v2565, 0.5
    %v2570 = vmul.f32 %v2540, 0.5
    %v2571 = vmul.f32 %v2541, 0.5
    %v2572 = vmul.f32 %v2548, 0.5
    %v2573 = vmul.f32 %v2549, 0.5
    %v2574 = vtanh.pop %v2570
    %v2575 = vtanh.pop %v2571
    %v2576 = vtanh.pop %v2572
    %v2577 = vtanh.pop %v2573
    %v2578 = vmul.f32 %v2574, 0.5
    %v2579 = vmul.f32 %v2575, 0.5
    %v2580 = vmul.f32 %v2576, 0.5
    %v2581 = vmul.f32 %v2577, 0.5
    %v2582 = vadd.f32 %v2578, 0.5
    %v2583 = vadd.f32 %v2579, 0.5
    %v2584 = vadd.f32 %v2580, 0.5
    %v2585 = vadd.f32 %v2581, 0.5
    %v2586 = vtanh.pop %v2542
    %v2587 = vtanh.pop %v2543
    %v2588 = vtanh.pop %v2550
    %v2589 = vtanh.pop %v2551
    %v2590 = vmul.f32 %v2544, 0.5
    %v2591 = vmul.f32 %v2545, 0.5
    %v2592 = vmul.f32 %v2552, 0.5
    %v2593 = vmul.f32 %v2553, 0.5
    %v2594 = vtanh.pop %v2590
    %v2595 = vtanh.pop %v2591
    %v2596 = vtanh.pop %v2592
    %v2597 = vtanh.pop %v2593
    %v2598 = vmul.f32 %v2594, 0.5
    %v2599 = vmul.f32 %v2595, 0.5
    %v2600 = vmul.f32 %v2596, 0.5
    %v2601 = vmul.f32 %v2597, 0.5
    %v2602 = vadd.f32 %v2598, 0.5
    %v2603 = vadd.f32 %v2599, 0.5
    %v2604 = vadd.f32 %v2600, 0.5
    %v2605 = vadd.f32 %v2601, 0.5
    %v2606 = vmul.f32 %v2582, 0.0
    %v2607 = vmul.f32 %v2583, 0.0
    %v2608 = vmul.f32 %v2584, 0.0
    %v2609 = vmul.f32 %v2585, 0.0
    %v2610 = vmul.f32 %v2566, %v2586
    %v2611 = vmul.f32 %v2567, %v2587
    %v2612 = vmul.f32 %v2568, %v2588
    %v2613 = vmul.f32 %v2569, %v2589
    %v2614 = vadd.f32 %v2606, %v2610
    %v2615 = vadd.f32 %v2607, %v2611
    %v2616 = vadd.f32 %v2608, %v2612
    %v2617 = vadd.f32 %v2609, %v2613
    %v2618 = vtanh.pop %v2614
    %v2619 = vtanh.pop %v2615
    %v2620 = vtanh.pop %v2616
    %v2621 = vtanh.pop %v2617
    %v2622 = vmul.f32 %v2602, %v2618
    %v2623 = vmul.f32 %v2603, %v2619
    %v2624 = vmul.f32 %v2604, %v2620
    %v2625 = vmul.f32 %v2605, %v2621
    %v2626 = vld [vmem:[#allocation2 + $0x80] sm:$0xff]
    %v2627 = vld [vmem:[#allocation2 + $0x88] sm:$0xff]
    %v2628 = vld [vmem:[#allocation2 + $0x90] sm:$0xff]
    %v2629 = vld [vmem:[#allocation2 + $0x98] sm:$0xff]
    %v2630 = vld [vmem:[#allocation2 + $0xa0] sm:$0xff]
    %v2631 = vld [vmem:[#allocation2 + $0xa8] sm:$0xff]
    %v2632 = vld [vmem:[#allocation2 + $0xb0] sm:$0xff]
    %v2633 = vld [vmem:[#allocation2 + $0xb8] sm:$0xff]
    %v2634 = vld [vmem:[#allocation2 + $0xc0] sm:$0xff]
    %v2635 = vld [vmem:[#allocation2 + $0xc8] sm:$0xff]
    %v2636 = vld [vmem:[#allocation2 + $0xd0] sm:$0xff]
    %v2637 = vld [vmem:[#allocation2 + $0xd8] sm:$0xff]
    %v2638 = vld [vmem:[#allocation2 + $0xe0] sm:$0xff]
    %v2639 = vld [vmem:[#allocation2 + $0xe8] sm:$0xff]
    %v2640 = vld [vmem:[#allocation2 + $0xf0] sm:$0xff]
    %v2641 = vld [vmem:[#allocation2 + $0xf8] sm:$0xff]
    %v2642 = vpack.c.bf16 %v2624, %v2622
    %v2643 = vpack.c.bf16 %v2625, %v2623
    %2644 = vmatprep.subr.bf16.mxu0 %v2111
    %2645 = vmatpush1.bf16.msra.mxu0 %v2110
    %2646 = vmatprep.subr.bf16.mxu0 %v2119
    %2647 = vmatpush1.bf16.msra.mxu0 %v2118
    %2648 = vmatprep.subr.bf16.mxu0 %v2127
    %2649 = vmatpush1.bf16.msra.mxu0 %v2126
    %2650 = vmatprep.subr.bf16.mxu0 %v2135
    %2651 = vmatpush1.bf16.msra.mxu0 %v2134
    %2652 = vmatprep.subr.bf16.mxu0 %v2143
    %2653 = vmatpush1.bf16.msra.mxu0 %v2142
    %2654 = vmatprep.subr.bf16.mxu0 %v2151
    %2655 = vmatpush1.bf16.msra.mxu0 %v2150
    %2656 = vmatprep.subr.bf16.mxu0 %v2159
    %2657 = vmatpush1.bf16.msra.mxu0 %v2158
    %2658 = vmatprep.subr.bf16.mxu0 %v2167
    %2659 = vmatpush1.bf16.msra.mxu0 %v2166
    %2660 = vmatprep.subr.bf16.mxu0 %v2175
    %2661 = vmatpush1.bf16.msra.mxu0 %v2174
    %2662 = vmatprep.subr.bf16.mxu0 %v2183
    %2663 = vmatpush1.bf16.msra.mxu0 %v2182
    %2664 = vmatprep.subr.bf16.mxu0 %v2191
    %2665 = vmatpush1.bf16.msra.mxu0 %v2190
    %2666 = vmatprep.subr.bf16.mxu0 %v2199
    %2667 = vmatpush1.bf16.msra.mxu0 %v2198
    %2668 = vmatprep.subr.bf16.mxu0 %v2207
    %2669 = vmatpush1.bf16.msra.mxu0 %v2206
    %2670 = vmatprep.subr.bf16.mxu0 %v2215
    %2671 = vmatpush1.bf16.msra.mxu0 %v2214
    %2672 = vmatprep.subr.bf16.mxu0 %v2223
    %2673 = vmatpush1.bf16.msra.mxu0 %v2222
    %2674 = vmatprep.subr.bf16.mxu0 %v2231
    %2675 = vmatpush1.bf16.msra.mxu0 %v2230
    %2676 = vmatprep.mubr.bf16.mxu0 %v2643
    %2677 = vmatmul.mubr.bf16.gmra.mrb[0].mxu0 %v2642
    %v2678 = vpop.f32.mrb[0].mxu0
    %v2679 = vadd.f32 0.0, %v2678
    %v2680 = vpop.f32.mrb[0].mxu0
    %v2681 = vadd.f32 0.0, %v2680
    %v2682 = vpop.f32.mrb[0].mxu0
    %v2683 = vadd.f32 0.0, %v2682
    %v2684 = vpop.f32.mrb[0].mxu0
    %v2685 = vadd.f32 0.0, %v2684
    %2686 = vdwg.mxu0
    %2687 = vmatprep.subr.bf16.mxu0 %v2113
    %2688 = vmatpush1.bf16.msra.mxu0 %v2112
    %2689 = vmatprep.subr.bf16.mxu0 %v2121
    %2690 = vmatpush1.bf16.msra.mxu0 %v2120
    %2691 = vmatprep.subr.bf16.mxu0 %v2129
    %2692 = vmatpush1.bf16.msra.mxu0 %v2128
    %2693 = vmatprep.subr.bf16.mxu0 %v2137
    %2694 = vmatpush1.bf16.msra.mxu0 %v2136
    %2695 = vmatprep.subr.bf16.mxu0 %v2145
    %2696 = vmatpush1.bf16.msra.mxu0 %v2144
    %2697 = vmatprep.subr.bf16.mxu0 %v2153
    %2698 = vmatpush1.bf16.msra.mxu0 %v2152
    %2699 = vmatprep.subr.bf16.mxu0 %v2161
    %2700 = vmatpush1.bf16.msra.mxu0 %v2160
    %2701 = vmatprep.subr.bf16.mxu0 %v2169
    %2702 = vmatpush1.bf16.msra.mxu0 %v2168
    %2703 = vmatprep.subr.bf16.mxu0 %v2177
    %2704 = vmatpush1.bf16.msra.mxu0 %v2176
    %2705 = vmatprep.subr.bf16.mxu0 %v2185
    %2706 = vmatpush1.bf16.msra.mxu0 %v2184
    %2707 = vmatprep.subr.bf16.mxu0 %v2193
    %2708 = vmatpush1.bf16.msra.mxu0 %v2192
    %2709 = vmatprep.subr.bf16.mxu0 %v2201
    %2710 = vmatpush1.bf16.msra.mxu0 %v2200
    %2711 = vmatprep.subr.bf16.mxu0 %v2209
    %2712 = vmatpush1.bf16.msra.mxu0 %v2208
    %2713 = vmatprep.subr.bf16.mxu0 %v2217
    %2714 = vmatpush1.bf16.msra.mxu0 %v2216
    %2715 = vmatprep.subr.bf16.mxu0 %v2225
    %2716 = vmatpush1.bf16.msra.mxu0 %v2224
    %2717 = vmatprep.subr.bf16.mxu0 %v2233
    %2718 = vmatpush1.bf16.msra.mxu0 %v2232
    %2719 = vmatprep.mubr.bf16.mxu0 %v2643
    %2720 = vmatmul.mubr.bf16.gmra.mrb[0].mxu0 %v2642
    %v2721 = vpop.f32.mrb[0].mxu0
    %v2722 = vadd.f32 0.0, %v2721
    %v2723 = vpop.f32.mrb[0].mxu0
    %v2724 = vadd.f32 0.0, %v2723
    %v2725 = vpop.f32.mrb[0].mxu0
    %v2726 = vadd.f32 0.0, %v2725
    %v2727 = vpop.f32.mrb[0].mxu0
    %v2728 = vadd.f32 0.0, %v2727
    %2729 = vdwg.mxu0
    %2730 = vmatprep.subr.bf16.mxu0 %v2115
    %2731 = vmatpush1.bf16.msra.mxu0 %v2114
    %2732 = vmatprep.subr.bf16.mxu0 %v2123
    %2733 = vmatpush1.bf16.msra.mxu0 %v2122
    %2734 = vmatprep.subr.bf16.mxu0 %v2131
    %2735 = vmatpush1.bf16.msra.mxu0 %v2130
    %2736 = vmatprep.subr.bf16.mxu0 %v2139
    %2737 = vmatpush1.bf16.msra.mxu0 %v2138
    %2738 = vmatprep.subr.bf16.mxu0 %v2147
    %2739 = vmatpush1.bf16.msra.mxu0 %v2146
    %2740 = vmatprep.subr.bf16.mxu0 %v2155
    %2741 = vmatpush1.bf16.msra.mxu0 %v2154
    %2742 = vmatprep.subr.bf16.mxu0 %v2163
    %2743 = vmatpush1.bf16.msra.mxu0 %v2162
    %2744 = vmatprep.subr.bf16.mxu0 %v2171
    %2745 = vmatpush1.bf16.msra.mxu0 %v2170
    %2746 = vmatprep.subr.bf16.mxu0 %v2179
    %2747 = vmatpush1.bf16.msra.mxu0 %v2178
    %2748 = vmatprep.subr.bf16.mxu0 %v2187
    %2749 = vmatpush1.bf16.msra.mxu0 %v2186
    %2750 = vmatprep.subr.bf16.mxu0 %v2195
    %2751 = vmatpush1.bf16.msra.mxu0 %v2194
    %2752 = vmatprep.subr.bf16.mxu0 %v2203
    %2753 = vmatpush1.bf16.msra.mxu0 %v2202
    %2754 = vmatprep.subr.bf16.mxu0 %v2211
    %2755 = vmatpush1.bf16.msra.mxu0 %v2210
    %2756 = vmatprep.subr.bf16.mxu0 %v2219
    %2757 = vmatpush1.bf16.msra.mxu0 %v2218
    %2758 = vmatprep.subr.bf16.mxu0 %v2227
    %2759 = vmatpush1.bf16.msra.mxu0 %v2226
    %2760 = vmatprep.subr.bf16.mxu0 %v2235
    %2761 = vmatpush1.bf16.msra.mxu0 %v2234
    %2762 = vmatprep.mubr.bf16.mxu0 %v2643
    %2763 = vmatmul.mubr.bf16.gmra.mrb[0].mxu0 %v2642
    %v2764 = vpop.f32.mrb[0].mxu0
    %v2765 = vadd.f32 0.0, %v2764
    %v2766 = vpop.f32.mrb[0].mxu0
    %v2767 = vadd.f32 0.0, %v2766
    %v2768 = vpop.f32.mrb[0].mxu0
    %v2769 = vadd.f32 0.0, %v2768
    %v2770 = vpop.f32.mrb[0].mxu0
    %v2771 = vadd.f32 0.0, %v2770
    %2772 = vdwg.mxu0
    %2773 = vmatprep.subr.bf16.mxu0 %v2117
    %2774 = vmatpush1.bf16.msra.mxu0 %v2116
    %2775 = vmatprep.subr.bf16.mxu0 %v2125
    %2776 = vmatpush1.bf16.msra.mxu0 %v2124
    %2777 = vmatprep.subr.bf16.mxu0 %v2133
    %2778 = vmatpush1.bf16.msra.mxu0 %v2132
    %2779 = vmatprep.subr.bf16.mxu0 %v2141
    %2780 = vmatpush1.bf16.msra.mxu0 %v2140
    %2781 = vmatprep.subr.bf16.mxu0 %v2149
    %2782 = vmatpush1.bf16.msra.mxu0 %v2148
    %2783 = vmatprep.subr.bf16.mxu0 %v2157
    %2784 = vmatpush1.bf16.msra.mxu0 %v2156
    %2785 = vmatprep.subr.bf16.mxu0 %v2165
    %2786 = vmatpush1.bf16.msra.mxu0 %v2164
    %2787 = vmatprep.subr.bf16.mxu0 %v2173
    %2788 = vmatpush1.bf16.msra.mxu0 %v2172
    %2789 = vmatprep.subr.bf16.mxu0 %v2181
    %2790 = vmatpush1.bf16.msra.mxu0 %v2180
    %2791 = vmatprep.subr.bf16.mxu0 %v2189
    %2792 = vmatpush1.bf16.msra.mxu0 %v2188
    %2793 = vmatprep.subr.bf16.mxu0 %v2197
    %2794 = vmatpush1.bf16.msra.mxu0 %v2196
    %2795 = vmatprep.subr.bf16.mxu0 %v2205
    %2796 = vmatpush1.bf16.msra.mxu0 %v2204
    %2797 = vmatprep.subr.bf16.mxu0 %v2213
    %2798 = vmatpush1.bf16.msra.mxu0 %v2212
    %2799 = vmatprep.subr.bf16.mxu0 %v2221
    %2800 = vmatpush1.bf16.msra.mxu0 %v2220
    %2801 = vmatprep.subr.bf16.mxu0 %v2229
    %2802 = vmatpush1.bf16.msra.mxu0 %v2228
    %2803 = vmatprep.subr.bf16.mxu0 %v2237
    %2804 = vmatpush1.bf16.msra.mxu0 %v2236
    %2805 = vmatprep.mubr.bf16.mxu0 %v2643
    %2806 = vmatmul.mubr.bf16.gmra.mrb[0].mxu0 %v2642
    %v2807 = vpop.f32.mrb[0].mxu0
    %v2808 = vadd.f32 0.0, %v2807
    %v2809 = vpop.f32.mrb[0].mxu0
    %v2810 = vadd.f32 0.0, %v2809
    %v2811 = vpop.f32.mrb[0].mxu0
    %v2812 = vadd.f32 0.0, %v2811
    %v2813 = vpop.f32.mrb[0].mxu0
    %v2814 = vadd.f32 0.0, %v2813
    %2815 = vdwg.mxu0
    %v2816 = vadd.f32 %v2626, %v2679
    %v2817 = vadd.f32 %v2627, %v2681
    %v2818 = vadd.f32 %v2628, %v2722
    %v2819 = vadd.f32 %v2629, %v2724
    %v2820 = vadd.f32 %v2630, %v2765
    %v2821 = vadd.f32 %v2631, %v2767
    %v2822 = vadd.f32 %v2632, %v2808
    %v2823 = vadd.f32 %v2633, %v2810
    %v2824 = vadd.f32 %v2634, %v2683
    %v2825 = vadd.f32 %v2635, %v2685
    %v2826 = vadd.f32 %v2636, %v2726
    %v2827 = vadd.f32 %v2637, %v2728
    %v2828 = vadd.f32 %v2638, %v2769
    %v2829 = vadd.f32 %v2639, %v2771
    %v2830 = vadd.f32 %v2640, %v2812
    %v2831 = vadd.f32 %v2641, %v2814
    %v2832 = vmul.f32 %v2816, 0.5
    %v2833 = vmul.f32 %v2817, 0.5
    %v2834 = vmul.f32 %v2824, 0.5
    %v2835 = vmul.f32 %v2825, 0.5
    %v2836 = vtanh.pop %v2832
    %v2837 = vtanh.pop %v2833
    %v2838 = vtanh.pop %v2834
    %v2839 = vtanh.pop %v2835
    %v2840 = vmul.f32 %v2836, 0.5
    %v2841 = vmul.f32 %v2837, 0.5
    %v2842 = vmul.f32 %v2838, 0.5
    %v2843 = vmul.f32 %v2839, 0.5
    %v2844 = vadd.f32 %v2840, 0.5
    %v2845 = vadd.f32 %v2841, 0.5
    %v2846 = vadd.f32 %v2842, 0.5
    %v2847 = vadd.f32 %v2843, 0.5
    %v2848 = vmul.f32 %v2818, 0.5
    %v2849 = vmul.f32 %v2819, 0.5
    %v2850 = vmul.f32 %v2826, 0.5
    %v2851 = vmul.f32 %v2827, 0.5
    %v2852 = vtanh.pop %v2848
    %v2853 = vtanh.pop %v2849
    %v2854 = vtanh.pop %v2850
    %v2855 = vtanh.pop %v2851
    %v2856 = vmul.f32 %v2852, 0.5
    %v2857 = vmul.f32 %v2853, 0.5
    %v2858 = vmul.f32 %v2854, 0.5
    %v2859 = vmul.f32 %v2855, 0.5
    %v2860 = vadd.f32 %v2856, 0.5
    %v2861 = vadd.f32 %v2857, 0.5
    %v2862 = vadd.f32 %v2858, 0.5
    %v2863 = vadd.f32 %v2859, 0.5
    %v2864 = vtanh.pop %v2820
    %v2865 = vtanh.pop %v2821
    %v2866 = vtanh.pop %v2828
    %v2867 = vtanh.pop %v2829
    %v2868 = vmul.f32 %v2822, 0.5
    %v2869 = vmul.f32 %v2823, 0.5
    %v2870 = vmul.f32 %v2830, 0.5
    %v2871 = vmul.f32 %v2831, 0.5
    %v2872 = vtanh.pop %v2868
    %v2873 = vtanh.pop %v2869
    %v2874 = vtanh.pop %v2870
    %v2875 = vtanh.pop %v2871
    %v2876 = vmul.f32 %v2872, 0.5
    %v2877 = vmul.f32 %v2873, 0.5
    %v2878 = vmul.f32 %v2874, 0.5
    %v2879 = vmul.f32 %v2875, 0.5
    %v2880 = vadd.f32 %v2876, 0.5
    %v2881 = vadd.f32 %v2877, 0.5
    %v2882 = vadd.f32 %v2878, 0.5
    %v2883 = vadd.f32 %v2879, 0.5
    %v2884 = vmul.f32 %v2860, %v2614
    %v2885 = vmul.f32 %v2861, %v2615
    %v2886 = vmul.f32 %v2862, %v2616
    %v2887 = vmul.f32 %v2863, %v2617
    %v2888 = vmul.f32 %v2844, %v2864
    %v2889 = vmul.f32 %v2845, %v2865
    %v2890 = vmul.f32 %v2846, %v2866
    %v2891 = vmul.f32 %v2847, %v2867
    %v2892 = vadd.f32 %v2884, %v2888
    %v2893 = vadd.f32 %v2885, %v2889
    %v2894 = vadd.f32 %v2886, %v2890
    %v2895 = vadd.f32 %v2887, %v2891
    %v2896 = vtanh.pop %v2892
    %v2897 = vtanh.pop %v2893
    %v2898 = vtanh.pop %v2894
    %v2899 = vtanh.pop %v2895
    %v2900 = vmul.f32 %v2880, %v2896
    %v2901 = vmul.f32 %v2881, %v2897
    %v2902 = vmul.f32 %v2882, %v2898
    %v2903 = vmul.f32 %v2883, %v2899
    %v2904 = vld [vmem:[#allocation2 + $0x100] sm:$0xff]
    %v2905 = vld [vmem:[#allocation2 + $0x108] sm:$0xff]
    %v2906 = vld [vmem:[#allocation2 + $0x110] sm:$0xff]
    %v2907 = vld [vmem:[#allocation2 + $0x118] sm:$0xff]
    %v2908 = vld [vmem:[#allocation2 + $0x120] sm:$0xff]
    %v2909 = vld [vmem:[#allocation2 + $0x128] sm:$0xff]
    %v2910 = vld [vmem:[#allocation2 + $0x130] sm:$0xff]
    %v2911 = vld [vmem:[#allocation2 + $0x138] sm:$0xff]
    %v2912 = vld [vmem:[#allocation2 + $0x140] sm:$0xff]
    %v2913 = vld [vmem:[#allocation2 + $0x148] sm:$0xff]
    %v2914 = vld [vmem:[#allocation2 + $0x150] sm:$0xff]
    %v2915 = vld [vmem:[#allocation2 + $0x158] sm:$0xff]
    %v2916 = vld [vmem:[#allocation2 + $0x160] sm:$0xff]
    %v2917 = vld [vmem:[#allocation2 + $0x168] sm:$0xff]
    %v2918 = vld [vmem:[#allocation2 + $0x170] sm:$0xff]
    %v2919 = vld [vmem:[#allocation2 + $0x178] sm:$0xff]
    %v2920 = vpack.c.bf16 %v2902, %v2900
    %v2921 = vpack.c.bf16 %v2903, %v2901
    %2922 = vmatprep.subr.bf16.mxu0 %v2111
    %2923 = vmatpush1.bf16.msra.mxu0 %v2110
    %2924 = vmatprep.subr.bf16.mxu0 %v2119
    %2925 = vmatpush1.bf16.msra.mxu0 %v2118
    %2926 = vmatprep.subr.bf16.mxu0 %v2127
    %2927 = vmatpush1.bf16.msra.mxu0 %v2126
    %2928 = vmatprep.subr.bf16.mxu0 %v2135
    %2929 = vmatpush1.bf16.msra.mxu0 %v2134
    %2930 = vmatprep.subr.bf16.mxu0 %v2143
    %2931 = vmatpush1.bf16.msra.mxu0 %v2142
    %2932 = vmatprep.subr.bf16.mxu0 %v2151
    %2933 = vmatpush1.bf16.msra.mxu0 %v2150
    %2934 = vmatprep.subr.bf16.mxu0 %v2159
    %2935 = vmatpush1.bf16.msra.mxu0 %v2158
    %2936 = vmatprep.subr.bf16.mxu0 %v2167
    %2937 = vmatpush1.bf16.msra.mxu0 %v2166
    %2938 = vmatprep.subr.bf16.mxu0 %v2175
    %2939 = vmatpush1.bf16.msra.mxu0 %v2174
    %2940 = vmatprep.subr.bf16.mxu0 %v2183
    %2941 = vmatpush1.bf16.msra.mxu0 %v2182
    %2942 = vmatprep.subr.bf16.mxu0 %v2191
    %2943 = vmatpush1.bf16.msra.mxu0 %v2190
    %2944 = vmatprep.subr.bf16.mxu0 %v2199
    %2945 = vmatpush1.bf16.msra.mxu0 %v2198
    %2946 = vmatprep.subr.bf16.mxu0 %v2207
    %2947 = vmatpush1.bf16.msra.mxu0 %v2206
    %2948 = vmatprep.subr.bf16.mxu0 %v2215
    %2949 = vmatpush1.bf16.msra.mxu0 %v2214
    %2950 = vmatprep.subr.bf16.mxu0 %v2223
    %2951 = vmatpush1.bf16.msra.mxu0 %v2222
    %2952 = vmatprep.subr.bf16.mxu0 %v2231
    %2953 = vmatpush1.bf16.msra.mxu0 %v2230
    %2954 = vmatprep.mubr.bf16.mxu0 %v2921
    %2955 = vmatmul.mubr.bf16.gmra.mrb[0].mxu0 %v2920
    %v2956 = vpop.f32.mrb[0].mxu0
    %v2957 = vadd.f32 0.0, %v2956
    %v2958 = vpop.f32.mrb[0].mxu0
    %v2959 = vadd.f32 0.0, %v2958
    %v2960 = vpop.f32.mrb[0].mxu0
    %v2961 = vadd.f32 0.0, %v2960
    %v2962 = vpop.f32.mrb[0].mxu0
    %v2963 = vadd.f32 0.0, %v2962
    %2964 = vdwg.mxu0
    %2965 = vmatprep.subr.bf16.mxu0 %v2113
    %2966 = vmatpush1.bf16.msra.mxu0 %v2112
    %2967 = vmatprep.subr.bf16.mxu0 %v2121
    %2968 = vmatpush1.bf16.msra.mxu0 %v2120
    %2969 = vmatprep.subr.bf16.mxu0 %v2129
    %2970 = vmatpush1.bf16.msra.mxu0 %v2128
    %2971 = vmatprep.subr.bf16.mxu0 %v2137
    %2972 = vmatpush1.bf16.msra.mxu0 %v2136
    %2973 = vmatprep.subr.bf16.mxu0 %v2145
    %2974 = vmatpush1.bf16.msra.mxu0 %v2144
    %2975 = vmatprep.subr.bf16.mxu0 %v2153
    %2976 = vmatpush1.bf16.msra.mxu0 %v2152
    %2977 = vmatprep.subr.bf16.mxu0 %v2161
    %2978 = vmatpush1.bf16.msra.mxu0 %v2160
    %2979 = vmatprep.subr.bf16.mxu0 %v2169
    %2980 = vmatpush1.bf16.msra.mxu0 %v2168
    %2981 = vmatprep.subr.bf16.mxu0 %v2177
    %2982 = vmatpush1.bf16.msra.mxu0 %v2176
    %2983 = vmatprep.subr.bf16.mxu0 %v2185
    %2984 = vmatpush1.bf16.msra.mxu0 %v2184
    %2985 = vmatprep.subr.bf16.mxu0 %v2193
    %2986 = vmatpush1.bf16.msra.mxu0 %v2192
    %2987 = vmatprep.subr.bf16.mxu0 %v2201
    %2988 = vmatpush1.bf16.msra.mxu0 %v2200
    %2989 = vmatprep.subr.bf16.mxu0 %v2209
    %2990 = vmatpush1.bf16.msra.mxu0 %v2208
    %2991 = vmatprep.subr.bf16.mxu0 %v2217
    %2992 = vmatpush1.bf16.msra.mxu0 %v2216
    %2993 = vmatprep.subr.bf16.mxu0 %v2225
    %2994 = vmatpush1.bf16.msra.mxu0 %v2224
    %2995 = vmatprep.subr.bf16.mxu0 %v2233
    %2996 = vmatpush1.bf16.msra.mxu0 %v2232
    %2997 = vmatprep.mubr.bf16.mxu0 %v2921
    %2998 = vmatmul.mubr.bf16.gmra.mrb[0].mxu0 %v2920
    %v2999 = vpop.f32.mrb[0].mxu0
    %v3000 = vadd.f32 0.0, %v2999
    %v3001 = vpop.f32.mrb[0].mxu0
    %v3002 = vadd.f32 0.0, %v3001
    %v3003 = vpop.f32.mrb[0].mxu0
    %v3004 = vadd.f32 0.0, %v3003
    %v3005 = vpop.f32.mrb[0].mxu0
    %v3006 = vadd.f32 0.0, %v3005
    %3007 = vdwg.mxu0
    %3008 = vmatprep.subr.bf16.mxu0 %v2115
    %3009 = vmatpush1.bf16.msra.mxu0 %v2114
    %3010 = vmatprep.subr.bf16.mxu0 %v2123
    %3011 = vmatpush1.bf16.msra.mxu0 %v2122
    %3012 = vmatprep.subr.bf16.mxu0 %v2131
    %3013 = vmatpush1.bf16.msra.mxu0 %v2130
    %3014 = vmatprep.subr.bf16.mxu0 %v2139
    %3015 = vmatpush1.bf16.msra.mxu0 %v2138
    %3016 = vmatprep.subr.bf16.mxu0 %v2147
    %3017 = vmatpush1.bf16.msra.mxu0 %v2146
    %3018 = vmatprep.subr.bf16.mxu0 %v2155
    %3019 = vmatpush1.bf16.msra.mxu0 %v2154
    %3020 = vmatprep.subr.bf16.mxu0 %v2163
    %3021 = vmatpush1.bf16.msra.mxu0 %v2162
    %3022 = vmatprep.subr.bf16.mxu0 %v2171
    %3023 = vmatpush1.bf16.msra.mxu0 %v2170
    %3024 = vmatprep.subr.bf16.mxu0 %v2179
    %3025 = vmatpush1.bf16.msra.mxu0 %v2178
    %3026 = vmatprep.subr.bf16.mxu0 %v2187
    %3027 = vmatpush1.bf16.msra.mxu0 %v2186
    %3028 = vmatprep.subr.bf16.mxu0 %v2195
    %3029 = vmatpush1.bf16.msra.mxu0 %v2194
    %3030 = vmatprep.subr.bf16.mxu0 %v2203
    %3031 = vmatpush1.bf16.msra.mxu0 %v2202
    %3032 = vmatprep.subr.bf16.mxu0 %v2211
    %3033 = vmatpush1.bf16.msra.mxu0 %v2210
    %3034 = vmatprep.subr.bf16.mxu0 %v2219
    %3035 = vmatpush1.bf16.msra.mxu0 %v2218
    %3036 = vmatprep.subr.bf16.mxu0 %v2227
    %3037 = vmatpush1.bf16.msra.mxu0 %v2226
    %3038 = vmatprep.subr.bf16.mxu0 %v2235
    %3039 = vmatpush1.bf16.msra.mxu0 %v2234
    %3040 = vmatprep.mubr.bf16.mxu0 %v2921
    %3041 = vmatmul.mubr.bf16.gmra.mrb[0].mxu0 %v2920
    %v3042 = vpop.f32.mrb[0].mxu0
    %v3043 = vadd.f32 0.0, %v3042
    %v3044 = vpop.f32.mrb[0].mxu0
    %v3045 = vadd.f32 0.0, %v3044
    %v3046 = vpop.f32.mrb[0].mxu0
    %v3047 = vadd.f32 0.0, %v3046
    %v3048 = vpop.f32.mrb[0].mxu0
    %v3049 = vadd.f32 0.0, %v3048
    %3050 = vdwg.mxu0
    %3051 = vmatprep.subr.bf16.mxu0 %v2117
    %3052 = vmatpush1.bf16.msra.mxu0 %v2116
    %3053 = vmatprep.subr.bf16.mxu0 %v2125
    %3054 = vmatpush1.bf16.msra.mxu0 %v2124
    %3055 = vmatprep.subr.bf16.mxu0 %v2133
    %3056 = vmatpush1.bf16.msra.mxu0 %v2132
    %3057 = vmatprep.subr.bf16.mxu0 %v2141
    %3058 = vmatpush1.bf16.msra.mxu0 %v2140
    %3059 = vmatprep.subr.bf16.mxu0 %v2149
    %3060 = vmatpush1.bf16.msra.mxu0 %v2148
    %3061 = vmatprep.subr.bf16.mxu0 %v2157
    %3062 = vmatpush1.bf16.msra.mxu0 %v2156
    %3063 = vmatprep.subr.bf16.mxu0 %v2165
    %3064 = vmatpush1.bf16.msra.mxu0 %v2164
    %3065 = vmatprep.subr.bf16.mxu0 %v2173
    %3066 = vmatpush1.bf16.msra.mxu0 %v2172
    %3067 = vmatprep.subr.bf16.mxu0 %v2181
    %3068 = vmatpush1.bf16.msra.mxu0 %v2180
    %3069 = vmatprep.subr.bf16.mxu0 %v2189
    %3070 = vmatpush1.bf16.msra.mxu0 %v2188
    %3071 = vmatprep.subr.bf16.mxu0 %v2197
    %3072 = vmatpush1.bf16.msra.mxu0 %v2196
    %3073 = vmatprep.subr.bf16.mxu0 %v2205
    %3074 = vmatpush1.bf16.msra.mxu0 %v2204
    %3075 = vmatprep.subr.bf16.mxu0 %v2213
    %3076 = vmatpush1.bf16.msra.mxu0 %v2212
    %3077 = vmatprep.subr.bf16.mxu0 %v2221
    %3078 = vmatpush1.bf16.msra.mxu0 %v2220
    %3079 = vmatprep.subr.bf16.mxu0 %v2229
    %3080 = vmatpush1.bf16.msra.mxu0 %v2228
    %3081 = vmatprep.subr.bf16.mxu0 %v2237
    %3082 = vmatpush1.bf16.msra.mxu0 %v2236
    %3083 = vmatprep.mubr.bf16.mxu0 %v2921
    %3084 = vmatmul.mubr.bf16.gmra.mrb[0].mxu0 %v2920
    %v3085 = vpop.f32.mrb[0].mxu0
    %v3086 = vadd.f32 0.0, %v3085
    %v3087 = vpop.f32.mrb[0].mxu0
    %v3088 = vadd.f32 0.0, %v3087
    %v3089 = vpop.f32.mrb[0].mxu0
    %v3090 = vadd.f32 0.0, %v3089
    %v3091 = vpop.f32.mrb[0].mxu0
    %v3092 = vadd.f32 0.0, %v3091
    %3093 = vdwg.mxu0
    %v3094 = vadd.f32 %v2904, %v2957
    %v3095 = vadd.f32 %v2905, %v2959
    %v3096 = vadd.f32 %v2906, %v3000
    %v3097 = vadd.f32 %v2907, %v3002
    %v3098 = vadd.f32 %v2908, %v3043
    %v3099 = vadd.f32 %v2909, %v3045
    %v3100 = vadd.f32 %v2910, %v3086
    %v3101 = vadd.f32 %v2911, %v3088
    %v3102 = vadd.f32 %v2912, %v2961
    %v3103 = vadd.f32 %v2913, %v2963
    %v3104 = vadd.f32 %v2914, %v3004
    %v3105 = vadd.f32 %v2915, %v3006
    %v3106 = vadd.f32 %v2916, %v3047
    %v3107 = vadd.f32 %v2917, %v3049
    %v3108 = vadd.f32 %v2918, %v3090
    %v3109 = vadd.f32 %v2919, %v3092
    %v3110 = vmul.f32 %v3094, 0.5
    %v3111 = vmul.f32 %v3095, 0.5
    %v3112 = vmul.f32 %v3102, 0.5
    %v3113 = vmul.f32 %v3103, 0.5
    %v3114 = vtanh.pop %v3110
    %v3115 = vtanh.pop %v3111
    %v3116 = vtanh.pop %v3112
    %v3117 = vtanh.pop %v3113
    %v3118 = vmul.f32 %v3114, 0.5
    %v3119 = vmul.f32 %v3115, 0.5
    %v3120 = vmul.f32 %v3116, 0.5
    %v3121 = vmul.f32 %v3117, 0.5
    %v3122 = vadd.f32 %v3118, 0.5
    %v3123 = vadd.f32 %v3119, 0.5
    %v3124 = vadd.f32 %v3120, 0.5
    %v3125 = vadd.f32 %v3121, 0.5
    %v3126 = vmul.f32 %v3096, 0.5
    %v3127 = vmul.f32 %v3097, 0.5
    %v3128 = vmul.f32 %v3104, 0.5
    %v3129 = vmul.f32 %v3105, 0.5
    %v3130 = vtanh.pop %v3126
    %v3131 = vtanh.pop %v3127
    %v3132 = vtanh.pop %v3128
    %v3133 = vtanh.pop %v3129
    %v3134 = vmul.f32 %v3130, 0.5
    %v3135 = vmul.f32 %v3131, 0.5
    %v3136 = vmul.f32 %v3132, 0.5
    %v3137 = vmul.f32 %v3133, 0.5
    %v3138 = vadd.f32 %v3134, 0.5
    %v3139 = vadd.f32 %v3135, 0.5
    %v3140 = vadd.f32 %v3136, 0.5
    %v3141 = vadd.f32 %v3137, 0.5
    %v3142 = vtanh.pop %v3098
    %v3143 = vtanh.pop %v3099
    %v3144 = vtanh.pop %v3106
    %v3145 = vtanh.pop %v3107
    %v3146 = vmul.f32 %v3100, 0.5
    %v3147 = vmul.f32 %v3101, 0.5
    %v3148 = vmul.f32 %v3108, 0.5
    %v3149 = vmul.f32 %v3109, 0.5
    %v3150 = vtanh.pop %v3146
    %v3151 = vtanh.pop %v3147
    %v3152 = vtanh.pop %v3148
    %v3153 = vtanh.pop %v3149
    %v3154 = vmul.f32 %v3150, 0.5
    %v3155 = vmul.f32 %v3151, 0.5
    %v3156 = vmul.f32 %v3152, 0.5
    %v3157 = vmul.f32 %v3153, 0.5
    %v3158 = vadd.f32 %v3154, 0.5
    %v3159 = vadd.f32 %v3155, 0.5
    %v3160 = vadd.f32 %v3156, 0.5
    %v3161 = vadd.f32 %v3157, 0.5
    %v3162 = vmul.f32 %v3138, %v2892
    %v3163 = vmul.f32 %v3139, %v2893
    %v3164 = vmul.f32 %v3140, %v2894
    %v3165 = vmul.f32 %v3141, %v2895
    %v3166 = vmul.f32 %v3122, %v3142
    %v3167 = vmul.f32 %v3123, %v3143
    %v3168 = vmul.f32 %v3124, %v3144
    %v3169 = vmul.f32 %v3125, %v3145
    %v3170 = vadd.f32 %v3162, %v3166
    %v3171 = vadd.f32 %v3163, %v3167
    %v3172 = vadd.f32 %v3164, %v3168
    %v3173 = vadd.f32 %v3165, %v3169
    %v3174 = vtanh.pop %v3170
    %v3175 = vtanh.pop %v3171
    %v3176 = vtanh.pop %v3172
    %v3177 = vtanh.pop %v3173
    %v3178 = vmul.f32 %v3158, %v3174
    %v3179 = vmul.f32 %v3159, %v3175
    %v3180 = vmul.f32 %v3160, %v3176
    %v3181 = vmul.f32 %v3161, %v3177
    %v3182 = vld [vmem:[#allocation2 + $0x180] sm:$0xff]
    %v3183 = vld [vmem:[#allocation2 + $0x188] sm:$0xff]
    %v3184 = vld [vmem:[#allocation2 + $0x190] sm:$0xff]
    %v3185 = vld [vmem:[#allocation2 + $0x198] sm:$0xff]
    %v3186 = vld [vmem:[#allocation2 + $0x1a0] sm:$0xff]
    %v3187 = vld [vmem:[#allocation2 + $0x1a8] sm:$0xff]
    %v3188 = vld [vmem:[#allocation2 + $0x1b0] sm:$0xff]
    %v3189 = vld [vmem:[#allocation2 + $0x1b8] sm:$0xff]
    %v3190 = vld [vmem:[#allocation2 + $0x1c0] sm:$0xff]
    %v3191 = vld [vmem:[#allocation2 + $0x1c8] sm:$0xff]
    %v3192 = vld [vmem:[#allocation2 + $0x1d0] sm:$0xff]
    %v3193 = vld [vmem:[#allocation2 + $0x1d8] sm:$0xff]
    %v3194 = vld [vmem:[#allocation2 + $0x1e0] sm:$0xff]
    %v3195 = vld [vmem:[#allocation2 + $0x1e8] sm:$0xff]
    %v3196 = vld [vmem:[#allocation2 + $0x1f0] sm:$0xff]
    %v3197 = vld [vmem:[#allocation2 + $0x1f8] sm:$0xff]
    %v3198 = vpack.c.bf16 %v3180, %v3178
    %v3199 = vpack.c.bf16 %v3181, %v3179
    %3200 = vmatprep.subr.bf16.mxu0 %v2111
    %3201 = vmatpush1.bf16.msra.mxu0 %v2110
    %3202 = vmatprep.subr.bf16.mxu0 %v2119
    %3203 = vmatpush1.bf16.msra.mxu0 %v2118
    %3204 = vmatprep.subr.bf16.mxu0 %v2127
    %3205 = vmatpush1.bf16.msra.mxu0 %v2126
    %3206 = vmatprep.subr.bf16.mxu0 %v2135
    %3207 = vmatpush1.bf16.msra.mxu0 %v2134
    %3208 = vmatprep.subr.bf16.mxu0 %v2143
    %3209 = vmatpush1.bf16.msra.mxu0 %v2142
    %3210 = vmatprep.subr.bf16.mxu0 %v2151
    %3211 = vmatpush1.bf16.msra.mxu0 %v2150
    %3212 = vmatprep.subr.bf16.mxu0 %v2159
    %3213 = vmatpush1.bf16.msra.mxu0 %v2158
    %3214 = vmatprep.subr.bf16.mxu0 %v2167
    %3215 = vmatpush1.bf16.msra.mxu0 %v2166
    %3216 = vmatprep.subr.bf16.mxu0 %v2175
    %3217 = vmatpush1.bf16.msra.mxu0 %v2174
    %3218 = vmatprep.subr.bf16.mxu0 %v2183
    %3219 = vmatpush1.bf16.msra.mxu0 %v2182
    %3220 = vmatprep.subr.bf16.mxu0 %v2191
    %3221 = vmatpush1.bf16.msra.mxu0 %v2190
    %3222 = vmatprep.subr.bf16.mxu0 %v2199
    %3223 = vmatpush1.bf16.msra.mxu0 %v2198
    %3224 = vmatprep.subr.bf16.mxu0 %v2207
    %3225 = vmatpush1.bf16.msra.mxu0 %v2206
    %3226 = vmatprep.subr.bf16.mxu0 %v2215
    %3227 = vmatpush1.bf16.msra.mxu0 %v2214
    %3228 = vmatprep.subr.bf16.mxu0 %v2223
    %3229 = vmatpush1.bf16.msra.mxu0 %v2222
    %3230 = vmatprep.subr.bf16.mxu0 %v2231
    %3231 = vmatpush1.bf16.msra.mxu0 %v2230
    %3232 = vmatprep.mubr.bf16.mxu0 %v3199
    %3233 = vmatmul.mubr.bf16.gmra.mrb[0].mxu0 %v3198
    %v3234 = vpop.f32.mrb[0].mxu0
    %v3235 = vadd.f32 0.0, %v3234
    %v3236 = vpop.f32.mrb[0].mxu0
    %v3237 = vadd.f32 0.0, %v3236
    %v3238 = vpop.f32.mrb[0].mxu0
    %v3239 = vadd.f32 0.0, %v3238
    %v3240 = vpop.f32.mrb[0].mxu0
    %v3241 = vadd.f32 0.0, %v3240
    %3242 = vdwg.mxu0
    %3243 = vmatprep.subr.bf16.mxu0 %v2113
    %3244 = vmatpush1.bf16.msra.mxu0 %v2112
    %3245 = vmatprep.subr.bf16.mxu0 %v2121
    %3246 = vmatpush1.bf16.msra.mxu0 %v2120
    %3247 = vmatprep.subr.bf16.mxu0 %v2129
    %3248 = vmatpush1.bf16.msra.mxu0 %v2128
    %3249 = vmatprep.subr.bf16.mxu0 %v2137
    %3250 = vmatpush1.bf16.msra.mxu0 %v2136
    %3251 = vmatprep.subr.bf16.mxu0 %v2145
    %3252 = vmatpush1.bf16.msra.mxu0 %v2144
    %3253 = vmatprep.subr.bf16.mxu0 %v2153
    %3254 = vmatpush1.bf16.msra.mxu0 %v2152
    %3255 = vmatprep.subr.bf16.mxu0 %v2161
    %3256 = vmatpush1.bf16.msra.mxu0 %v2160
    %3257 = vmatprep.subr.bf16.mxu0 %v2169
    %3258 = vmatpush1.bf16.msra.mxu0 %v2168
    %3259 = vmatprep.subr.bf16.mxu0 %v2177
    %3260 = vmatpush1.bf16.msra.mxu0 %v2176
    %3261 = vmatprep.subr.bf16.mxu0 %v2185
    %3262 = vmatpush1.bf16.msra.mxu0 %v2184
    %3263 = vmatprep.subr.bf16.mxu0 %v2193
    %3264 = vmatpush1.bf16.msra.mxu0 %v2192
    %3265 = vmatprep.subr.bf16.mxu0 %v2201
    %3266 = vmatpush1.bf16.msra.mxu0 %v2200
    %3267 = vmatprep.subr.bf16.mxu0 %v2209
    %3268 = vmatpush1.bf16.msra.mxu0 %v2208
    %3269 = vmatprep.subr.bf16.mxu0 %v2217
    %3270 = vmatpush1.bf16.msra.mxu0 %v2216
    %3271 = vmatprep.subr.bf16.mxu0 %v2225
    %3272 = vmatpush1.bf16.msra.mxu0 %v2224
    %3273 = vmatprep.subr.bf16.mxu0 %v2233
    %3274 = vmatpush1.bf16.msra.mxu0 %v2232
    %3275 = vmatprep.mubr.bf16.mxu0 %v3199
    %3276 = vmatmul.mubr.bf16.gmra.mrb[0].mxu0 %v3198
    %v3277 = vpop.f32.mrb[0].mxu0
    %v3278 = vadd.f32 0.0, %v3277
    %v3279 = vpop.f32.mrb[0].mxu0
    %v3280 = vadd.f32 0.0, %v3279
    %v3281 = vpop.f32.mrb[0].mxu0
    %v3282 = vadd.f32 0.0, %v3281
    %v3283 = vpop.f32.mrb[0].mxu0
    %v3284 = vadd.f32 0.0, %v3283
    %3285 = vdwg.mxu0
    %3286 = vmatprep.subr.bf16.mxu0 %v2115
    %3287 = vmatpush1.bf16.msra.mxu0 %v2114
    %3288 = vmatprep.subr.bf16.mxu0 %v2123
    %3289 = vmatpush1.bf16.msra.mxu0 %v2122
    %3290 = vmatprep.subr.bf16.mxu0 %v2131
    %3291 = vmatpush1.bf16.msra.mxu0 %v2130
    %3292 = vmatprep.subr.bf16.mxu0 %v2139
    %3293 = vmatpush1.bf16.msra.mxu0 %v2138
    %3294 = vmatprep.subr.bf16.mxu0 %v2147
    %3295 = vmatpush1.bf16.msra.mxu0 %v2146
    %3296 = vmatprep.subr.bf16.mxu0 %v2155
    %3297 = vmatpush1.bf16.msra.mxu0 %v2154
    %3298 = vmatprep.subr.bf16.mxu0 %v2163
    %3299 = vmatpush1.bf16.msra.mxu0 %v2162
    %3300 = vmatprep.subr.bf16.mxu0 %v2171
    %3301 = vmatpush1.bf16.msra.mxu0 %v2170
    %3302 = vmatprep.subr.bf16.mxu0 %v2179
    %3303 = vmatpush1.bf16.msra.mxu0 %v2178
    %3304 = vmatprep.subr.bf16.mxu0 %v2187
    %3305 = vmatpush1.bf16.msra.mxu0 %v2186
    %3306 = vmatprep.subr.bf16.mxu0 %v2195
    %3307 = vmatpush1.bf16.msra.mxu0 %v2194
    %3308 = vmatprep.subr.bf16.mxu0 %v2203
    %3309 = vmatpush1.bf16.msra.mxu0 %v2202
    %3310 = vmatprep.subr.bf16.mxu0 %v2211
    %3311 = vmatpush1.bf16.msra.mxu0 %v2210
    %3312 = vmatprep.subr.bf16.mxu0 %v2219
    %3313 = vmatpush1.bf16.msra.mxu0 %v2218
    %3314 = vmatprep.subr.bf16.mxu0 %v2227
    %3315 = vmatpush1.bf16.msra.mxu0 %v2226
    %3316 = vmatprep.subr.bf16.mxu0 %v2235
    %3317 = vmatpush1.bf16.msra.mxu0 %v2234
    %3318 = vmatprep.mubr.bf16.mxu0 %v3199
    %3319 = vmatmul.mubr.bf16.gmra.mrb[0].mxu0 %v3198
    %v3320 = vpop.f32.mrb[0].mxu0
    %v3321 = vadd.f32 0.0, %v3320
    %v3322 = vpop.f32.mrb[0].mxu0
    %v3323 = vadd.f32 0.0, %v3322
    %v3324 = vpop.f32.mrb[0].mxu0
    %v3325 = vadd.f32 0.0, %v3324
    %v3326 = vpop.f32.mrb[0].mxu0
    %v3327 = vadd.f32 0.0, %v3326
    %3328 = vdwg.mxu0
    %3329 = vmatprep.subr.bf16.mxu0 %v2117
    %3330 = vmatpush1.bf16.msra.mxu0 %v2116
    %3331 = vmatprep.subr.bf16.mxu0 %v2125
    %3332 = vmatpush1.bf16.msra.mxu0 %v2124
    %3333 = vmatprep.subr.bf16.mxu0 %v2133
    %3334 = vmatpush1.bf16.msra.mxu0 %v2132
    %3335 = vmatprep.subr.bf16.mxu0 %v2141
    %3336 = vmatpush1.bf16.msra.mxu0 %v2140
    %3337 = vmatprep.subr.bf16.mxu0 %v2149
    %3338 = vmatpush1.bf16.msra.mxu0 %v2148
    %3339 = vmatprep.subr.bf16.mxu0 %v2157
    %3340 = vmatpush1.bf16.msra.mxu0 %v2156
    %3341 = vmatprep.subr.bf16.mxu0 %v2165
    %3342 = vmatpush1.bf16.msra.mxu0 %v2164
    %3343 = vmatprep.subr.bf16.mxu0 %v2173
    %3344 = vmatpush1.bf16.msra.mxu0 %v2172
    %3345 = vmatprep.subr.bf16.mxu0 %v2181
    %3346 = vmatpush1.bf16.msra.mxu0 %v2180
    %3347 = vmatprep.subr.bf16.mxu0 %v2189
    %3348 = vmatpush1.bf16.msra.mxu0 %v2188
    %3349 = vmatprep.subr.bf16.mxu0 %v2197
    %3350 = vmatpush1.bf16.msra.mxu0 %v2196
    %3351 = vmatprep.subr.bf16.mxu0 %v2205
    %3352 = vmatpush1.bf16.msra.mxu0 %v2204
    %3353 = vmatprep.subr.bf16.mxu0 %v2213
    %3354 = vmatpush1.bf16.msra.mxu0 %v2212
    %3355 = vmatprep.subr.bf16.mxu0 %v2221
    %3356 = vmatpush1.bf16.msra.mxu0 %v2220
    %3357 = vmatprep.subr.bf16.mxu0 %v2229
    %3358 = vmatpush1.bf16.msra.mxu0 %v2228
    %3359 = vmatprep.subr.bf16.mxu0 %v2237
    %3360 = vmatpush1.bf16.msra.mxu0 %v2236
    %3361 = vmatprep.mubr.bf16.mxu0 %v3199
    %3362 = vmatmul.mubr.bf16.gmra.mrb[0].mxu0 %v3198
    %v3363 = vpop.f32.mrb[0].mxu0
    %v3364 = vadd.f32 0.0, %v3363
    %v3365 = vpop.f32.mrb[0].mxu0
    %v3366 = vadd.f32 0.0, %v3365
    %v3367 = vpop.f32.mrb[0].mxu0
    %v3368 = vadd.f32 0.0, %v3367
    %v3369 = vpop.f32.mrb[0].mxu0
    %v3370 = vadd.f32 0.0, %v3369
    %3371 = vdwg.mxu0
    %v3372 = vadd.f32 %v3182, %v3235
    %v3373 = vadd.f32 %v3183, %v3237
    %v3374 = vadd.f32 %v3184, %v3278
    %v3375 = vadd.f32 %v3185, %v3280
    %v3376 = vadd.f32 %v3186, %v3321
    %v3377 = vadd.f32 %v3187, %v3323
    %v3378 = vadd.f32 %v3188, %v3364
    %v3379 = vadd.f32 %v3189, %v3366
    %v3380 = vadd.f32 %v3190, %v3239
    %v3381 = vadd.f32 %v3191, %v3241
    %v3382 = vadd.f32 %v3192, %v3282
    %v3383 = vadd.f32 %v3193, %v3284
    %v3384 = vadd.f32 %v3194, %v3325
    %v3385 = vadd.f32 %v3195, %v3327
    %v3386 = vadd.f32 %v3196, %v3368
    %v3387 = vadd.f32 %v3197, %v3370
    %v3388 = vmul.f32 %v3372, 0.5
    %v3389 = vmul.f32 %v3373, 0.5
    %v3390 = vmul.f32 %v3380, 0.5
    %v3391 = vmul.f32 %v3381, 0.5
    %v3392 = vtanh.pop %v3388
    %v3393 = vtanh.pop %v3389
    %v3394 = vtanh.pop %v3390
    %v3395 = vtanh.pop %v3391
    %v3396 = vmul.f32 %v3392, 0.5
    %v3397 = vmul.f32 %v3393, 0.5
    %v3398 = vmul.f32 %v3394, 0.5
    %v3399 = vmul.f32 %v3395, 0.5
    %v3400 = vadd.f32 %v3396, 0.5
    %v3401 = vadd.f32 %v3397, 0.5
    %v3402 = vadd.f32 %v3398, 0.5
    %v3403 = vadd.f32 %v3399, 0.5
    %v3404 = vmul.f32 %v3374, 0.5
    %v3405 = vmul.f32 %v3375, 0.5
    %v3406 = vmul.f32 %v3382, 0.5
    %v3407 = vmul.f32 %v3383, 0.5
    %v3408 = vtanh.pop %v3404
    %v3409 = vtanh.pop %v3405
    %v3410 = vtanh.pop %v3406
    %v3411 = vtanh.pop %v3407
    %v3412 = vmul.f32 %v3408, 0.5
    %v3413 = vmul.f32 %v3409, 0.5
    %v3414 = vmul.f32 %v3410, 0.5
    %v3415 = vmul.f32 %v3411, 0.5
    %v3416 = vadd.f32 %v3412, 0.5
    %v3417 = vadd.f32 %v3413, 0.5
    %v3418 = vadd.f32 %v3414, 0.5
    %v3419 = vadd.f32 %v3415, 0.5
    %v3420 = vtanh.pop %v3376
    %v3421 = vtanh.pop %v3377
    %v3422 = vtanh.pop %v3384
    %v3423 = vtanh.pop %v3385
    %v3424 = vmul.f32 %v3378, 0.5
    %v3425 = vmul.f32 %v3379, 0.5
    %v3426 = vmul.f32 %v3386, 0.5
    %v3427 = vmul.f32 %v3387, 0.5
    %v3428 = vtanh.pop %v3424
    %v3429 = vtanh.pop %v3425
    %v3430 = vtanh.pop %v3426
    %v3431 = vtanh.pop %v3427
    %v3432 = vmul.f32 %v3428, 0.5
    %v3433 = vmul.f32 %v3429, 0.5
    %v3434 = vmul.f32 %v3430, 0.5
    %v3435 = vmul.f32 %v3431, 0.5
    %v3436 = vadd.f32 %v3432, 0.5
    %v3437 = vadd.f32 %v3433, 0.5
    %v3438 = vadd.f32 %v3434, 0.5
    %v3439 = vadd.f32 %v3435, 0.5
    %v3440 = vmul.f32 %v3416, %v3170
    %v3441 = vmul.f32 %v3417, %v3171
    %v3442 = vmul.f32 %v3418, %v3172
    %v3443 = vmul.f32 %v3419, %v3173
    %v3444 = vmul.f32 %v3400, %v3420
    %v3445 = vmul.f32 %v3401, %v3421
    %v3446 = vmul.f32 %v3402, %v3422
    %v3447 = vmul.f32 %v3403, %v3423
    %v3448 = vadd.f32 %v3440, %v3444
    %v3449 = vadd.f32 %v3441, %v3445
    %v3450 = vadd.f32 %v3442, %v3446
    %v3451 = vadd.f32 %v3443, %v3447
    %v3452 = vtanh.pop %v3448
    %v3453 = vtanh.pop %v3449
    %v3454 = vtanh.pop %v3450
    %v3455 = vtanh.pop %v3451
    %v3456 = vmul.f32 %v3436, %v3452
    %v3457 = vmul.f32 %v3437, %v3453
    %v3458 = vmul.f32 %v3438, %v3454
    %v3459 = vmul.f32 %v3439, %v3455
    %v3460 = vld [vmem:[#allocation2 + $0x200] sm:$0xff]
    %v3461 = vld [vmem:[#allocation2 + $0x208] sm:$0xff]
    %v3462 = vld [vmem:[#allocation2 + $0x210] sm:$0xff]
    %v3463 = vld [vmem:[#allocation2 + $0x218] sm:$0xff]
    %v3464 = vld [vmem:[#allocation2 + $0x220] sm:$0xff]
    %v3465 = vld [vmem:[#allocation2 + $0x228] sm:$0xff]
    %v3466 = vld [vmem:[#allocation2 + $0x230] sm:$0xff]
    %v3467 = vld [vmem:[#allocation2 + $0x238] sm:$0xff]
    %v3468 = vld [vmem:[#allocation2 + $0x240] sm:$0xff]
    %v3469 = vld [vmem:[#allocation2 + $0x248] sm:$0xff]
    %v3470 = vld [vmem:[#allocation2 + $0x250] sm:$0xff]
    %v3471 = vld [vmem:[#allocation2 + $0x258] sm:$0xff]
    %v3472 = vld [vmem:[#allocation2 + $0x260] sm:$0xff]
    %v3473 = vld [vmem:[#allocation2 + $0x268] sm:$0xff]
    %v3474 = vld [vmem:[#allocation2 + $0x270] sm:$0xff]
    %v3475 = vld [vmem:[#allocation2 + $0x278] sm:$0xff]
    %v3476 = vpack.c.bf16 %v3458, %v3456
    %v3477 = vpack.c.bf16 %v3459, %v3457
    %3478 = vmatprep.subr.bf16.mxu0 %v2111
    %3479 = vmatpush1.bf16.msra.mxu0 %v2110
    %3480 = vmatprep.subr.bf16.mxu0 %v2119
    %3481 = vmatpush1.bf16.msra.mxu0 %v2118
    %3482 = vmatprep.subr.bf16.mxu0 %v2127
    %3483 = vmatpush1.bf16.msra.mxu0 %v2126
    %3484 = vmatprep.subr.bf16.mxu0 %v2135
    %3485 = vmatpush1.bf16.msra.mxu0 %v2134
    %3486 = vmatprep.subr.bf16.mxu0 %v2143
    %3487 = vmatpush1.bf16.msra.mxu0 %v2142
    %3488 = vmatprep.subr.bf16.mxu0 %v2151
    %3489 = vmatpush1.bf16.msra.mxu0 %v2150
    %3490 = vmatprep.subr.bf16.mxu0 %v2159
    %3491 = vmatpush1.bf16.msra.mxu0 %v2158
    %3492 = vmatprep.subr.bf16.mxu0 %v2167
    %3493 = vmatpush1.bf16.msra.mxu0 %v2166
    %3494 = vmatprep.subr.bf16.mxu0 %v2175
    %3495 = vmatpush1.bf16.msra.mxu0 %v2174
    %3496 = vmatprep.subr.bf16.mxu0 %v2183
    %3497 = vmatpush1.bf16.msra.mxu0 %v2182
    %3498 = vmatprep.subr.bf16.mxu0 %v2191
    %3499 = vmatpush1.bf16.msra.mxu0 %v2190
    %3500 = vmatprep.subr.bf16.mxu0 %v2199
    %3501 = vmatpush1.bf16.msra.mxu0 %v2198
    %3502 = vmatprep.subr.bf16.mxu0 %v2207
    %3503 = vmatpush1.bf16.msra.mxu0 %v2206
    %3504 = vmatprep.subr.bf16.mxu0 %v2215
    %3505 = vmatpush1.bf16.msra.mxu0 %v2214
    %3506 = vmatprep.subr.bf16.mxu0 %v2223
    %3507 = vmatpush1.bf16.msra.mxu0 %v2222
    %3508 = vmatprep.subr.bf16.mxu0 %v2231
    %3509 = vmatpush1.bf16.msra.mxu0 %v2230
    %3510 = vmatprep.mubr.bf16.mxu0 %v3477
    %3511 = vmatmul.mubr.bf16.gmra.mrb[0].mxu0 %v3476
    %v3512 = vpop.f32.mrb[0].mxu0
    %v3513 = vadd.f32 0.0, %v3512
    %v3514 = vpop.f32.mrb[0].mxu0
    %v3515 = vadd.f32 0.0, %v3514
    %v3516 = vpop.f32.mrb[0].mxu0
    %v3517 = vadd.f32 0.0, %v3516
    %v3518 = vpop.f32.mrb[0].mxu0
    %v3519 = vadd.f32 0.0, %v3518
    %3520 = vdwg.mxu0
    %3521 = vmatprep.subr.bf16.mxu0 %v2113
    %3522 = vmatpush1.bf16.msra.mxu0 %v2112
    %3523 = vmatprep.subr.bf16.mxu0 %v2121
    %3524 = vmatpush1.bf16.msra.mxu0 %v2120
    %3525 = vmatprep.subr.bf16.mxu0 %v2129
    %3526 = vmatpush1.bf16.msra.mxu0 %v2128
    %3527 = vmatprep.subr.bf16.mxu0 %v2137
    %3528 = vmatpush1.bf16.msra.mxu0 %v2136
    %3529 = vmatprep.subr.bf16.mxu0 %v2145
    %3530 = vmatpush1.bf16.msra.mxu0 %v2144
    %3531 = vmatprep.subr.bf16.mxu0 %v2153
    %3532 = vmatpush1.bf16.msra.mxu0 %v2152
    %3533 = vmatprep.subr.bf16.mxu0 %v2161
    %3534 = vmatpush1.bf16.msra.mxu0 %v2160
    %3535 = vmatprep.subr.bf16.mxu0 %v2169
    %3536 = vmatpush1.bf16.msra.mxu0 %v2168
    %3537 = vmatprep.subr.bf16.mxu0 %v2177
    %3538 = vmatpush1.bf16.msra.mxu0 %v2176
    %3539 = vmatprep.subr.bf16.mxu0 %v2185
    %3540 = vmatpush1.bf16.msra.mxu0 %v2184
    %3541 = vmatprep.subr.bf16.mxu0 %v2193
    %3542 = vmatpush1.bf16.msra.mxu0 %v2192
    %3543 = vmatprep.subr.bf16.mxu0 %v2201
    %3544 = vmatpush1.bf16.msra.mxu0 %v2200
    %3545 = vmatprep.subr.bf16.mxu0 %v2209
    %3546 = vmatpush1.bf16.msra.mxu0 %v2208
    %3547 = vmatprep.subr.bf16.mxu0 %v2217
    %3548 = vmatpush1.bf16.msra.mxu0 %v2216
    %3549 = vmatprep.subr.bf16.mxu0 %v2225
    %3550 = vmatpush1.bf16.msra.mxu0 %v2224
    %3551 = vmatprep.subr.bf16.mxu0 %v2233
    %3552 = vmatpush1.bf16.msra.mxu0 %v2232
    %3553 = vmatprep.mubr.bf16.mxu0 %v3477
    %3554 = vmatmul.mubr.bf16.gmra.mrb[0].mxu0 %v3476
    %v3555 = vpop.f32.mrb[0].mxu0
    %v3556 = vadd.f32 0.0, %v3555
    %v3557 = vpop.f32.mrb[0].mxu0
    %v3558 = vadd.f32 0.0, %v3557
    %v3559 = vpop.f32.mrb[0].mxu0
    %v3560 = vadd.f32 0.0, %v3559
    %v3561 = vpop.f32.mrb[0].mxu0
    %v3562 = vadd.f32 0.0, %v3561
    %3563 = vdwg.mxu0
    %3564 = vmatprep.subr.bf16.mxu0 %v2115
    %3565 = vmatpush1.bf16.msra.mxu0 %v2114
    %3566 = vmatprep.subr.bf16.mxu0 %v2123
    %3567 = vmatpush1.bf16.msra.mxu0 %v2122
    %3568 = vmatprep.subr.bf16.mxu0 %v2131
    %3569 = vmatpush1.bf16.msra.mxu0 %v2130
    %3570 = vmatprep.subr.bf16.mxu0 %v2139
    %3571 = vmatpush1.bf16.msra.mxu0 %v2138
    %3572 = vmatprep.subr.bf16.mxu0 %v2147
    %3573 = vmatpush1.bf16.msra.mxu0 %v2146
    %3574 = vmatprep.subr.bf16.mxu0 %v2155
    %3575 = vmatpush1.bf16.msra.mxu0 %v2154
    %3576 = vmatprep.subr.bf16.mxu0 %v2163
    %3577 = vmatpush1.bf16.msra.mxu0 %v2162
    %3578 = vmatprep.subr.bf16.mxu0 %v2171
    %3579 = vmatpush1.bf16.msra.mxu0 %v2170
    %3580 = vmatprep.subr.bf16.mxu0 %v2179
    %3581 = vmatpush1.bf16.msra.mxu0 %v2178
    %3582 = vmatprep.subr.bf16.mxu0 %v2187
    %3583 = vmatpush1.bf16.msra.mxu0 %v2186
    %3584 = vmatprep.subr.bf16.mxu0 %v2195
    %3585 = vmatpush1.bf16.msra.mxu0 %v2194
    %3586 = vmatprep.subr.bf16.mxu0 %v2203
    %3587 = vmatpush1.bf16.msra.mxu0 %v2202
    %3588 = vmatprep.subr.bf16.mxu0 %v2211
    %3589 = vmatpush1.bf16.msra.mxu0 %v2210
    %3590 = vmatprep.subr.bf16.mxu0 %v2219
    %3591 = vmatpush1.bf16.msra.mxu0 %v2218
    %3592 = vmatprep.subr.bf16.mxu0 %v2227
    %3593 = vmatpush1.bf16.msra.mxu0 %v2226
    %3594 = vmatprep.subr.bf16.mxu0 %v2235
    %3595 = vmatpush1.bf16.msra.mxu0 %v2234
    %3596 = vmatprep.mubr.bf16.mxu0 %v3477
    %3597 = vmatmul.mubr.bf16.gmra.mrb[0].mxu0 %v3476
    %v3598 = vpop.f32.mrb[0].mxu0
    %v3599 = vadd.f32 0.0, %v3598
    %v3600 = vpop.f32.mrb[0].mxu0
    %v3601 = vadd.f32 0.0, %v3600
    %v3602 = vpop.f32.mrb[0].mxu0
    %v3603 = vadd.f32 0.0, %v3602
    %v3604 = vpop.f32.mrb[0].mxu0
    %v3605 = vadd.f32 0.0, %v3604
    %3606 = vdwg.mxu0
    %3607 = vmatprep.subr.bf16.mxu0 %v2117
    %3608 = vmatpush1.bf16.msra.mxu0 %v2116
    %3609 = vmatprep.subr.bf16.mxu0 %v2125
    %3610 = vmatpush1.bf16.msra.mxu0 %v2124
    %3611 = vmatprep.subr.bf16.mxu0 %v2133
    %3612 = vmatpush1.bf16.msra.mxu0 %v2132
    %3613 = vmatprep.subr.bf16.mxu0 %v2141
    %3614 = vmatpush1.bf16.msra.mxu0 %v2140
    %3615 = vmatprep.subr.bf16.mxu0 %v2149
    %3616 = vmatpush1.bf16.msra.mxu0 %v2148
    %3617 = vmatprep.subr.bf16.mxu0 %v2157
    %3618 = vmatpush1.bf16.msra.mxu0 %v2156
    %3619 = vmatprep.subr.bf16.mxu0 %v2165
    %3620 = vmatpush1.bf16.msra.mxu0 %v2164
    %3621 = vmatprep.subr.bf16.mxu0 %v2173
    %3622 = vmatpush1.bf16.msra.mxu0 %v2172
    %3623 = vmatprep.subr.bf16.mxu0 %v2181
    %3624 = vmatpush1.bf16.msra.mxu0 %v2180
    %3625 = vmatprep.subr.bf16.mxu0 %v2189
    %3626 = vmatpush1.bf16.msra.mxu0 %v2188
    %3627 = vmatprep.subr.bf16.mxu0 %v2197
    %3628 = vmatpush1.bf16.msra.mxu0 %v2196
    %3629 = vmatprep.subr.bf16.mxu0 %v2205
    %3630 = vmatpush1.bf16.msra.mxu0 %v2204
    %3631 = vmatprep.subr.bf16.mxu0 %v2213
    %3632 = vmatpush1.bf16.msra.mxu0 %v2212
    %3633 = vmatprep.subr.bf16.mxu0 %v2221
    %3634 = vmatpush1.bf16.msra.mxu0 %v2220
    %3635 = vmatprep.subr.bf16.mxu0 %v2229
    %3636 = vmatpush1.bf16.msra.mxu0 %v2228
    %3637 = vmatprep.subr.bf16.mxu0 %v2237
    %3638 = vmatpush1.bf16.msra.mxu0 %v2236
    %3639 = vmatprep.mubr.bf16.mxu0 %v3477
    %3640 = vmatmul.mubr.bf16.gmra.mrb[0].mxu0 %v3476
    %v3641 = vpop.f32.mrb[0].mxu0
    %v3642 = vadd.f32 0.0, %v3641
    %v3643 = vpop.f32.mrb[0].mxu0
    %v3644 = vadd.f32 0.0, %v3643
    %v3645 = vpop.f32.mrb[0].mxu0
    %v3646 = vadd.f32 0.0, %v3645
    %v3647 = vpop.f32.mrb[0].mxu0
    %v3648 = vadd.f32 0.0, %v3647
    %3649 = vdwg.mxu0
    %v3650 = vadd.f32 %v3460, %v3513
    %v3651 = vadd.f32 %v3461, %v3515
    %v3652 = vadd.f32 %v3462, %v3556
    %v3653 = vadd.f32 %v3463, %v3558
    %v3654 = vadd.f32 %v3464, %v3599
    %v3655 = vadd.f32 %v3465, %v3601
    %v3656 = vadd.f32 %v3466, %v3642
    %v3657 = vadd.f32 %v3467, %v3644
    %v3658 = vadd.f32 %v3468, %v3517
    %v3659 = vadd.f32 %v3469, %v3519
    %v3660 = vadd.f32 %v3470, %v3560
    %v3661 = vadd.f32 %v3471, %v3562
    %v3662 = vadd.f32 %v3472, %v3603
    %v3663 = vadd.f32 %v3473, %v3605
    %v3664 = vadd.f32 %v3474, %v3646
    %v3665 = vadd.f32 %v3475, %v3648
    %v3666 = vmul.f32 %v3650, 0.5
    %v3667 = vmul.f32 %v3651, 0.5
    %v3668 = vmul.f32 %v3658, 0.5
    %v3669 = vmul.f32 %v3659, 0.5
    %v3670 = vtanh.pop %v3666
    %v3671 = vtanh.pop %v3667
    %v3672 = vtanh.pop %v3668
    %v3673 = vtanh.pop %v3669
    %v3674 = vmul.f32 %v3670, 0.5
    %v3675 = vmul.f32 %v3671, 0.5
    %v3676 = vmul.f32 %v3672, 0.5
    %v3677 = vmul.f32 %v3673, 0.5
    %v3678 = vadd.f32 %v3674, 0.5
    %v3679 = vadd.f32 %v3675, 0.5
    %v3680 = vadd.f32 %v3676, 0.5
    %v3681 = vadd.f32 %v3677, 0.5
    %v3682 = vmul.f32 %v3652, 0.5
    %v3683 = vmul.f32 %v3653, 0.5
    %v3684 = vmul.f32 %v3660, 0.5
    %v3685 = vmul.f32 %v3661, 0.5
    %v3686 = vtanh.pop %v3682
    %v3687 = vtanh.pop %v3683
    %v3688 = vtanh.pop %v3684
    %v3689 = vtanh.pop %v3685
    %v3690 = vmul.f32 %v3686, 0.5
    %v3691 = vmul.f32 %v3687, 0.5
    %v3692 = vmul.f32 %v3688, 0.5
    %v3693 = vmul.f32 %v3689, 0.5
    %v3694 = vadd.f32 %v3690, 0.5
    %v3695 = vadd.f32 %v3691, 0.5
    %v3696 = vadd.f32 %v3692, 0.5
    %v3697 = vadd.f32 %v3693, 0.5
    %v3698 = vtanh.pop %v3654
    %v3699 = vtanh.pop %v3655
    %v3700 = vtanh.pop %v3662
    %v3701 = vtanh.pop %v3663
    %v3702 = vmul.f32 %v3656, 0.5
    %v3703 = vmul.f32 %v3657, 0.5
    %v3704 = vmul.f32 %v3664, 0.5
    %v3705 = vmul.f32 %v3665, 0.5
    %v3706 = vtanh.pop %v3702
    %v3707 = vtanh.pop %v3703
    %v3708 = vtanh.pop %v3704
    %v3709 = vtanh.pop %v3705
    %v3710 = vmul.f32 %v3706, 0.5
    %v3711 = vmul.f32 %v3707, 0.5
    %v3712 = vmul.f32 %v3708, 0.5
    %v3713 = vmul.f32 %v3709, 0.5
    %v3714 = vadd.f32 %v3710, 0.5
    %v3715 = vadd.f32 %v3711, 0.5
    %v3716 = vadd.f32 %v3712, 0.5
    %v3717 = vadd.f32 %v3713, 0.5
    %v3718 = vmul.f32 %v3694, %v3448
    %v3719 = vmul.f32 %v3695, %v3449
    %v3720 = vmul.f32 %v3696, %v3450
    %v3721 = vmul.f32 %v3697, %v3451
    %v3722 = vmul.f32 %v3678, %v3698
    %v3723 = vmul.f32 %v3679, %v3699
    %v3724 = vmul.f32 %v3680, %v3700
    %v3725 = vmul.f32 %v3681, %v3701
    %v3726 = vadd.f32 %v3718, %v3722
    %v3727 = vadd.f32 %v3719, %v3723
    %v3728 = vadd.f32 %v3720, %v3724
    %v3729 = vadd.f32 %v3721, %v3725
    %v3730 = vtanh.pop %v3726
    %v3731 = vtanh.pop %v3727
    %v3732 = vtanh.pop %v3728
    %v3733 = vtanh.pop %v3729
    %v3734 = vmul.f32 %v3714, %v3730
    %v3735 = vmul.f32 %v3715, %v3731
    %v3736 = vmul.f32 %v3716, %v3732
    %v3737 = vmul.f32 %v3717, %v3733
    %v3738 = vld [vmem:[#allocation2 + $0x280] sm:$0xff]
    %v3739 = vld [vmem:[#allocation2 + $0x288] sm:$0xff]
    %v3740 = vld [vmem:[#allocation2 + $0x290] sm:$0xff]
    %v3741 = vld [vmem:[#allocation2 + $0x298] sm:$0xff]
    %v3742 = vld [vmem:[#allocation2 + $0x2a0] sm:$0xff]
    %v3743 = vld [vmem:[#allocation2 + $0x2a8] sm:$0xff]
    %v3744 = vld [vmem:[#allocation2 + $0x2b0] sm:$0xff]
    %v3745 = vld [vmem:[#allocation2 + $0x2b8] sm:$0xff]
    %v3746 = vld [vmem:[#allocation2 + $0x2c0] sm:$0xff]
    %v3747 = vld [vmem:[#allocation2 + $0x2c8] sm:$0xff]
    %v3748 = vld [vmem:[#allocation2 + $0x2d0] sm:$0xff]
    %v3749 = vld [vmem:[#allocation2 + $0x2d8] sm:$0xff]
    %v3750 = vld [vmem:[#allocation2 + $0x2e0] sm:$0xff]
    %v3751 = vld [vmem:[#allocation2 + $0x2e8] sm:$0xff]
    %v3752 = vld [vmem:[#allocation2 + $0x2f0] sm:$0xff]
    %v3753 = vld [vmem:[#allocation2 + $0x2f8] sm:$0xff]
    %v3754 = vpack.c.bf16 %v3736, %v3734
    %v3755 = vpack.c.bf16 %v3737, %v3735
    %3756 = vmatprep.subr.bf16.mxu0 %v2111
    %3757 = vmatpush1.bf16.msra.mxu0 %v2110
    %3758 = vmatprep.subr.bf16.mxu0 %v2119
    %3759 = vmatpush1.bf16.msra.mxu0 %v2118
    %3760 = vmatprep.subr.bf16.mxu0 %v2127
    %3761 = vmatpush1.bf16.msra.mxu0 %v2126
    %3762 = vmatprep.subr.bf16.mxu0 %v2135
    %3763 = vmatpush1.bf16.msra.mxu0 %v2134
    %3764 = vmatprep.subr.bf16.mxu0 %v2143
    %3765 = vmatpush1.bf16.msra.mxu0 %v2142
    %3766 = vmatprep.subr.bf16.mxu0 %v2151
    %3767 = vmatpush1.bf16.msra.mxu0 %v2150
    %3768 = vmatprep.subr.bf16.mxu0 %v2159
    %3769 = vmatpush1.bf16.msra.mxu0 %v2158
    %3770 = vmatprep.subr.bf16.mxu0 %v2167
    %3771 = vmatpush1.bf16.msra.mxu0 %v2166
    %3772 = vmatprep.subr.bf16.mxu0 %v2175
    %3773 = vmatpush1.bf16.msra.mxu0 %v2174
    %3774 = vmatprep.subr.bf16.mxu0 %v2183
    %3775 = vmatpush1.bf16.msra.mxu0 %v2182
    %3776 = vmatprep.subr.bf16.mxu0 %v2191
    %3777 = vmatpush1.bf16.msra.mxu0 %v2190
    %3778 = vmatprep.subr.bf16.mxu0 %v2199
    %3779 = vmatpush1.bf16.msra.mxu0 %v2198
    %3780 = vmatprep.subr.bf16.mxu0 %v2207
    %3781 = vmatpush1.bf16.msra.mxu0 %v2206
    %3782 = vmatprep.subr.bf16.mxu0 %v2215
    %3783 = vmatpush1.bf16.msra.mxu0 %v2214
    %3784 = vmatprep.subr.bf16.mxu0 %v2223
    %3785 = vmatpush1.bf16.msra.mxu0 %v2222
    %3786 = vmatprep.subr.bf16.mxu0 %v2231
    %3787 = vmatpush1.bf16.msra.mxu0 %v2230
    %3788 = vmatprep.mubr.bf16.mxu0 %v3755
    %3789 = vmatmul.mubr.bf16.gmra.mrb[0].mxu0 %v3754
    %v3790 = vpop.f32.mrb[0].mxu0
    %v3791 = vadd.f32 0.0, %v3790
    %v3792 = vpop.f32.mrb[0].mxu0
    %v3793 = vadd.f32 0.0, %v3792
    %v3794 = vpop.f32.mrb[0].mxu0
    %v3795 = vadd.f32 0.0, %v3794
    %v3796 = vpop.f32.mrb[0].mxu0
    %v3797 = vadd.f32 0.0, %v3796
    %3798 = vdwg.mxu0
    %3799 = vmatprep.subr.bf16.mxu0 %v2113
    %3800 = vmatpush1.bf16.msra.mxu0 %v2112
    %3801 = vmatprep.subr.bf16.mxu0 %v2121
    %3802 = vmatpush1.bf16.msra.mxu0 %v2120
    %3803 = vmatprep.subr.bf16.mxu0 %v2129
    %3804 = vmatpush1.bf16.msra.mxu0 %v2128
    %3805 = vmatprep.subr.bf16.mxu0 %v2137
    %3806 = vmatpush1.bf16.msra.mxu0 %v2136
    %3807 = vmatprep.subr.bf16.mxu0 %v2145
    %3808 = vmatpush1.bf16.msra.mxu0 %v2144
    %3809 = vmatprep.subr.bf16.mxu0 %v2153
    %3810 = vmatpush1.bf16.msra.mxu0 %v2152
    %3811 = vmatprep.subr.bf16.mxu0 %v2161
    %3812 = vmatpush1.bf16.msra.mxu0 %v2160
    %3813 = vmatprep.subr.bf16.mxu0 %v2169
    %3814 = vmatpush1.bf16.msra.mxu0 %v2168
    %3815 = vmatprep.subr.bf16.mxu0 %v2177
    %3816 = vmatpush1.bf16.msra.mxu0 %v2176
    %3817 = vmatprep.subr.bf16.mxu0 %v2185
    %3818 = vmatpush1.bf16.msra.mxu0 %v2184
    %3819 = vmatprep.subr.bf16.mxu0 %v2193
    %3820 = vmatpush1.bf16.msra.mxu0 %v2192
    %3821 = vmatprep.subr.bf16.mxu0 %v2201
    %3822 = vmatpush1.bf16.msra.mxu0 %v2200
    %3823 = vmatprep.subr.bf16.mxu0 %v2209
    %3824 = vmatpush1.bf16.msra.mxu0 %v2208
    %3825 = vmatprep.subr.bf16.mxu0 %v2217
    %3826 = vmatpush1.bf16.msra.mxu0 %v2216
    %3827 = vmatprep.subr.bf16.mxu0 %v2225
    %3828 = vmatpush1.bf16.msra.mxu0 %v2224
    %3829 = vmatprep.subr.bf16.mxu0 %v2233
    %3830 = vmatpush1.bf16.msra.mxu0 %v2232
    %3831 = vmatprep.mubr.bf16.mxu0 %v3755
    %3832 = vmatmul.mubr.bf16.gmra.mrb[0].mxu0 %v3754
    %v3833 = vpop.f32.mrb[0].mxu0
    %v3834 = vadd.f32 0.0, %v3833
    %v3835 = vpop.f32.mrb[0].mxu0
    %v3836 = vadd.f32 0.0, %v3835
    %v3837 = vpop.f32.mrb[0].mxu0
    %v3838 = vadd.f32 0.0, %v3837
    %v3839 = vpop.f32.mrb[0].mxu0
    %v3840 = vadd.f32 0.0, %v3839
    %3841 = vdwg.mxu0
    %3842 = vmatprep.subr.bf16.mxu0 %v2115
    %3843 = vmatpush1.bf16.msra.mxu0 %v2114
    %3844 = vmatprep.subr.bf16.mxu0 %v2123
    %3845 = vmatpush1.bf16.msra.mxu0 %v2122
    %3846 = vmatprep.subr.bf16.mxu0 %v2131
    %3847 = vmatpush1.bf16.msra.mxu0 %v2130
    %3848 = vmatprep.subr.bf16.mxu0 %v2139
    %3849 = vmatpush1.bf16.msra.mxu0 %v2138
    %3850 = vmatprep.subr.bf16.mxu0 %v2147
    %3851 = vmatpush1.bf16.msra.mxu0 %v2146
    %3852 = vmatprep.subr.bf16.mxu0 %v2155
    %3853 = vmatpush1.bf16.msra.mxu0 %v2154
    %3854 = vmatprep.subr.bf16.mxu0 %v2163
    %3855 = vmatpush1.bf16.msra.mxu0 %v2162
    %3856 = vmatprep.subr.bf16.mxu0 %v2171
    %3857 = vmatpush1.bf16.msra.mxu0 %v2170
    %3858 = vmatprep.subr.bf16.mxu0 %v2179
    %3859 = vmatpush1.bf16.msra.mxu0 %v2178
    %3860 = vmatprep.subr.bf16.mxu0 %v2187
    %3861 = vmatpush1.bf16.msra.mxu0 %v2186
    %3862 = vmatprep.subr.bf16.mxu0 %v2195
    %3863 = vmatpush1.bf16.msra.mxu0 %v2194
    %3864 = vmatprep.subr.bf16.mxu0 %v2203
    %3865 = vmatpush1.bf16.msra.mxu0 %v2202
    %3866 = vmatprep.subr.bf16.mxu0 %v2211
    %3867 = vmatpush1.bf16.msra.mxu0 %v2210
    %3868 = vmatprep.subr.bf16.mxu0 %v2219
    %3869 = vmatpush1.bf16.msra.mxu0 %v2218
    %3870 = vmatprep.subr.bf16.mxu0 %v2227
    %3871 = vmatpush1.bf16.msra.mxu0 %v2226
    %3872 = vmatprep.subr.bf16.mxu0 %v2235
    %3873 = vmatpush1.bf16.msra.mxu0 %v2234
    %3874 = vmatprep.mubr.bf16.mxu0 %v3755
    %3875 = vmatmul.mubr.bf16.gmra.mrb[0].mxu0 %v3754
    %v3876 = vpop.f32.mrb[0].mxu0
    %v3877 = vadd.f32 0.0, %v3876
    %v3878 = vpop.f32.mrb[0].mxu0
    %v3879 = vadd.f32 0.0, %v3878
    %v3880 = vpop.f32.mrb[0].mxu0
    %v3881 = vadd.f32 0.0, %v3880
    %v3882 = vpop.f32.mrb[0].mxu0
    %v3883 = vadd.f32 0.0, %v3882
    %3884 = vdwg.mxu0
    %3885 = vmatprep.subr.bf16.mxu0 %v2117
    %3886 = vmatpush1.bf16.msra.mxu0 %v2116
    %3887 = vmatprep.subr.bf16.mxu0 %v2125
    %3888 = vmatpush1.bf16.msra.mxu0 %v2124
    %3889 = vmatprep.subr.bf16.mxu0 %v2133
    %3890 = vmatpush1.bf16.msra.mxu0 %v2132
    %3891 = vmatprep.subr.bf16.mxu0 %v2141
    %3892 = vmatpush1.bf16.msra.mxu0 %v2140
    %3893 = vmatprep.subr.bf16.mxu0 %v2149
    %3894 = vmatpush1.bf16.msra.mxu0 %v2148
    %3895 = vmatprep.subr.bf16.mxu0 %v2157
    %3896 = vmatpush1.bf16.msra.mxu0 %v2156
    %3897 = vmatprep.subr.bf16.mxu0 %v2165
    %3898 = vmatpush1.bf16.msra.mxu0 %v2164
    %3899 = vmatprep.subr.bf16.mxu0 %v2173
    %3900 = vmatpush1.bf16.msra.mxu0 %v2172
    %3901 = vmatprep.subr.bf16.mxu0 %v2181
    %3902 = vmatpush1.bf16.msra.mxu0 %v2180
    %3903 = vmatprep.subr.bf16.mxu0 %v2189
    %3904 = vmatpush1.bf16.msra.mxu0 %v2188
    %3905 = vmatprep.subr.bf16.mxu0 %v2197
    %3906 = vmatpush1.bf16.msra.mxu0 %v2196
    %3907 = vmatprep.subr.bf16.mxu0 %v2205
    %3908 = vmatpush1.bf16.msra.mxu0 %v2204
    %3909 = vmatprep.subr.bf16.mxu0 %v2213
    %3910 = vmatpush1.bf16.msra.mxu0 %v2212
    %3911 = vmatprep.subr.bf16.mxu0 %v2221
    %3912 = vmatpush1.bf16.msra.mxu0 %v2220
    %3913 = vmatprep.subr.bf16.mxu0 %v2229
    %3914 = vmatpush1.bf16.msra.mxu0 %v2228
    %3915 = vmatprep.subr.bf16.mxu0 %v2237
    %3916 = vmatpush1.bf16.msra.mxu0 %v2236
    %3917 = vmatprep.mubr.bf16.mxu0 %v3755
    %3918 = vmatmul.mubr.bf16.gmra.mrb[0].mxu0 %v3754
    %v3919 = vpop.f32.mrb[0].mxu0
    %v3920 = vadd.f32 0.0, %v3919
    %v3921 = vpop.f32.mrb[0].mxu0
    %v3922 = vadd.f32 0.0, %v3921
    %v3923 = vpop.f32.mrb[0].mxu0
    %v3924 = vadd.f32 0.0, %v3923
    %v3925 = vpop.f32.mrb[0].mxu0
    %v3926 = vadd.f32 0.0, %v3925
    %3927 = vdwg.mxu0
    %v3928 = vadd.f32 %v3738, %v3791
    %v3929 = vadd.f32 %v3739, %v3793
    %v3930 = vadd.f32 %v3740, %v3834
    %v3931 = vadd.f32 %v3741, %v3836
    %v3932 = vadd.f32 %v3742, %v3877
    %v3933 = vadd.f32 %v3743, %v3879
    %v3934 = vadd.f32 %v3744, %v3920
    %v3935 = vadd.f32 %v3745, %v3922
    %v3936 = vadd.f32 %v3746, %v3795
    %v3937 = vadd.f32 %v3747, %v3797
    %v3938 = vadd.f32 %v3748, %v3838
    %v3939 = vadd.f32 %v3749, %v3840
    %v3940 = vadd.f32 %v3750, %v3881
    %v3941 = vadd.f32 %v3751, %v3883
    %v3942 = vadd.f32 %v3752, %v3924
    %v3943 = vadd.f32 %v3753, %v3926
    %v3944 = vmul.f32 %v3928, 0.5
    %v3945 = vmul.f32 %v3929, 0.5
    %v3946 = vmul.f32 %v3936, 0.5
    %v3947 = vmul.f32 %v3937, 0.5
    %v3948 = vtanh.pop %v3944
    %v3949 = vtanh.pop %v3945
    %v3950 = vtanh.pop %v3946
    %v3951 = vtanh.pop %v3947
    %v3952 = vmul.f32 %v3948, 0.5
    %v3953 = vmul.f32 %v3949, 0.5
    %v3954 = vmul.f32 %v3950, 0.5
    %v3955 = vmul.f32 %v3951, 0.5
    %v3956 = vadd.f32 %v3952, 0.5
    %v3957 = vadd.f32 %v3953, 0.5
    %v3958 = vadd.f32 %v3954, 0.5
    %v3959 = vadd.f32 %v3955, 0.5
    %v3960 = vmul.f32 %v3930, 0.5
    %v3961 = vmul.f32 %v3931, 0.5
    %v3962 = vmul.f32 %v3938, 0.5
    %v3963 = vmul.f32 %v3939, 0.5
    %v3964 = vtanh.pop %v3960
    %v3965 = vtanh.pop %v3961
    %v3966 = vtanh.pop %v3962
    %v3967 = vtanh.pop %v3963
    %v3968 = vmul.f32 %v3964, 0.5
    %v3969 = vmul.f32 %v3965, 0.5
    %v3970 = vmul.f32 %v3966, 0.5
    %v3971 = vmul.f32 %v3967, 0.5
    %v3972 = vadd.f32 %v3968, 0.5
    %v3973 = vadd.f32 %v3969, 0.5
    %v3974 = vadd.f32 %v3970, 0.5
    %v3975 = vadd.f32 %v3971, 0.5
    %v3976 = vtanh.pop %v3932
    %v3977 = vtanh.pop %v3933
    %v3978 = vtanh.pop %v3940
    %v3979 = vtanh.pop %v3941
    %v3980 = vmul.f32 %v3934, 0.5
    %v3981 = vmul.f32 %v3935, 0.5
    %v3982 = vmul.f32 %v3942, 0.5
    %v3983 = vmul.f32 %v3943, 0.5
    %v3984 = vtanh.pop %v3980
    %v3985 = vtanh.pop %v3981
    %v3986 = vtanh.pop %v3982
    %v3987 = vtanh.pop %v3983
    %v3988 = vmul.f32 %v3984, 0.5
    %v3989 = vmul.f32 %v3985, 0.5
    %v3990 = vmul.f32 %v3986, 0.5
    %v3991 = vmul.f32 %v3987, 0.5
    %v3992 = vadd.f32 %v3988, 0.5
    %v3993 = vadd.f32 %v3989, 0.5
    %v3994 = vadd.f32 %v3990, 0.5
    %v3995 = vadd.f32 %v3991, 0.5
    %v3996 = vmul.f32 %v3972, %v3726
    %v3997 = vmul.f32 %v3973, %v3727
    %v3998 = vmul.f32 %v3974, %v3728
    %v3999 = vmul.f32 %v3975, %v3729
    %v4000 = vmul.f32 %v3956, %v3976
    %v4001 = vmul.f32 %v3957, %v3977
    %v4002 = vmul.f32 %v3958, %v3978
    %v4003 = vmul.f32 %v3959, %v3979
    %v4004 = vadd.f32 %v3996, %v4000
    %v4005 = vadd.f32 %v3997, %v4001
    %v4006 = vadd.f32 %v3998, %v4002
    %v4007 = vadd.f32 %v3999, %v4003
    %v4008 = vtanh.pop %v4004
    %v4009 = vtanh.pop %v4005
    %v4010 = vtanh.pop %v4006
    %v4011 = vtanh.pop %v4007
    %v4012 = vmul.f32 %v3992, %v4008
    %v4013 = vmul.f32 %v3993, %v4009
    %v4014 = vmul.f32 %v3994, %v4010
    %v4015 = vmul.f32 %v3995, %v4011
    %v4016 = vld [vmem:[#allocation2 + $0x300] sm:$0xff]
    %v4017 = vld [vmem:[#allocation2 + $0x308] sm:$0xff]
    %v4018 = vld [vmem:[#allocation2 + $0x310] sm:$0xff]
    %v4019 = vld [vmem:[#allocation2 + $0x318] sm:$0xff]
    %v4020 = vld [vmem:[#allocation2 + $0x320] sm:$0xff]
    %v4021 = vld [vmem:[#allocation2 + $0x328] sm:$0xff]
    %v4022 = vld [vmem:[#allocation2 + $0x330] sm:$0xff]
    %v4023 = vld [vmem:[#allocation2 + $0x338] sm:$0xff]
    %v4024 = vld [vmem:[#allocation2 + $0x340] sm:$0xff]
    %v4025 = vld [vmem:[#allocation2 + $0x348] sm:$0xff]
    %v4026 = vld [vmem:[#allocation2 + $0x350] sm:$0xff]
    %v4027 = vld [vmem:[#allocation2 + $0x358] sm:$0xff]
    %v4028 = vld [vmem:[#allocation2 + $0x360] sm:$0xff]
    %v4029 = vld [vmem:[#allocation2 + $0x368] sm:$0xff]
    %v4030 = vld [vmem:[#allocation2 + $0x370] sm:$0xff]
    %v4031 = vld [vmem:[#allocation2 + $0x378] sm:$0xff]
    %v4032 = vpack.c.bf16 %v4014, %v4012
    %v4033 = vpack.c.bf16 %v4015, %v4013
    %4034 = vmatprep.subr.bf16.mxu0 %v2111
    %4035 = vmatpush1.bf16.msra.mxu0 %v2110
    %4036 = vmatprep.subr.bf16.mxu0 %v2119
    %4037 = vmatpush1.bf16.msra.mxu0 %v2118
    %4038 = vmatprep.subr.bf16.mxu0 %v2127
    %4039 = vmatpush1.bf16.msra.mxu0 %v2126
    %4040 = vmatprep.subr.bf16.mxu0 %v2135
    %4041 = vmatpush1.bf16.msra.mxu0 %v2134
    %4042 = vmatprep.subr.bf16.mxu0 %v2143
    %4043 = vmatpush1.bf16.msra.mxu0 %v2142
    %4044 = vmatprep.subr.bf16.mxu0 %v2151
    %4045 = vmatpush1.bf16.msra.mxu0 %v2150
    %4046 = vmatprep.subr.bf16.mxu0 %v2159
    %4047 = vmatpush1.bf16.msra.mxu0 %v2158
    %4048 = vmatprep.subr.bf16.mxu0 %v2167
    %4049 = vmatpush1.bf16.msra.mxu0 %v2166
    %4050 = vmatprep.subr.bf16.mxu0 %v2175
    %4051 = vmatpush1.bf16.msra.mxu0 %v2174
    %4052 = vmatprep.subr.bf16.mxu0 %v2183
    %4053 = vmatpush1.bf16.msra.mxu0 %v2182
    %4054 = vmatprep.subr.bf16.mxu0 %v2191
    %4055 = vmatpush1.bf16.msra.mxu0 %v2190
    %4056 = vmatprep.subr.bf16.mxu0 %v2199
    %4057 = vmatpush1.bf16.msra.mxu0 %v2198
    %4058 = vmatprep.subr.bf16.mxu0 %v2207
    %4059 = vmatpush1.bf16.msra.mxu0 %v2206
    %4060 = vmatprep.subr.bf16.mxu0 %v2215
    %4061 = vmatpush1.bf16.msra.mxu0 %v2214
    %4062 = vmatprep.subr.bf16.mxu0 %v2223
    %4063 = vmatpush1.bf16.msra.mxu0 %v2222
    %4064 = vmatprep.subr.bf16.mxu0 %v2231
    %4065 = vmatpush1.bf16.msra.mxu0 %v2230
    %4066 = vmatprep.mubr.bf16.mxu0 %v4033
    %4067 = vmatmul.mubr.bf16.gmra.mrb[0].mxu0 %v4032
    %v4068 = vpop.f32.mrb[0].mxu0
    %v4069 = vadd.f32 0.0, %v4068
    %v4070 = vpop.f32.mrb[0].mxu0
    %v4071 = vadd.f32 0.0, %v4070
    %v4072 = vpop.f32.mrb[0].mxu0
    %v4073 = vadd.f32 0.0, %v4072
    %v4074 = vpop.f32.mrb[0].mxu0
    %v4075 = vadd.f32 0.0, %v4074
    %4076 = vdwg.mxu0
    %4077 = vmatprep.subr.bf16.mxu0 %v2113
    %4078 = vmatpush1.bf16.msra.mxu0 %v2112
    %4079 = vmatprep.subr.bf16.mxu0 %v2121
    %4080 = vmatpush1.bf16.msra.mxu0 %v2120
    %4081 = vmatprep.subr.bf16.mxu0 %v2129
    %4082 = vmatpush1.bf16.msra.mxu0 %v2128
    %4083 = vmatprep.subr.bf16.mxu0 %v2137
    %4084 = vmatpush1.bf16.msra.mxu0 %v2136
    %4085 = vmatprep.subr.bf16.mxu0 %v2145
    %4086 = vmatpush1.bf16.msra.mxu0 %v2144
    %4087 = vmatprep.subr.bf16.mxu0 %v2153
    %4088 = vmatpush1.bf16.msra.mxu0 %v2152
    %4089 = vmatprep.subr.bf16.mxu0 %v2161
    %4090 = vmatpush1.bf16.msra.mxu0 %v2160
    %4091 = vmatprep.subr.bf16.mxu0 %v2169
    %4092 = vmatpush1.bf16.msra.mxu0 %v2168
    %4093 = vmatprep.subr.bf16.mxu0 %v2177
    %4094 = vmatpush1.bf16.msra.mxu0 %v2176
    %4095 = vmatprep.subr.bf16.mxu0 %v2185
    %4096 = vmatpush1.bf16.msra.mxu0 %v2184
    %4097 = vmatprep.subr.bf16.mxu0 %v2193
    %4098 = vmatpush1.bf16.msra.mxu0 %v2192
    %4099 = vmatprep.subr.bf16.mxu0 %v2201
    %4100 = vmatpush1.bf16.msra.mxu0 %v2200
    %4101 = vmatprep.subr.bf16.mxu0 %v2209
    %4102 = vmatpush1.bf16.msra.mxu0 %v2208
    %4103 = vmatprep.subr.bf16.mxu0 %v2217
    %4104 = vmatpush1.bf16.msra.mxu0 %v2216
    %4105 = vmatprep.subr.bf16.mxu0 %v2225
    %4106 = vmatpush1.bf16.msra.mxu0 %v2224
    %4107 = vmatprep.subr.bf16.mxu0 %v2233
    %4108 = vmatpush1.bf16.msra.mxu0 %v2232
    %4109 = vmatprep.mubr.bf16.mxu0 %v4033
    %4110 = vmatmul.mubr.bf16.gmra.mrb[0].mxu0 %v4032
    %v4111 = vpop.f32.mrb[0].mxu0
    %v4112 = vadd.f32 0.0, %v4111
    %v4113 = vpop.f32.mrb[0].mxu0
    %v4114 = vadd.f32 0.0, %v4113
    %v4115 = vpop.f32.mrb[0].mxu0
    %v4116 = vadd.f32 0.0, %v4115
    %v4117 = vpop.f32.mrb[0].mxu0
    %v4118 = vadd.f32 0.0, %v4117
    %4119 = vdwg.mxu0
    %4120 = vmatprep.subr.bf16.mxu0 %v2115
    %4121 = vmatpush1.bf16.msra.mxu0 %v2114
    %4122 = vmatprep.subr.bf16.mxu0 %v2123
    %4123 = vmatpush1.bf16.msra.mxu0 %v2122
    %4124 = vmatprep.subr.bf16.mxu0 %v2131
    %4125 = vmatpush1.bf16.msra.mxu0 %v2130
    %4126 = vmatprep.subr.bf16.mxu0 %v2139
    %4127 = vmatpush1.bf16.msra.mxu0 %v2138
    %4128 = vmatprep.subr.bf16.mxu0 %v2147
    %4129 = vmatpush1.bf16.msra.mxu0 %v2146
    %4130 = vmatprep.subr.bf16.mxu0 %v2155
    %4131 = vmatpush1.bf16.msra.mxu0 %v2154
    %4132 = vmatprep.subr.bf16.mxu0 %v2163
    %4133 = vmatpush1.bf16.msra.mxu0 %v2162
    %4134 = vmatprep.subr.bf16.mxu0 %v2171
    %4135 = vmatpush1.bf16.msra.mxu0 %v2170
    %4136 = vmatprep.subr.bf16.mxu0 %v2179
    %4137 = vmatpush1.bf16.msra.mxu0 %v2178
    %4138 = vmatprep.subr.bf16.mxu0 %v2187
    %4139 = vmatpush1.bf16.msra.mxu0 %v2186
    %4140 = vmatprep.subr.bf16.mxu0 %v2195
    %4141 = vmatpush1.bf16.msra.mxu0 %v2194
    %4142 = vmatprep.subr.bf16.mxu0 %v2203
    %4143 = vmatpush1.bf16.msra.mxu0 %v2202
    %4144 = vmatprep.subr.bf16.mxu0 %v2211
    %4145 = vmatpush1.bf16.msra.mxu0 %v2210
    %4146 = vmatprep.subr.bf16.mxu0 %v2219
    %4147 = vmatpush1.bf16.msra.mxu0 %v2218
    %4148 = vmatprep.subr.bf16.mxu0 %v2227
    %4149 = vmatpush1.bf16.msra.mxu0 %v2226
    %4150 = vmatprep.subr.bf16.mxu0 %v2235
    %4151 = vmatpush1.bf16.msra.mxu0 %v2234
    %4152 = vmatprep.mubr.bf16.mxu0 %v4033
    %4153 = vmatmul.mubr.bf16.gmra.mrb[0].mxu0 %v4032
    %v4154 = vpop.f32.mrb[0].mxu0
    %v4155 = vadd.f32 0.0, %v4154
    %v4156 = vpop.f32.mrb[0].mxu0
    %v4157 = vadd.f32 0.0, %v4156
    %v4158 = vpop.f32.mrb[0].mxu0
    %v4159 = vadd.f32 0.0, %v4158
    %v4160 = vpop.f32.mrb[0].mxu0
    %v4161 = vadd.f32 0.0, %v4160
    %4162 = vdwg.mxu0
    %4163 = vmatprep.subr.bf16.mxu0 %v2117
    %4164 = vmatpush1.bf16.msra.mxu0 %v2116
    %4165 = vmatprep.subr.bf16.mxu0 %v2125
    %4166 = vmatpush1.bf16.msra.mxu0 %v2124
    %4167 = vmatprep.subr.bf16.mxu0 %v2133
    %4168 = vmatpush1.bf16.msra.mxu0 %v2132
    %4169 = vmatprep.subr.bf16.mxu0 %v2141
    %4170 = vmatpush1.bf16.msra.mxu0 %v2140
    %4171 = vmatprep.subr.bf16.mxu0 %v2149
    %4172 = vmatpush1.bf16.msra.mxu0 %v2148
    %4173 = vmatprep.subr.bf16.mxu0 %v2157
    %4174 = vmatpush1.bf16.msra.mxu0 %v2156
    %4175 = vmatprep.subr.bf16.mxu0 %v2165
    %4176 = vmatpush1.bf16.msra.mxu0 %v2164
    %4177 = vmatprep.subr.bf16.mxu0 %v2173
    %4178 = vmatpush1.bf16.msra.mxu0 %v2172
    %4179 = vmatprep.subr.bf16.mxu0 %v2181
    %4180 = vmatpush1.bf16.msra.mxu0 %v2180
    %4181 = vmatprep.subr.bf16.mxu0 %v2189
    %4182 = vmatpush1.bf16.msra.mxu0 %v2188
    %4183 = vmatprep.subr.bf16.mxu0 %v2197
    %4184 = vmatpush1.bf16.msra.mxu0 %v2196
    %4185 = vmatprep.subr.bf16.mxu0 %v2205
    %4186 = vmatpush1.bf16.msra.mxu0 %v2204
    %4187 = vmatprep.subr.bf16.mxu0 %v2213
    %4188 = vmatpush1.bf16.msra.mxu0 %v2212
    %4189 = vmatprep.subr.bf16.mxu0 %v2221
    %4190 = vmatpush1.bf16.msra.mxu0 %v2220
    %4191 = vmatprep.subr.bf16.mxu0 %v2229
    %4192 = vmatpush1.bf16.msra.mxu0 %v2228
    %4193 = vmatprep.subr.bf16.mxu0 %v2237
    %4194 = vmatpush1.bf16.msra.mxu0 %v2236
    %4195 = vmatprep.mubr.bf16.mxu0 %v4033
    %4196 = vmatmul.mubr.bf16.gmra.mrb[0].mxu0 %v4032
    %v4197 = vpop.f32.mrb[0].mxu0
    %v4198 = vadd.f32 0.0, %v4197
    %v4199 = vpop.f32.mrb[0].mxu0
    %v4200 = vadd.f32 0.0, %v4199
    %v4201 = vpop.f32.mrb[0].mxu0
    %v4202 = vadd.f32 0.0, %v4201
    %v4203 = vpop.f32.mrb[0].mxu0
    %v4204 = vadd.f32 0.0, %v4203
    %4205 = vdwg.mxu0
    %v4206 = vadd.f32 %v4016, %v4069
    %v4207 = vadd.f32 %v4017, %v4071
    %v4208 = vadd.f32 %v4018, %v4112
    %v4209 = vadd.f32 %v4019, %v4114
    %v4210 = vadd.f32 %v4020, %v4155
    %v4211 = vadd.f32 %v4021, %v4157
    %v4212 = vadd.f32 %v4022, %v4198
    %v4213 = vadd.f32 %v4023, %v4200
    %v4214 = vadd.f32 %v4024, %v4073
    %v4215 = vadd.f32 %v4025, %v4075
    %v4216 = vadd.f32 %v4026, %v4116
    %v4217 = vadd.f32 %v4027, %v4118
    %v4218 = vadd.f32 %v4028, %v4159
    %v4219 = vadd.f32 %v4029, %v4161
    %v4220 = vadd.f32 %v4030, %v4202
    %v4221 = vadd.f32 %v4031, %v4204
    %v4222 = vmul.f32 %v4206, 0.5
    %v4223 = vmul.f32 %v4207, 0.5
    %v4224 = vmul.f32 %v4214, 0.5
    %v4225 = vmul.f32 %v4215, 0.5
    %v4226 = vtanh.pop %v4222
    %v4227 = vtanh.pop %v4223
    %v4228 = vtanh.pop %v4224
    %v4229 = vtanh.pop %v4225
    %v4230 = vmul.f32 %v4226, 0.5
    %v4231 = vmul.f32 %v4227, 0.5
    %v4232 = vmul.f32 %v4228, 0.5
    %v4233 = vmul.f32 %v4229, 0.5
    %v4234 = vadd.f32 %v4230, 0.5
    %v4235 = vadd.f32 %v4231, 0.5
    %v4236 = vadd.f32 %v4232, 0.5
    %v4237 = vadd.f32 %v4233, 0.5
    %v4238 = vmul.f32 %v4208, 0.5
    %v4239 = vmul.f32 %v4209, 0.5
    %v4240 = vmul.f32 %v4216, 0.5
    %v4241 = vmul.f32 %v4217, 0.5
    %v4242 = vtanh.pop %v4238
    %v4243 = vtanh.pop %v4239
    %v4244 = vtanh.pop %v4240
    %v4245 = vtanh.pop %v4241
    %v4246 = vmul.f32 %v4242, 0.5
    %v4247 = vmul.f32 %v4243, 0.5
    %v4248 = vmul.f32 %v4244, 0.5
    %v4249 = vmul.f32 %v4245, 0.5
    %v4250 = vadd.f32 %v4246, 0.5
    %v4251 = vadd.f32 %v4247, 0.5
    %v4252 = vadd.f32 %v4248, 0.5
    %v4253 = vadd.f32 %v4249, 0.5
    %v4254 = vtanh.pop %v4210
    %v4255 = vtanh.pop %v4211
    %v4256 = vtanh.pop %v4218
    %v4257 = vtanh.pop %v4219
    %v4258 = vmul.f32 %v4212, 0.5
    %v4259 = vmul.f32 %v4213, 0.5
    %v4260 = vmul.f32 %v4220, 0.5
    %v4261 = vmul.f32 %v4221, 0.5
    %v4262 = vtanh.pop %v4258
    %v4263 = vtanh.pop %v4259
    %v4264 = vtanh.pop %v4260
    %v4265 = vtanh.pop %v4261
    %v4266 = vmul.f32 %v4262, 0.5
    %v4267 = vmul.f32 %v4263, 0.5
    %v4268 = vmul.f32 %v4264, 0.5
    %v4269 = vmul.f32 %v4265, 0.5
    %v4270 = vadd.f32 %v4266, 0.5
    %v4271 = vadd.f32 %v4267, 0.5
    %v4272 = vadd.f32 %v4268, 0.5
    %v4273 = vadd.f32 %v4269, 0.5
    %v4274 = vmul.f32 %v4250, %v4004
    %v4275 = vmul.f32 %v4251, %v4005
    %v4276 = vmul.f32 %v4252, %v4006
    %v4277 = vmul.f32 %v4253, %v4007
    %v4278 = vmul.f32 %v4234, %v4254
    %v4279 = vmul.f32 %v4235, %v4255
    %v4280 = vmul.f32 %v4236, %v4256
    %v4281 = vmul.f32 %v4237, %v4257
    %v4282 = vadd.f32 %v4274, %v4278
    %v4283 = vadd.f32 %v4275, %v4279
    %v4284 = vadd.f32 %v4276, %v4280
    %v4285 = vadd.f32 %v4277, %v4281
    %v4286 = vtanh.pop %v4282
    %v4287 = vtanh.pop %v4283
    %v4288 = vtanh.pop %v4284
    %v4289 = vtanh.pop %v4285
    %v4290 = vmul.f32 %v4270, %v4286
    %v4291 = vmul.f32 %v4271, %v4287
    %v4292 = vmul.f32 %v4272, %v4288
    %v4293 = vmul.f32 %v4273, %v4289
    %v4294 = vld [vmem:[#allocation2 + $0x380] sm:$0xff]
    %v4295 = vld [vmem:[#allocation2 + $0x388] sm:$0xff]
    %v4296 = vld [vmem:[#allocation2 + $0x390] sm:$0xff]
    %v4297 = vld [vmem:[#allocation2 + $0x398] sm:$0xff]
    %v4298 = vld [vmem:[#allocation2 + $0x3a0] sm:$0xff]
    %v4299 = vld [vmem:[#allocation2 + $0x3a8] sm:$0xff]
    %v4300 = vld [vmem:[#allocation2 + $0x3b0] sm:$0xff]
    %v4301 = vld [vmem:[#allocation2 + $0x3b8] sm:$0xff]
    %v4302 = vld [vmem:[#allocation2 + $0x3c0] sm:$0xff]
    %v4303 = vld [vmem:[#allocation2 + $0x3c8] sm:$0xff]
    %v4304 = vld [vmem:[#allocation2 + $0x3d0] sm:$0xff]
    %v4305 = vld [vmem:[#allocation2 + $0x3d8] sm:$0xff]
    %v4306 = vld [vmem:[#allocation2 + $0x3e0] sm:$0xff]
    %v4307 = vld [vmem:[#allocation2 + $0x3e8] sm:$0xff]
    %v4308 = vld [vmem:[#allocation2 + $0x3f0] sm:$0xff]
    %v4309 = vld [vmem:[#allocation2 + $0x3f8] sm:$0xff]
    %v4310 = vpack.c.bf16 %v4292, %v4290
    %v4311 = vpack.c.bf16 %v4293, %v4291
    %4312 = vmatprep.subr.bf16.mxu0 %v2111
    %4313 = vmatpush1.bf16.msra.mxu0 %v2110
    %4314 = vmatprep.subr.bf16.mxu0 %v2119
    %4315 = vmatpush1.bf16.msra.mxu0 %v2118
    %4316 = vmatprep.subr.bf16.mxu0 %v2127
    %4317 = vmatpush1.bf16.msra.mxu0 %v2126
    %4318 = vmatprep.subr.bf16.mxu0 %v2135
    %4319 = vmatpush1.bf16.msra.mxu0 %v2134
    %4320 = vmatprep.subr.bf16.mxu0 %v2143
    %4321 = vmatpush1.bf16.msra.mxu0 %v2142
    %4322 = vmatprep.subr.bf16.mxu0 %v2151
    %4323 = vmatpush1.bf16.msra.mxu0 %v2150
    %4324 = vmatprep.subr.bf16.mxu0 %v2159
    %4325 = vmatpush1.bf16.msra.mxu0 %v2158
    %4326 = vmatprep.subr.bf16.mxu0 %v2167
    %4327 = vmatpush1.bf16.msra.mxu0 %v2166
    %4328 = vmatprep.subr.bf16.mxu0 %v2175
    %4329 = vmatpush1.bf16.msra.mxu0 %v2174
    %4330 = vmatprep.subr.bf16.mxu0 %v2183
    %4331 = vmatpush1.bf16.msra.mxu0 %v2182
    %4332 = vmatprep.subr.bf16.mxu0 %v2191
    %4333 = vmatpush1.bf16.msra.mxu0 %v2190
    %4334 = vmatprep.subr.bf16.mxu0 %v2199
    %4335 = vmatpush1.bf16.msra.mxu0 %v2198
    %4336 = vmatprep.subr.bf16.mxu0 %v2207
    %4337 = vmatpush1.bf16.msra.mxu0 %v2206
    %4338 = vmatprep.subr.bf16.mxu0 %v2215
    %4339 = vmatpush1.bf16.msra.mxu0 %v2214
    %4340 = vmatprep.subr.bf16.mxu0 %v2223
    %4341 = vmatpush1.bf16.msra.mxu0 %v2222
    %4342 = vmatprep.subr.bf16.mxu0 %v2231
    %4343 = vmatpush1.bf16.msra.mxu0 %v2230
    %4344 = vmatprep.mubr.bf16.mxu0 %v4311
    %4345 = vmatmul.mubr.bf16.gmra.mrb[0].mxu0 %v4310
    %v4346 = vpop.f32.mrb[0].mxu0
    %v4347 = vadd.f32 0.0, %v4346
    %v4348 = vpop.f32.mrb[0].mxu0
    %v4349 = vadd.f32 0.0, %v4348
    %v4350 = vpop.f32.mrb[0].mxu0
    %v4351 = vadd.f32 0.0, %v4350
    %v4352 = vpop.f32.mrb[0].mxu0
    %v4353 = vadd.f32 0.0, %v4352
    %4354 = vdwg.mxu0
    %4355 = vmatprep.subr.bf16.mxu0 %v2113
    %4356 = vmatpush1.bf16.msra.mxu0 %v2112
    %4357 = vmatprep.subr.bf16.mxu0 %v2121
    %4358 = vmatpush1.bf16.msra.mxu0 %v2120
    %4359 = vmatprep.subr.bf16.mxu0 %v2129
    %4360 = vmatpush1.bf16.msra.mxu0 %v2128
    %4361 = vmatprep.subr.bf16.mxu0 %v2137
    %4362 = vmatpush1.bf16.msra.mxu0 %v2136
    %4363 = vmatprep.subr.bf16.mxu0 %v2145
    %4364 = vmatpush1.bf16.msra.mxu0 %v2144
    %4365 = vmatprep.subr.bf16.mxu0 %v2153
    %4366 = vmatpush1.bf16.msra.mxu0 %v2152
    %4367 = vmatprep.subr.bf16.mxu0 %v2161
    %4368 = vmatpush1.bf16.msra.mxu0 %v2160
    %4369 = vmatprep.subr.bf16.mxu0 %v2169
    %4370 = vmatpush1.bf16.msra.mxu0 %v2168
    %4371 = vmatprep.subr.bf16.mxu0 %v2177
    %4372 = vmatpush1.bf16.msra.mxu0 %v2176
    %4373 = vmatprep.subr.bf16.mxu0 %v2185
    %4374 = vmatpush1.bf16.msra.mxu0 %v2184
    %4375 = vmatprep.subr.bf16.mxu0 %v2193
    %4376 = vmatpush1.bf16.msra.mxu0 %v2192
    %4377 = vmatprep.subr.bf16.mxu0 %v2201
    %4378 = vmatpush1.bf16.msra.mxu0 %v2200
    %4379 = vmatprep.subr.bf16.mxu0 %v2209
    %4380 = vmatpush1.bf16.msra.mxu0 %v2208
    %4381 = vmatprep.subr.bf16.mxu0 %v2217
    %4382 = vmatpush1.bf16.msra.mxu0 %v2216
    %4383 = vmatprep.subr.bf16.mxu0 %v2225
    %4384 = vmatpush1.bf16.msra.mxu0 %v2224
    %4385 = vmatprep.subr.bf16.mxu0 %v2233
    %4386 = vmatpush1.bf16.msra.mxu0 %v2232
    %4387 = vmatprep.mubr.bf16.mxu0 %v4311
    %4388 = vmatmul.mubr.bf16.gmra.mrb[0].mxu0 %v4310
    %v4389 = vpop.f32.mrb[0].mxu0
    %v4390 = vadd.f32 0.0, %v4389
    %v4391 = vpop.f32.mrb[0].mxu0
    %v4392 = vadd.f32 0.0, %v4391
    %v4393 = vpop.f32.mrb[0].mxu0
    %v4394 = vadd.f32 0.0, %v4393
    %v4395 = vpop.f32.mrb[0].mxu0
    %v4396 = vadd.f32 0.0, %v4395
    %4397 = vdwg.mxu0
    %4398 = vmatprep.subr.bf16.mxu0 %v2115
    %4399 = vmatpush1.bf16.msra.mxu0 %v2114
    %4400 = vmatprep.subr.bf16.mxu0 %v2123
    %4401 = vmatpush1.bf16.msra.mxu0 %v2122
    %4402 = vmatprep.subr.bf16.mxu0 %v2131
    %4403 = vmatpush1.bf16.msra.mxu0 %v2130
    %4404 = vmatprep.subr.bf16.mxu0 %v2139
    %4405 = vmatpush1.bf16.msra.mxu0 %v2138
    %4406 = vmatprep.subr.bf16.mxu0 %v2147
    %4407 = vmatpush1.bf16.msra.mxu0 %v2146
    %4408 = vmatprep.subr.bf16.mxu0 %v2155
    %4409 = vmatpush1.bf16.msra.mxu0 %v2154
    %4410 = vmatprep.subr.bf16.mxu0 %v2163
    %4411 = vmatpush1.bf16.msra.mxu0 %v2162
    %4412 = vmatprep.subr.bf16.mxu0 %v2171
    %4413 = vmatpush1.bf16.msra.mxu0 %v2170
    %4414 = vmatprep.subr.bf16.mxu0 %v2179
    %4415 = vmatpush1.bf16.msra.mxu0 %v2178
    %4416 = vmatprep.subr.bf16.mxu0 %v2187
    %4417 = vmatpush1.bf16.msra.mxu0 %v2186
    %4418 = vmatprep.subr.bf16.mxu0 %v2195
    %4419 = vmatpush1.bf16.msra.mxu0 %v2194
    %4420 = vmatprep.subr.bf16.mxu0 %v2203
    %4421 = vmatpush1.bf16.msra.mxu0 %v2202
    %4422 = vmatprep.subr.bf16.mxu0 %v2211
    %4423 = vmatpush1.bf16.msra.mxu0 %v2210
    %4424 = vmatprep.subr.bf16.mxu0 %v2219
    %4425 = vmatpush1.bf16.msra.mxu0 %v2218
    %4426 = vmatprep.subr.bf16.mxu0 %v2227
    %4427 = vmatpush1.bf16.msra.mxu0 %v2226
    %4428 = vmatprep.subr.bf16.mxu0 %v2235
    %4429 = vmatpush1.bf16.msra.mxu0 %v2234
    %4430 = vmatprep.mubr.bf16.mxu0 %v4311
    %4431 = vmatmul.mubr.bf16.gmra.mrb[0].mxu0 %v4310
    %v4432 = vpop.f32.mrb[0].mxu0
    %v4433 = vadd.f32 0.0, %v4432
    %v4434 = vpop.f32.mrb[0].mxu0
    %v4435 = vadd.f32 0.0, %v4434
    %v4436 = vpop.f32.mrb[0].mxu0
    %v4437 = vadd.f32 0.0, %v4436
    %v4438 = vpop.f32.mrb[0].mxu0
    %v4439 = vadd.f32 0.0, %v4438
    %4440 = vdwg.mxu0
    %4441 = vmatprep.subr.bf16.mxu0 %v2117
    %4442 = vmatpush1.bf16.msra.mxu0 %v2116
    %4443 = vmatprep.subr.bf16.mxu0 %v2125
    %4444 = vmatpush1.bf16.msra.mxu0 %v2124
    %4445 = vmatprep.subr.bf16.mxu0 %v2133
    %4446 = vmatpush1.bf16.msra.mxu0 %v2132
    %4447 = vmatprep.subr.bf16.mxu0 %v2141
    %4448 = vmatpush1.bf16.msra.mxu0 %v2140
    %4449 = vmatprep.subr.bf16.mxu0 %v2149
    %4450 = vmatpush1.bf16.msra.mxu0 %v2148
    %4451 = vmatprep.subr.bf16.mxu0 %v2157
    %4452 = vmatpush1.bf16.msra.mxu0 %v2156
    %4453 = vmatprep.subr.bf16.mxu0 %v2165
    %4454 = vmatpush1.bf16.msra.mxu0 %v2164
    %4455 = vmatprep.subr.bf16.mxu0 %v2173
    %4456 = vmatpush1.bf16.msra.mxu0 %v2172
    %4457 = vmatprep.subr.bf16.mxu0 %v2181
    %4458 = vmatpush1.bf16.msra.mxu0 %v2180
    %4459 = vmatprep.subr.bf16.mxu0 %v2189
    %4460 = vmatpush1.bf16.msra.mxu0 %v2188
    %4461 = vmatprep.subr.bf16.mxu0 %v2197
    %4462 = vmatpush1.bf16.msra.mxu0 %v2196
    %4463 = vmatprep.subr.bf16.mxu0 %v2205
    %4464 = vmatpush1.bf16.msra.mxu0 %v2204
    %4465 = vmatprep.subr.bf16.mxu0 %v2213
    %4466 = vmatpush1.bf16.msra.mxu0 %v2212
    %4467 = vmatprep.subr.bf16.mxu0 %v2221
    %4468 = vmatpush1.bf16.msra.mxu0 %v2220
    %4469 = vmatprep.subr.bf16.mxu0 %v2229
    %4470 = vmatpush1.bf16.msra.mxu0 %v2228
    %4471 = vmatprep.subr.bf16.mxu0 %v2237
    %4472 = vmatpush1.bf16.msra.mxu0 %v2236
    %4473 = vmatprep.mubr.bf16.mxu0 %v4311
    %4474 = vmatmul.mubr.bf16.gmra.mrb[0].mxu0 %v4310
    %v4475 = vpop.f32.mrb[0].mxu0
    %v4476 = vadd.f32 0.0, %v4475
    %v4477 = vpop.f32.mrb[0].mxu0
    %v4478 = vadd.f32 0.0, %v4477
    %v4479 = vpop.f32.mrb[0].mxu0
    %v4480 = vadd.f32 0.0, %v4479
    %v4481 = vpop.f32.mrb[0].mxu0
    %v4482 = vadd.f32 0.0, %v4481
    %4483 = vdwg.mxu0
    %v4484 = vadd.f32 %v4294, %v4347
    %v4485 = vadd.f32 %v4295, %v4349
    %v4486 = vadd.f32 %v4296, %v4390
    %v4487 = vadd.f32 %v4297, %v4392
    %v4488 = vadd.f32 %v4298, %v4433
    %v4489 = vadd.f32 %v4299, %v4435
    %v4490 = vadd.f32 %v4300, %v4476
    %v4491 = vadd.f32 %v4301, %v4478
    %v4492 = vadd.f32 %v4302, %v4351
    %v4493 = vadd.f32 %v4303, %v4353
    %v4494 = vadd.f32 %v4304, %v4394
    %v4495 = vadd.f32 %v4305, %v4396
    %v4496 = vadd.f32 %v4306, %v4437
    %v4497 = vadd.f32 %v4307, %v4439
    %v4498 = vadd.f32 %v4308, %v4480
    %v4499 = vadd.f32 %v4309, %v4482
    %v4500 = vmul.f32 %v4484, 0.5
    %v4501 = vmul.f32 %v4485, 0.5
    %v4502 = vmul.f32 %v4492, 0.5
    %v4503 = vmul.f32 %v4493, 0.5
    %v4504 = vtanh.pop %v4500
    %v4505 = vtanh.pop %v4501
    %v4506 = vtanh.pop %v4502
    %v4507 = vtanh.pop %v4503
    %v4508 = vmul.f32 %v4504, 0.5
    %v4509 = vmul.f32 %v4505, 0.5
    %v4510 = vmul.f32 %v4506, 0.5
    %v4511 = vmul.f32 %v4507, 0.5
    %v4512 = vadd.f32 %v4508, 0.5
    %v4513 = vadd.f32 %v4509, 0.5
    %v4514 = vadd.f32 %v4510, 0.5
    %v4515 = vadd.f32 %v4511, 0.5
    %v4516 = vmul.f32 %v4486, 0.5
    %v4517 = vmul.f32 %v4487, 0.5
    %v4518 = vmul.f32 %v4494, 0.5
    %v4519 = vmul.f32 %v4495, 0.5
    %v4520 = vtanh.pop %v4516
    %v4521 = vtanh.pop %v4517
    %v4522 = vtanh.pop %v4518
    %v4523 = vtanh.pop %v4519
    %v4524 = vmul.f32 %v4520, 0.5
    %v4525 = vmul.f32 %v4521, 0.5
    %v4526 = vmul.f32 %v4522, 0.5
    %v4527 = vmul.f32 %v4523, 0.5
    %v4528 = vadd.f32 %v4524, 0.5
    %v4529 = vadd.f32 %v4525, 0.5
    %v4530 = vadd.f32 %v4526, 0.5
    %v4531 = vadd.f32 %v4527, 0.5
    %v4532 = vtanh.pop %v4488
    %v4533 = vtanh.pop %v4489
    %v4534 = vtanh.pop %v4496
    %v4535 = vtanh.pop %v4497
    %v4536 = vmul.f32 %v4490, 0.5
    %v4537 = vmul.f32 %v4491, 0.5
    %v4538 = vmul.f32 %v4498, 0.5
    %v4539 = vmul.f32 %v4499, 0.5
    %v4540 = vtanh.pop %v4536
    %v4541 = vtanh.pop %v4537
    %v4542 = vtanh.pop %v4538
    %v4543 = vtanh.pop %v4539
    %v4544 = vmul.f32 %v4540, 0.5
    %v4545 = vmul.f32 %v4541, 0.5
    %v4546 = vmul.f32 %v4542, 0.5
    %v4547 = vmul.f32 %v4543, 0.5
    %v4548 = vadd.f32 %v4544, 0.5
    %v4549 = vadd.f32 %v4545, 0.5
    %v4550 = vadd.f32 %v4546, 0.5
    %v4551 = vadd.f32 %v4547, 0.5
    %v4552 = vmul.f32 %v4528, %v4282
    %v4553 = vmul.f32 %v4529, %v4283
    %v4554 = vmul.f32 %v4530, %v4284
    %v4555 = vmul.f32 %v4531, %v4285
    %v4556 = vmul.f32 %v4512, %v4532
    %v4557 = vmul.f32 %v4513, %v4533
    %v4558 = vmul.f32 %v4514, %v4534
    %v4559 = vmul.f32 %v4515, %v4535
    %v4560 = vadd.f32 %v4552, %v4556
    %v4561 = vadd.f32 %v4553, %v4557
    %v4562 = vadd.f32 %v4554, %v4558
    %v4563 = vadd.f32 %v4555, %v4559
    %v4564 = vtanh.pop %v4560
    %v4565 = vtanh.pop %v4561
    %v4566 = vtanh.pop %v4562
    %v4567 = vtanh.pop %v4563
    %v4568 = vmul.f32 %v4548, %v4564
    %v4569 = vmul.f32 %v4549, %v4565
    %v4570 = vmul.f32 %v4550, %v4566
    %v4571 = vmul.f32 %v4551, %v4567
    %4574 = vrot.lane.b32.xlu0 %v4569, 32
    %v4575 = vpop.permute.xlu0 %4574
    %4576 = vrot.lane.b32.xlu0 %v4571, 32
    %v4577 = vpop.permute.xlu0 %4576
    %vm4580 = vcmask 261120
    %v4581 = vsel %vm4580, %v4568, %v4575
    %v4582 = vsel %vm4580, %v4570, %v4577
    %vm4583 = vcmask 523264
    %v4584 = vsel %vm4583, %v4581, 0.0
    %v4585 = vsel %vm4583, %v4582, 0.0
    %4588 = vrot.lane.b32.xlu0 %v4561, 32
    %v4589 = vpop.permute.xlu0 %4588
    %4590 = vrot.lane.b32.xlu0 %v4563, 32
    %v4591 = vpop.permute.xlu0 %4590
    %v4594 = vsel %vm4580, %v4560, %v4589
    %v4595 = vsel %vm4580, %v4562, %v4591
    %v4596 = vsel %vm4583, %v4594, 0.0
    %v4597 = vsel %vm4583, %v4595, 0.0
    %4598 = vst [vmem:[#allocation13] sm:$0xff] 0.0
    %4599 = vst [vmem:[#allocation13 + $0x8] sm:$0xff] 0.0
    %v4600 = vlaneseq
    %v4601 = vand.u32 %v4600, 127
    %v4602 = vld [vmem:[%s5] sm:$0xff]
    %v4603 = vld [vmem:[%s5 + $0x8] sm:$0xff]
    %4604 = vset.pattern.permute.xlu0 0
    %4605 = vperm.xlu0 %4604, %v4602
    %v4606 = vpop.permute.xlu0 %4605
    %4607 = vset.pattern.permute.xlu0 0
    %4608 = vperm.xlu0 %4607, %v4603
    %v4609 = vpop.permute.xlu0 %4608
    %vm4610 = vcmp.eq.s32.totalorder %v4601, %v4606
    %vm4611 = vcmp.eq.s32.totalorder %v4601, %v4609
    %v4612 = vsel %vm4610, 1, 0
    %v4613 = vsel %vm4611, 1, 0
    %v4614 = vcvt.s32.f32 %v4612
    %v4615 = vcvt.s32.f32 %v4613
    %v4616 = vpack.c.bf16 %v4615, %v4614
    %v4617 = vpack.c.bf16 %v4585, %v4584
    %v4618 = vld [vmem:[#allocation11] sm:$0xff]
    %v4619 = vld [vmem:[#allocation11 + $0x8] sm:$0xff]
    %v4620 = vld [vmem:[#allocation11 + $0x10] sm:$0xf]
    %v4621 = vld [vmem:[#allocation11 + $0x14] sm:$0xff]
    %v4622 = vld [vmem:[#allocation11 + $0x1c] sm:$0xff]
    %v4623 = vld [vmem:[#allocation11 + $0x24] sm:$0xf]
    %v4624 = vld [vmem:[#allocation11 + $0x28] sm:$0xff]
    %v4625 = vld [vmem:[#allocation11 + $0x30] sm:$0xff]
    %v4626 = vld [vmem:[#allocation11 + $0x38] sm:$0xf]
    %v4627 = vld [vmem:[#allocation11 + $0x3c] sm:$0xff]
    %v4628 = vld [vmem:[#allocation11 + $0x44] sm:$0xff]
    %v4629 = vld [vmem:[#allocation11 + $0x4c] sm:$0xf]
    %v4630 = vld [vmem:[#allocation11 + $0x50] sm:$0xff]
    %v4631 = vld [vmem:[#allocation11 + $0x58] sm:$0xff]
    %v4632 = vld [vmem:[#allocation11 + $0x60] sm:$0xf]
    %v4633 = vld [vmem:[#allocation11 + $0x64] sm:$0xff]
    %v4634 = vld [vmem:[#allocation11 + $0x6c] sm:$0xff]
    %v4635 = vld [vmem:[#allocation11 + $0x74] sm:$0xf]
    %v4636 = vld [vmem:[#allocation11 + $0x78] sm:$0xff]
    %v4637 = vld [vmem:[#allocation11 + $0x80] sm:$0xff]
    %v4638 = vld [vmem:[#allocation11 + $0x88] sm:$0xf]
    %v4639 = vld [vmem:[#allocation11 + $0x8c] sm:$0xff]
    %v4640 = vld [vmem:[#allocation11 + $0x94] sm:$0xff]
    %v4641 = vld [vmem:[#allocation11 + $0x9c] sm:$0xf]
    %v4642 = vld [vmem:[#allocation11 + $0xa0] sm:$0xff]
    %v4643 = vld [vmem:[#allocation11 + $0xa8] sm:$0xff]
    %v4644 = vld [vmem:[#allocation11 + $0xb0] sm:$0xf]
    %v4645 = vld [vmem:[#allocation11 + $0xb4] sm:$0xff]
    %v4646 = vld [vmem:[#allocation11 + $0xbc] sm:$0xff]
    %v4647 = vld [vmem:[#allocation11 + $0xc4] sm:$0xf]
    %v4648 = vld [vmem:[#allocation11 + $0xc8] sm:$0xff]
    %v4649 = vld [vmem:[#allocation11 + $0xd0] sm:$0xff]
    %v4650 = vld [vmem:[#allocation11 + $0xd8] sm:$0xf]
    %v4651 = vld [vmem:[#allocation11 + $0xdc] sm:$0xff]
    %v4652 = vld [vmem:[#allocation11 + $0xe4] sm:$0xff]
    %v4653 = vld [vmem:[#allocation11 + $0xec] sm:$0xf]
    %v4654 = vld [vmem:[#allocation11 + $0xf0] sm:$0xff]
    %v4655 = vld [vmem:[#allocation11 + $0xf8] sm:$0xff]
    %v4656 = vld [vmem:[#allocation11 + $0x100] sm:$0xf]
    %v4657 = vld [vmem:[#allocation11 + $0x104] sm:$0xff]
    %v4658 = vld [vmem:[#allocation11 + $0x10c] sm:$0xff]
    %v4659 = vld [vmem:[#allocation11 + $0x114] sm:$0xf]
    %v4660 = vld [vmem:[#allocation11 + $0x118] sm:$0xff]
    %v4661 = vld [vmem:[#allocation11 + $0x120] sm:$0xff]
    %v4662 = vld [vmem:[#allocation11 + $0x128] sm:$0xf]
    %v4663 = vld [vmem:[#allocation11 + $0x12c] sm:$0xff]
    %v4664 = vld [vmem:[#allocation11 + $0x134] sm:$0xff]
    %v4665 = vld [vmem:[#allocation11 + $0x13c] sm:$0xf]
    %v4698 = vunpack.c.l.b16 %v4618
    %v4699 = vunpack.c.h.b16 %v4618
    %v4700 = vunpack.c.l.b16 %v4619
    %v4701 = vunpack.c.h.b16 %v4619
    %v4702 = vunpack.c.l.b16 %v4621
    %v4703 = vunpack.c.h.b16 %v4621
    %v4704 = vunpack.c.l.b16 %v4622
    %v4705 = vunpack.c.h.b16 %v4622
    %v4706 = vunpack.c.l.b16 %v4624
    %v4707 = vunpack.c.h.b16 %v4624
    %v4708 = vunpack.c.l.b16 %v4625
    %v4709 = vunpack.c.h.b16 %v4625
    %v4710 = vunpack.c.l.b16 %v4627
    %v4711 = vunpack.c.h.b16 %v4627
    %v4712 = vunpack.c.l.b16 %v4628
    %v4713 = vunpack.c.h.b16 %v4628
    %v4714 = vunpack.c.l.b16 %v4630
    %v4715 = vunpack.c.h.b16 %v4630
    %v4716 = vunpack.c.l.b16 %v4631
    %v4717 = vunpack.c.h.b16 %v4631
    %v4718 = vunpack.c.l.b16 %v4633
    %v4719 = vunpack.c.h.b16 %v4633
    %v4720 = vunpack.c.l.b16 %v4634
    %v4721 = vunpack.c.h.b16 %v4634
    %v4722 = vunpack.c.l.b16 %v4636
    %v4723 = vunpack.c.h.b16 %v4636
    %v4724 = vunpack.c.l.b16 %v4637
    %v4725 = vunpack.c.h.b16 %v4637
    %v4726 = vunpack.c.l.b16 %v4639
    %v4727 = vunpack.c.h.b16 %v4639
    %v4728 = vunpack.c.l.b16 %v4640
    %v4729 = vunpack.c.h.b16 %v4640
    %v4730 = vunpack.c.l.b16 %v4642
    %v4731 = vunpack.c.h.b16 %v4642
    %v4732 = vunpack.c.l.b16 %v4643
    %v4733 = vunpack.c.h.b16 %v4643
    %v4734 = vunpack.c.l.b16 %v4645
    %v4735 = vunpack.c.h.b16 %v4645
    %v4736 = vunpack.c.l.b16 %v4646
    %v4737 = vunpack.c.h.b16 %v4646
    %v4738 = vunpack.c.l.b16 %v4648
    %v4739 = vunpack.c.h.b16 %v4648
    %v4740 = vunpack.c.l.b16 %v4649
    %v4741 = vunpack.c.h.b16 %v4649
    %v4742 = vunpack.c.l.b16 %v4651
    %v4743 = vunpack.c.h.b16 %v4651
    %v4744 = vunpack.c.l.b16 %v4652
    %v4745 = vunpack.c.h.b16 %v4652
    %v4746 = vunpack.c.l.b16 %v4654
    %v4747 = vunpack.c.h.b16 %v4654
    %v4748 = vunpack.c.l.b16 %v4655
    %v4749 = vunpack.c.h.b16 %v4655
    %v4750 = vunpack.c.l.b16 %v4657
    %v4751 = vunpack.c.h.b16 %v4657
    %v4752 = vunpack.c.l.b16 %v4658
    %v4753 = vunpack.c.h.b16 %v4658
    %v4754 = vunpack.c.l.b16 %v4660
    %v4755 = vunpack.c.h.b16 %v4660
    %v4756 = vunpack.c.l.b16 %v4661
    %v4757 = vunpack.c.h.b16 %v4661
    %v4758 = vunpack.c.l.b16 %v4663
    %v4759 = vunpack.c.h.b16 %v4663
    %v4760 = vunpack.c.l.b16 %v4664
    %v4761 = vunpack.c.h.b16 %v4664
    %v4762 = vpack.c.b16 %v4702, %v4698
    %v4763 = vpack.c.b16 %v4703, %v4699
    %v4764 = vpack.c.b16 %v4704, %v4700
    %v4765 = vpack.c.b16 %v4705, %v4701
    %v4766 = vpack.c.b16 %v4710, %v4706
    %v4767 = vpack.c.b16 %v4711, %v4707
    %v4768 = vpack.c.b16 %v4712, %v4708
    %v4769 = vpack.c.b16 %v4713, %v4709
    %v4770 = vpack.c.b16 %v4718, %v4714
    %v4771 = vpack.c.b16 %v4719, %v4715
    %v4772 = vpack.c.b16 %v4720, %v4716
    %v4773 = vpack.c.b16 %v4721, %v4717
    %v4774 = vpack.c.b16 %v4726, %v4722
    %v4775 = vpack.c.b16 %v4727, %v4723
    %v4776 = vpack.c.b16 %v4728, %v4724
    %v4777 = vpack.c.b16 %v4729, %v4725
    %v4778 = vpack.c.b16 %v4734, %v4730
    %v4779 = vpack.c.b16 %v4735, %v4731
    %v4780 = vpack.c.b16 %v4736, %v4732
    %v4781 = vpack.c.b16 %v4737, %v4733
    %v4782 = vpack.c.b16 %v4742, %v4738
    %v4783 = vpack.c.b16 %v4743, %v4739
    %v4784 = vpack.c.b16 %v4744, %v4740
    %v4785 = vpack.c.b16 %v4745, %v4741
    %v4786 = vpack.c.b16 %v4750, %v4746
    %v4787 = vpack.c.b16 %v4751, %v4747
    %v4788 = vpack.c.b16 %v4752, %v4748
    %v4789 = vpack.c.b16 %v4753, %v4749
    %v4790 = vpack.c.b16 %v4758, %v4754
    %v4791 = vpack.c.b16 %v4759, %v4755
    %v4792 = vpack.c.b16 %v4760, %v4756
    %v4793 = vpack.c.b16 %v4761, %v4757
    %4826 = vmatprep.subr.bf16.mxu0 %v4763
    %4827 = vmatpush1.bf16.msra.mxu0 %v4762
    %4828 = vmatprep.subr.bf16.mxu0 %v4767
    %4829 = vmatpush1.bf16.msra.mxu0 %v4766
    %4830 = vmatprep.subr.bf16.mxu0 %v4771
    %4831 = vmatpush1.bf16.msra.mxu0 %v4770
    %4832 = vmatprep.subr.bf16.mxu0 %v4775
    %4833 = vmatpush1.bf16.msra.mxu0 %v4774
    %4834 = vmatprep.subr.bf16.mxu0 %v4779
    %4835 = vmatpush1.bf16.msra.mxu0 %v4778
    %4836 = vmatprep.subr.bf16.mxu0 %v4783
    %4837 = vmatpush1.bf16.msra.mxu0 %v4782
    %4838 = vmatprep.subr.bf16.mxu0 %v4787
    %4839 = vmatpush1.bf16.msra.mxu0 %v4786
    %4840 = vmatprep.subr.bf16.mxu0 %v4791
    %4841 = vmatpush1.bf16.msra.mxu0 %v4790
    %4842 = vmatprep.subr.bf16.mxu0 0
    %4843 = vmatpush1.bf16.msra.mxu0 0
    %4844 = vmatprep.subr.bf16.mxu0 0
    %4845 = vmatpush1.bf16.msra.mxu0 0
    %4846 = vmatprep.subr.bf16.mxu0 0
    %4847 = vmatpush1.bf16.msra.mxu0 0
    %4848 = vmatprep.subr.bf16.mxu0 0
    %4849 = vmatpush1.bf16.msra.mxu0 0
    %4850 = vmatprep.subr.bf16.mxu0 0
    %4851 = vmatpush1.bf16.msra.mxu0 0
    %4852 = vmatprep.subr.bf16.mxu0 0
    %4853 = vmatpush1.bf16.msra.mxu0 0
    %4854 = vmatprep.subr.bf16.mxu0 0
    %4855 = vmatpush1.bf16.msra.mxu0 0
    %4856 = vmatprep.subr.bf16.mxu0 0
    %4857 = vmatpush1.bf16.msra.mxu0 0
    %4858 = vmatprep.mubr.bf16.mxu0 0
    %4859 = vmatmul.mubr.bf16.gmra.mrb[0].mxu0 %v4617
    %v4860 = vpop.f32.mrb[0].mxu0
    %v4861 = vadd.f32 0.0, %v4860
    %v4862 = vpop.f32.mrb[0].mxu0
    %v4863 = vadd.f32 0.0, %v4862
    %v4864 = vpop.f32.mrb[0].mxu0
    %v4865 = vadd.f32 0.0, %v4864
    %v4866 = vpop.f32.mrb[0].mxu0
    %v4867 = vadd.f32 0.0, %v4866
    %4868 = vdwg.mxu0
    %4869 = vmatprep.subr.bf16.mxu0 %v4765
    %4870 = vmatpush1.bf16.msra.mxu0 %v4764
    %4871 = vmatprep.subr.bf16.mxu0 %v4769
    %4872 = vmatpush1.bf16.msra.mxu0 %v4768
    %4873 = vmatprep.subr.bf16.mxu0 %v4773
    %4874 = vmatpush1.bf16.msra.mxu0 %v4772
    %4875 = vmatprep.subr.bf16.mxu0 %v4777
    %4876 = vmatpush1.bf16.msra.mxu0 %v4776
    %4877 = vmatprep.subr.bf16.mxu0 %v4781
    %4878 = vmatpush1.bf16.msra.mxu0 %v4780
    %4879 = vmatprep.subr.bf16.mxu0 %v4785
    %4880 = vmatpush1.bf16.msra.mxu0 %v4784
    %4881 = vmatprep.subr.bf16.mxu0 %v4789
    %4882 = vmatpush1.bf16.msra.mxu0 %v4788
    %4883 = vmatprep.subr.bf16.mxu0 %v4793
    %4884 = vmatpush1.bf16.msra.mxu0 %v4792
    %4885 = vmatprep.subr.bf16.mxu0 0
    %4886 = vmatpush1.bf16.msra.mxu0 0
    %4887 = vmatprep.subr.bf16.mxu0 0
    %4888 = vmatpush1.bf16.msra.mxu0 0
    %4889 = vmatprep.subr.bf16.mxu0 0
    %4890 = vmatpush1.bf16.msra.mxu0 0
    %4891 = vmatprep.subr.bf16.mxu0 0
    %4892 = vmatpush1.bf16.msra.mxu0 0
    %4893 = vmatprep.subr.bf16.mxu0 0
    %4894 = vmatpush1.bf16.msra.mxu0 0
    %4895 = vmatprep.subr.bf16.mxu0 0
    %4896 = vmatpush1.bf16.msra.mxu0 0
    %4897 = vmatprep.subr.bf16.mxu0 0
    %4898 = vmatpush1.bf16.msra.mxu0 0
    %4899 = vmatprep.subr.bf16.mxu0 0
    %4900 = vmatpush1.bf16.msra.mxu0 0
    %4901 = vmatprep.mubr.bf16.mxu0 0
    %4902 = vmatmul.mubr.bf16.gmra.mrb[0].mxu0 %v4617
    %v4903 = vpop.f32.mrb[0].mxu0
    %v4904 = vadd.f32 0.0, %v4903
    %v4905 = vpop.f32.mrb[0].mxu0
    %v4906 = vadd.f32 0.0, %v4905
    %v4907 = vpop.f32.mrb[0].mxu0
    %v4908 = vadd.f32 0.0, %v4907
    %v4909 = vpop.f32.mrb[0].mxu0
    %v4910 = vadd.f32 0.0, %v4909
    %4911 = vdwg.mxu0
    %v4912 = vld [vmem:[#allocation10] sm:$0xff]
    %v4913 = vld [vmem:[#allocation10 + $0x8] sm:$0xff]
    %v4914 = vld [vmem:[#allocation10 + $0x10] sm:$0xff]
    %v4915 = vld [vmem:[#allocation10 + $0x18] sm:$0xff]
    %v4916 = vld [vmem:[#allocation10 + $0x20] sm:$0xff]
    %v4917 = vld [vmem:[#allocation10 + $0x28] sm:$0xff]
    %v4918 = vld [vmem:[#allocation10 + $0x30] sm:$0xff]
    %v4919 = vld [vmem:[#allocation10 + $0x38] sm:$0xff]
    %v4920 = vld [vmem:[#allocation10 + $0x40] sm:$0xff]
    %v4921 = vld [vmem:[#allocation10 + $0x48] sm:$0xff]
    %v4922 = vld [vmem:[#allocation10 + $0x50] sm:$0xff]
    %v4923 = vld [vmem:[#allocation10 + $0x58] sm:$0xff]
    %v4924 = vld [vmem:[#allocation10 + $0x60] sm:$0xff]
    %v4925 = vld [vmem:[#allocation10 + $0x68] sm:$0xff]
    %v4926 = vld [vmem:[#allocation10 + $0x70] sm:$0xff]
    %v4927 = vld [vmem:[#allocation10 + $0x78] sm:$0xff]
    %v4928 = vld [vmem:[#allocation10 + $0x80] sm:$0xff]
    %v4929 = vld [vmem:[#allocation10 + $0x88] sm:$0xff]
    %v4930 = vld [vmem:[#allocation10 + $0x90] sm:$0xff]
    %v4931 = vld [vmem:[#allocation10 + $0x98] sm:$0xff]
    %v4932 = vld [vmem:[#allocation10 + $0xa0] sm:$0xff]
    %v4933 = vld [vmem:[#allocation10 + $0xa8] sm:$0xff]
    %v4934 = vld [vmem:[#allocation10 + $0xb0] sm:$0xff]
    %v4935 = vld [vmem:[#allocation10 + $0xb8] sm:$0xff]
    %v4936 = vld [vmem:[#allocation10 + $0xc0] sm:$0xff]
    %v4937 = vld [vmem:[#allocation10 + $0xc8] sm:$0xff]
    %v4938 = vld [vmem:[#allocation10 + $0xd0] sm:$0xff]
    %v4939 = vld [vmem:[#allocation10 + $0xd8] sm:$0xff]
    %v4940 = vld [vmem:[#allocation10 + $0xe0] sm:$0xff]
    %v4941 = vld [vmem:[#allocation10 + $0xe8] sm:$0xff]
    %v4942 = vld [vmem:[#allocation10 + $0xf0] sm:$0xff]
    %v4943 = vld [vmem:[#allocation10 + $0xf8] sm:$0xff]
    %v4944 = vld [vmem:[%s7] sm:$0xf]
    %v4946 = vlaneseq
    %v4947 = vshrl.u32 %v4946, 7
    %v4948 = vsub.s32 0, %v4947
    %v4949 = vrot.slane %v4944, %v4948
    %v4950 = vlaneseq
    %v4951 = vshrl.u32 %v4950, 7
    %v4952 = vsub.s32 1, %v4951
    %v4953 = vrot.slane %v4944, %v4952
    %v4954 = vlaneseq
    %v4955 = vshrl.u32 %v4954, 7
    %v4956 = vsub.s32 2, %v4955
    %v4957 = vrot.slane %v4944, %v4956
    %v4958 = vlaneseq
    %v4959 = vshrl.u32 %v4958, 7
    %v4960 = vsub.s32 3, %v4959
    %v4961 = vrot.slane %v4944, %v4960
    %v4998 = vunpack.c.l.b16 %v4912
    %v4999 = vunpack.c.h.b16 %v4912
    %v5000 = vunpack.c.l.b16 %v4913
    %v5001 = vunpack.c.h.b16 %v4913
    %v5002 = vunpack.c.l.b16 %v4914
    %v5003 = vunpack.c.h.b16 %v4914
    %v5004 = vunpack.c.l.b16 %v4915
    %v5005 = vunpack.c.h.b16 %v4915
    %v5006 = vunpack.c.l.b16 %v4916
    %v5007 = vunpack.c.h.b16 %v4916
    %v5008 = vunpack.c.l.b16 %v4917
    %v5009 = vunpack.c.h.b16 %v4917
    %v5010 = vunpack.c.l.b16 %v4918
    %v5011 = vunpack.c.h.b16 %v4918
    %v5012 = vunpack.c.l.b16 %v4919
    %v5013 = vunpack.c.h.b16 %v4919
    %v5014 = vunpack.c.l.b16 %v4920
    %v5015 = vunpack.c.h.b16 %v4920
    %v5016 = vunpack.c.l.b16 %v4921
    %v5017 = vunpack.c.h.b16 %v4921
    %v5018 = vunpack.c.l.b16 %v4922
    %v5019 = vunpack.c.h.b16 %v4922
    %v5020 = vunpack.c.l.b16 %v4923
    %v5021 = vunpack.c.h.b16 %v4923
    %v5022 = vunpack.c.l.b16 %v4924
    %v5023 = vunpack.c.h.b16 %v4924
    %v5024 = vunpack.c.l.b16 %v4925
    %v5025 = vunpack.c.h.b16 %v4925
    %v5026 = vunpack.c.l.b16 %v4926
    %v5027 = vunpack.c.h.b16 %v4926
    %v5028 = vunpack.c.l.b16 %v4927
    %v5029 = vunpack.c.h.b16 %v4927
    %v5030 = vunpack.c.l.b16 %v4928
    %v5031 = vunpack.c.h.b16 %v4928
    %v5032 = vunpack.c.l.b16 %v4929
    %v5033 = vunpack.c.h.b16 %v4929
    %v5034 = vunpack.c.l.b16 %v4930
    %v5035 = vunpack.c.h.b16 %v4930
    %v5036 = vunpack.c.l.b16 %v4931
    %v5037 = vunpack.c.h.b16 %v4931
    %v5038 = vunpack.c.l.b16 %v4932
    %v5039 = vunpack.c.h.b16 %v4932
    %v5040 = vunpack.c.l.b16 %v4933
    %v5041 = vunpack.c.h.b16 %v4933
    %v5042 = vunpack.c.l.b16 %v4934
    %v5043 = vunpack.c.h.b16 %v4934
    %v5044 = vunpack.c.l.b16 %v4935
    %v5045 = vunpack.c.h.b16 %v4935
    %v5046 = vunpack.c.l.b16 %v4936
    %v5047 = vunpack.c.h.b16 %v4936
    %v5048 = vunpack.c.l.b16 %v4937
    %v5049 = vunpack.c.h.b16 %v4937
    %v5050 = vunpack.c.l.b16 %v4938
    %v5051 = vunpack.c.h.b16 %v4938
    %v5052 = vunpack.c.l.b16 %v4939
    %v5053 = vunpack.c.h.b16 %v4939
    %v5054 = vunpack.c.l.b16 %v4940
    %v5055 = vunpack.c.h.b16 %v4940
    %v5056 = vunpack.c.l.b16 %v4941
    %v5057 = vunpack.c.h.b16 %v4941
    %v5058 = vunpack.c.l.b16 %v4942
    %v5059 = vunpack.c.h.b16 %v4942
    %v5060 = vunpack.c.l.b16 %v4943
    %v5061 = vunpack.c.h.b16 %v4943
    %v5062 = vpack.c.b16 %v5002, %v4998
    %v5063 = vpack.c.b16 %v5003, %v4999
    %v5064 = vpack.c.b16 %v5004, %v5000
    %v5065 = vpack.c.b16 %v5005, %v5001
    %v5066 = vpack.c.b16 %v5010, %v5006
    %v5067 = vpack.c.b16 %v5011, %v5007
    %v5068 = vpack.c.b16 %v5012, %v5008
    %v5069 = vpack.c.b16 %v5013, %v5009
    %v5070 = vpack.c.b16 %v5018, %v5014
    %v5071 = vpack.c.b16 %v5019, %v5015
    %v5072 = vpack.c.b16 %v5020, %v5016
    %v5073 = vpack.c.b16 %v5021, %v5017
    %v5074 = vpack.c.b16 %v5026, %v5022
    %v5075 = vpack.c.b16 %v5027, %v5023
    %v5076 = vpack.c.b16 %v5028, %v5024
    %v5077 = vpack.c.b16 %v5029, %v5025
    %v5078 = vpack.c.b16 %v5034, %v5030
    %v5079 = vpack.c.b16 %v5035, %v5031
    %v5080 = vpack.c.b16 %v5036, %v5032
    %v5081 = vpack.c.b16 %v5037, %v5033
    %v5082 = vpack.c.b16 %v5042, %v5038
    %v5083 = vpack.c.b16 %v5043, %v5039
    %v5084 = vpack.c.b16 %v5044, %v5040
    %v5085 = vpack.c.b16 %v5045, %v5041
    %v5086 = vpack.c.b16 %v5050, %v5046
    %v5087 = vpack.c.b16 %v5051, %v5047
    %v5088 = vpack.c.b16 %v5052, %v5048
    %v5089 = vpack.c.b16 %v5053, %v5049
    %v5090 = vpack.c.b16 %v5058, %v5054
    %v5091 = vpack.c.b16 %v5059, %v5055
    %v5092 = vpack.c.b16 %v5060, %v5056
    %v5093 = vpack.c.b16 %v5061, %v5057
    %5126 = vmatprep.subr.bf16.mxu0 %v5063
    %5127 = vmatpush1.bf16.msra.mxu0 %v5062
    %5128 = vmatprep.subr.bf16.mxu0 %v5067
    %5129 = vmatpush1.bf16.msra.mxu0 %v5066
    %5130 = vmatprep.subr.bf16.mxu0 %v5071
    %5131 = vmatpush1.bf16.msra.mxu0 %v5070
    %5132 = vmatprep.subr.bf16.mxu0 %v5075
    %5133 = vmatpush1.bf16.msra.mxu0 %v5074
    %5134 = vmatprep.subr.bf16.mxu0 %v5079
    %5135 = vmatpush1.bf16.msra.mxu0 %v5078
    %5136 = vmatprep.subr.bf16.mxu0 %v5083
    %5137 = vmatpush1.bf16.msra.mxu0 %v5082
    %5138 = vmatprep.subr.bf16.mxu0 %v5087
    %5139 = vmatpush1.bf16.msra.mxu0 %v5086
    %5140 = vmatprep.subr.bf16.mxu0 %v5091
    %5141 = vmatpush1.bf16.msra.mxu0 %v5090
    %5142 = vmatprep.subr.bf16.mxu0 0
    %5143 = vmatpush1.bf16.msra.mxu0 0
    %5144 = vmatprep.subr.bf16.mxu0 0
    %5145 = vmatpush1.bf16.msra.mxu0 0
    %5146 = vmatprep.subr.bf16.mxu0 0
    %5147 = vmatpush1.bf16.msra.mxu0 0
    %5148 = vmatprep.subr.bf16.mxu0 0
    %5149 = vmatpush1.bf16.msra.mxu0 0
    %5150 = vmatprep.subr.bf16.mxu0 0
    %5151 = vmatpush1.bf16.msra.mxu0 0
    %5152 = vmatprep.subr.bf16.mxu0 0
    %5153 = vmatpush1.bf16.msra.mxu0 0
    %5154 = vmatprep.subr.bf16.mxu0 0
    %5155 = vmatpush1.bf16.msra.mxu0 0
    %5156 = vmatprep.subr.bf16.mxu0 0
    %5157 = vmatpush1.bf16.msra.mxu0 0
    %5158 = vmatprep.mubr.bf16.mxu0 0
    %5159 = vmatmul.mubr.bf16.gmra.mrb[0].mxu0 %v4616
    %v5160 = vpop.f32.mrb[0].mxu0
    %v5161 = vadd.f32 %v4949, %v5160
    %v5162 = vpop.f32.mrb[0].mxu0
    %v5163 = vadd.f32 %v4953, %v5162
    %v5164 = vpop.f32.mrb[0].mxu0
    %v5165 = vadd.f32 %v4949, %v5164
    %v5166 = vpop.f32.mrb[0].mxu0
    %v5167 = vadd.f32 %v4953, %v5166
    %5168 = vdwg.mxu0
    %5169 = vmatprep.subr.bf16.mxu0 %v5065
    %5170 = vmatpush1.bf16.msra.mxu0 %v5064
    %5171 = vmatprep.subr.bf16.mxu0 %v5069
    %5172 = vmatpush1.bf16.msra.mxu0 %v5068
    %5173 = vmatprep.subr.bf16.mxu0 %v5073
    %5174 = vmatpush1.bf16.msra.mxu0 %v5072
    %5175 = vmatprep.subr.bf16.mxu0 %v5077
    %5176 = vmatpush1.bf16.msra.mxu0 %v5076
    %5177 = vmatprep.subr.bf16.mxu0 %v5081
    %5178 = vmatpush1.bf16.msra.mxu0 %v5080
    %5179 = vmatprep.subr.bf16.mxu0 %v5085
    %5180 = vmatpush1.bf16.msra.mxu0 %v5084
    %5181 = vmatprep.subr.bf16.mxu0 %v5089
    %5182 = vmatpush1.bf16.msra.mxu0 %v5088
    %5183 = vmatprep.subr.bf16.mxu0 %v5093
    %5184 = vmatpush1.bf16.msra.mxu0 %v5092
    %5185 = vmatprep.subr.bf16.mxu0 0
    %5186 = vmatpush1.bf16.msra.mxu0 0
    %5187 = vmatprep.subr.bf16.mxu0 0
    %5188 = vmatpush1.bf16.msra.mxu0 0
    %5189 = vmatprep.subr.bf16.mxu0 0
    %5190 = vmatpush1.bf16.msra.mxu0 0
    %5191 = vmatprep.subr.bf16.mxu0 0
    %5192 = vmatpush1.bf16.msra.mxu0 0
    %5193 = vmatprep.subr.bf16.mxu0 0
    %5194 = vmatpush1.bf16.msra.mxu0 0
    %5195 = vmatprep.subr.bf16.mxu0 0
    %5196 = vmatpush1.bf16.msra.mxu0 0
    %5197 = vmatprep.subr.bf16.mxu0 0
    %5198 = vmatpush1.bf16.msra.mxu0 0
    %5199 = vmatprep.subr.bf16.mxu0 0
    %5200 = vmatpush1.bf16.msra.mxu0 0
    %5201 = vmatprep.mubr.bf16.mxu0 0
    %5202 = vmatmul.mubr.bf16.gmra.mrb[0].mxu0 %v4616
    %v5203 = vpop.f32.mrb[0].mxu0
    %v5204 = vadd.f32 %v4957, %v5203
    %v5205 = vpop.f32.mrb[0].mxu0
    %v5206 = vadd.f32 %v4961, %v5205
    %v5207 = vpop.f32.mrb[0].mxu0
    %v5208 = vadd.f32 %v4957, %v5207
    %v5209 = vpop.f32.mrb[0].mxu0
    %v5210 = vadd.f32 %v4961, %v5209
    %5211 = vdwg.mxu0
    %v5212 = vadd.f32 %v5161, %v4861
    %v5213 = vadd.f32 %v5163, %v4863
    %v5214 = vadd.f32 %v5204, %v4904
    %v5215 = vadd.f32 %v5206, %v4906
    %v5216 = vadd.f32 %v5165, %v4865
    %v5217 = vadd.f32 %v5167, %v4867
    %v5218 = vadd.f32 %v5208, %v4908
    %v5219 = vadd.f32 %v5210, %v4910
    %v5220 = vmul.f32 %v5212, 0.5
    %v5221 = vmul.f32 %v5216, 0.5
    %v5222 = vtanh.pop %v5220
    %v5223 = vtanh.pop %v5221
    %v5224 = vmul.f32 %v5222, 0.5
    %v5225 = vmul.f32 %v5223, 0.5
    %v5226 = vadd.f32 %v5224, 0.5
    %v5227 = vadd.f32 %v5225, 0.5
    %v5228 = vmul.f32 %v5213, 0.5
    %v5229 = vmul.f32 %v5217, 0.5
    %v5230 = vtanh.pop %v5228
    %v5231 = vtanh.pop %v5229
    %v5232 = vmul.f32 %v5230, 0.5
    %v5233 = vmul.f32 %v5231, 0.5
    %v5234 = vadd.f32 %v5232, 0.5
    %v5235 = vadd.f32 %v5233, 0.5
    %v5236 = vtanh.pop %v5214
    %v5237 = vtanh.pop %v5218
    %v5238 = vmul.f32 %v5215, 0.5
    %v5239 = vmul.f32 %v5219, 0.5
    %v5240 = vtanh.pop %v5238
    %v5241 = vtanh.pop %v5239
    %v5242 = vmul.f32 %v5240, 0.5
    %v5243 = vmul.f32 %v5241, 0.5
    %v5244 = vadd.f32 %v5242, 0.5
    %v5245 = vadd.f32 %v5243, 0.5
    %v5246 = vmul.f32 %v5234, %v4596
    %v5247 = vmul.f32 %v5235, %v4597
    %v5248 = vmul.f32 %v5226, %v5236
    %v5249 = vmul.f32 %v5227, %v5237
    %v5250 = vadd.f32 %v5246, %v5248
    %v5251 = vadd.f32 %v5247, %v5249
    %v5252 = vtanh.pop %v5250
    %v5253 = vtanh.pop %v5251
    %v5254 = vmul.f32 %v5244, %v5252
    %v5255 = vmul.f32 %v5245, %v5253
    %v5256 = vpack.c.bf16 %v5255, %v5254
    %v5273 = vunpack.c.l.b16 %v4620
    %v5274 = vunpack.c.l.b16 %v4623
    %v5275 = vunpack.c.l.b16 %v4626
    %v5276 = vunpack.c.l.b16 %v4629
    %v5277 = vunpack.c.l.b16 %v4632
    %v5278 = vunpack.c.l.b16 %v4635
    %v5279 = vunpack.c.l.b16 %v4638
    %v5280 = vunpack.c.l.b16 %v4641
    %v5281 = vunpack.c.l.b16 %v4644
    %v5282 = vunpack.c.l.b16 %v4647
    %v5283 = vunpack.c.l.b16 %v4650
    %v5284 = vunpack.c.l.b16 %v4653
    %v5285 = vunpack.c.l.b16 %v4656
    %v5286 = vunpack.c.l.b16 %v4659
    %v5287 = vunpack.c.l.b16 %v4662
    %v5288 = vunpack.c.l.b16 %v4665
    %v5289 = vpack.c.b16 %v5274, %v5273
    %v5290 = vpack.c.b16 %v5276, %v5275
    %v5291 = vpack.c.b16 %v5278, %v5277
    %v5292 = vpack.c.b16 %v5280, %v5279
    %v5293 = vpack.c.b16 %v5282, %v5281
    %v5294 = vpack.c.b16 %v5284, %v5283
    %v5295 = vpack.c.b16 %v5286, %v5285
    %v5296 = vpack.c.b16 %v5288, %v5287
    %5305 = vmatprep.subr.bf16.mxu0 %v4763
    %5306 = vmatpush1.bf16.msra.mxu0 %v4762
    %5307 = vmatprep.subr.bf16.mxu0 %v4767
    %5308 = vmatpush1.bf16.msra.mxu0 %v4766
    %5309 = vmatprep.subr.bf16.mxu0 %v4771
    %5310 = vmatpush1.bf16.msra.mxu0 %v4770
    %5311 = vmatprep.subr.bf16.mxu0 %v4775
    %5312 = vmatpush1.bf16.msra.mxu0 %v4774
    %5313 = vmatprep.subr.bf16.mxu0 %v4779
    %5314 = vmatpush1.bf16.msra.mxu0 %v4778
    %5315 = vmatprep.subr.bf16.mxu0 %v4783
    %5316 = vmatpush1.bf16.msra.mxu0 %v4782
    %5317 = vmatprep.subr.bf16.mxu0 %v4787
    %5318 = vmatpush1.bf16.msra.mxu0 %v4786
    %5319 = vmatprep.subr.bf16.mxu0 %v4791
    %5320 = vmatpush1.bf16.msra.mxu0 %v4790
    %5321 = vmatprep.subr.bf16.mxu0 0
    %5322 = vmatpush1.bf16.msra.mxu0 0
    %5323 = vmatprep.subr.bf16.mxu0 0
    %5324 = vmatpush1.bf16.msra.mxu0 0
    %5325 = vmatprep.subr.bf16.mxu0 0
    %5326 = vmatpush1.bf16.msra.mxu0 0
    %5327 = vmatprep.subr.bf16.mxu0 0
    %5328 = vmatpush1.bf16.msra.mxu0 0
    %5329 = vmatprep.subr.bf16.mxu0 0
    %5330 = vmatpush1.bf16.msra.mxu0 0
    %5331 = vmatprep.subr.bf16.mxu0 0
    %5332 = vmatpush1.bf16.msra.mxu0 0
    %5333 = vmatprep.subr.bf16.mxu0 0
    %5334 = vmatpush1.bf16.msra.mxu0 0
    %5335 = vmatprep.subr.bf16.mxu0 0
    %5336 = vmatpush1.bf16.msra.mxu0 0
    %5337 = vmatprep.mubr.bf16.mxu0 0
    %5338 = vmatmul.mubr.bf16.gmra.mrb[0].mxu0 %v5256
    %v5339 = vpop.f32.mrb[0].mxu0
    %v5340 = vadd.f32 0.0, %v5339
    %v5341 = vpop.f32.mrb[0].mxu0
    %v5342 = vadd.f32 0.0, %v5341
    %v5343 = vpop.f32.mrb[0].mxu0
    %v5344 = vadd.f32 0.0, %v5343
    %v5345 = vpop.f32.mrb[0].mxu0
    %v5346 = vadd.f32 0.0, %v5345
    %5347 = vdwg.mxu0
    %5348 = vmatprep.subr.bf16.mxu0 %v4765
    %5349 = vmatpush1.bf16.msra.mxu0 %v4764
    %5350 = vmatprep.subr.bf16.mxu0 %v4769
    %5351 = vmatpush1.bf16.msra.mxu0 %v4768
    %5352 = vmatprep.subr.bf16.mxu0 %v4773
    %5353 = vmatpush1.bf16.msra.mxu0 %v4772
    %5354 = vmatprep.subr.bf16.mxu0 %v4777
    %5355 = vmatpush1.bf16.msra.mxu0 %v4776
    %5356 = vmatprep.subr.bf16.mxu0 %v4781
    %5357 = vmatpush1.bf16.msra.mxu0 %v4780
    %5358 = vmatprep.subr.bf16.mxu0 %v4785
    %5359 = vmatpush1.bf16.msra.mxu0 %v4784
    %5360 = vmatprep.subr.bf16.mxu0 %v4789
    %5361 = vmatpush1.bf16.msra.mxu0 %v4788
    %5362 = vmatprep.subr.bf16.mxu0 %v4793
    %5363 = vmatpush1.bf16.msra.mxu0 %v4792
    %5364 = vmatprep.subr.bf16.mxu0 0
    %5365 = vmatpush1.bf16.msra.mxu0 0
    %5366 = vmatprep.subr.bf16.mxu0 0
    %5367 = vmatpush1.bf16.msra.mxu0 0
    %5368 = vmatprep.subr.bf16.mxu0 0
    %5369 = vmatpush1.bf16.msra.mxu0 0
    %5370 = vmatprep.subr.bf16.mxu0 0
    %5371 = vmatpush1.bf16.msra.mxu0 0
    %5372 = vmatprep.subr.bf16.mxu0 0
    %5373 = vmatpush1.bf16.msra.mxu0 0
    %5374 = vmatprep.subr.bf16.mxu0 0
    %5375 = vmatpush1.bf16.msra.mxu0 0
    %5376 = vmatprep.subr.bf16.mxu0 0
    %5377 = vmatpush1.bf16.msra.mxu0 0
    %5378 = vmatprep.subr.bf16.mxu0 0
    %5379 = vmatpush1.bf16.msra.mxu0 0
    %5380 = vmatprep.mubr.bf16.mxu0 0
    %5381 = vmatmul.mubr.bf16.gmra.mrb[0].mxu0 %v5256
    %v5382 = vpop.f32.mrb[0].mxu0
    %v5383 = vadd.f32 0.0, %v5382
    %v5384 = vpop.f32.mrb[0].mxu0
    %v5385 = vadd.f32 0.0, %v5384
    %v5386 = vpop.f32.mrb[0].mxu0
    %v5387 = vadd.f32 0.0, %v5386
    %v5388 = vpop.f32.mrb[0].mxu0
    %v5389 = vadd.f32 0.0, %v5388
    %5390 = vdwg.mxu0
    %5391 = vmatprep.subr.bf16.mxu0 0
    %5392 = vmatpush1.bf16.msra.mxu0 %v5289
    %5393 = vmatprep.subr.bf16.mxu0 0
    %5394 = vmatpush1.bf16.msra.mxu0 %v5290
    %5395 = vmatprep.subr.bf16.mxu0 0
    %5396 = vmatpush1.bf16.msra.mxu0 %v5291
    %5397 = vmatprep.subr.bf16.mxu0 0
    %5398 = vmatpush1.bf16.msra.mxu0 %v5292
    %5399 = vmatprep.subr.bf16.mxu0 0
    %5400 = vmatpush1.bf16.msra.mxu0 %v5293
    %5401 = vmatprep.subr.bf16.mxu0 0
    %5402 = vmatpush1.bf16.msra.mxu0 %v5294
    %5403 = vmatprep.subr.bf16.mxu0 0
    %5404 = vmatpush1.bf16.msra.mxu0 %v5295
    %5405 = vmatprep.subr.bf16.mxu0 0
    %5406 = vmatpush1.bf16.msra.mxu0 %v5296
    %5407 = vmatprep.subr.bf16.mxu0 0
    %5408 = vmatpush1.bf16.msra.mxu0 0
    %5409 = vmatprep.subr.bf16.mxu0 0
    %5410 = vmatpush1.bf16.msra.mxu0 0
    %5411 = vmatprep.subr.bf16.mxu0 0
    %5412 = vmatpush1.bf16.msra.mxu0 0
    %5413 = vmatprep.subr.bf16.mxu0 0
    %5414 = vmatpush1.bf16.msra.mxu0 0
    %5415 = vmatprep.subr.bf16.mxu0 0
    %5416 = vmatpush1.bf16.msra.mxu0 0
    %5417 = vmatprep.subr.bf16.mxu0 0
    %5418 = vmatpush1.bf16.msra.mxu0 0
    %5419 = vmatprep.subr.bf16.mxu0 0
    %5420 = vmatpush1.bf16.msra.mxu0 0
    %5421 = vmatprep.subr.bf16.mxu0 0
    %5422 = vmatpush1.bf16.msra.mxu0 0
    %5423 = vmatprep.mubr.bf16.mxu0 0
    %5424 = vmatmul.mubr.bf16.gmra.mrb[0].mxu0 %v5256
    %v5425 = vpop.f32.mrb[0].mxu0
    %v5426 = vadd.f32 0.0, %v5425
    %v5427 = vpop.f32.mrb[0].mxu0
    %v5428 = vpop.f32.mrb[0].mxu0
    %v5429 = vadd.f32 0.0, %v5428
    %v5430 = vpop.f32.mrb[0].mxu0
    %5431 = vdwg.mxu0
    %v5432 = vld [vmem:[%s9] sm:$0x1]
    %v5434 = vlaneseq
    %v5435 = vshrl.u32 %v5434, 7
    %v5436 = vsub.s32 0, %v5435
    %v5437 = vrot.slane %v5432, %v5436
    %v5439 = vadd.f32 %v5426, %v5437
    %v5440 = vadd.f32 %v5429, %v5437
    %s5441 = scalar_lea.vmem [#allocation13], 16
    %5442 = vst [vmem:[%s5441] sm:$0xff] %v5439
    %5443 = vst [vmem:[%s5441 + $0x8] sm:$0xff] %v5440
    %5444 = vmax.xlane.f32.xlu0 %v5439
    %v5445 = vpop.xlane.xlu0 %5444
    %5446 = vmax.xlane.f32.xlu0 %v5440
    %v5447 = vpop.xlane.xlu0 %5446
    %vm5448 = vcmp.eq.f32.partialorder %v5439, %v5445
    %vm5449 = vcmp.eq.f32.partialorder %v5440, %v5447
    %v5450 = vsel %vm5448, %v4601, 128
    %v5451 = vsel %vm5449, %v4601, 128
    %v5452 = vand.u32 %v5450, 65535
    %v5453 = vshra.s32 %v5450, 16
    %v5454 = vcvt.s32.f32 %v5452
    %v5455 = vcvt.s32.f32 %v5453
    %5456 = vmin.xlane.f32.xlu0 %v5455
    %v5457 = vpop.xlane.xlu0 %5456
    %vm5458 = vcmp.eq.f32.partialorder %v5455, %v5457
    %v5459 = vsel %vm5458, %v5454, inf
    %5460 = vmin.xlane.f32.xlu0 %v5459
    %v5461 = vpop.xlane.xlu0 %5460
    %v5462 = vcvt.f32.s32 %v5461
    %v5463 = vcvt.f32.s32 %v5457
    %v5464 = vshll.u32 %v5463, 16
    %v5465 = vadd.s32 %v5464, %v5462
    %v5466 = vand.u32 %v5451, 65535
    %v5467 = vshra.s32 %v5451, 16
    %v5468 = vcvt.s32.f32 %v5466
    %v5469 = vcvt.s32.f32 %v5467
    %5470 = vmin.xlane.f32.xlu0 %v5469
    %v5471 = vpop.xlane.xlu0 %5470
    %vm5472 = vcmp.eq.f32.partialorder %v5469, %v5471
    %v5473 = vsel %vm5472, %v5468, inf
    %5474 = vmin.xlane.f32.xlu0 %v5473
    %v5475 = vpop.xlane.xlu0 %5474
    %v5476 = vcvt.f32.s32 %v5475
    %v5477 = vcvt.f32.s32 %v5471
    %v5478 = vshll.u32 %v5477, 16
    %v5479 = vadd.s32 %v5478, %v5476
    %vm5480 = vcmp.eq.s32.totalorder %v4601, %v5465
    %vm5481 = vcmp.eq.s32.totalorder %v4601, %v5479
    %v5482 = vsel %vm5480, 1, 0
    %v5483 = vsel %vm5481, 1, 0
    %v5484 = vcvt.s32.f32 %v5482
    %v5485 = vcvt.s32.f32 %v5483
    %s5486 = scalar_lea.vmem %s5, 16
    %v5487 = vld [vmem:[%s5486] sm:$0xff]
    %v5488 = vld [vmem:[%s5486 + $0x8] sm:$0xff]
    %5489 = vset.pattern.permute.xlu0 0
    %5490 = vperm.xlu0 %5489, %v5487
    %v5491 = vpop.permute.xlu0 %5490
    %5492 = vset.pattern.permute.xlu0 0
    %5493 = vperm.xlu0 %5492, %v5488
    %v5494 = vpop.permute.xlu0 %5493
    %vm5495 = vcmp.eq.s32.totalorder %v4601, %v5491
    %vm5496 = vcmp.eq.s32.totalorder %v4601, %v5494
    %v5497 = vsel %vm5495, 1, 0
    %v5498 = vsel %vm5496, 1, 0
    %v5499 = vcvt.s32.f32 %v5497
    %v5500 = vcvt.s32.f32 %v5498
    %s5501 = sld [smem:[#allocation4 + $0x1]]
    %p5502 = scmp.ne.s32.totalorder %s5501, 0
    %s5503 = scalar_select %p5502, 1, 0
    %v5504 = vstv %s5503
    %vm5505 = vcmp.eq.s32.totalorder %v5504, 1
    %v5506 = vsel %vm5505, %v5499, %v5484
    %v5507 = vsel %vm5505, %v5500, %v5485
    %v5508 = vpack.c.bf16 %v5507, %v5506
    %v5509 = vld [vmem:[#allocation10] sm:$0xff]
    %v5510 = vld [vmem:[#allocation10 + $0x8] sm:$0xff]
    %v5511 = vld [vmem:[#allocation10 + $0x10] sm:$0xff]
    %v5512 = vld [vmem:[#allocation10 + $0x18] sm:$0xff]
    %v5513 = vld [vmem:[#allocation10 + $0x20] sm:$0xff]
    %v5514 = vld [vmem:[#allocation10 + $0x28] sm:$0xff]
    %v5515 = vld [vmem:[#allocation10 + $0x30] sm:$0xff]
    %v5516 = vld [vmem:[#allocation10 + $0x38] sm:$0xff]
    %v5517 = vld [vmem:[#allocation10 + $0x40] sm:$0xff]
    %v5518 = vld [vmem:[#allocation10 + $0x48] sm:$0xff]
    %v5519 = vld [vmem:[#allocation10 + $0x50] sm:$0xff]
    %v5520 = vld [vmem:[#allocation10 + $0x58] sm:$0xff]
    %v5521 = vld [vmem:[#allocation10 + $0x60] sm:$0xff]
    %v5522 = vld [vmem:[#allocation10 + $0x68] sm:$0xff]
    %v5523 = vld [vmem:[#allocation10 + $0x70] sm:$0xff]
    %v5524 = vld [vmem:[#allocation10 + $0x78] sm:$0xff]
    %v5525 = vld [vmem:[#allocation10 + $0x80] sm:$0xff]
    %v5526 = vld [vmem:[#allocation10 + $0x88] sm:$0xff]
    %v5527 = vld [vmem:[#allocation10 + $0x90] sm:$0xff]
    %v5528 = vld [vmem:[#allocation10 + $0x98] sm:$0xff]
    %v5529 = vld [vmem:[#allocation10 + $0xa0] sm:$0xff]
    %v5530 = vld [vmem:[#allocation10 + $0xa8] sm:$0xff]
    %v5531 = vld [vmem:[#allocation10 + $0xb0] sm:$0xff]
    %v5532 = vld [vmem:[#allocation10 + $0xb8] sm:$0xff]
    %v5533 = vld [vmem:[#allocation10 + $0xc0] sm:$0xff]
    %v5534 = vld [vmem:[#allocation10 + $0xc8] sm:$0xff]
    %v5535 = vld [vmem:[#allocation10 + $0xd0] sm:$0xff]
    %v5536 = vld [vmem:[#allocation10 + $0xd8] sm:$0xff]
    %v5537 = vld [vmem:[#allocation10 + $0xe0] sm:$0xff]
    %v5538 = vld [vmem:[#allocation10 + $0xe8] sm:$0xff]
    %v5539 = vld [vmem:[#allocation10 + $0xf0] sm:$0xff]
    %v5540 = vld [vmem:[#allocation10 + $0xf8] sm:$0xff]
    %v5541 = vld [vmem:[%s7] sm:$0xf]
    %v5543 = vlaneseq
    %v5544 = vshrl.u32 %v5543, 7
    %v5545 = vsub.s32 0, %v5544
    %v5546 = vrot.slane %v5541, %v5545
    %v5547 = vlaneseq
    %v5548 = vshrl.u32 %v5547, 7
    %v5549 = vsub.s32 1, %v5548
    %v5550 = vrot.slane %v5541, %v5549
    %v5551 = vlaneseq
    %v5552 = vshrl.u32 %v5551, 7
    %v5553 = vsub.s32 2, %v5552
    %v5554 = vrot.slane %v5541, %v5553
    %v5555 = vlaneseq
    %v5556 = vshrl.u32 %v5555, 7
    %v5557 = vsub.s32 3, %v5556
    %v5558 = vrot.slane %v5541, %v5557
    %v5595 = vunpack.c.l.b16 %v5509
    %v5596 = vunpack.c.h.b16 %v5509
    %v5597 = vunpack.c.l.b16 %v5510
    %v5598 = vunpack.c.h.b16 %v5510
    %v5599 = vunpack.c.l.b16 %v5511
    %v5600 = vunpack.c.h.b16 %v5511
    %v5601 = vunpack.c.l.b16 %v5512
    %v5602 = vunpack.c.h.b16 %v5512
    %v5603 = vunpack.c.l.b16 %v5513
    %v5604 = vunpack.c.h.b16 %v5513
    %v5605 = vunpack.c.l.b16 %v5514
    %v5606 = vunpack.c.h.b16 %v5514
    %v5607 = vunpack.c.l.b16 %v5515
    %v5608 = vunpack.c.h.b16 %v5515
    %v5609 = vunpack.c.l.b16 %v5516
    %v5610 = vunpack.c.h.b16 %v5516
    %v5611 = vunpack.c.l.b16 %v5517
    %v5612 = vunpack.c.h.b16 %v5517
    %v5613 = vunpack.c.l.b16 %v5518
    %v5614 = vunpack.c.h.b16 %v5518
    %v5615 = vunpack.c.l.b16 %v5519
    %v5616 = vunpack.c.h.b16 %v5519
    %v5617 = vunpack.c.l.b16 %v5520
    %v5618 = vunpack.c.h.b16 %v5520
    %v5619 = vunpack.c.l.b16 %v5521
    %v5620 = vunpack.c.h.b16 %v5521
    %v5621 = vunpack.c.l.b16 %v5522
    %v5622 = vunpack.c.h.b16 %v5522
    %v5623 = vunpack.c.l.b16 %v5523
    %v5624 = vunpack.c.h.b16 %v5523
    %v5625 = vunpack.c.l.b16 %v5524
    %v5626 = vunpack.c.h.b16 %v5524
    %v5627 = vunpack.c.l.b16 %v5525
    %v5628 = vunpack.c.h.b16 %v5525
    %v5629 = vunpack.c.l.b16 %v5526
    %v5630 = vunpack.c.h.b16 %v5526
    %v5631 = vunpack.c.l.b16 %v5527
    %v5632 = vunpack.c.h.b16 %v5527
    %v5633 = vunpack.c.l.b16 %v5528
    %v5634 = vunpack.c.h.b16 %v5528
    %v5635 = vunpack.c.l.b16 %v5529
    %v5636 = vunpack.c.h.b16 %v5529
    %v5637 = vunpack.c.l.b16 %v5530
    %v5638 = vunpack.c.h.b16 %v5530
    %v5639 = vunpack.c.l.b16 %v5531
    %v5640 = vunpack.c.h.b16 %v5531
    %v5641 = vunpack.c.l.b16 %v5532
    %v5642 = vunpack.c.h.b16 %v5532
    %v5643 = vunpack.c.l.b16 %v5533
    %v5644 = vunpack.c.h.b16 %v5533
    %v5645 = vunpack.c.l.b16 %v5534
    %v5646 = vunpack.c.h.b16 %v5534
    %v5647 = vunpack.c.l.b16 %v5535
    %v5648 = vunpack.c.h.b16 %v5535
    %v5649 = vunpack.c.l.b16 %v5536
    %v5650 = vunpack.c.h.b16 %v5536
    %v5651 = vunpack.c.l.b16 %v5537
    %v5652 = vunpack.c.h.b16 %v5537
    %v5653 = vunpack.c.l.b16 %v5538
    %v5654 = vunpack.c.h.b16 %v5538
    %v5655 = vunpack.c.l.b16 %v5539
    %v5656 = vunpack.c.h.b16 %v5539
    %v5657 = vunpack.c.l.b16 %v5540
    %v5658 = vunpack.c.h.b16 %v5540
    %v5659 = vpack.c.b16 %v5599, %v5595
    %v5660 = vpack.c.b16 %v5600, %v5596
    %v5661 = vpack.c.b16 %v5601, %v5597
    %v5662 = vpack.c.b16 %v5602, %v5598
    %v5663 = vpack.c.b16 %v5607, %v5603
    %v5664 = vpack.c.b16 %v5608, %v5604
    %v5665 = vpack.c.b16 %v5609, %v5605
    %v5666 = vpack.c.b16 %v5610, %v5606
    %v5667 = vpack.c.b16 %v5615, %v5611
    %v5668 = vpack.c.b16 %v5616, %v5612
    %v5669 = vpack.c.b16 %v5617, %v5613
    %v5670 = vpack.c.b16 %v5618, %v5614
    %v5671 = vpack.c.b16 %v5623, %v5619
    %v5672 = vpack.c.b16 %v5624, %v5620
    %v5673 = vpack.c.b16 %v5625, %v5621
    %v5674 = vpack.c.b16 %v5626, %v5622
    %v5675 = vpack.c.b16 %v5631, %v5627
    %v5676 = vpack.c.b16 %v5632, %v5628
    %v5677 = vpack.c.b16 %v5633, %v5629
    %v5678 = vpack.c.b16 %v5634, %v5630
    %v5679 = vpack.c.b16 %v5639, %v5635
    %v5680 = vpack.c.b16 %v5640, %v5636
    %v5681 = vpack.c.b16 %v5641, %v5637
    %v5682 = vpack.c.b16 %v5642, %v5638
    %v5683 = vpack.c.b16 %v5647, %v5643
    %v5684 = vpack.c.b16 %v5648, %v5644
    %v5685 = vpack.c.b16 %v5649, %v5645
    %v5686 = vpack.c.b16 %v5650, %v5646
    %v5687 = vpack.c.b16 %v5655, %v5651
    %v5688 = vpack.c.b16 %v5656, %v5652
    %v5689 = vpack.c.b16 %v5657, %v5653
    %v5690 = vpack.c.b16 %v5658, %v5654
    %5723 = vmatprep.subr.bf16.mxu0 %v5660
    %5724 = vmatpush1.bf16.msra.mxu0 %v5659
    %5725 = vmatprep.subr.bf16.mxu0 %v5664
    %5726 = vmatpush1.bf16.msra.mxu0 %v5663
    %5727 = vmatprep.subr.bf16.mxu0 %v5668
    %5728 = vmatpush1.bf16.msra.mxu0 %v5667
    %5729 = vmatprep.subr.bf16.mxu0 %v5672
    %5730 = vmatpush1.bf16.msra.mxu0 %v5671
    %5731 = vmatprep.subr.bf16.mxu0 %v5676
    %5732 = vmatpush1.bf16.msra.mxu0 %v5675
    %5733 = vmatprep.subr.bf16.mxu0 %v5680
    %5734 = vmatpush1.bf16.msra.mxu0 %v5679
    %5735 = vmatprep.subr.bf16.mxu0 %v5684
    %5736 = vmatpush1.bf16.msra.mxu0 %v5683
    %5737 = vmatprep.subr.bf16.mxu0 %v5688
    %5738 = vmatpush1.bf16.msra.mxu0 %v5687
    %5739 = vmatprep.subr.bf16.mxu0 0
    %5740 = vmatpush1.bf16.msra.mxu0 0
    %5741 = vmatprep.subr.bf16.mxu0 0
    %5742 = vmatpush1.bf16.msra.mxu0 0
    %5743 = vmatprep.subr.bf16.mxu0 0
    %5744 = vmatpush1.bf16.msra.mxu0 0
    %5745 = vmatprep.subr.bf16.mxu0 0
    %5746 = vmatpush1.bf16.msra.mxu0 0
    %5747 = vmatprep.subr.bf16.mxu0 0
    %5748 = vmatpush1.bf16.msra.mxu0 0
    %5749 = vmatprep.subr.bf16.mxu0 0
    %5750 = vmatpush1.bf16.msra.mxu0 0
    %5751 = vmatprep.subr.bf16.mxu0 0
    %5752 = vmatpush1.bf16.msra.mxu0 0
    %5753 = vmatprep.subr.bf16.mxu0 0
    %5754 = vmatpush1.bf16.msra.mxu0 0
    %5755 = vmatprep.mubr.bf16.mxu0 0
    %5756 = vmatmul.mubr.bf16.gmra.mrb[0].mxu0 %v5508
    %v5757 = vpop.f32.mrb[0].mxu0
    %v5758 = vadd.f32 %v5546, %v5757
    %v5759 = vpop.f32.mrb[0].mxu0
    %v5760 = vadd.f32 %v5550, %v5759
    %v5761 = vpop.f32.mrb[0].mxu0
    %v5762 = vadd.f32 %v5546, %v5761
    %v5763 = vpop.f32.mrb[0].mxu0
    %v5764 = vadd.f32 %v5550, %v5763
    %5765 = vdwg.mxu0
    %5766 = vmatprep.subr.bf16.mxu0 %v5662
    %5767 = vmatpush1.bf16.msra.mxu0 %v5661
    %5768 = vmatprep.subr.bf16.mxu0 %v5666
    %5769 = vmatpush1.bf16.msra.mxu0 %v5665
    %5770 = vmatprep.subr.bf16.mxu0 %v5670
    %5771 = vmatpush1.bf16.msra.mxu0 %v5669
    %5772 = vmatprep.subr.bf16.mxu0 %v5674
    %5773 = vmatpush1.bf16.msra.mxu0 %v5673
    %5774 = vmatprep.subr.bf16.mxu0 %v5678
    %5775 = vmatpush1.bf16.msra.mxu0 %v5677
    %5776 = vmatprep.subr.bf16.mxu0 %v5682
    %5777 = vmatpush1.bf16.msra.mxu0 %v5681
    %5778 = vmatprep.subr.bf16.mxu0 %v5686
    %5779 = vmatpush1.bf16.msra.mxu0 %v5685
    %5780 = vmatprep.subr.bf16.mxu0 %v5690
    %5781 = vmatpush1.bf16.msra.mxu0 %v5689
    %5782 = vmatprep.subr.bf16.mxu0 0
    %5783 = vmatpush1.bf16.msra.mxu0 0
    %5784 = vmatprep.subr.bf16.mxu0 0
    %5785 = vmatpush1.bf16.msra.mxu0 0
    %5786 = vmatprep.subr.bf16.mxu0 0
    %5787 = vmatpush1.bf16.msra.mxu0 0
    %5788 = vmatprep.subr.bf16.mxu0 0
    %5789 = vmatpush1.bf16.msra.mxu0 0
    %5790 = vmatprep.subr.bf16.mxu0 0
    %5791 = vmatpush1.bf16.msra.mxu0 0
    %5792 = vmatprep.subr.bf16.mxu0 0
    %5793 = vmatpush1.bf16.msra.mxu0 0
    %5794 = vmatprep.subr.bf16.mxu0 0
    %5795 = vmatpush1.bf16.msra.mxu0 0
    %5796 = vmatprep.subr.bf16.mxu0 0
    %5797 = vmatpush1.bf16.msra.mxu0 0
    %5798 = vmatprep.mubr.bf16.mxu0 0
    %5799 = vmatmul.mubr.bf16.gmra.mrb[0].mxu0 %v5508
    %v5800 = vpop.f32.mrb[0].mxu0
    %v5801 = vadd.f32 %v5554, %v5800
    %v5802 = vpop.f32.mrb[0].mxu0
    %v5803 = vadd.f32 %v5558, %v5802
    %v5804 = vpop.f32.mrb[0].mxu0
    %v5805 = vadd.f32 %v5554, %v5804
    %v5806 = vpop.f32.mrb[0].mxu0
    %v5807 = vadd.f32 %v5558, %v5806
    %5808 = vdwg.mxu0
    %v5809 = vadd.f32 %v5758, %v5340
    %v5810 = vadd.f32 %v5760, %v5342
    %v5811 = vadd.f32 %v5801, %v5383
    %v5812 = vadd.f32 %v5803, %v5385
    %v5813 = vadd.f32 %v5762, %v5344
    %v5814 = vadd.f32 %v5764, %v5346
    %v5815 = vadd.f32 %v5805, %v5387
    %v5816 = vadd.f32 %v5807, %v5389
    %v5817 = vmul.f32 %v5809, 0.5
    %v5818 = vmul.f32 %v5813, 0.5
    %v5819 = vtanh.pop %v5817
    %v5820 = vtanh.pop %v5818
    %v5821 = vmul.f32 %v5819, 0.5
    %v5822 = vmul.f32 %v5820, 0.5
    %v5823 = vadd.f32 %v5821, 0.5
    %v5824 = vadd.f32 %v5822, 0.5
    %v5825 = vmul.f32 %v5810, 0.5
    %v5826 = vmul.f32 %v5814, 0.5
    %v5827 = vtanh.pop %v5825
    %v5828 = vtanh.pop %v5826
    %v5829 = vmul.f32 %v5827, 0.5
    %v5830 = vmul.f32 %v5828, 0.5
    %v5831 = vadd.f32 %v5829, 0.5
    %v5832 = vadd.f32 %v5830, 0.5
    %v5833 = vtanh.pop %v5811
    %v5834 = vtanh.pop %v5815
    %v5835 = vmul.f32 %v5812, 0.5
    %v5836 = vmul.f32 %v5816, 0.5
    %v5837 = vtanh.pop %v5835
    %v5838 = vtanh.pop %v5836
    %v5839 = vmul.f32 %v5837, 0.5
    %v5840 = vmul.f32 %v5838, 0.5
    %v5841 = vadd.f32 %v5839, 0.5
    %v5842 = vadd.f32 %v5840, 0.5
    %v5843 = vmul.f32 %v5831, %v5250
    %v5844 = vmul.f32 %v5832, %v5251
    %v5845 = vmul.f32 %v5823, %v5833
    %v5846 = vmul.f32 %v5824, %v5834
    %v5847 = vadd.f32 %v5843, %v5845
    %v5848 = vadd.f32 %v5844, %v5846
    %v5849 = vtanh.pop %v5847
    %v5850 = vtanh.pop %v5848
    %v5851 = vmul.f32 %v5841, %v5849
    %v5852 = vmul.f32 %v5842, %v5850
    %v5853 = vpack.c.bf16 %v5852, %v5851
    %v5854 = vld [vmem:[#allocation11] sm:$0xff]
    %v5855 = vld [vmem:[#allocation11 + $0x8] sm:$0xff]
    %v5856 = vld [vmem:[#allocation11 + $0x10] sm:$0xf]
    %v5857 = vld [vmem:[#allocation11 + $0x14] sm:$0xff]
    %v5858 = vld [vmem:[#allocation11 + $0x1c] sm:$0xff]
    %v5859 = vld [vmem:[#allocation11 + $0x24] sm:$0xf]
    %v5860 = vld [vmem:[#allocation11 + $0x28] sm:$0xff]
    %v5861 = vld [vmem:[#allocation11 + $0x30] sm:$0xff]
    %v5862 = vld [vmem:[#allocation11 + $0x38] sm:$0xf]
    %v5863 = vld [vmem:[#allocation11 + $0x3c] sm:$0xff]
    %v5864 = vld [vmem:[#allocation11 + $0x44] sm:$0xff]
    %v5865 = vld [vmem:[#allocation11 + $0x4c] sm:$0xf]
    %v5866 = vld [vmem:[#allocation11 + $0x50] sm:$0xff]
    %v5867 = vld [vmem:[#allocation11 + $0x58] sm:$0xff]
    %v5868 = vld [vmem:[#allocation11 + $0x60] sm:$0xf]
    %v5869 = vld [vmem:[#allocation11 + $0x64] sm:$0xff]
    %v5870 = vld [vmem:[#allocation11 + $0x6c] sm:$0xff]
    %v5871 = vld [vmem:[#allocation11 + $0x74] sm:$0xf]
    %v5872 = vld [vmem:[#allocation11 + $0x78] sm:$0xff]
    %v5873 = vld [vmem:[#allocation11 + $0x80] sm:$0xff]
    %v5874 = vld [vmem:[#allocation11 + $0x88] sm:$0xf]
    %v5875 = vld [vmem:[#allocation11 + $0x8c] sm:$0xff]
    %v5876 = vld [vmem:[#allocation11 + $0x94] sm:$0xff]
    %v5877 = vld [vmem:[#allocation11 + $0x9c] sm:$0xf]
    %v5878 = vld [vmem:[#allocation11 + $0xa0] sm:$0xff]
    %v5879 = vld [vmem:[#allocation11 + $0xa8] sm:$0xff]
    %v5880 = vld [vmem:[#allocation11 + $0xb0] sm:$0xf]
    %v5881 = vld [vmem:[#allocation11 + $0xb4] sm:$0xff]
    %v5882 = vld [vmem:[#allocation11 + $0xbc] sm:$0xff]
    %v5883 = vld [vmem:[#allocation11 + $0xc4] sm:$0xf]
    %v5884 = vld [vmem:[#allocation11 + $0xc8] sm:$0xff]
    %v5885 = vld [vmem:[#allocation11 + $0xd0] sm:$0xff]
    %v5886 = vld [vmem:[#allocation11 + $0xd8] sm:$0xf]
    %v5887 = vld [vmem:[#allocation11 + $0xdc] sm:$0xff]
    %v5888 = vld [vmem:[#allocation11 + $0xe4] sm:$0xff]
    %v5889 = vld [vmem:[#allocation11 + $0xec] sm:$0xf]
    %v5890 = vld [vmem:[#allocation11 + $0xf0] sm:$0xff]
    %v5891 = vld [vmem:[#allocation11 + $0xf8] sm:$0xff]
    %v5892 = vld [vmem:[#allocation11 + $0x100] sm:$0xf]
    %v5893 = vld [vmem:[#allocation11 + $0x104] sm:$0xff]
    %v5894 = vld [vmem:[#allocation11 + $0x10c] sm:$0xff]
    %v5895 = vld [vmem:[#allocation11 + $0x114] sm:$0xf]
    %v5896 = vld [vmem:[#allocation11 + $0x118] sm:$0xff]
    %v5897 = vld [vmem:[#allocation11 + $0x120] sm:$0xff]
    %v5898 = vld [vmem:[#allocation11 + $0x128] sm:$0xf]
    %v5899 = vld [vmem:[#allocation11 + $0x12c] sm:$0xff]
    %v5900 = vld [vmem:[#allocation11 + $0x134] sm:$0xff]
    %v5901 = vld [vmem:[#allocation11 + $0x13c] sm:$0xf]
    %v5950 = vunpack.c.l.b16 %v5854
    %v5951 = vunpack.c.h.b16 %v5854
    %v5952 = vunpack.c.l.b16 %v5855
    %v5953 = vunpack.c.h.b16 %v5855
    %v5954 = vunpack.c.l.b16 %v5856
    %v5955 = vunpack.c.l.b16 %v5857
    %v5956 = vunpack.c.h.b16 %v5857
    %v5957 = vunpack.c.l.b16 %v5858
    %v5958 = vunpack.c.h.b16 %v5858
    %v5959 = vunpack.c.l.b16 %v5859
    %v5960 = vunpack.c.l.b16 %v5860
    %v5961 = vunpack.c.h.b16 %v5860
    %v5962 = vunpack.c.l.b16 %v5861
    %v5963 = vunpack.c.h.b16 %v5861
    %v5964 = vunpack.c.l.b16 %v5862
    %v5965 = vunpack.c.l.b16 %v5863
    %v5966 = vunpack.c.h.b16 %v5863
    %v5967 = vunpack.c.l.b16 %v5864
    %v5968 = vunpack.c.h.b16 %v5864
    %v5969 = vunpack.c.l.b16 %v5865
    %v5970 = vunpack.c.l.b16 %v5866
    %v5971 = vunpack.c.h.b16 %v5866
    %v5972 = vunpack.c.l.b16 %v5867
    %v5973 = vunpack.c.h.b16 %v5867
    %v5974 = vunpack.c.l.b16 %v5868
    %v5975 = vunpack.c.l.b16 %v5869
    %v5976 = vunpack.c.h.b16 %v5869
    %v5977 = vunpack.c.l.b16 %v5870
    %v5978 = vunpack.c.h.b16 %v5870
    %v5979 = vunpack.c.l.b16 %v5871
    %v5980 = vunpack.c.l.b16 %v5872
    %v5981 = vunpack.c.h.b16 %v5872
    %v5982 = vunpack.c.l.b16 %v5873
    %v5983 = vunpack.c.h.b16 %v5873
    %v5984 = vunpack.c.l.b16 %v5874
    %v5985 = vunpack.c.l.b16 %v5875
    %v5986 = vunpack.c.h.b16 %v5875
    %v5987 = vunpack.c.l.b16 %v5876
    %v5988 = vunpack.c.h.b16 %v5876
    %v5989 = vunpack.c.l.b16 %v5877
    %v5990 = vunpack.c.l.b16 %v5878
    %v5991 = vunpack.c.h.b16 %v5878
    %v5992 = vunpack.c.l.b16 %v5879
    %v5993 = vunpack.c.h.b16 %v5879
    %v5994 = vunpack.c.l.b16 %v5880
    %v5995 = vunpack.c.l.b16 %v5881
    %v5996 = vunpack.c.h.b16 %v5881
    %v5997 = vunpack.c.l.b16 %v5882
    %v5998 = vunpack.c.h.b16 %v5882
    %v5999 = vunpack.c.l.b16 %v5883
    %v6000 = vunpack.c.l.b16 %v5884
    %v6001 = vunpack.c.h.b16 %v5884
    %v6002 = vunpack.c.l.b16 %v5885
    %v6003 = vunpack.c.h.b16 %v5885
    %v6004 = vunpack.c.l.b16 %v5886
    %v6005 = vunpack.c.l.b16 %v5887
    %v6006 = vunpack.c.h.b16 %v5887
    %v6007 = vunpack.c.l.b16 %v5888
    %v6008 = vunpack.c.h.b16 %v5888
    %v6009 = vunpack.c.l.b16 %v5889
    %v6010 = vunpack.c.l.b16 %v5890
    %v6011 = vunpack.c.h.b16 %v5890
    %v6012 = vunpack.c.l.b16 %v5891
    %v6013 = vunpack.c.h.b16 %v5891
    %v6014 = vunpack.c.l.b16 %v5892
    %v6015 = vunpack.c.l.b16 %v5893
    %v6016 = vunpack.c.h.b16 %v5893
    %v6017 = vunpack.c.l.b16 %v5894
    %v6018 = vunpack.c.h.b16 %v5894
    %v6019 = vunpack.c.l.b16 %v5895
    %v6020 = vunpack.c.l.b16 %v5896
    %v6021 = vunpack.c.h.b16 %v5896
    %v6022 = vunpack.c.l.b16 %v5897
    %v6023 = vunpack.c.h.b16 %v5897
    %v6024 = vunpack.c.l.b16 %v5898
    %v6025 = vunpack.c.l.b16 %v5899
    %v6026 = vunpack.c.h.b16 %v5899
    %v6027 = vunpack.c.l.b16 %v5900
    %v6028 = vunpack.c.h.b16 %v5900
    %v6029 = vunpack.c.l.b16 %v5901
    %v6030 = vpack.c.b16 %v5955, %v5950
    %v6031 = vpack.c.b16 %v5956, %v5951
    %v6032 = vpack.c.b16 %v5957, %v5952
    %v6033 = vpack.c.b16 %v5958, %v5953
    %v6034 = vpack.c.b16 %v5959, %v5954
    %v6035 = vpack.c.b16 %v5965, %v5960
    %v6036 = vpack.c.b16 %v5966, %v5961
    %v6037 = vpack.c.b16 %v5967, %v5962
    %v6038 = vpack.c.b16 %v5968, %v5963
    %v6039 = vpack.c.b16 %v5969, %v5964
    %v6040 = vpack.c.b16 %v5975, %v5970
    %v6041 = vpack.c.b16 %v5976, %v5971
    %v6042 = vpack.c.b16 %v5977, %v5972
    %v6043 = vpack.c.b16 %v5978, %v5973
    %v6044 = vpack.c.b16 %v5979, %v5974
    %v6045 = vpack.c.b16 %v5985, %v5980
    %v6046 = vpack.c.b16 %v5986, %v5981
    %v6047 = vpack.c.b16 %v5987, %v5982
    %v6048 = vpack.c.b16 %v5988, %v5983
    %v6049 = vpack.c.b16 %v5989, %v5984
    %v6050 = vpack.c.b16 %v5995, %v5990
    %v6051 = vpack.c.b16 %v5996, %v5991
    %v6052 = vpack.c.b16 %v5997, %v5992
    %v6053 = vpack.c.b16 %v5998, %v5993
    %v6054 = vpack.c.b16 %v5999, %v5994
    %v6055 = vpack.c.b16 %v6005, %v6000
    %v6056 = vpack.c.b16 %v6006, %v6001
    %v6057 = vpack.c.b16 %v6007, %v6002
    %v6058 = vpack.c.b16 %v6008, %v6003
    %v6059 = vpack.c.b16 %v6009, %v6004
    %v6060 = vpack.c.b16 %v6015, %v6010
    %v6061 = vpack.c.b16 %v6016, %v6011
    %v6062 = vpack.c.b16 %v6017, %v6012
    %v6063 = vpack.c.b16 %v6018, %v6013
    %v6064 = vpack.c.b16 %v6019, %v6014
    %v6065 = vpack.c.b16 %v6025, %v6020
    %v6066 = vpack.c.b16 %v6026, %v6021
    %v6067 = vpack.c.b16 %v6027, %v6022
    %v6068 = vpack.c.b16 %v6028, %v6023
    %v6069 = vpack.c.b16 %v6029, %v6024
    %6110 = vmatprep.subr.bf16.mxu0 %v6031
    %6111 = vmatpush1.bf16.msra.mxu0 %v6030
    %6112 = vmatprep.subr.bf16.mxu0 %v6036
    %6113 = vmatpush1.bf16.msra.mxu0 %v6035
    %6114 = vmatprep.subr.bf16.mxu0 %v6041
    %6115 = vmatpush1.bf16.msra.mxu0 %v6040
    %6116 = vmatprep.subr.bf16.mxu0 %v6046
    %6117 = vmatpush1.bf16.msra.mxu0 %v6045
    %6118 = vmatprep.subr.bf16.mxu0 %v6051
    %6119 = vmatpush1.bf16.msra.mxu0 %v6050
    %6120 = vmatprep.subr.bf16.mxu0 %v6056
    %6121 = vmatpush1.bf16.msra.mxu0 %v6055
    %6122 = vmatprep.subr.bf16.mxu0 %v6061
    %6123 = vmatpush1.bf16.msra.mxu0 %v6060
    %6124 = vmatprep.subr.bf16.mxu0 %v6066
    %6125 = vmatpush1.bf16.msra.mxu0 %v6065
    %6126 = vmatprep.subr.bf16.mxu0 0
    %6127 = vmatpush1.bf16.msra.mxu0 0
    %6128 = vmatprep.subr.bf16.mxu0 0
    %6129 = vmatpush1.bf16.msra.mxu0 0
    %6130 = vmatprep.subr.bf16.mxu0 0
    %6131 = vmatpush1.bf16.msra.mxu0 0
    %6132 = vmatprep.subr.bf16.mxu0 0
    %6133 = vmatpush1.bf16.msra.mxu0 0
    %6134 = vmatprep.subr.bf16.mxu0 0
    %6135 = vmatpush1.bf16.msra.mxu0 0
    %6136 = vmatprep.subr.bf16.mxu0 0
    %6137 = vmatpush1.bf16.msra.mxu0 0
    %6138 = vmatprep.subr.bf16.mxu0 0
    %6139 = vmatpush1.bf16.msra.mxu0 0
    %6140 = vmatprep.subr.bf16.mxu0 0
    %6141 = vmatpush1.bf16.msra.mxu0 0
    %6142 = vmatprep.mubr.bf16.mxu0 0
    %6143 = vmatmul.mubr.bf16.gmra.mrb[0].mxu0 %v5853
    %v6144 = vpop.f32.mrb[0].mxu0
    %v6145 = vadd.f32 0.0, %v6144
    %v6146 = vpop.f32.mrb[0].mxu0
    %v6147 = vadd.f32 0.0, %v6146
    %v6148 = vpop.f32.mrb[0].mxu0
    %v6149 = vadd.f32 0.0, %v6148
    %v6150 = vpop.f32.mrb[0].mxu0
    %v6151 = vadd.f32 0.0, %v6150
    %6152 = vdwg.mxu0
    %6153 = vmatprep.subr.bf16.mxu0 %v6033
    %6154 = vmatpush1.bf16.msra.mxu0 %v6032
    %6155 = vmatprep.subr.bf16.mxu0 %v6038
    %6156 = vmatpush1.bf16.msra.mxu0 %v6037
    %6157 = vmatprep.subr.bf16.mxu0 %v6043
    %6158 = vmatpush1.bf16.msra.mxu0 %v6042
    %6159 = vmatprep.subr.bf16.mxu0 %v6048
    %6160 = vmatpush1.bf16.msra.mxu0 %v6047
    %6161 = vmatprep.subr.bf16.mxu0 %v6053
    %6162 = vmatpush1.bf16.msra.mxu0 %v6052
    %6163 = vmatprep.subr.bf16.mxu0 %v6058
    %6164 = vmatpush1.bf16.msra.mxu0 %v6057
    %6165 = vmatprep.subr.bf16.mxu0 %v6063
    %6166 = vmatpush1.bf16.msra.mxu0 %v6062
    %6167 = vmatprep.subr.bf16.mxu0 %v6068
    %6168 = vmatpush1.bf16.msra.mxu0 %v6067
    %6169 = vmatprep.subr.bf16.mxu0 0
    %6170 = vmatpush1.bf16.msra.mxu0 0
    %6171 = vmatprep.subr.bf16.mxu0 0
    %6172 = vmatpush1.bf16.msra.mxu0 0
    %6173 = vmatprep.subr.bf16.mxu0 0
    %6174 = vmatpush1.bf16.msra.mxu0 0
    %6175 = vmatprep.subr.bf16.mxu0 0
    %6176 = vmatpush1.bf16.msra.mxu0 0
    %6177 = vmatprep.subr.bf16.mxu0 0
    %6178 = vmatpush1.bf16.msra.mxu0 0
    %6179 = vmatprep.subr.bf16.mxu0 0
    %6180 = vmatpush1.bf16.msra.mxu0 0
    %6181 = vmatprep.subr.bf16.mxu0 0
    %6182 = vmatpush1.bf16.msra.mxu0 0
    %6183 = vmatprep.subr.bf16.mxu0 0
    %6184 = vmatpush1.bf16.msra.mxu0 0
    %6185 = vmatprep.mubr.bf16.mxu0 0
    %6186 = vmatmul.mubr.bf16.gmra.mrb[0].mxu0 %v5853
    %v6187 = vpop.f32.mrb[0].mxu0
    %v6188 = vadd.f32 0.0, %v6187
    %v6189 = vpop.f32.mrb[0].mxu0
    %v6190 = vadd.f32 0.0, %v6189
    %v6191 = vpop.f32.mrb[0].mxu0
    %v6192 = vadd.f32 0.0, %v6191
    %v6193 = vpop.f32.mrb[0].mxu0
    %v6194 = vadd.f32 0.0, %v6193
    %6195 = vdwg.mxu0
    %6196 = vmatprep.subr.bf16.mxu0 0
    %6197 = vmatpush1.bf16.msra.mxu0 %v6034
    %6198 = vmatprep.subr.bf16.mxu0 0
    %6199 = vmatpush1.bf16.msra.mxu0 %v6039
    %6200 = vmatprep.subr.bf16.mxu0 0
    %6201 = vmatpush1.bf16.msra.mxu0 %v6044
    %6202 = vmatprep.subr.bf16.mxu0 0
    %6203 = vmatpush1.bf16.msra.mxu0 %v6049
    %6204 = vmatprep.subr.bf16.mxu0 0
    %6205 = vmatpush1.bf16.msra.mxu0 %v6054
    %6206 = vmatprep.subr.bf16.mxu0 0
    %6207 = vmatpush1.bf16.msra.mxu0 %v6059
    %6208 = vmatprep.subr.bf16.mxu0 0
    %6209 = vmatpush1.bf16.msra.mxu0 %v6064
    %6210 = vmatprep.subr.bf16.mxu0 0
    %6211 = vmatpush1.bf16.msra.mxu0 %v6069
    %6212 = vmatprep.subr.bf16.mxu0 0
    %6213 = vmatpush1.bf16.msra.mxu0 0
    %6214 = vmatprep.subr.bf16.mxu0 0
    %6215 = vmatpush1.bf16.msra.mxu0 0
    %6216 = vmatprep.subr.bf16.mxu0 0
    %6217 = vmatpush1.bf16.msra.mxu0 0
    %6218 = vmatprep.subr.bf16.mxu0 0
    %6219 = vmatpush1.bf16.msra.mxu0 0
    %6220 = vmatprep.subr.bf16.mxu0 0
    %6221 = vmatpush1.bf16.msra.mxu0 0
    %6222 = vmatprep.subr.bf16.mxu0 0
    %6223 = vmatpush1.bf16.msra.mxu0 0
    %6224 = vmatprep.subr.bf16.mxu0 0
    %6225 = vmatpush1.bf16.msra.mxu0 0
    %6226 = vmatprep.subr.bf16.mxu0 0
    %6227 = vmatpush1.bf16.msra.mxu0 0
    %6228 = vmatprep.mubr.bf16.mxu0 0
    %6229 = vmatmul.mubr.bf16.gmra.mrb[0].mxu0 %v5853
    %v6230 = vpop.f32.mrb[0].mxu0
    %v6231 = vadd.f32 0.0, %v6230
    %v6232 = vpop.f32.mrb[0].mxu0
    %v6233 = vpop.f32.mrb[0].mxu0
    %v6234 = vadd.f32 0.0, %v6233
    %v6235 = vpop.f32.mrb[0].mxu0
    %6236 = vdwg.mxu0
    %v6237 = vld [vmem:[%s9] sm:$0x1]
    %v6239 = vlaneseq
    %v6240 = vshrl.u32 %v6239, 7
    %v6241 = vsub.s32 0, %v6240
    %v6242 = vrot.slane %v6237, %v6241
    %v6244 = vadd.f32 %v6231, %v6242
    %v6245 = vadd.f32 %v6234, %v6242
    %s6246 = scalar_lea.vmem [#allocation13], 32
    %6247 = vst [vmem:[%s6246] sm:$0xff] %v6244
    %6248 = vst [vmem:[%s6246 + $0x8] sm:$0xff] %v6245
    %6249 = vmax.xlane.f32.xlu0 %v6244
    %v6250 = vpop.xlane.xlu0 %6249
    %6251 = vmax.xlane.f32.xlu0 %v6245
    %v6252 = vpop.xlane.xlu0 %6251
    %vm6253 = vcmp.eq.f32.partialorder %v6244, %v6250
    %vm6254 = vcmp.eq.f32.partialorder %v6245, %v6252
    %v6255 = vsel %vm6253, %v4601, 128
    %v6256 = vsel %vm6254, %v4601, 128
    %v6257 = vand.u32 %v6255, 65535
    %v6258 = vshra.s32 %v6255, 16
    %v6259 = vcvt.s32.f32 %v6257
    %v6260 = vcvt.s32.f32 %v6258
    %6261 = vmin.xlane.f32.xlu0 %v6260
    %v6262 = vpop.xlane.xlu0 %6261
    %vm6263 = vcmp.eq.f32.partialorder %v6260, %v6262
    %v6264 = vsel %vm6263, %v6259, inf
    %6265 = vmin.xlane.f32.xlu0 %v6264
    %v6266 = vpop.xlane.xlu0 %6265
    %v6267 = vcvt.f32.s32 %v6266
    %v6268 = vcvt.f32.s32 %v6262
    %v6269 = vshll.u32 %v6268, 16
    %v6270 = vadd.s32 %v6269, %v6267
    %v6271 = vand.u32 %v6256, 65535
    %v6272 = vshra.s32 %v6256, 16
    %v6273 = vcvt.s32.f32 %v6271
    %v6274 = vcvt.s32.f32 %v6272
    %6275 = vmin.xlane.f32.xlu0 %v6274
    %v6276 = vpop.xlane.xlu0 %6275
    %vm6277 = vcmp.eq.f32.partialorder %v6274, %v6276
    %v6278 = vsel %vm6277, %v6273, inf
    %6279 = vmin.xlane.f32.xlu0 %v6278
    %v6280 = vpop.xlane.xlu0 %6279
    %v6281 = vcvt.f32.s32 %v6280
    %v6282 = vcvt.f32.s32 %v6276
    %v6283 = vshll.u32 %v6282, 16
    %v6284 = vadd.s32 %v6283, %v6281
    %vm6285 = vcmp.eq.s32.totalorder %v4601, %v6270
    %vm6286 = vcmp.eq.s32.totalorder %v4601, %v6284
    %v6287 = vsel %vm6285, 1, 0
    %v6288 = vsel %vm6286, 1, 0
    %v6289 = vcvt.s32.f32 %v6287
    %v6290 = vcvt.s32.f32 %v6288
    %s6291 = scalar_lea.vmem %s5, 32
    %v6292 = vld [vmem:[%s6291] sm:$0xff]
    %v6293 = vld [vmem:[%s6291 + $0x8] sm:$0xff]
    %6294 = vset.pattern.permute.xlu0 0
    %6295 = vperm.xlu0 %6294, %v6292
    %v6296 = vpop.permute.xlu0 %6295
    %6297 = vset.pattern.permute.xlu0 0
    %6298 = vperm.xlu0 %6297, %v6293
    %v6299 = vpop.permute.xlu0 %6298
    %vm6300 = vcmp.eq.s32.totalorder %v4601, %v6296
    %vm6301 = vcmp.eq.s32.totalorder %v4601, %v6299
    %v6302 = vsel %vm6300, 1, 0
    %v6303 = vsel %vm6301, 1, 0
    %v6304 = vcvt.s32.f32 %v6302
    %v6305 = vcvt.s32.f32 %v6303
    %s6306 = sld [smem:[#allocation4 + $0x2]]
    %p6307 = scmp.ne.s32.totalorder %s6306, 0
    %s6308 = scalar_select %p6307, 1, 0
    %v6309 = vstv %s6308
    %vm6310 = vcmp.eq.s32.totalorder %v6309, 1
    %v6311 = vsel %vm6310, %v6304, %v6289
    %v6312 = vsel %vm6310, %v6305, %v6290
    %v6313 = vpack.c.bf16 %v6312, %v6311
    %v6314 = vld [vmem:[#allocation10] sm:$0xff]
    %v6315 = vld [vmem:[#allocation10 + $0x8] sm:$0xff]
    %v6316 = vld [vmem:[#allocation10 + $0x10] sm:$0xff]
    %v6317 = vld [vmem:[#allocation10 + $0x18] sm:$0xff]
    %v6318 = vld [vmem:[#allocation10 + $0x20] sm:$0xff]
    %v6319 = vld [vmem:[#allocation10 + $0x28] sm:$0xff]
    %v6320 = vld [vmem:[#allocation10 + $0x30] sm:$0xff]
    %v6321 = vld [vmem:[#allocation10 + $0x38] sm:$0xff]
    %v6322 = vld [vmem:[#allocation10 + $0x40] sm:$0xff]
    %v6323 = vld [vmem:[#allocation10 + $0x48] sm:$0xff]
    %v6324 = vld [vmem:[#allocation10 + $0x50] sm:$0xff]
    %v6325 = vld [vmem:[#allocation10 + $0x58] sm:$0xff]
    %v6326 = vld [vmem:[#allocation10 + $0x60] sm:$0xff]
    %v6327 = vld [vmem:[#allocation10 + $0x68] sm:$0xff]
    %v6328 = vld [vmem:[#allocation10 + $0x70] sm:$0xff]
    %v6329 = vld [vmem:[#allocation10 + $0x78] sm:$0xff]
    %v6330 = vld [vmem:[#allocation10 + $0x80] sm:$0xff]
    %v6331 = vld [vmem:[#allocation10 + $0x88] sm:$0xff]
    %v6332 = vld [vmem:[#allocation10 + $0x90] sm:$0xff]
    %v6333 = vld [vmem:[#allocation10 + $0x98] sm:$0xff]
    %v6334 = vld [vmem:[#allocation10 + $0xa0] sm:$0xff]
    %v6335 = vld [vmem:[#allocation10 + $0xa8] sm:$0xff]
    %v6336 = vld [vmem:[#allocation10 + $0xb0] sm:$0xff]
    %v6337 = vld [vmem:[#allocation10 + $0xb8] sm:$0xff]
    %v6338 = vld [vmem:[#allocation10 + $0xc0] sm:$0xff]
    %v6339 = vld [vmem:[#allocation10 + $0xc8] sm:$0xff]
    %v6340 = vld [vmem:[#allocation10 + $0xd0] sm:$0xff]
    %v6341 = vld [vmem:[#allocation10 + $0xd8] sm:$0xff]
    %v6342 = vld [vmem:[#allocation10 + $0xe0] sm:$0xff]
    %v6343 = vld [vmem:[#allocation10 + $0xe8] sm:$0xff]
    %v6344 = vld [vmem:[#allocation10 + $0xf0] sm:$0xff]
    %v6345 = vld [vmem:[#allocation10 + $0xf8] sm:$0xff]
    %v6346 = vld [vmem:[%s7] sm:$0xf]
    %v6348 = vlaneseq
    %v6349 = vshrl.u32 %v6348, 7
    %v6350 = vsub.s32 0, %v6349
    %v6351 = vrot.slane %v6346, %v6350
    %v6352 = vlaneseq
    %v6353 = vshrl.u32 %v6352, 7
    %v6354 = vsub.s32 1, %v6353
    %v6355 = vrot.slane %v6346, %v6354
    %v6356 = vlaneseq
    %v6357 = vshrl.u32 %v6356, 7
    %v6358 = vsub.s32 2, %v6357
    %v6359 = vrot.slane %v6346, %v6358
    %v6360 = vlaneseq
    %v6361 = vshrl.u32 %v6360, 7
    %v6362 = vsub.s32 3, %v6361
    %v6363 = vrot.slane %v6346, %v6362
    %v6400 = vunpack.c.l.b16 %v6314
    %v6401 = vunpack.c.h.b16 %v6314
    %v6402 = vunpack.c.l.b16 %v6315
    %v6403 = vunpack.c.h.b16 %v6315
    %v6404 = vunpack.c.l.b16 %v6316
    %v6405 = vunpack.c.h.b16 %v6316
    %v6406 = vunpack.c.l.b16 %v6317
    %v6407 = vunpack.c.h.b16 %v6317
    %v6408 = vunpack.c.l.b16 %v6318
    %v6409 = vunpack.c.h.b16 %v6318
    %v6410 = vunpack.c.l.b16 %v6319
    %v6411 = vunpack.c.h.b16 %v6319
    %v6412 = vunpack.c.l.b16 %v6320
    %v6413 = vunpack.c.h.b16 %v6320
    %v6414 = vunpack.c.l.b16 %v6321
    %v6415 = vunpack.c.h.b16 %v6321
    %v6416 = vunpack.c.l.b16 %v6322
    %v6417 = vunpack.c.h.b16 %v6322
    %v6418 = vunpack.c.l.b16 %v6323
    %v6419 = vunpack.c.h.b16 %v6323
    %v6420 = vunpack.c.l.b16 %v6324
    %v6421 = vunpack.c.h.b16 %v6324
    %v6422 = vunpack.c.l.b16 %v6325
    %v6423 = vunpack.c.h.b16 %v6325
    %v6424 = vunpack.c.l.b16 %v6326
    %v6425 = vunpack.c.h.b16 %v6326
    %v6426 = vunpack.c.l.b16 %v6327
    %v6427 = vunpack.c.h.b16 %v6327
    %v6428 = vunpack.c.l.b16 %v6328
    %v6429 = vunpack.c.h.b16 %v6328
    %v6430 = vunpack.c.l.b16 %v6329
    %v6431 = vunpack.c.h.b16 %v6329
    %v6432 = vunpack.c.l.b16 %v6330
    %v6433 = vunpack.c.h.b16 %v6330
    %v6434 = vunpack.c.l.b16 %v6331
    %v6435 = vunpack.c.h.b16 %v6331
    %v6436 = vunpack.c.l.b16 %v6332
    %v6437 = vunpack.c.h.b16 %v6332
    %v6438 = vunpack.c.l.b16 %v6333
    %v6439 = vunpack.c.h.b16 %v6333
    %v6440 = vunpack.c.l.b16 %v6334
    %v6441 = vunpack.c.h.b16 %v6334
    %v6442 = vunpack.c.l.b16 %v6335
    %v6443 = vunpack.c.h.b16 %v6335
    %v6444 = vunpack.c.l.b16 %v6336
    %v6445 = vunpack.c.h.b16 %v6336
    %v6446 = vunpack.c.l.b16 %v6337
    %v6447 = vunpack.c.h.b16 %v6337
    %v6448 = vunpack.c.l.b16 %v6338
    %v6449 = vunpack.c.h.b16 %v6338
    %v6450 = vunpack.c.l.b16 %v6339
    %v6451 = vunpack.c.h.b16 %v6339
    %v6452 = vunpack.c.l.b16 %v6340
    %v6453 = vunpack.c.h.b16 %v6340
    %v6454 = vunpack.c.l.b16 %v6341
    %v6455 = vunpack.c.h.b16 %v6341
    %v6456 = vunpack.c.l.b16 %v6342
    %v6457 = vunpack.c.h.b16 %v6342
    %v6458 = vunpack.c.l.b16 %v6343
    %v6459 = vunpack.c.h.b16 %v6343
    %v6460 = vunpack.c.l.b16 %v6344
    %v6461 = vunpack.c.h.b16 %v6344
    %v6462 = vunpack.c.l.b16 %v6345
    %v6463 = vunpack.c.h.b16 %v6345
    %v6464 = vpack.c.b16 %v6404, %v6400
    %v6465 = vpack.c.b16 %v6405, %v6401
    %v6466 = vpack.c.b16 %v6406, %v6402
    %v6467 = vpack.c.b16 %v6407, %v6403
    %v6468 = vpack.c.b16 %v6412, %v6408
    %v6469 = vpack.c.b16 %v6413, %v6409
    %v6470 = vpack.c.b16 %v6414, %v6410
    %v6471 = vpack.c.b16 %v6415, %v6411
    %v6472 = vpack.c.b16 %v6420, %v6416
    %v6473 = vpack.c.b16 %v6421, %v6417
    %v6474 = vpack.c.b16 %v6422, %v6418
    %v6475 = vpack.c.b16 %v6423, %v6419
    %v6476 = vpack.c.b16 %v6428, %v6424
    %v6477 = vpack.c.b16 %v6429, %v6425
    %v6478 = vpack.c.b16 %v6430, %v6426
    %v6479 = vpack.c.b16 %v6431, %v6427
    %v6480 = vpack.c.b16 %v6436, %v6432
    %v6481 = vpack.c.b16 %v6437, %v6433
    %v6482 = vpack.c.b16 %v6438, %v6434
    %v6483 = vpack.c.b16 %v6439, %v6435
    %v6484 = vpack.c.b16 %v6444, %v6440
    %v6485 = vpack.c.b16 %v6445, %v6441
    %v6486 = vpack.c.b16 %v6446, %v6442
    %v6487 = vpack.c.b16 %v6447, %v6443
    %v6488 = vpack.c.b16 %v6452, %v6448
    %v6489 = vpack.c.b16 %v6453, %v6449
    %v6490 = vpack.c.b16 %v6454, %v6450
    %v6491 = vpack.c.b16 %v6455, %v6451
    %v6492 = vpack.c.b16 %v6460, %v6456
    %v6493 = vpack.c.b16 %v6461, %v6457
    %v6494 = vpack.c.b16 %v6462, %v6458
    %v6495 = vpack.c.b16 %v6463, %v6459
    %6528 = vmatprep.subr.bf16.mxu0 %v6465
    %6529 = vmatpush1.bf16.msra.mxu0 %v6464
    %6530 = vmatprep.subr.bf16.mxu0 %v6469
    %6531 = vmatpush1.bf16.msra.mxu0 %v6468
    %6532 = vmatprep.subr.bf16.mxu0 %v6473
    %6533 = vmatpush1.bf16.msra.mxu0 %v6472
    %6534 = vmatprep.subr.bf16.mxu0 %v6477
    %6535 = vmatpush1.bf16.msra.mxu0 %v6476
    %6536 = vmatprep.subr.bf16.mxu0 %v6481
    %6537 = vmatpush1.bf16.msra.mxu0 %v6480
    %6538 = vmatprep.subr.bf16.mxu0 %v6485
    %6539 = vmatpush1.bf16.msra.mxu0 %v6484
    %6540 = vmatprep.subr.bf16.mxu0 %v6489
    %6541 = vmatpush1.bf16.msra.mxu0 %v6488
    %6542 = vmatprep.subr.bf16.mxu0 %v6493
    %6543 = vmatpush1.bf16.msra.mxu0 %v6492
    %6544 = vmatprep.subr.bf16.mxu0 0
    %6545 = vmatpush1.bf16.msra.mxu0 0
    %6546 = vmatprep.subr.bf16.mxu0 0
    %6547 = vmatpush1.bf16.msra.mxu0 0
    %6548 = vmatprep.subr.bf16.mxu0 0
    %6549 = vmatpush1.bf16.msra.mxu0 0
    %6550 = vmatprep.subr.bf16.mxu0 0
    %6551 = vmatpush1.bf16.msra.mxu0 0
    %6552 = vmatprep.subr.bf16.mxu0 0
    %6553 = vmatpush1.bf16.msra.mxu0 0
    %6554 = vmatprep.subr.bf16.mxu0 0
    %6555 = vmatpush1.bf16.msra.mxu0 0
    %6556 = vmatprep.subr.bf16.mxu0 0
    %6557 = vmatpush1.bf16.msra.mxu0 0
    %6558 = vmatprep.subr.bf16.mxu0 0
    %6559 = vmatpush1.bf16.msra.mxu0 0
    %6560 = vmatprep.mubr.bf16.mxu0 0
    %6561 = vmatmul.mubr.bf16.gmra.mrb[0].mxu0 %v6313
    %v6562 = vpop.f32.mrb[0].mxu0
    %v6563 = vadd.f32 %v6351, %v6562
    %v6564 = vpop.f32.mrb[0].mxu0
    %v6565 = vadd.f32 %v6355, %v6564
    %v6566 = vpop.f32.mrb[0].mxu0
    %v6567 = vadd.f32 %v6351, %v6566
    %v6568 = vpop.f32.mrb[0].mxu0
    %v6569 = vadd.f32 %v6355, %v6568
    %6570 = vdwg.mxu0
    %6571 = vmatprep.subr.bf16.mxu0 %v6467
    %6572 = vmatpush1.bf16.msra.mxu0 %v6466
    %6573 = vmatprep.subr.bf16.mxu0 %v6471
    %6574 = vmatpush1.bf16.msra.mxu0 %v6470
    %6575 = vmatprep.subr.bf16.mxu0 %v6475
    %6576 = vmatpush1.bf16.msra.mxu0 %v6474
    %6577 = vmatprep.subr.bf16.mxu0 %v6479
    %6578 = vmatpush1.bf16.msra.mxu0 %v6478
    %6579 = vmatprep.subr.bf16.mxu0 %v6483
    %6580 = vmatpush1.bf16.msra.mxu0 %v6482
    %6581 = vmatprep.subr.bf16.mxu0 %v6487
    %6582 = vmatpush1.bf16.msra.mxu0 %v6486
    %6583 = vmatprep.subr.bf16.mxu0 %v6491
    %6584 = vmatpush1.bf16.msra.mxu0 %v6490
    %6585 = vmatprep.subr.bf16.mxu0 %v6495
    %6586 = vmatpush1.bf16.msra.mxu0 %v6494
    %6587 = vmatprep.subr.bf16.mxu0 0
    %6588 = vmatpush1.bf16.msra.mxu0 0
    %6589 = vmatprep.subr.bf16.mxu0 0
    %6590 = vmatpush1.bf16.msra.mxu0 0
    %6591 = vmatprep.subr.bf16.mxu0 0
    %6592 = vmatpush1.bf16.msra.mxu0 0
    %6593 = vmatprep.subr.bf16.mxu0 0
    %6594 = vmatpush1.bf16.msra.mxu0 0
    %6595 = vmatprep.subr.bf16.mxu0 0
    %6596 = vmatpush1.bf16.msra.mxu0 0
    %6597 = vmatprep.subr.bf16.mxu0 0
    %6598 = vmatpush1.bf16.msra.mxu0 0
    %6599 = vmatprep.subr.bf16.mxu0 0
    %6600 = vmatpush1.bf16.msra.mxu0 0
    %6601 = vmatprep.subr.bf16.mxu0 0
    %6602 = vmatpush1.bf16.msra.mxu0 0
    %6603 = vmatprep.mubr.bf16.mxu0 0
    %6604 = vmatmul.mubr.bf16.gmra.mrb[0].mxu0 %v6313
    %v6605 = vpop.f32.mrb[0].mxu0
    %v6606 = vadd.f32 %v6359, %v6605
    %v6607 = vpop.f32.mrb[0].mxu0
    %v6608 = vadd.f32 %v6363, %v6607
    %v6609 = vpop.f32.mrb[0].mxu0
    %v6610 = vadd.f32 %v6359, %v6609
    %v6611 = vpop.f32.mrb[0].mxu0
    %v6612 = vadd.f32 %v6363, %v6611
    %6613 = vdwg.mxu0
    %v6614 = vadd.f32 %v6563, %v6145
    %v6615 = vadd.f32 %v6565, %v6147
    %v6616 = vadd.f32 %v6606, %v6188
    %v6617 = vadd.f32 %v6608, %v6190
    %v6618 = vadd.f32 %v6567, %v6149
    %v6619 = vadd.f32 %v6569, %v6151
    %v6620 = vadd.f32 %v6610, %v6192
    %v6621 = vadd.f32 %v6612, %v6194
    %v6622 = vmul.f32 %v6614, 0.5
    %v6623 = vmul.f32 %v6618, 0.5
    %v6624 = vtanh.pop %v6622
    %v6625 = vtanh.pop %v6623
    %v6626 = vmul.f32 %v6624, 0.5
    %v6627 = vmul.f32 %v6625, 0.5
    %v6628 = vadd.f32 %v6626, 0.5
    %v6629 = vadd.f32 %v6627, 0.5
    %v6630 = vmul.f32 %v6615, 0.5
    %v6631 = vmul.f32 %v6619, 0.5
    %v6632 = vtanh.pop %v6630
    %v6633 = vtanh.pop %v6631
    %v6634 = vmul.f32 %v6632, 0.5
    %v6635 = vmul.f32 %v6633, 0.5
    %v6636 = vadd.f32 %v6634, 0.5
    %v6637 = vadd.f32 %v6635, 0.5
    %v6638 = vtanh.pop %v6616
    %v6639 = vtanh.pop %v6620
    %v6640 = vmul.f32 %v6617, 0.5
    %v6641 = vmul.f32 %v6621, 0.5
    %v6642 = vtanh.pop %v6640
    %v6643 = vtanh.pop %v6641
    %v6644 = vmul.f32 %v6642, 0.5
    %v6645 = vmul.f32 %v6643, 0.5
    %v6646 = vadd.f32 %v6644, 0.5
    %v6647 = vadd.f32 %v6645, 0.5
    %v6648 = vmul.f32 %v6636, %v5847
    %v6649 = vmul.f32 %v6637, %v5848
    %v6650 = vmul.f32 %v6628, %v6638
    %v6651 = vmul.f32 %v6629, %v6639
    %v6652 = vadd.f32 %v6648, %v6650
    %v6653 = vadd.f32 %v6649, %v6651
    %v6654 = vtanh.pop %v6652
    %v6655 = vtanh.pop %v6653
    %v6656 = vmul.f32 %v6646, %v6654
    %v6657 = vmul.f32 %v6647, %v6655
    %v6658 = vpack.c.bf16 %v6657, %v6656
    %v6659 = vld [vmem:[#allocation11] sm:$0xff]
    %v6660 = vld [vmem:[#allocation11 + $0x8] sm:$0xff]
    %v6661 = vld [vmem:[#allocation11 + $0x10] sm:$0xf]
    %v6662 = vld [vmem:[#allocation11 + $0x14] sm:$0xff]
    %v6663 = vld [vmem:[#allocation11 + $0x1c] sm:$0xff]
    %v6664 = vld [vmem:[#allocation11 + $0x24] sm:$0xf]
    %v6665 = vld [vmem:[#allocation11 + $0x28] sm:$0xff]
    %v6666 = vld [vmem:[#allocation11 + $0x30] sm:$0xff]
    %v6667 = vld [vmem:[#allocation11 + $0x38] sm:$0xf]
    %v6668 = vld [vmem:[#allocation11 + $0x3c] sm:$0xff]
    %v6669 = vld [vmem:[#allocation11 + $0x44] sm:$0xff]
    %v6670 = vld [vmem:[#allocation11 + $0x4c] sm:$0xf]
    %v6671 = vld [vmem:[#allocation11 + $0x50] sm:$0xff]
    %v6672 = vld [vmem:[#allocation11 + $0x58] sm:$0xff]
    %v6673 = vld [vmem:[#allocation11 + $0x60] sm:$0xf]
    %v6674 = vld [vmem:[#allocation11 + $0x64] sm:$0xff]
    %v6675 = vld [vmem:[#allocation11 + $0x6c] sm:$0xff]
    %v6676 = vld [vmem:[#allocation11 + $0x74] sm:$0xf]
    %v6677 = vld [vmem:[#allocation11 + $0x78] sm:$0xff]
    %v6678 = vld [vmem:[#allocation11 + $0x80] sm:$0xff]
    %v6679 = vld [vmem:[#allocation11 + $0x88] sm:$0xf]
    %v6680 = vld [vmem:[#allocation11 + $0x8c] sm:$0xff]
    %v6681 = vld [vmem:[#allocation11 + $0x94] sm:$0xff]
    %v6682 = vld [vmem:[#allocation11 + $0x9c] sm:$0xf]
    %v6683 = vld [vmem:[#allocation11 + $0xa0] sm:$0xff]
    %v6684 = vld [vmem:[#allocation11 + $0xa8] sm:$0xff]
    %v6685 = vld [vmem:[#allocation11 + $0xb0] sm:$0xf]
    %v6686 = vld [vmem:[#allocation11 + $0xb4] sm:$0xff]
    %v6687 = vld [vmem:[#allocation11 + $0xbc] sm:$0xff]
    %v6688 = vld [vmem:[#allocation11 + $0xc4] sm:$0xf]
    %v6689 = vld [vmem:[#allocation11 + $0xc8] sm:$0xff]
    %v6690 = vld [vmem:[#allocation11 + $0xd0] sm:$0xff]
    %v6691 = vld [vmem:[#allocation11 + $0xd8] sm:$0xf]
    %v6692 = vld [vmem:[#allocation11 + $0xdc] sm:$0xff]
    %v6693 = vld [vmem:[#allocation11 + $0xe4] sm:$0xff]
    %v6694 = vld [vmem:[#allocation11 + $0xec] sm:$0xf]
    %v6695 = vld [vmem:[#allocation11 + $0xf0] sm:$0xff]
    %v6696 = vld [vmem:[#allocation11 + $0xf8] sm:$0xff]
    %v6697 = vld [vmem:[#allocation11 + $0x100] sm:$0xf]
    %v6698 = vld [vmem:[#allocation11 + $0x104] sm:$0xff]
    %v6699 = vld [vmem:[#allocation11 + $0x10c] sm:$0xff]
    %v6700 = vld [vmem:[#allocation11 + $0x114] sm:$0xf]
    %v6701 = vld [vmem:[#allocation11 + $0x118] sm:$0xff]
    %v6702 = vld [vmem:[#allocation11 + $0x120] sm:$0xff]
    %v6703 = vld [vmem:[#allocation11 + $0x128] sm:$0xf]
    %v6704 = vld [vmem:[#allocation11 + $0x12c] sm:$0xff]
    %v6705 = vld [vmem:[#allocation11 + $0x134] sm:$0xff]
    %v6706 = vld [vmem:[#allocation11 + $0x13c] sm:$0xf]
    %v6755 = vunpack.c.l.b16 %v6659
    %v6756 = vunpack.c.h.b16 %v6659
    %v6757 = vunpack.c.l.b16 %v6660
    %v6758 = vunpack.c.h.b16 %v6660
    %v6759 = vunpack.c.l.b16 %v6661
    %v6760 = vunpack.c.l.b16 %v6662
    %v6761 = vunpack.c.h.b16 %v6662
    %v6762 = vunpack.c.l.b16 %v6663
    %v6763 = vunpack.c.h.b16 %v6663
    %v6764 = vunpack.c.l.b16 %v6664
    %v6765 = vunpack.c.l.b16 %v6665
    %v6766 = vunpack.c.h.b16 %v6665
    %v6767 = vunpack.c.l.b16 %v6666
    %v6768 = vunpack.c.h.b16 %v6666
    %v6769 = vunpack.c.l.b16 %v6667
    %v6770 = vunpack.c.l.b16 %v6668
    %v6771 = vunpack.c.h.b16 %v6668
    %v6772 = vunpack.c.l.b16 %v6669
    %v6773 = vunpack.c.h.b16 %v6669
    %v6774 = vunpack.c.l.b16 %v6670
    %v6775 = vunpack.c.l.b16 %v6671
    %v6776 = vunpack.c.h.b16 %v6671
    %v6777 = vunpack.c.l.b16 %v6672
    %v6778 = vunpack.c.h.b16 %v6672
    %v6779 = vunpack.c.l.b16 %v6673
    %v6780 = vunpack.c.l.b16 %v6674
    %v6781 = vunpack.c.h.b16 %v6674
    %v6782 = vunpack.c.l.b16 %v6675
    %v6783 = vunpack.c.h.b16 %v6675
    %v6784 = vunpack.c.l.b16 %v6676
    %v6785 = vunpack.c.l.b16 %v6677
    %v6786 = vunpack.c.h.b16 %v6677
    %v6787 = vunpack.c.l.b16 %v6678
    %v6788 = vunpack.c.h.b16 %v6678
    %v6789 = vunpack.c.l.b16 %v6679
    %v6790 = vunpack.c.l.b16 %v6680
    %v6791 = vunpack.c.h.b16 %v6680
    %v6792 = vunpack.c.l.b16 %v6681
    %v6793 = vunpack.c.h.b16 %v6681
    %v6794 = vunpack.c.l.b16 %v6682
    %v6795 = vunpack.c.l.b16 %v6683
    %v6796 = vunpack.c.h.b16 %v6683
    %v6797 = vunpack.c.l.b16 %v6684
    %v6798 = vunpack.c.h.b16 %v6684
    %v6799 = vunpack.c.l.b16 %v6685
    %v6800 = vunpack.c.l.b16 %v6686
    %v6801 = vunpack.c.h.b16 %v6686
    %v6802 = vunpack.c.l.b16 %v6687
    %v6803 = vunpack.c.h.b16 %v6687
    %v6804 = vunpack.c.l.b16 %v6688
    %v6805 = vunpack.c.l.b16 %v6689
    %v6806 = vunpack.c.h.b16 %v6689
    %v6807 = vunpack.c.l.b16 %v6690
    %v6808 = vunpack.c.h.b16 %v6690
    %v6809 = vunpack.c.l.b16 %v6691
    %v6810 = vunpack.c.l.b16 %v6692
    %v6811 = vunpack.c.h.b16 %v6692
    %v6812 = vunpack.c.l.b16 %v6693
    %v6813 = vunpack.c.h.b16 %v6693
    %v6814 = vunpack.c.l.b16 %v6694
    %v6815 = vunpack.c.l.b16 %v6695
    %v6816 = vunpack.c.h.b16 %v6695
    %v6817 = vunpack.c.l.b16 %v6696
    %v6818 = vunpack.c.h.b16 %v6696
    %v6819 = vunpack.c.l.b16 %v6697
    %v6820 = vunpack.c.l.b16 %v6698
    %v6821 = vunpack.c.h.b16 %v6698
    %v6822 = vunpack.c.l.b16 %v6699
    %v6823 = vunpack.c.h.b16 %v6699
    %v6824 = vunpack.c.l.b16 %v6700
    %v6825 = vunpack.c.l.b16 %v6701
    %v6826 = vunpack.c.h.b16 %v6701
    %v6827 = vunpack.c.l.b16 %v6702
    %v6828 = vunpack.c.h.b16 %v6702
    %v6829 = vunpack.c.l.b16 %v6703
    %v6830 = vunpack.c.l.b16 %v6704
    %v6831 = vunpack.c.h.b16 %v6704
    %v6832 = vunpack.c.l.b16 %v6705
    %v6833 = vunpack.c.h.b16 %v6705
    %v6834 = vunpack.c.l.b16 %v6706
    %v6835 = vpack.c.b16 %v6760, %v6755
    %v6836 = vpack.c.b16 %v6761, %v6756
    %v6837 = vpack.c.b16 %v6762, %v6757
    %v6838 = vpack.c.b16 %v6763, %v6758
    %v6839 = vpack.c.b16 %v6764, %v6759
    %v6840 = vpack.c.b16 %v6770, %v6765
    %v6841 = vpack.c.b16 %v6771, %v6766
    %v6842 = vpack.c.b16 %v6772, %v6767
    %v6843 = vpack.c.b16 %v6773, %v6768
    %v6844 = vpack.c.b16 %v6774, %v6769
    %v6845 = vpack.c.b16 %v6780, %v6775
    %v6846 = vpack.c.b16 %v6781, %v6776
    %v6847 = vpack.c.b16 %v6782, %v6777
    %v6848 = vpack.c.b16 %v6783, %v6778
    %v6849 = vpack.c.b16 %v6784, %v6779
    %v6850 = vpack.c.b16 %v6790, %v6785
    %v6851 = vpack.c.b16 %v6791, %v6786
    %v6852 = vpack.c.b16 %v6792, %v6787
    %v6853 = vpack.c.b16 %v6793, %v6788
    %v6854 = vpack.c.b16 %v6794, %v6789
    %v6855 = vpack.c.b16 %v6800, %v6795
    %v6856 = vpack.c.b16 %v6801, %v6796
    %v6857 = vpack.c.b16 %v6802, %v6797
    %v6858 = vpack.c.b16 %v6803, %v6798
    %v6859 = vpack.c.b16 %v6804, %v6799
    %v6860 = vpack.c.b16 %v6810, %v6805
    %v6861 = vpack.c.b16 %v6811, %v6806
    %v6862 = vpack.c.b16 %v6812, %v6807
    %v6863 = vpack.c.b16 %v6813, %v6808
    %v6864 = vpack.c.b16 %v6814, %v6809
    %v6865 = vpack.c.b16 %v6820, %v6815
    %v6866 = vpack.c.b16 %v6821, %v6816
    %v6867 = vpack.c.b16 %v6822, %v6817
    %v6868 = vpack.c.b16 %v6823, %v6818
    %v6869 = vpack.c.b16 %v6824, %v6819
    %v6870 = vpack.c.b16 %v6830, %v6825
    %v6871 = vpack.c.b16 %v6831, %v6826
    %v6872 = vpack.c.b16 %v6832, %v6827
    %v6873 = vpack.c.b16 %v6833, %v6828
    %v6874 = vpack.c.b16 %v6834, %v6829
    %6915 = vmatprep.subr.bf16.mxu0 %v6836
    %6916 = vmatpush1.bf16.msra.mxu0 %v6835
    %6917 = vmatprep.subr.bf16.mxu0 %v6841
    %6918 = vmatpush1.bf16.msra.mxu0 %v6840
    %6919 = vmatprep.subr.bf16.mxu0 %v6846
    %6920 = vmatpush1.bf16.msra.mxu0 %v6845
    %6921 = vmatprep.subr.bf16.mxu0 %v6851
    %6922 = vmatpush1.bf16.msra.mxu0 %v6850
    %6923 = vmatprep.subr.bf16.mxu0 %v6856
    %6924 = vmatpush1.bf16.msra.mxu0 %v6855
    %6925 = vmatprep.subr.bf16.mxu0 %v6861
    %6926 = vmatpush1.bf16.msra.mxu0 %v6860
    %6927 = vmatprep.subr.bf16.mxu0 %v6866
    %6928 = vmatpush1.bf16.msra.mxu0 %v6865
    %6929 = vmatprep.subr.bf16.mxu0 %v6871
    %6930 = vmatpush1.bf16.msra.mxu0 %v6870
    %6931 = vmatprep.subr.bf16.mxu0 0
    %6932 = vmatpush1.bf16.msra.mxu0 0
    %6933 = vmatprep.subr.bf16.mxu0 0
    %6934 = vmatpush1.bf16.msra.mxu0 0
    %6935 = vmatprep.subr.bf16.mxu0 0
    %6936 = vmatpush1.bf16.msra.mxu0 0
    %6937 = vmatprep.subr.bf16.mxu0 0
    %6938 = vmatpush1.bf16.msra.mxu0 0
    %6939 = vmatprep.subr.bf16.mxu0 0
    %6940 = vmatpush1.bf16.msra.mxu0 0
    %6941 = vmatprep.subr.bf16.mxu0 0
    %6942 = vmatpush1.bf16.msra.mxu0 0
    %6943 = vmatprep.subr.bf16.mxu0 0
    %6944 = vmatpush1.bf16.msra.mxu0 0
    %6945 = vmatprep.subr.bf16.mxu0 0
    %6946 = vmatpush1.bf16.msra.mxu0 0
    %6947 = vmatprep.mubr.bf16.mxu0 0
    %6948 = vmatmul.mubr.bf16.gmra.mrb[0].mxu0 %v6658
    %v6949 = vpop.f32.mrb[0].mxu0
    %v6950 = vadd.f32 0.0, %v6949
    %v6951 = vpop.f32.mrb[0].mxu0
    %v6952 = vadd.f32 0.0, %v6951
    %v6953 = vpop.f32.mrb[0].mxu0
    %v6954 = vadd.f32 0.0, %v6953
    %v6955 = vpop.f32.mrb[0].mxu0
    %v6956 = vadd.f32 0.0, %v6955
    %6957 = vdwg.mxu0
    %6958 = vmatprep.subr.bf16.mxu0 %v6838
    %6959 = vmatpush1.bf16.msra.mxu0 %v6837
    %6960 = vmatprep.subr.bf16.mxu0 %v6843
    %6961 = vmatpush1.bf16.msra.mxu0 %v6842
    %6962 = vmatprep.subr.bf16.mxu0 %v6848
    %6963 = vmatpush1.bf16.msra.mxu0 %v6847
    %6964 = vmatprep.subr.bf16.mxu0 %v6853
    %6965 = vmatpush1.bf16.msra.mxu0 %v6852
    %6966 = vmatprep.subr.bf16.mxu0 %v6858
    %6967 = vmatpush1.bf16.msra.mxu0 %v6857
    %6968 = vmatprep.subr.bf16.mxu0 %v6863
    %6969 = vmatpush1.bf16.msra.mxu0 %v6862
    %6970 = vmatprep.subr.bf16.mxu0 %v6868
    %6971 = vmatpush1.bf16.msra.mxu0 %v6867
    %6972 = vmatprep.subr.bf16.mxu0 %v6873
    %6973 = vmatpush1.bf16.msra.mxu0 %v6872
    %6974 = vmatprep.subr.bf16.mxu0 0
    %6975 = vmatpush1.bf16.msra.mxu0 0
    %6976 = vmatprep.subr.bf16.mxu0 0
    %6977 = vmatpush1.bf16.msra.mxu0 0
    %6978 = vmatprep.subr.bf16.mxu0 0
    %6979 = vmatpush1.bf16.msra.mxu0 0
    %6980 = vmatprep.subr.bf16.mxu0 0
    %6981 = vmatpush1.bf16.msra.mxu0 0
    %6982 = vmatprep.subr.bf16.mxu0 0
    %6983 = vmatpush1.bf16.msra.mxu0 0
    %6984 = vmatprep.subr.bf16.mxu0 0
    %6985 = vmatpush1.bf16.msra.mxu0 0
    %6986 = vmatprep.subr.bf16.mxu0 0
    %6987 = vmatpush1.bf16.msra.mxu0 0
    %6988 = vmatprep.subr.bf16.mxu0 0
    %6989 = vmatpush1.bf16.msra.mxu0 0
    %6990 = vmatprep.mubr.bf16.mxu0 0
    %6991 = vmatmul.mubr.bf16.gmra.mrb[0].mxu0 %v6658
    %v6992 = vpop.f32.mrb[0].mxu0
    %v6993 = vadd.f32 0.0, %v6992
    %v6994 = vpop.f32.mrb[0].mxu0
    %v6995 = vadd.f32 0.0, %v6994
    %v6996 = vpop.f32.mrb[0].mxu0
    %v6997 = vadd.f32 0.0, %v6996
    %v6998 = vpop.f32.mrb[0].mxu0
    %v6999 = vadd.f32 0.0, %v6998
    %7000 = vdwg.mxu0
    %7001 = vmatprep.subr.bf16.mxu0 0
    %7002 = vmatpush1.bf16.msra.mxu0 %v6839
    %7003 = vmatprep.subr.bf16.mxu0 0
    %7004 = vmatpush1.bf16.msra.mxu0 %v6844
    %7005 = vmatprep.subr.bf16.mxu0 0
    %7006 = vmatpush1.bf16.msra.mxu0 %v6849
    %7007 = vmatprep.subr.bf16.mxu0 0
    %7008 = vmatpush1.bf16.msra.mxu0 %v6854
    %7009 = vmatprep.subr.bf16.mxu0 0
    %7010 = vmatpush1.bf16.msra.mxu0 %v6859
    %7011 = vmatprep.subr.bf16.mxu0 0
    %7012 = vmatpush1.bf16.msra.mxu0 %v6864
    %7013 = vmatprep.subr.bf16.mxu0 0
    %7014 = vmatpush1.bf16.msra.mxu0 %v6869
    %7015 = vmatprep.subr.bf16.mxu0 0
    %7016 = vmatpush1.bf16.msra.mxu0 %v6874
    %7017 = vmatprep.subr.bf16.mxu0 0
    %7018 = vmatpush1.bf16.msra.mxu0 0
    %7019 = vmatprep.subr.bf16.mxu0 0
    %7020 = vmatpush1.bf16.msra.mxu0 0
    %7021 = vmatprep.subr.bf16.mxu0 0
    %7022 = vmatpush1.bf16.msra.mxu0 0
    %7023 = vmatprep.subr.bf16.mxu0 0
    %7024 = vmatpush1.bf16.msra.mxu0 0
    %7025 = vmatprep.subr.bf16.mxu0 0
    %7026 = vmatpush1.bf16.msra.mxu0 0
    %7027 = vmatprep.subr.bf16.mxu0 0
    %7028 = vmatpush1.bf16.msra.mxu0 0
    %7029 = vmatprep.subr.bf16.mxu0 0
    %7030 = vmatpush1.bf16.msra.mxu0 0
    %7031 = vmatprep.subr.bf16.mxu0 0
    %7032 = vmatpush1.bf16.msra.mxu0 0
    %7033 = vmatprep.mubr.bf16.mxu0 0
    %7034 = vmatmul.mubr.bf16.gmra.mrb[0].mxu0 %v6658
    %v7035 = vpop.f32.mrb[0].mxu0
    %v7036 = vadd.f32 0.0, %v7035
    %v7037 = vpop.f32.mrb[0].mxu0
    %v7038 = vpop.f32.mrb[0].mxu0
    %v7039 = vadd.f32 0.0, %v7038
    %v7040 = vpop.f32.mrb[0].mxu0
    %7041 = vdwg.mxu0
    %v7042 = vld [vmem:[%s9] sm:$0x1]
    %v7044 = vlaneseq
    %v7045 = vshrl.u32 %v7044, 7
    %v7046 = vsub.s32 0, %v7045
    %v7047 = vrot.slane %v7042, %v7046
    %v7049 = vadd.f32 %v7036, %v7047
    %v7050 = vadd.f32 %v7039, %v7047
    %s7051 = scalar_lea.vmem [#allocation13], 48
    %7052 = vst [vmem:[%s7051] sm:$0xff] %v7049
    %7053 = vst [vmem:[%s7051 + $0x8] sm:$0xff] %v7050
    %7054 = vmax.xlane.f32.xlu0 %v7049
    %v7055 = vpop.xlane.xlu0 %7054
    %7056 = vmax.xlane.f32.xlu0 %v7050
    %v7057 = vpop.xlane.xlu0 %7056
    %vm7058 = vcmp.eq.f32.partialorder %v7049, %v7055
    %vm7059 = vcmp.eq.f32.partialorder %v7050, %v7057
    %v7060 = vsel %vm7058, %v4601, 128
    %v7061 = vsel %vm7059, %v4601, 128
    %v7062 = vand.u32 %v7060, 65535
    %v7063 = vshra.s32 %v7060, 16
    %v7064 = vcvt.s32.f32 %v7062
    %v7065 = vcvt.s32.f32 %v7063
    %7066 = vmin.xlane.f32.xlu0 %v7065
    %v7067 = vpop.xlane.xlu0 %7066
    %vm7068 = vcmp.eq.f32.partialorder %v7065, %v7067
    %v7069 = vsel %vm7068, %v7064, inf
    %7070 = vmin.xlane.f32.xlu0 %v7069
    %v7071 = vpop.xlane.xlu0 %7070
    %v7072 = vcvt.f32.s32 %v7071
    %v7073 = vcvt.f32.s32 %v7067
    %v7074 = vshll.u32 %v7073, 16
    %v7075 = vadd.s32 %v7074, %v7072
    %v7076 = vand.u32 %v7061, 65535
    %v7077 = vshra.s32 %v7061, 16
    %v7078 = vcvt.s32.f32 %v7076
    %v7079 = vcvt.s32.f32 %v7077
    %7080 = vmin.xlane.f32.xlu0 %v7079
    %v7081 = vpop.xlane.xlu0 %7080
    %vm7082 = vcmp.eq.f32.partialorder %v7079, %v7081
    %v7083 = vsel %vm7082, %v7078, inf
    %7084 = vmin.xlane.f32.xlu0 %v7083
    %v7085 = vpop.xlane.xlu0 %7084
    %v7086 = vcvt.f32.s32 %v7085
    %v7087 = vcvt.f32.s32 %v7081
    %v7088 = vshll.u32 %v7087, 16
    %v7089 = vadd.s32 %v7088, %v7086
    %vm7090 = vcmp.eq.s32.totalorder %v4601, %v7075
    %vm7091 = vcmp.eq.s32.totalorder %v4601, %v7089
    %v7092 = vsel %vm7090, 1, 0
    %v7093 = vsel %vm7091, 1, 0
    %v7094 = vcvt.s32.f32 %v7092
    %v7095 = vcvt.s32.f32 %v7093
    %s7096 = scalar_lea.vmem %s5, 48
    %v7097 = vld [vmem:[%s7096] sm:$0xff]
    %v7098 = vld [vmem:[%s7096 + $0x8] sm:$0xff]
    %7099 = vset.pattern.permute.xlu0 0
    %7100 = vperm.xlu0 %7099, %v7097
    %v7101 = vpop.permute.xlu0 %7100
    %7102 = vset.pattern.permute.xlu0 0
    %7103 = vperm.xlu0 %7102, %v7098
    %v7104 = vpop.permute.xlu0 %7103
    %vm7105 = vcmp.eq.s32.totalorder %v4601, %v7101
    %vm7106 = vcmp.eq.s32.totalorder %v4601, %v7104
    %v7107 = vsel %vm7105, 1, 0
    %v7108 = vsel %vm7106, 1, 0
    %v7109 = vcvt.s32.f32 %v7107
    %v7110 = vcvt.s32.f32 %v7108
    %s7111 = sld [smem:[#allocation4 + $0x3]]
    %p7112 = scmp.ne.s32.totalorder %s7111, 0
    %s7113 = scalar_select %p7112, 1, 0
    %v7114 = vstv %s7113
    %vm7115 = vcmp.eq.s32.totalorder %v7114, 1
    %v7116 = vsel %vm7115, %v7109, %v7094
    %v7117 = vsel %vm7115, %v7110, %v7095
    %v7118 = vpack.c.bf16 %v7117, %v7116
    %v7119 = vld [vmem:[#allocation10] sm:$0xff]
    %v7120 = vld [vmem:[#allocation10 + $0x8] sm:$0xff]
    %v7121 = vld [vmem:[#allocation10 + $0x10] sm:$0xff]
    %v7122 = vld [vmem:[#allocation10 + $0x18] sm:$0xff]
    %v7123 = vld [vmem:[#allocation10 + $0x20] sm:$0xff]
    %v7124 = vld [vmem:[#allocation10 + $0x28] sm:$0xff]
    %v7125 = vld [vmem:[#allocation10 + $0x30] sm:$0xff]
    %v7126 = vld [vmem:[#allocation10 + $0x38] sm:$0xff]
    %v7127 = vld [vmem:[#allocation10 + $0x40] sm:$0xff]
    %v7128 = vld [vmem:[#allocation10 + $0x48] sm:$0xff]
    %v7129 = vld [vmem:[#allocation10 + $0x50] sm:$0xff]
    %v7130 = vld [vmem:[#allocation10 + $0x58] sm:$0xff]
    %v7131 = vld [vmem:[#allocation10 + $0x60] sm:$0xff]
    %v7132 = vld [vmem:[#allocation10 + $0x68] sm:$0xff]
    %v7133 = vld [vmem:[#allocation10 + $0x70] sm:$0xff]
    %v7134 = vld [vmem:[#allocation10 + $0x78] sm:$0xff]
    %v7135 = vld [vmem:[#allocation10 + $0x80] sm:$0xff]
    %v7136 = vld [vmem:[#allocation10 + $0x88] sm:$0xff]
    %v7137 = vld [vmem:[#allocation10 + $0x90] sm:$0xff]
    %v7138 = vld [vmem:[#allocation10 + $0x98] sm:$0xff]
    %v7139 = vld [vmem:[#allocation10 + $0xa0] sm:$0xff]
    %v7140 = vld [vmem:[#allocation10 + $0xa8] sm:$0xff]
    %v7141 = vld [vmem:[#allocation10 + $0xb0] sm:$0xff]
    %v7142 = vld [vmem:[#allocation10 + $0xb8] sm:$0xff]
    %v7143 = vld [vmem:[#allocation10 + $0xc0] sm:$0xff]
    %v7144 = vld [vmem:[#allocation10 + $0xc8] sm:$0xff]
    %v7145 = vld [vmem:[#allocation10 + $0xd0] sm:$0xff]
    %v7146 = vld [vmem:[#allocation10 + $0xd8] sm:$0xff]
    %v7147 = vld [vmem:[#allocation10 + $0xe0] sm:$0xff]
    %v7148 = vld [vmem:[#allocation10 + $0xe8] sm:$0xff]
    %v7149 = vld [vmem:[#allocation10 + $0xf0] sm:$0xff]
    %v7150 = vld [vmem:[#allocation10 + $0xf8] sm:$0xff]
    %v7151 = vld [vmem:[%s7] sm:$0xf]
    %v7153 = vlaneseq
    %v7154 = vshrl.u32 %v7153, 7
    %v7155 = vsub.s32 0, %v7154
    %v7156 = vrot.slane %v7151, %v7155
    %v7157 = vlaneseq
    %v7158 = vshrl.u32 %v7157, 7
    %v7159 = vsub.s32 1, %v7158
    %v7160 = vrot.slane %v7151, %v7159
    %v7161 = vlaneseq
    %v7162 = vshrl.u32 %v7161, 7
    %v7163 = vsub.s32 2, %v7162
    %v7164 = vrot.slane %v7151, %v7163
    %v7165 = vlaneseq
    %v7166 = vshrl.u32 %v7165, 7
    %v7167 = vsub.s32 3, %v7166
    %v7168 = vrot.slane %v7151, %v7167
    %v7205 = vunpack.c.l.b16 %v7119
    %v7206 = vunpack.c.h.b16 %v7119
    %v7207 = vunpack.c.l.b16 %v7120
    %v7208 = vunpack.c.h.b16 %v7120
    %v7209 = vunpack.c.l.b16 %v7121
    %v7210 = vunpack.c.h.b16 %v7121
    %v7211 = vunpack.c.l.b16 %v7122
    %v7212 = vunpack.c.h.b16 %v7122
    %v7213 = vunpack.c.l.b16 %v7123
    %v7214 = vunpack.c.h.b16 %v7123
    %v7215 = vunpack.c.l.b16 %v7124
    %v7216 = vunpack.c.h.b16 %v7124
    %v7217 = vunpack.c.l.b16 %v7125
    %v7218 = vunpack.c.h.b16 %v7125
    %v7219 = vunpack.c.l.b16 %v7126
    %v7220 = vunpack.c.h.b16 %v7126
    %v7221 = vunpack.c.l.b16 %v7127
    %v7222 = vunpack.c.h.b16 %v7127
    %v7223 = vunpack.c.l.b16 %v7128
    %v7224 = vunpack.c.h.b16 %v7128
    %v7225 = vunpack.c.l.b16 %v7129
    %v7226 = vunpack.c.h.b16 %v7129
    %v7227 = vunpack.c.l.b16 %v7130
    %v7228 = vunpack.c.h.b16 %v7130
    %v7229 = vunpack.c.l.b16 %v7131
    %v7230 = vunpack.c.h.b16 %v7131
    %v7231 = vunpack.c.l.b16 %v7132
    %v7232 = vunpack.c.h.b16 %v7132
    %v7233 = vunpack.c.l.b16 %v7133
    %v7234 = vunpack.c.h.b16 %v7133
    %v7235 = vunpack.c.l.b16 %v7134
    %v7236 = vunpack.c.h.b16 %v7134
    %v7237 = vunpack.c.l.b16 %v7135
    %v7238 = vunpack.c.h.b16 %v7135
    %v7239 = vunpack.c.l.b16 %v7136
    %v7240 = vunpack.c.h.b16 %v7136
    %v7241 = vunpack.c.l.b16 %v7137
    %v7242 = vunpack.c.h.b16 %v7137
    %v7243 = vunpack.c.l.b16 %v7138
    %v7244 = vunpack.c.h.b16 %v7138
    %v7245 = vunpack.c.l.b16 %v7139
    %v7246 = vunpack.c.h.b16 %v7139
    %v7247 = vunpack.c.l.b16 %v7140
    %v7248 = vunpack.c.h.b16 %v7140
    %v7249 = vunpack.c.l.b16 %v7141
    %v7250 = vunpack.c.h.b16 %v7141
    %v7251 = vunpack.c.l.b16 %v7142
    %v7252 = vunpack.c.h.b16 %v7142
    %v7253 = vunpack.c.l.b16 %v7143
    %v7254 = vunpack.c.h.b16 %v7143
    %v7255 = vunpack.c.l.b16 %v7144
    %v7256 = vunpack.c.h.b16 %v7144
    %v7257 = vunpack.c.l.b16 %v7145
    %v7258 = vunpack.c.h.b16 %v7145
    %v7259 = vunpack.c.l.b16 %v7146
    %v7260 = vunpack.c.h.b16 %v7146
    %v7261 = vunpack.c.l.b16 %v7147
    %v7262 = vunpack.c.h.b16 %v7147
    %v7263 = vunpack.c.l.b16 %v7148
    %v7264 = vunpack.c.h.b16 %v7148
    %v7265 = vunpack.c.l.b16 %v7149
    %v7266 = vunpack.c.h.b16 %v7149
    %v7267 = vunpack.c.l.b16 %v7150
    %v7268 = vunpack.c.h.b16 %v7150
    %v7269 = vpack.c.b16 %v7209, %v7205
    %v7270 = vpack.c.b16 %v7210, %v7206
    %v7271 = vpack.c.b16 %v7211, %v7207
    %v7272 = vpack.c.b16 %v7212, %v7208
    %v7273 = vpack.c.b16 %v7217, %v7213
    %v7274 = vpack.c.b16 %v7218, %v7214
    %v7275 = vpack.c.b16 %v7219, %v7215
    %v7276 = vpack.c.b16 %v7220, %v7216
    %v7277 = vpack.c.b16 %v7225, %v7221
    %v7278 = vpack.c.b16 %v7226, %v7222
    %v7279 = vpack.c.b16 %v7227, %v7223
    %v7280 = vpack.c.b16 %v7228, %v7224
    %v7281 = vpack.c.b16 %v7233, %v7229
    %v7282 = vpack.c.b16 %v7234, %v7230
    %v7283 = vpack.c.b16 %v7235, %v7231
    %v7284 = vpack.c.b16 %v7236, %v7232
    %v7285 = vpack.c.b16 %v7241, %v7237
    %v7286 = vpack.c.b16 %v7242, %v7238
    %v7287 = vpack.c.b16 %v7243, %v7239
    %v7288 = vpack.c.b16 %v7244, %v7240
    %v7289 = vpack.c.b16 %v7249, %v7245
    %v7290 = vpack.c.b16 %v7250, %v7246
    %v7291 = vpack.c.b16 %v7251, %v7247
    %v7292 = vpack.c.b16 %v7252, %v7248
    %v7293 = vpack.c.b16 %v7257, %v7253
    %v7294 = vpack.c.b16 %v7258, %v7254
    %v7295 = vpack.c.b16 %v7259, %v7255
    %v7296 = vpack.c.b16 %v7260, %v7256
    %v7297 = vpack.c.b16 %v7265, %v7261
    %v7298 = vpack.c.b16 %v7266, %v7262
    %v7299 = vpack.c.b16 %v7267, %v7263
    %v7300 = vpack.c.b16 %v7268, %v7264
    %7333 = vmatprep.subr.bf16.mxu0 %v7270
    %7334 = vmatpush1.bf16.msra.mxu0 %v7269
    %7335 = vmatprep.subr.bf16.mxu0 %v7274
    %7336 = vmatpush1.bf16.msra.mxu0 %v7273
    %7337 = vmatprep.subr.bf16.mxu0 %v7278
    %7338 = vmatpush1.bf16.msra.mxu0 %v7277
    %7339 = vmatprep.subr.bf16.mxu0 %v7282
    %7340 = vmatpush1.bf16.msra.mxu0 %v7281
    %7341 = vmatprep.subr.bf16.mxu0 %v7286
    %7342 = vmatpush1.bf16.msra.mxu0 %v7285
    %7343 = vmatprep.subr.bf16.mxu0 %v7290
    %7344 = vmatpush1.bf16.msra.mxu0 %v7289
    %7345 = vmatprep.subr.bf16.mxu0 %v7294
    %7346 = vmatpush1.bf16.msra.mxu0 %v7293
    %7347 = vmatprep.subr.bf16.mxu0 %v7298
    %7348 = vmatpush1.bf16.msra.mxu0 %v7297
    %7349 = vmatprep.subr.bf16.mxu0 0
    %7350 = vmatpush1.bf16.msra.mxu0 0
    %7351 = vmatprep.subr.bf16.mxu0 0
    %7352 = vmatpush1.bf16.msra.mxu0 0
    %7353 = vmatprep.subr.bf16.mxu0 0
    %7354 = vmatpush1.bf16.msra.mxu0 0
    %7355 = vmatprep.subr.bf16.mxu0 0
    %7356 = vmatpush1.bf16.msra.mxu0 0
    %7357 = vmatprep.subr.bf16.mxu0 0
    %7358 = vmatpush1.bf16.msra.mxu0 0
    %7359 = vmatprep.subr.bf16.mxu0 0
    %7360 = vmatpush1.bf16.msra.mxu0 0
    %7361 = vmatprep.subr.bf16.mxu0 0
    %7362 = vmatpush1.bf16.msra.mxu0 0
    %7363 = vmatprep.subr.bf16.mxu0 0
    %7364 = vmatpush1.bf16.msra.mxu0 0
    %7365 = vmatprep.mubr.bf16.mxu0 0
    %7366 = vmatmul.mubr.bf16.gmra.mrb[0].mxu0 %v7118
    %v7367 = vpop.f32.mrb[0].mxu0
    %v7368 = vadd.f32 %v7156, %v7367
    %v7369 = vpop.f32.mrb[0].mxu0
    %v7370 = vadd.f32 %v7160, %v7369
    %v7371 = vpop.f32.mrb[0].mxu0
    %v7372 = vadd.f32 %v7156, %v7371
    %v7373 = vpop.f32.mrb[0].mxu0
    %v7374 = vadd.f32 %v7160, %v7373
    %7375 = vdwg.mxu0
    %7376 = vmatprep.subr.bf16.mxu0 %v7272
    %7377 = vmatpush1.bf16.msra.mxu0 %v7271
    %7378 = vmatprep.subr.bf16.mxu0 %v7276
    %7379 = vmatpush1.bf16.msra.mxu0 %v7275
    %7380 = vmatprep.subr.bf16.mxu0 %v7280
    %7381 = vmatpush1.bf16.msra.mxu0 %v7279
    %7382 = vmatprep.subr.bf16.mxu0 %v7284
    %7383 = vmatpush1.bf16.msra.mxu0 %v7283
    %7384 = vmatprep.subr.bf16.mxu0 %v7288
    %7385 = vmatpush1.bf16.msra.mxu0 %v7287
    %7386 = vmatprep.subr.bf16.mxu0 %v7292
    %7387 = vmatpush1.bf16.msra.mxu0 %v7291
    %7388 = vmatprep.subr.bf16.mxu0 %v7296
    %7389 = vmatpush1.bf16.msra.mxu0 %v7295
    %7390 = vmatprep.subr.bf16.mxu0 %v7300
    %7391 = vmatpush1.bf16.msra.mxu0 %v7299
    %7392 = vmatprep.subr.bf16.mxu0 0
    %7393 = vmatpush1.bf16.msra.mxu0 0
    %7394 = vmatprep.subr.bf16.mxu0 0
    %7395 = vmatpush1.bf16.msra.mxu0 0
    %7396 = vmatprep.subr.bf16.mxu0 0
    %7397 = vmatpush1.bf16.msra.mxu0 0
    %7398 = vmatprep.subr.bf16.mxu0 0
    %7399 = vmatpush1.bf16.msra.mxu0 0
    %7400 = vmatprep.subr.bf16.mxu0 0
    %7401 = vmatpush1.bf16.msra.mxu0 0
    %7402 = vmatprep.subr.bf16.mxu0 0
    %7403 = vmatpush1.bf16.msra.mxu0 0
    %7404 = vmatprep.subr.bf16.mxu0 0
    %7405 = vmatpush1.bf16.msra.mxu0 0
    %7406 = vmatprep.subr.bf16.mxu0 0
    %7407 = vmatpush1.bf16.msra.mxu0 0
    %7408 = vmatprep.mubr.bf16.mxu0 0
    %7409 = vmatmul.mubr.bf16.gmra.mrb[0].mxu0 %v7118
    %v7410 = vpop.f32.mrb[0].mxu0
    %v7411 = vadd.f32 %v7164, %v7410
    %v7412 = vpop.f32.mrb[0].mxu0
    %v7413 = vadd.f32 %v7168, %v7412
    %v7414 = vpop.f32.mrb[0].mxu0
    %v7415 = vadd.f32 %v7164, %v7414
    %v7416 = vpop.f32.mrb[0].mxu0
    %v7417 = vadd.f32 %v7168, %v7416
    %7418 = vdwg.mxu0
    %v7419 = vadd.f32 %v7368, %v6950
    %v7420 = vadd.f32 %v7370, %v6952
    %v7421 = vadd.f32 %v7411, %v6993
    %v7422 = vadd.f32 %v7413, %v6995
    %v7423 = vadd.f32 %v7372, %v6954
    %v7424 = vadd.f32 %v7374, %v6956
    %v7425 = vadd.f32 %v7415, %v6997
    %v7426 = vadd.f32 %v7417, %v6999
    %v7427 = vmul.f32 %v7419, 0.5
    %v7428 = vmul.f32 %v7423, 0.5
    %v7429 = vtanh.pop %v7427
    %v7430 = vtanh.pop %v7428
    %v7431 = vmul.f32 %v7429, 0.5
    %v7432 = vmul.f32 %v7430, 0.5
    %v7433 = vadd.f32 %v7431, 0.5
    %v7434 = vadd.f32 %v7432, 0.5
    %v7435 = vmul.f32 %v7420, 0.5
    %v7436 = vmul.f32 %v7424, 0.5
    %v7437 = vtanh.pop %v7435
    %v7438 = vtanh.pop %v7436
    %v7439 = vmul.f32 %v7437, 0.5
    %v7440 = vmul.f32 %v7438, 0.5
    %v7441 = vadd.f32 %v7439, 0.5
    %v7442 = vadd.f32 %v7440, 0.5
    %v7443 = vtanh.pop %v7421
    %v7444 = vtanh.pop %v7425
    %v7445 = vmul.f32 %v7422, 0.5
    %v7446 = vmul.f32 %v7426, 0.5
    %v7447 = vtanh.pop %v7445
    %v7448 = vtanh.pop %v7446
    %v7449 = vmul.f32 %v7447, 0.5
    %v7450 = vmul.f32 %v7448, 0.5
    %v7451 = vadd.f32 %v7449, 0.5
    %v7452 = vadd.f32 %v7450, 0.5
    %v7453 = vmul.f32 %v7441, %v6652
    %v7454 = vmul.f32 %v7442, %v6653
    %v7455 = vmul.f32 %v7433, %v7443
    %v7456 = vmul.f32 %v7434, %v7444
    %v7457 = vadd.f32 %v7453, %v7455
    %v7458 = vadd.f32 %v7454, %v7456
    %v7459 = vtanh.pop %v7457
    %v7460 = vtanh.pop %v7458
    %v7461 = vmul.f32 %v7451, %v7459
    %v7462 = vmul.f32 %v7452, %v7460
    %v7463 = vpack.c.bf16 %v7462, %v7461
    %v7464 = vld [vmem:[#allocation11] sm:$0xff]
    %v7465 = vld [vmem:[#allocation11 + $0x8] sm:$0xff]
    %v7466 = vld [vmem:[#allocation11 + $0x10] sm:$0xf]
    %v7467 = vld [vmem:[#allocation11 + $0x14] sm:$0xff]
    %v7468 = vld [vmem:[#allocation11 + $0x1c] sm:$0xff]
    %v7469 = vld [vmem:[#allocation11 + $0x24] sm:$0xf]
    %v7470 = vld [vmem:[#allocation11 + $0x28] sm:$0xff]
    %v7471 = vld [vmem:[#allocation11 + $0x30] sm:$0xff]
    %v7472 = vld [vmem:[#allocation11 + $0x38] sm:$0xf]
    %v7473 = vld [vmem:[#allocation11 + $0x3c] sm:$0xff]
    %v7474 = vld [vmem:[#allocation11 + $0x44] sm:$0xff]
    %v7475 = vld [vmem:[#allocation11 + $0x4c] sm:$0xf]
    %v7476 = vld [vmem:[#allocation11 + $0x50] sm:$0xff]
    %v7477 = vld [vmem:[#allocation11 + $0x58] sm:$0xff]
    %v7478 = vld [vmem:[#allocation11 + $0x60] sm:$0xf]
    %v7479 = vld [vmem:[#allocation11 + $0x64] sm:$0xff]
    %v7480 = vld [vmem:[#allocation11 + $0x6c] sm:$0xff]
    %v7481 = vld [vmem:[#allocation11 + $0x74] sm:$0xf]
    %v7482 = vld [vmem:[#allocation11 + $0x78] sm:$0xff]
    %v7483 = vld [vmem:[#allocation11 + $0x80] sm:$0xff]
    %v7484 = vld [vmem:[#allocation11 + $0x88] sm:$0xf]
    %v7485 = vld [vmem:[#allocation11 + $0x8c] sm:$0xff]
    %v7486 = vld [vmem:[#allocation11 + $0x94] sm:$0xff]
    %v7487 = vld [vmem:[#allocation11 + $0x9c] sm:$0xf]
    %v7488 = vld [vmem:[#allocation11 + $0xa0] sm:$0xff]
    %v7489 = vld [vmem:[#allocation11 + $0xa8] sm:$0xff]
    %v7490 = vld [vmem:[#allocation11 + $0xb0] sm:$0xf]
    %v7491 = vld [vmem:[#allocation11 + $0xb4] sm:$0xff]
    %v7492 = vld [vmem:[#allocation11 + $0xbc] sm:$0xff]
    %v7493 = vld [vmem:[#allocation11 + $0xc4] sm:$0xf]
    %v7494 = vld [vmem:[#allocation11 + $0xc8] sm:$0xff]
    %v7495 = vld [vmem:[#allocation11 + $0xd0] sm:$0xff]
    %v7496 = vld [vmem:[#allocation11 + $0xd8] sm:$0xf]
    %v7497 = vld [vmem:[#allocation11 + $0xdc] sm:$0xff]
    %v7498 = vld [vmem:[#allocation11 + $0xe4] sm:$0xff]
    %v7499 = vld [vmem:[#allocation11 + $0xec] sm:$0xf]
    %v7500 = vld [vmem:[#allocation11 + $0xf0] sm:$0xff]
    %v7501 = vld [vmem:[#allocation11 + $0xf8] sm:$0xff]
    %v7502 = vld [vmem:[#allocation11 + $0x100] sm:$0xf]
    %v7503 = vld [vmem:[#allocation11 + $0x104] sm:$0xff]
    %v7504 = vld [vmem:[#allocation11 + $0x10c] sm:$0xff]
    %v7505 = vld [vmem:[#allocation11 + $0x114] sm:$0xf]
    %v7506 = vld [vmem:[#allocation11 + $0x118] sm:$0xff]
    %v7507 = vld [vmem:[#allocation11 + $0x120] sm:$0xff]
    %v7508 = vld [vmem:[#allocation11 + $0x128] sm:$0xf]
    %v7509 = vld [vmem:[#allocation11 + $0x12c] sm:$0xff]
    %v7510 = vld [vmem:[#allocation11 + $0x134] sm:$0xff]
    %v7511 = vld [vmem:[#allocation11 + $0x13c] sm:$0xf]
    %v7560 = vunpack.c.l.b16 %v7464
    %v7561 = vunpack.c.h.b16 %v7464
    %v7562 = vunpack.c.l.b16 %v7465
    %v7563 = vunpack.c.h.b16 %v7465
    %v7564 = vunpack.c.l.b16 %v7466
    %v7565 = vunpack.c.l.b16 %v7467
    %v7566 = vunpack.c.h.b16 %v7467
    %v7567 = vunpack.c.l.b16 %v7468
    %v7568 = vunpack.c.h.b16 %v7468
    %v7569 = vunpack.c.l.b16 %v7469
    %v7570 = vunpack.c.l.b16 %v7470
    %v7571 = vunpack.c.h.b16 %v7470
    %v7572 = vunpack.c.l.b16 %v7471
    %v7573 = vunpack.c.h.b16 %v7471
    %v7574 = vunpack.c.l.b16 %v7472
    %v7575 = vunpack.c.l.b16 %v7473
    %v7576 = vunpack.c.h.b16 %v7473
    %v7577 = vunpack.c.l.b16 %v7474
    %v7578 = vunpack.c.h.b16 %v7474
    %v7579 = vunpack.c.l.b16 %v7475
    %v7580 = vunpack.c.l.b16 %v7476
    %v7581 = vunpack.c.h.b16 %v7476
    %v7582 = vunpack.c.l.b16 %v7477
    %v7583 = vunpack.c.h.b16 %v7477
    %v7584 = vunpack.c.l.b16 %v7478
    %v7585 = vunpack.c.l.b16 %v7479
    %v7586 = vunpack.c.h.b16 %v7479
    %v7587 = vunpack.c.l.b16 %v7480
    %v7588 = vunpack.c.h.b16 %v7480
    %v7589 = vunpack.c.l.b16 %v7481
    %v7590 = vunpack.c.l.b16 %v7482
    %v7591 = vunpack.c.h.b16 %v7482
    %v7592 = vunpack.c.l.b16 %v7483
    %v7593 = vunpack.c.h.b16 %v7483
    %v7594 = vunpack.c.l.b16 %v7484
    %v7595 = vunpack.c.l.b16 %v7485
    %v7596 = vunpack.c.h.b16 %v7485
    %v7597 = vunpack.c.l.b16 %v7486
    %v7598 = vunpack.c.h.b16 %v7486
    %v7599 = vunpack.c.l.b16 %v7487
    %v7600 = vunpack.c.l.b16 %v7488
    %v7601 = vunpack.c.h.b16 %v7488
    %v7602 = vunpack.c.l.b16 %v7489
    %v7603 = vunpack.c.h.b16 %v7489
    %v7604 = vunpack.c.l.b16 %v7490
    %v7605 = vunpack.c.l.b16 %v7491
    %v7606 = vunpack.c.h.b16 %v7491
    %v7607 = vunpack.c.l.b16 %v7492
    %v7608 = vunpack.c.h.b16 %v7492
    %v7609 = vunpack.c.l.b16 %v7493
    %v7610 = vunpack.c.l.b16 %v7494
    %v7611 = vunpack.c.h.b16 %v7494
    %v7612 = vunpack.c.l.b16 %v7495
    %v7613 = vunpack.c.h.b16 %v7495
    %v7614 = vunpack.c.l.b16 %v7496
    %v7615 = vunpack.c.l.b16 %v7497
    %v7616 = vunpack.c.h.b16 %v7497
    %v7617 = vunpack.c.l.b16 %v7498
    %v7618 = vunpack.c.h.b16 %v7498
    %v7619 = vunpack.c.l.b16 %v7499
    %v7620 = vunpack.c.l.b16 %v7500
    %v7621 = vunpack.c.h.b16 %v7500
    %v7622 = vunpack.c.l.b16 %v7501
    %v7623 = vunpack.c.h.b16 %v7501
    %v7624 = vunpack.c.l.b16 %v7502
    %v7625 = vunpack.c.l.b16 %v7503
    %v7626 = vunpack.c.h.b16 %v7503
    %v7627 = vunpack.c.l.b16 %v7504
    %v7628 = vunpack.c.h.b16 %v7504
    %v7629 = vunpack.c.l.b16 %v7505
    %v7630 = vunpack.c.l.b16 %v7506
    %v7631 = vunpack.c.h.b16 %v7506
    %v7632 = vunpack.c.l.b16 %v7507
    %v7633 = vunpack.c.h.b16 %v7507
    %v7634 = vunpack.c.l.b16 %v7508
    %v7635 = vunpack.c.l.b16 %v7509
    %v7636 = vunpack.c.h.b16 %v7509
    %v7637 = vunpack.c.l.b16 %v7510
    %v7638 = vunpack.c.h.b16 %v7510
    %v7639 = vunpack.c.l.b16 %v7511
    %v7640 = vpack.c.b16 %v7565, %v7560
    %v7641 = vpack.c.b16 %v7566, %v7561
    %v7642 = vpack.c.b16 %v7567, %v7562
    %v7643 = vpack.c.b16 %v7568, %v7563
    %v7644 = vpack.c.b16 %v7569, %v7564
    %v7645 = vpack.c.b16 %v7575, %v7570
    %v7646 = vpack.c.b16 %v7576, %v7571
    %v7647 = vpack.c.b16 %v7577, %v7572
    %v7648 = vpack.c.b16 %v7578, %v7573
    %v7649 = vpack.c.b16 %v7579, %v7574
    %v7650 = vpack.c.b16 %v7585, %v7580
    %v7651 = vpack.c.b16 %v7586, %v7581
    %v7652 = vpack.c.b16 %v7587, %v7582
    %v7653 = vpack.c.b16 %v7588, %v7583
    %v7654 = vpack.c.b16 %v7589, %v7584
    %v7655 = vpack.c.b16 %v7595, %v7590
    %v7656 = vpack.c.b16 %v7596, %v7591
    %v7657 = vpack.c.b16 %v7597, %v7592
    %v7658 = vpack.c.b16 %v7598, %v7593
    %v7659 = vpack.c.b16 %v7599, %v7594
    %v7660 = vpack.c.b16 %v7605, %v7600
    %v7661 = vpack.c.b16 %v7606, %v7601
    %v7662 = vpack.c.b16 %v7607, %v7602
    %v7663 = vpack.c.b16 %v7608, %v7603
    %v7664 = vpack.c.b16 %v7609, %v7604
    %v7665 = vpack.c.b16 %v7615, %v7610
    %v7666 = vpack.c.b16 %v7616, %v7611
    %v7667 = vpack.c.b16 %v7617, %v7612
    %v7668 = vpack.c.b16 %v7618, %v7613
    %v7669 = vpack.c.b16 %v7619, %v7614
    %v7670 = vpack.c.b16 %v7625, %v7620
    %v7671 = vpack.c.b16 %v7626, %v7621
    %v7672 = vpack.c.b16 %v7627, %v7622
    %v7673 = vpack.c.b16 %v7628, %v7623
    %v7674 = vpack.c.b16 %v7629, %v7624
    %v7675 = vpack.c.b16 %v7635, %v7630
    %v7676 = vpack.c.b16 %v7636, %v7631
    %v7677 = vpack.c.b16 %v7637, %v7632
    %v7678 = vpack.c.b16 %v7638, %v7633
    %v7679 = vpack.c.b16 %v7639, %v7634
    %7720 = vmatprep.subr.bf16.mxu0 %v7641
    %7721 = vmatpush1.bf16.msra.mxu0 %v7640
    %7722 = vmatprep.subr.bf16.mxu0 %v7646
    %7723 = vmatpush1.bf16.msra.mxu0 %v7645
    %7724 = vmatprep.subr.bf16.mxu0 %v7651
    %7725 = vmatpush1.bf16.msra.mxu0 %v7650
    %7726 = vmatprep.subr.bf16.mxu0 %v7656
    %7727 = vmatpush1.bf16.msra.mxu0 %v7655
    %7728 = vmatprep.subr.bf16.mxu0 %v7661
    %7729 = vmatpush1.bf16.msra.mxu0 %v7660
    %7730 = vmatprep.subr.bf16.mxu0 %v7666
    %7731 = vmatpush1.bf16.msra.mxu0 %v7665
    %7732 = vmatprep.subr.bf16.mxu0 %v7671
    %7733 = vmatpush1.bf16.msra.mxu0 %v7670
    %7734 = vmatprep.subr.bf16.mxu0 %v7676
    %7735 = vmatpush1.bf16.msra.mxu0 %v7675
    %7736 = vmatprep.subr.bf16.mxu0 0
    %7737 = vmatpush1.bf16.msra.mxu0 0
    %7738 = vmatprep.subr.bf16.mxu0 0
    %7739 = vmatpush1.bf16.msra.mxu0 0
    %7740 = vmatprep.subr.bf16.mxu0 0
    %7741 = vmatpush1.bf16.msra.mxu0 0
    %7742 = vmatprep.subr.bf16.mxu0 0
    %7743 = vmatpush1.bf16.msra.mxu0 0
    %7744 = vmatprep.subr.bf16.mxu0 0
    %7745 = vmatpush1.bf16.msra.mxu0 0
    %7746 = vmatprep.subr.bf16.mxu0 0
    %7747 = vmatpush1.bf16.msra.mxu0 0
    %7748 = vmatprep.subr.bf16.mxu0 0
    %7749 = vmatpush1.bf16.msra.mxu0 0
    %7750 = vmatprep.subr.bf16.mxu0 0
    %7751 = vmatpush1.bf16.msra.mxu0 0
    %7752 = vmatprep.mubr.bf16.mxu0 0
    %7753 = vmatmul.mubr.bf16.gmra.mrb[0].mxu0 %v7463
    %v7754 = vpop.f32.mrb[0].mxu0
    %v7755 = vadd.f32 0.0, %v7754
    %v7756 = vpop.f32.mrb[0].mxu0
    %v7757 = vadd.f32 0.0, %v7756
    %v7758 = vpop.f32.mrb[0].mxu0
    %v7759 = vadd.f32 0.0, %v7758
    %v7760 = vpop.f32.mrb[0].mxu0
    %v7761 = vadd.f32 0.0, %v7760
    %7762 = vdwg.mxu0
    %7763 = vmatprep.subr.bf16.mxu0 %v7643
    %7764 = vmatpush1.bf16.msra.mxu0 %v7642
    %7765 = vmatprep.subr.bf16.mxu0 %v7648
    %7766 = vmatpush1.bf16.msra.mxu0 %v7647
    %7767 = vmatprep.subr.bf16.mxu0 %v7653
    %7768 = vmatpush1.bf16.msra.mxu0 %v7652
    %7769 = vmatprep.subr.bf16.mxu0 %v7658
    %7770 = vmatpush1.bf16.msra.mxu0 %v7657
    %7771 = vmatprep.subr.bf16.mxu0 %v7663
    %7772 = vmatpush1.bf16.msra.mxu0 %v7662
    %7773 = vmatprep.subr.bf16.mxu0 %v7668
    %7774 = vmatpush1.bf16.msra.mxu0 %v7667
    %7775 = vmatprep.subr.bf16.mxu0 %v7673
    %7776 = vmatpush1.bf16.msra.mxu0 %v7672
    %7777 = vmatprep.subr.bf16.mxu0 %v7678
    %7778 = vmatpush1.bf16.msra.mxu0 %v7677
    %7779 = vmatprep.subr.bf16.mxu0 0
    %7780 = vmatpush1.bf16.msra.mxu0 0
    %7781 = vmatprep.subr.bf16.mxu0 0
    %7782 = vmatpush1.bf16.msra.mxu0 0
    %7783 = vmatprep.subr.bf16.mxu0 0
    %7784 = vmatpush1.bf16.msra.mxu0 0
    %7785 = vmatprep.subr.bf16.mxu0 0
    %7786 = vmatpush1.bf16.msra.mxu0 0
    %7787 = vmatprep.subr.bf16.mxu0 0
    %7788 = vmatpush1.bf16.msra.mxu0 0
    %7789 = vmatprep.subr.bf16.mxu0 0
    %7790 = vmatpush1.bf16.msra.mxu0 0
    %7791 = vmatprep.subr.bf16.mxu0 0
    %7792 = vmatpush1.bf16.msra.mxu0 0
    %7793 = vmatprep.subr.bf16.mxu0 0
    %7794 = vmatpush1.bf16.msra.mxu0 0
    %7795 = vmatprep.mubr.bf16.mxu0 0
    %7796 = vmatmul.mubr.bf16.gmra.mrb[0].mxu0 %v7463
    %v7797 = vpop.f32.mrb[0].mxu0
    %v7798 = vadd.f32 0.0, %v7797
    %v7799 = vpop.f32.mrb[0].mxu0
    %v7800 = vadd.f32 0.0, %v7799
    %v7801 = vpop.f32.mrb[0].mxu0
    %v7802 = vadd.f32 0.0, %v7801
    %v7803 = vpop.f32.mrb[0].mxu0
    %v7804 = vadd.f32 0.0, %v7803
    %7805 = vdwg.mxu0
    %7806 = vmatprep.subr.bf16.mxu0 0
    %7807 = vmatpush1.bf16.msra.mxu0 %v7644
    %7808 = vmatprep.subr.bf16.mxu0 0
    %7809 = vmatpush1.bf16.msra.mxu0 %v7649
    %7810 = vmatprep.subr.bf16.mxu0 0
    %7811 = vmatpush1.bf16.msra.mxu0 %v7654
    %7812 = vmatprep.subr.bf16.mxu0 0
    %7813 = vmatpush1.bf16.msra.mxu0 %v7659
    %7814 = vmatprep.subr.bf16.mxu0 0
    %7815 = vmatpush1.bf16.msra.mxu0 %v7664
    %7816 = vmatprep.subr.bf16.mxu0 0
    %7817 = vmatpush1.bf16.msra.mxu0 %v7669
    %7818 = vmatprep.subr.bf16.mxu0 0
    %7819 = vmatpush1.bf16.msra.mxu0 %v7674
    %7820 = vmatprep.subr.bf16.mxu0 0
    %7821 = vmatpush1.bf16.msra.mxu0 %v7679
    %7822 = vmatprep.subr.bf16.mxu0 0
    %7823 = vmatpush1.bf16.msra.mxu0 0
    %7824 = vmatprep.subr.bf16.mxu0 0
    %7825 = vmatpush1.bf16.msra.mxu0 0
    %7826 = vmatprep.subr.bf16.mxu0 0
    %7827 = vmatpush1.bf16.msra.mxu0 0
    %7828 = vmatprep.subr.bf16.mxu0 0
    %7829 = vmatpush1.bf16.msra.mxu0 0
    %7830 = vmatprep.subr.bf16.mxu0 0
    %7831 = vmatpush1.bf16.msra.mxu0 0
    %7832 = vmatprep.subr.bf16.mxu0 0
    %7833 = vmatpush1.bf16.msra.mxu0 0
    %7834 = vmatprep.subr.bf16.mxu0 0
    %7835 = vmatpush1.bf16.msra.mxu0 0
    %7836 = vmatprep.subr.bf16.mxu0 0
    %7837 = vmatpush1.bf16.msra.mxu0 0
    %7838 = vmatprep.mubr.bf16.mxu0 0
    %7839 = vmatmul.mubr.bf16.gmra.mrb[0].mxu0 %v7463
    %v7840 = vpop.f32.mrb[0].mxu0
    %v7841 = vadd.f32 0.0, %v7840
    %v7842 = vpop.f32.mrb[0].mxu0
    %v7843 = vpop.f32.mrb[0].mxu0
    %v7844 = vadd.f32 0.0, %v7843
    %v7845 = vpop.f32.mrb[0].mxu0
    %7846 = vdwg.mxu0
    %v7847 = vld [vmem:[%s9] sm:$0x1]
    %v7849 = vlaneseq
    %v7850 = vshrl.u32 %v7849, 7
    %v7851 = vsub.s32 0, %v7850
    %v7852 = vrot.slane %v7847, %v7851
    %v7854 = vadd.f32 %v7841, %v7852
    %v7855 = vadd.f32 %v7844, %v7852
    %s7856 = scalar_lea.vmem [#allocation13], 64
    %7857 = vst [vmem:[%s7856] sm:$0xff] %v7854
    %7858 = vst [vmem:[%s7856 + $0x8] sm:$0xff] %v7855
    %7859 = vmax.xlane.f32.xlu0 %v7854
    %v7860 = vpop.xlane.xlu0 %7859
    %7861 = vmax.xlane.f32.xlu0 %v7855
    %v7862 = vpop.xlane.xlu0 %7861
    %vm7863 = vcmp.eq.f32.partialorder %v7854, %v7860
    %vm7864 = vcmp.eq.f32.partialorder %v7855, %v7862
    %v7865 = vsel %vm7863, %v4601, 128
    %v7866 = vsel %vm7864, %v4601, 128
    %v7867 = vand.u32 %v7865, 65535
    %v7868 = vshra.s32 %v7865, 16
    %v7869 = vcvt.s32.f32 %v7867
    %v7870 = vcvt.s32.f32 %v7868
    %7871 = vmin.xlane.f32.xlu0 %v7870
    %v7872 = vpop.xlane.xlu0 %7871
    %vm7873 = vcmp.eq.f32.partialorder %v7870, %v7872
    %v7874 = vsel %vm7873, %v7869, inf
    %7875 = vmin.xlane.f32.xlu0 %v7874
    %v7876 = vpop.xlane.xlu0 %7875
    %v7877 = vcvt.f32.s32 %v7876
    %v7878 = vcvt.f32.s32 %v7872
    %v7879 = vshll.u32 %v7878, 16
    %v7880 = vadd.s32 %v7879, %v7877
    %v7881 = vand.u32 %v7866, 65535
    %v7882 = vshra.s32 %v7866, 16
    %v7883 = vcvt.s32.f32 %v7881
    %v7884 = vcvt.s32.f32 %v7882
    %7885 = vmin.xlane.f32.xlu0 %v7884
    %v7886 = vpop.xlane.xlu0 %7885
    %vm7887 = vcmp.eq.f32.partialorder %v7884, %v7886
    %v7888 = vsel %vm7887, %v7883, inf
    %7889 = vmin.xlane.f32.xlu0 %v7888
    %v7890 = vpop.xlane.xlu0 %7889
    %v7891 = vcvt.f32.s32 %v7890
    %v7892 = vcvt.f32.s32 %v7886
    %v7893 = vshll.u32 %v7892, 16
    %v7894 = vadd.s32 %v7893, %v7891
    %vm7895 = vcmp.eq.s32.totalorder %v4601, %v7880
    %vm7896 = vcmp.eq.s32.totalorder %v4601, %v7894
    %v7897 = vsel %vm7895, 1, 0
    %v7898 = vsel %vm7896, 1, 0
    %v7899 = vcvt.s32.f32 %v7897
    %v7900 = vcvt.s32.f32 %v7898
    %s7901 = scalar_lea.vmem %s5, 64
    %v7902 = vld [vmem:[%s7901] sm:$0xff]
    %v7903 = vld [vmem:[%s7901 + $0x8] sm:$0xff]
    %7904 = vset.pattern.permute.xlu0 0
    %7905 = vperm.xlu0 %7904, %v7902
    %v7906 = vpop.permute.xlu0 %7905
    %7907 = vset.pattern.permute.xlu0 0
    %7908 = vperm.xlu0 %7907, %v7903
    %v7909 = vpop.permute.xlu0 %7908
    %vm7910 = vcmp.eq.s32.totalorder %v4601, %v7906
    %vm7911 = vcmp.eq.s32.totalorder %v4601, %v7909
    %v7912 = vsel %vm7910, 1, 0
    %v7913 = vsel %vm7911, 1, 0
    %v7914 = vcvt.s32.f32 %v7912
    %v7915 = vcvt.s32.f32 %v7913
    %s7916 = sld [smem:[#allocation4 + $0x4]]
    %p7917 = scmp.ne.s32.totalorder %s7916, 0
    %s7918 = scalar_select %p7917, 1, 0
    %v7919 = vstv %s7918
    %vm7920 = vcmp.eq.s32.totalorder %v7919, 1
    %v7921 = vsel %vm7920, %v7914, %v7899
    %v7922 = vsel %vm7920, %v7915, %v7900
    %v7923 = vpack.c.bf16 %v7922, %v7921
    %v7924 = vld [vmem:[#allocation10] sm:$0xff]
    %v7925 = vld [vmem:[#allocation10 + $0x8] sm:$0xff]
    %v7926 = vld [vmem:[#allocation10 + $0x10] sm:$0xff]
    %v7927 = vld [vmem:[#allocation10 + $0x18] sm:$0xff]
    %v7928 = vld [vmem:[#allocation10 + $0x20] sm:$0xff]
    %v7929 = vld [vmem:[#allocation10 + $0x28] sm:$0xff]
    %v7930 = vld [vmem:[#allocation10 + $0x30] sm:$0xff]
    %v7931 = vld [vmem:[#allocation10 + $0x38] sm:$0xff]
    %v7932 = vld [vmem:[#allocation10 + $0x40] sm:$0xff]
    %v7933 = vld [vmem:[#allocation10 + $0x48] sm:$0xff]
    %v7934 = vld [vmem:[#allocation10 + $0x50] sm:$0xff]
    %v7935 = vld [vmem:[#allocation10 + $0x58] sm:$0xff]
    %v7936 = vld [vmem:[#allocation10 + $0x60] sm:$0xff]
    %v7937 = vld [vmem:[#allocation10 + $0x68] sm:$0xff]
    %v7938 = vld [vmem:[#allocation10 + $0x70] sm:$0xff]
    %v7939 = vld [vmem:[#allocation10 + $0x78] sm:$0xff]
    %v7940 = vld [vmem:[#allocation10 + $0x80] sm:$0xff]
    %v7941 = vld [vmem:[#allocation10 + $0x88] sm:$0xff]
    %v7942 = vld [vmem:[#allocation10 + $0x90] sm:$0xff]
    %v7943 = vld [vmem:[#allocation10 + $0x98] sm:$0xff]
    %v7944 = vld [vmem:[#allocation10 + $0xa0] sm:$0xff]
    %v7945 = vld [vmem:[#allocation10 + $0xa8] sm:$0xff]
    %v7946 = vld [vmem:[#allocation10 + $0xb0] sm:$0xff]
    %v7947 = vld [vmem:[#allocation10 + $0xb8] sm:$0xff]
    %v7948 = vld [vmem:[#allocation10 + $0xc0] sm:$0xff]
    %v7949 = vld [vmem:[#allocation10 + $0xc8] sm:$0xff]
    %v7950 = vld [vmem:[#allocation10 + $0xd0] sm:$0xff]
    %v7951 = vld [vmem:[#allocation10 + $0xd8] sm:$0xff]
    %v7952 = vld [vmem:[#allocation10 + $0xe0] sm:$0xff]
    %v7953 = vld [vmem:[#allocation10 + $0xe8] sm:$0xff]
    %v7954 = vld [vmem:[#allocation10 + $0xf0] sm:$0xff]
    %v7955 = vld [vmem:[#allocation10 + $0xf8] sm:$0xff]
    %v7956 = vld [vmem:[%s7] sm:$0xf]
    %v7958 = vlaneseq
    %v7959 = vshrl.u32 %v7958, 7
    %v7960 = vsub.s32 0, %v7959
    %v7961 = vrot.slane %v7956, %v7960
    %v7962 = vlaneseq
    %v7963 = vshrl.u32 %v7962, 7
    %v7964 = vsub.s32 1, %v7963
    %v7965 = vrot.slane %v7956, %v7964
    %v7966 = vlaneseq
    %v7967 = vshrl.u32 %v7966, 7
    %v7968 = vsub.s32 2, %v7967
    %v7969 = vrot.slane %v7956, %v7968
    %v7970 = vlaneseq
    %v7971 = vshrl.u32 %v7970, 7
    %v7972 = vsub.s32 3, %v7971
    %v7973 = vrot.slane %v7956, %v7972
    %v8010 = vunpack.c.l.b16 %v7924
    %v8011 = vunpack.c.h.b16 %v7924
    %v8012 = vunpack.c.l.b16 %v7925
    %v8013 = vunpack.c.h.b16 %v7925
    %v8014 = vunpack.c.l.b16 %v7926
    %v8015 = vunpack.c.h.b16 %v7926
    %v8016 = vunpack.c.l.b16 %v7927
    %v8017 = vunpack.c.h.b16 %v7927
    %v8018 = vunpack.c.l.b16 %v7928
    %v8019 = vunpack.c.h.b16 %v7928
    %v8020 = vunpack.c.l.b16 %v7929
    %v8021 = vunpack.c.h.b16 %v7929
    %v8022 = vunpack.c.l.b16 %v7930
    %v8023 = vunpack.c.h.b16 %v7930
    %v8024 = vunpack.c.l.b16 %v7931
    %v8025 = vunpack.c.h.b16 %v7931
    %v8026 = vunpack.c.l.b16 %v7932
    %v8027 = vunpack.c.h.b16 %v7932
    %v8028 = vunpack.c.l.b16 %v7933
    %v8029 = vunpack.c.h.b16 %v7933
    %v8030 = vunpack.c.l.b16 %v7934
    %v8031 = vunpack.c.h.b16 %v7934
    %v8032 = vunpack.c.l.b16 %v7935
    %v8033 = vunpack.c.h.b16 %v7935
    %v8034 = vunpack.c.l.b16 %v7936
    %v8035 = vunpack.c.h.b16 %v7936
    %v8036 = vunpack.c.l.b16 %v7937
    %v8037 = vunpack.c.h.b16 %v7937
    %v8038 = vunpack.c.l.b16 %v7938
    %v8039 = vunpack.c.h.b16 %v7938
    %v8040 = vunpack.c.l.b16 %v7939
    %v8041 = vunpack.c.h.b16 %v7939
    %v8042 = vunpack.c.l.b16 %v7940
    %v8043 = vunpack.c.h.b16 %v7940
    %v8044 = vunpack.c.l.b16 %v7941
    %v8045 = vunpack.c.h.b16 %v7941
    %v8046 = vunpack.c.l.b16 %v7942
    %v8047 = vunpack.c.h.b16 %v7942
    %v8048 = vunpack.c.l.b16 %v7943
    %v8049 = vunpack.c.h.b16 %v7943
    %v8050 = vunpack.c.l.b16 %v7944
    %v8051 = vunpack.c.h.b16 %v7944
    %v8052 = vunpack.c.l.b16 %v7945
    %v8053 = vunpack.c.h.b16 %v7945
    %v8054 = vunpack.c.l.b16 %v7946
    %v8055 = vunpack.c.h.b16 %v7946
    %v8056 = vunpack.c.l.b16 %v7947
    %v8057 = vunpack.c.h.b16 %v7947
    %v8058 = vunpack.c.l.b16 %v7948
    %v8059 = vunpack.c.h.b16 %v7948
    %v8060 = vunpack.c.l.b16 %v7949
    %v8061 = vunpack.c.h.b16 %v7949
    %v8062 = vunpack.c.l.b16 %v7950
    %v8063 = vunpack.c.h.b16 %v7950
    %v8064 = vunpack.c.l.b16 %v7951
    %v8065 = vunpack.c.h.b16 %v7951
    %v8066 = vunpack.c.l.b16 %v7952
    %v8067 = vunpack.c.h.b16 %v7952
    %v8068 = vunpack.c.l.b16 %v7953
    %v8069 = vunpack.c.h.b16 %v7953
    %v8070 = vunpack.c.l.b16 %v7954
    %v8071 = vunpack.c.h.b16 %v7954
    %v8072 = vunpack.c.l.b16 %v7955
    %v8073 = vunpack.c.h.b16 %v7955
    %v8074 = vpack.c.b16 %v8014, %v8010
    %v8075 = vpack.c.b16 %v8015, %v8011
    %v8076 = vpack.c.b16 %v8016, %v8012
    %v8077 = vpack.c.b16 %v8017, %v8013
    %v8078 = vpack.c.b16 %v8022, %v8018
    %v8079 = vpack.c.b16 %v8023, %v8019
    %v8080 = vpack.c.b16 %v8024, %v8020
    %v8081 = vpack.c.b16 %v8025, %v8021
    %v8082 = vpack.c.b16 %v8030, %v8026
    %v8083 = vpack.c.b16 %v8031, %v8027
    %v8084 = vpack.c.b16 %v8032, %v8028
    %v8085 = vpack.c.b16 %v8033, %v8029
    %v8086 = vpack.c.b16 %v8038, %v8034
    %v8087 = vpack.c.b16 %v8039, %v8035
    %v8088 = vpack.c.b16 %v8040, %v8036
    %v8089 = vpack.c.b16 %v8041, %v8037
    %v8090 = vpack.c.b16 %v8046, %v8042
    %v8091 = vpack.c.b16 %v8047, %v8043
    %v8092 = vpack.c.b16 %v8048, %v8044
    %v8093 = vpack.c.b16 %v8049, %v8045
    %v8094 = vpack.c.b16 %v8054, %v8050
    %v8095 = vpack.c.b16 %v8055, %v8051
    %v8096 = vpack.c.b16 %v8056, %v8052
    %v8097 = vpack.c.b16 %v8057, %v8053
    %v8098 = vpack.c.b16 %v8062, %v8058
    %v8099 = vpack.c.b16 %v8063, %v8059
    %v8100 = vpack.c.b16 %v8064, %v8060
    %v8101 = vpack.c.b16 %v8065, %v8061
    %v8102 = vpack.c.b16 %v8070, %v8066
    %v8103 = vpack.c.b16 %v8071, %v8067
    %v8104 = vpack.c.b16 %v8072, %v8068
    %v8105 = vpack.c.b16 %v8073, %v8069
    %8138 = vmatprep.subr.bf16.mxu0 %v8075
    %8139 = vmatpush1.bf16.msra.mxu0 %v8074
    %8140 = vmatprep.subr.bf16.mxu0 %v8079
    %8141 = vmatpush1.bf16.msra.mxu0 %v8078
    %8142 = vmatprep.subr.bf16.mxu0 %v8083
    %8143 = vmatpush1.bf16.msra.mxu0 %v8082
    %8144 = vmatprep.subr.bf16.mxu0 %v8087
    %8145 = vmatpush1.bf16.msra.mxu0 %v8086
    %8146 = vmatprep.subr.bf16.mxu0 %v8091
    %8147 = vmatpush1.bf16.msra.mxu0 %v8090
    %8148 = vmatprep.subr.bf16.mxu0 %v8095
    %8149 = vmatpush1.bf16.msra.mxu0 %v8094
    %8150 = vmatprep.subr.bf16.mxu0 %v8099
    %8151 = vmatpush1.bf16.msra.mxu0 %v8098
    %8152 = vmatprep.subr.bf16.mxu0 %v8103
    %8153 = vmatpush1.bf16.msra.mxu0 %v8102
    %8154 = vmatprep.subr.bf16.mxu0 0
    %8155 = vmatpush1.bf16.msra.mxu0 0
    %8156 = vmatprep.subr.bf16.mxu0 0
    %8157 = vmatpush1.bf16.msra.mxu0 0
    %8158 = vmatprep.subr.bf16.mxu0 0
    %8159 = vmatpush1.bf16.msra.mxu0 0
    %8160 = vmatprep.subr.bf16.mxu0 0
    %8161 = vmatpush1.bf16.msra.mxu0 0
    %8162 = vmatprep.subr.bf16.mxu0 0
    %8163 = vmatpush1.bf16.msra.mxu0 0
    %8164 = vmatprep.subr.bf16.mxu0 0
    %8165 = vmatpush1.bf16.msra.mxu0 0
    %8166 = vmatprep.subr.bf16.mxu0 0
    %8167 = vmatpush1.bf16.msra.mxu0 0
    %8168 = vmatprep.subr.bf16.mxu0 0
    %8169 = vmatpush1.bf16.msra.mxu0 0
    %8170 = vmatprep.mubr.bf16.mxu0 0
    %8171 = vmatmul.mubr.bf16.gmra.mrb[0].mxu0 %v7923
    %v8172 = vpop.f32.mrb[0].mxu0
    %v8173 = vadd.f32 %v7961, %v8172
    %v8174 = vpop.f32.mrb[0].mxu0
    %v8175 = vadd.f32 %v7965, %v8174
    %v8176 = vpop.f32.mrb[0].mxu0
    %v8177 = vadd.f32 %v7961, %v8176
    %v8178 = vpop.f32.mrb[0].mxu0
    %v8179 = vadd.f32 %v7965, %v8178
    %8180 = vdwg.mxu0
    %8181 = vmatprep.subr.bf16.mxu0 %v8077
    %8182 = vmatpush1.bf16.msra.mxu0 %v8076
    %8183 = vmatprep.subr.bf16.mxu0 %v8081
    %8184 = vmatpush1.bf16.msra.mxu0 %v8080
    %8185 = vmatprep.subr.bf16.mxu0 %v8085
    %8186 = vmatpush1.bf16.msra.mxu0 %v8084
    %8187 = vmatprep.subr.bf16.mxu0 %v8089
    %8188 = vmatpush1.bf16.msra.mxu0 %v8088
    %8189 = vmatprep.subr.bf16.mxu0 %v8093
    %8190 = vmatpush1.bf16.msra.mxu0 %v8092
    %8191 = vmatprep.subr.bf16.mxu0 %v8097
    %8192 = vmatpush1.bf16.msra.mxu0 %v8096
    %8193 = vmatprep.subr.bf16.mxu0 %v8101
    %8194 = vmatpush1.bf16.msra.mxu0 %v8100
    %8195 = vmatprep.subr.bf16.mxu0 %v8105
    %8196 = vmatpush1.bf16.msra.mxu0 %v8104
    %8197 = vmatprep.subr.bf16.mxu0 0
    %8198 = vmatpush1.bf16.msra.mxu0 0
    %8199 = vmatprep.subr.bf16.mxu0 0
    %8200 = vmatpush1.bf16.msra.mxu0 0
    %8201 = vmatprep.subr.bf16.mxu0 0
    %8202 = vmatpush1.bf16.msra.mxu0 0
    %8203 = vmatprep.subr.bf16.mxu0 0
    %8204 = vmatpush1.bf16.msra.mxu0 0
    %8205 = vmatprep.subr.bf16.mxu0 0
    %8206 = vmatpush1.bf16.msra.mxu0 0
    %8207 = vmatprep.subr.bf16.mxu0 0
    %8208 = vmatpush1.bf16.msra.mxu0 0
    %8209 = vmatprep.subr.bf16.mxu0 0
    %8210 = vmatpush1.bf16.msra.mxu0 0
    %8211 = vmatprep.subr.bf16.mxu0 0
    %8212 = vmatpush1.bf16.msra.mxu0 0
    %8213 = vmatprep.mubr.bf16.mxu0 0
    %8214 = vmatmul.mubr.bf16.gmra.mrb[0].mxu0 %v7923
    %v8215 = vpop.f32.mrb[0].mxu0
    %v8216 = vadd.f32 %v7969, %v8215
    %v8217 = vpop.f32.mrb[0].mxu0
    %v8218 = vadd.f32 %v7973, %v8217
    %v8219 = vpop.f32.mrb[0].mxu0
    %v8220 = vadd.f32 %v7969, %v8219
    %v8221 = vpop.f32.mrb[0].mxu0
    %v8222 = vadd.f32 %v7973, %v8221
    %8223 = vdwg.mxu0
    %v8224 = vadd.f32 %v8173, %v7755
    %v8225 = vadd.f32 %v8175, %v7757
    %v8226 = vadd.f32 %v8216, %v7798
    %v8227 = vadd.f32 %v8218, %v7800
    %v8228 = vadd.f32 %v8177, %v7759
    %v8229 = vadd.f32 %v8179, %v7761
    %v8230 = vadd.f32 %v8220, %v7802
    %v8231 = vadd.f32 %v8222, %v7804
    %v8232 = vmul.f32 %v8224, 0.5
    %v8233 = vmul.f32 %v8228, 0.5
    %v8234 = vtanh.pop %v8232
    %v8235 = vtanh.pop %v8233
    %v8236 = vmul.f32 %v8234, 0.5
    %v8237 = vmul.f32 %v8235, 0.5
    %v8238 = vadd.f32 %v8236, 0.5
    %v8239 = vadd.f32 %v8237, 0.5
    %v8240 = vmul.f32 %v8225, 0.5
    %v8241 = vmul.f32 %v8229, 0.5
    %v8242 = vtanh.pop %v8240
    %v8243 = vtanh.pop %v8241
    %v8244 = vmul.f32 %v8242, 0.5
    %v8245 = vmul.f32 %v8243, 0.5
    %v8246 = vadd.f32 %v8244, 0.5
    %v8247 = vadd.f32 %v8245, 0.5
    %v8248 = vtanh.pop %v8226
    %v8249 = vtanh.pop %v8230
    %v8250 = vmul.f32 %v8227, 0.5
    %v8251 = vmul.f32 %v8231, 0.5
    %v8252 = vtanh.pop %v8250
    %v8253 = vtanh.pop %v8251
    %v8254 = vmul.f32 %v8252, 0.5
    %v8255 = vmul.f32 %v8253, 0.5
    %v8256 = vadd.f32 %v8254, 0.5
    %v8257 = vadd.f32 %v8255, 0.5
    %v8258 = vmul.f32 %v8246, %v7457
    %v8259 = vmul.f32 %v8247, %v7458
    %v8260 = vmul.f32 %v8238, %v8248
    %v8261 = vmul.f32 %v8239, %v8249
    %v8262 = vadd.f32 %v8258, %v8260
    %v8263 = vadd.f32 %v8259, %v8261
    %v8264 = vtanh.pop %v8262
    %v8265 = vtanh.pop %v8263
    %v8266 = vmul.f32 %v8256, %v8264
    %v8267 = vmul.f32 %v8257, %v8265
    %v8268 = vpack.c.bf16 %v8267, %v8266
    %v8269 = vld [vmem:[#allocation11] sm:$0xff]
    %v8270 = vld [vmem:[#allocation11 + $0x8] sm:$0xff]
    %v8271 = vld [vmem:[#allocation11 + $0x10] sm:$0xf]
    %v8272 = vld [vmem:[#allocation11 + $0x14] sm:$0xff]
    %v8273 = vld [vmem:[#allocation11 + $0x1c] sm:$0xff]
    %v8274 = vld [vmem:[#allocation11 + $0x24] sm:$0xf]
    %v8275 = vld [vmem:[#allocation11 + $0x28] sm:$0xff]
    %v8276 = vld [vmem:[#allocation11 + $0x30] sm:$0xff]
    %v8277 = vld [vmem:[#allocation11 + $0x38] sm:$0xf]
    %v8278 = vld [vmem:[#allocation11 + $0x3c] sm:$0xff]
    %v8279 = vld [vmem:[#allocation11 + $0x44] sm:$0xff]
    %v8280 = vld [vmem:[#allocation11 + $0x4c] sm:$0xf]
    %v8281 = vld [vmem:[#allocation11 + $0x50] sm:$0xff]
    %v8282 = vld [vmem:[#allocation11 + $0x58] sm:$0xff]
    %v8283 = vld [vmem:[#allocation11 + $0x60] sm:$0xf]
    %v8284 = vld [vmem:[#allocation11 + $0x64] sm:$0xff]
    %v8285 = vld [vmem:[#allocation11 + $0x6c] sm:$0xff]
    %v8286 = vld [vmem:[#allocation11 + $0x74] sm:$0xf]
    %v8287 = vld [vmem:[#allocation11 + $0x78] sm:$0xff]
    %v8288 = vld [vmem:[#allocation11 + $0x80] sm:$0xff]
    %v8289 = vld [vmem:[#allocation11 + $0x88] sm:$0xf]
    %v8290 = vld [vmem:[#allocation11 + $0x8c] sm:$0xff]
    %v8291 = vld [vmem:[#allocation11 + $0x94] sm:$0xff]
    %v8292 = vld [vmem:[#allocation11 + $0x9c] sm:$0xf]
    %v8293 = vld [vmem:[#allocation11 + $0xa0] sm:$0xff]
    %v8294 = vld [vmem:[#allocation11 + $0xa8] sm:$0xff]
    %v8295 = vld [vmem:[#allocation11 + $0xb0] sm:$0xf]
    %v8296 = vld [vmem:[#allocation11 + $0xb4] sm:$0xff]
    %v8297 = vld [vmem:[#allocation11 + $0xbc] sm:$0xff]
    %v8298 = vld [vmem:[#allocation11 + $0xc4] sm:$0xf]
    %v8299 = vld [vmem:[#allocation11 + $0xc8] sm:$0xff]
    %v8300 = vld [vmem:[#allocation11 + $0xd0] sm:$0xff]
    %v8301 = vld [vmem:[#allocation11 + $0xd8] sm:$0xf]
    %v8302 = vld [vmem:[#allocation11 + $0xdc] sm:$0xff]
    %v8303 = vld [vmem:[#allocation11 + $0xe4] sm:$0xff]
    %v8304 = vld [vmem:[#allocation11 + $0xec] sm:$0xf]
    %v8305 = vld [vmem:[#allocation11 + $0xf0] sm:$0xff]
    %v8306 = vld [vmem:[#allocation11 + $0xf8] sm:$0xff]
    %v8307 = vld [vmem:[#allocation11 + $0x100] sm:$0xf]
    %v8308 = vld [vmem:[#allocation11 + $0x104] sm:$0xff]
    %v8309 = vld [vmem:[#allocation11 + $0x10c] sm:$0xff]
    %v8310 = vld [vmem:[#allocation11 + $0x114] sm:$0xf]
    %v8311 = vld [vmem:[#allocation11 + $0x118] sm:$0xff]
    %v8312 = vld [vmem:[#allocation11 + $0x120] sm:$0xff]
    %v8313 = vld [vmem:[#allocation11 + $0x128] sm:$0xf]
    %v8314 = vld [vmem:[#allocation11 + $0x12c] sm:$0xff]
    %v8315 = vld [vmem:[#allocation11 + $0x134] sm:$0xff]
    %v8316 = vld [vmem:[#allocation11 + $0x13c] sm:$0xf]
    %v8365 = vunpack.c.l.b16 %v8269
    %v8366 = vunpack.c.h.b16 %v8269
    %v8367 = vunpack.c.l.b16 %v8270
    %v8368 = vunpack.c.h.b16 %v8270
    %v8369 = vunpack.c.l.b16 %v8271
    %v8370 = vunpack.c.l.b16 %v8272
    %v8371 = vunpack.c.h.b16 %v8272
    %v8372 = vunpack.c.l.b16 %v8273
    %v8373 = vunpack.c.h.b16 %v8273
    %v8374 = vunpack.c.l.b16 %v8274
    %v8375 = vunpack.c.l.b16 %v8275
    %v8376 = vunpack.c.h.b16 %v8275
    %v8377 = vunpack.c.l.b16 %v8276
    %v8378 = vunpack.c.h.b16 %v8276
    %v8379 = vunpack.c.l.b16 %v8277
    %v8380 = vunpack.c.l.b16 %v8278
    %v8381 = vunpack.c.h.b16 %v8278
    %v8382 = vunpack.c.l.b16 %v8279
    %v8383 = vunpack.c.h.b16 %v8279
    %v8384 = vunpack.c.l.b16 %v8280
    %v8385 = vunpack.c.l.b16 %v8281
    %v8386 = vunpack.c.h.b16 %v8281
    %v8387 = vunpack.c.l.b16 %v8282
    %v8388 = vunpack.c.h.b16 %v8282
    %v8389 = vunpack.c.l.b16 %v8283
    %v8390 = vunpack.c.l.b16 %v8284
    %v8391 = vunpack.c.h.b16 %v8284
    %v8392 = vunpack.c.l.b16 %v8285
    %v8393 = vunpack.c.h.b16 %v8285
    %v8394 = vunpack.c.l.b16 %v8286
    %v8395 = vunpack.c.l.b16 %v8287
    %v8396 = vunpack.c.h.b16 %v8287
    %v8397 = vunpack.c.l.b16 %v8288
    %v8398 = vunpack.c.h.b16 %v8288
    %v8399 = vunpack.c.l.b16 %v8289
    %v8400 = vunpack.c.l.b16 %v8290
    %v8401 = vunpack.c.h.b16 %v8290
    %v8402 = vunpack.c.l.b16 %v8291
    %v8403 = vunpack.c.h.b16 %v8291
    %v8404 = vunpack.c.l.b16 %v8292
    %v8405 = vunpack.c.l.b16 %v8293
    %v8406 = vunpack.c.h.b16 %v8293
    %v8407 = vunpack.c.l.b16 %v8294
    %v8408 = vunpack.c.h.b16 %v8294
    %v8409 = vunpack.c.l.b16 %v8295
    %v8410 = vunpack.c.l.b16 %v8296
    %v8411 = vunpack.c.h.b16 %v8296
    %v8412 = vunpack.c.l.b16 %v8297
    %v8413 = vunpack.c.h.b16 %v8297
    %v8414 = vunpack.c.l.b16 %v8298
    %v8415 = vunpack.c.l.b16 %v8299
    %v8416 = vunpack.c.h.b16 %v8299
    %v8417 = vunpack.c.l.b16 %v8300
    %v8418 = vunpack.c.h.b16 %v8300
    %v8419 = vunpack.c.l.b16 %v8301
    %v8420 = vunpack.c.l.b16 %v8302
    %v8421 = vunpack.c.h.b16 %v8302
    %v8422 = vunpack.c.l.b16 %v8303
    %v8423 = vunpack.c.h.b16 %v8303
    %v8424 = vunpack.c.l.b16 %v8304
    %v8425 = vunpack.c.l.b16 %v8305
    %v8426 = vunpack.c.h.b16 %v8305
    %v8427 = vunpack.c.l.b16 %v8306
    %v8428 = vunpack.c.h.b16 %v8306
    %v8429 = vunpack.c.l.b16 %v8307
    %v8430 = vunpack.c.l.b16 %v8308
    %v8431 = vunpack.c.h.b16 %v8308
    %v8432 = vunpack.c.l.b16 %v8309
    %v8433 = vunpack.c.h.b16 %v8309
    %v8434 = vunpack.c.l.b16 %v8310
    %v8435 = vunpack.c.l.b16 %v8311
    %v8436 = vunpack.c.h.b16 %v8311
    %v8437 = vunpack.c.l.b16 %v8312
    %v8438 = vunpack.c.h.b16 %v8312
    %v8439 = vunpack.c.l.b16 %v8313
    %v8440 = vunpack.c.l.b16 %v8314
    %v8441 = vunpack.c.h.b16 %v8314
    %v8442 = vunpack.c.l.b16 %v8315
    %v8443 = vunpack.c.h.b16 %v8315
    %v8444 = vunpack.c.l.b16 %v8316
    %v8445 = vpack.c.b16 %v8370, %v8365
    %v8446 = vpack.c.b16 %v8371, %v8366
    %v8447 = vpack.c.b16 %v8372, %v8367
    %v8448 = vpack.c.b16 %v8373, %v8368
    %v8449 = vpack.c.b16 %v8374, %v8369
    %v8450 = vpack.c.b16 %v8380, %v8375
    %v8451 = vpack.c.b16 %v8381, %v8376
    %v8452 = vpack.c.b16 %v8382, %v8377
    %v8453 = vpack.c.b16 %v8383, %v8378
    %v8454 = vpack.c.b16 %v8384, %v8379
    %v8455 = vpack.c.b16 %v8390, %v8385
    %v8456 = vpack.c.b16 %v8391, %v8386
    %v8457 = vpack.c.b16 %v8392, %v8387
    %v8458 = vpack.c.b16 %v8393, %v8388
    %v8459 = vpack.c.b16 %v8394, %v8389
    %v8460 = vpack.c.b16 %v8400, %v8395
    %v8461 = vpack.c.b16 %v8401, %v8396
    %v8462 = vpack.c.b16 %v8402, %v8397
    %v8463 = vpack.c.b16 %v8403, %v8398
    %v8464 = vpack.c.b16 %v8404, %v8399
    %v8465 = vpack.c.b16 %v8410, %v8405
    %v8466 = vpack.c.b16 %v8411, %v8406
    %v8467 = vpack.c.b16 %v8412, %v8407
    %v8468 = vpack.c.b16 %v8413, %v8408
    %v8469 = vpack.c.b16 %v8414, %v8409
    %v8470 = vpack.c.b16 %v8420, %v8415
    %v8471 = vpack.c.b16 %v8421, %v8416
    %v8472 = vpack.c.b16 %v8422, %v8417
    %v8473 = vpack.c.b16 %v8423, %v8418
    %v8474 = vpack.c.b16 %v8424, %v8419
    %v8475 = vpack.c.b16 %v8430, %v8425
    %v8476 = vpack.c.b16 %v8431, %v8426
    %v8477 = vpack.c.b16 %v8432, %v8427
    %v8478 = vpack.c.b16 %v8433, %v8428
    %v8479 = vpack.c.b16 %v8434, %v8429
    %v8480 = vpack.c.b16 %v8440, %v8435
    %v8481 = vpack.c.b16 %v8441, %v8436
    %v8482 = vpack.c.b16 %v8442, %v8437
    %v8483 = vpack.c.b16 %v8443, %v8438
    %v8484 = vpack.c.b16 %v8444, %v8439
    %8525 = vmatprep.subr.bf16.mxu0 %v8446
    %8526 = vmatpush1.bf16.msra.mxu0 %v8445
    %8527 = vmatprep.subr.bf16.mxu0 %v8451
    %8528 = vmatpush1.bf16.msra.mxu0 %v8450
    %8529 = vmatprep.subr.bf16.mxu0 %v8456
    %8530 = vmatpush1.bf16.msra.mxu0 %v8455
    %8531 = vmatprep.subr.bf16.mxu0 %v8461
    %8532 = vmatpush1.bf16.msra.mxu0 %v8460
    %8533 = vmatprep.subr.bf16.mxu0 %v8466
    %8534 = vmatpush1.bf16.msra.mxu0 %v8465
    %8535 = vmatprep.subr.bf16.mxu0 %v8471
    %8536 = vmatpush1.bf16.msra.mxu0 %v8470
    %8537 = vmatprep.subr.bf16.mxu0 %v8476
    %8538 = vmatpush1.bf16.msra.mxu0 %v8475
    %8539 = vmatprep.subr.bf16.mxu0 %v8481
    %8540 = vmatpush1.bf16.msra.mxu0 %v8480
    %8541 = vmatprep.subr.bf16.mxu0 0
    %8542 = vmatpush1.bf16.msra.mxu0 0
    %8543 = vmatprep.subr.bf16.mxu0 0
    %8544 = vmatpush1.bf16.msra.mxu0 0
    %8545 = vmatprep.subr.bf16.mxu0 0
    %8546 = vmatpush1.bf16.msra.mxu0 0
    %8547 = vmatprep.subr.bf16.mxu0 0
    %8548 = vmatpush1.bf16.msra.mxu0 0
    %8549 = vmatprep.subr.bf16.mxu0 0
    %8550 = vmatpush1.bf16.msra.mxu0 0
    %8551 = vmatprep.subr.bf16.mxu0 0
    %8552 = vmatpush1.bf16.msra.mxu0 0
    %8553 = vmatprep.subr.bf16.mxu0 0
    %8554 = vmatpush1.bf16.msra.mxu0 0
    %8555 = vmatprep.subr.bf16.mxu0 0
    %8556 = vmatpush1.bf16.msra.mxu0 0
    %8557 = vmatprep.mubr.bf16.mxu0 0
    %8558 = vmatmul.mubr.bf16.gmra.mrb[0].mxu0 %v8268
    %v8559 = vpop.f32.mrb[0].mxu0
    %v8560 = vadd.f32 0.0, %v8559
    %v8561 = vpop.f32.mrb[0].mxu0
    %v8562 = vadd.f32 0.0, %v8561
    %v8563 = vpop.f32.mrb[0].mxu0
    %v8564 = vadd.f32 0.0, %v8563
    %v8565 = vpop.f32.mrb[0].mxu0
    %v8566 = vadd.f32 0.0, %v8565
    %8567 = vdwg.mxu0
    %8568 = vmatprep.subr.bf16.mxu0 %v8448
    %8569 = vmatpush1.bf16.msra.mxu0 %v8447
    %8570 = vmatprep.subr.bf16.mxu0 %v8453
    %8571 = vmatpush1.bf16.msra.mxu0 %v8452
    %8572 = vmatprep.subr.bf16.mxu0 %v8458
    %8573 = vmatpush1.bf16.msra.mxu0 %v8457
    %8574 = vmatprep.subr.bf16.mxu0 %v8463
    %8575 = vmatpush1.bf16.msra.mxu0 %v8462
    %8576 = vmatprep.subr.bf16.mxu0 %v8468
    %8577 = vmatpush1.bf16.msra.mxu0 %v8467
    %8578 = vmatprep.subr.bf16.mxu0 %v8473
    %8579 = vmatpush1.bf16.msra.mxu0 %v8472
    %8580 = vmatprep.subr.bf16.mxu0 %v8478
    %8581 = vmatpush1.bf16.msra.mxu0 %v8477
    %8582 = vmatprep.subr.bf16.mxu0 %v8483
    %8583 = vmatpush1.bf16.msra.mxu0 %v8482
    %8584 = vmatprep.subr.bf16.mxu0 0
    %8585 = vmatpush1.bf16.msra.mxu0 0
    %8586 = vmatprep.subr.bf16.mxu0 0
    %8587 = vmatpush1.bf16.msra.mxu0 0
    %8588 = vmatprep.subr.bf16.mxu0 0
    %8589 = vmatpush1.bf16.msra.mxu0 0
    %8590 = vmatprep.subr.bf16.mxu0 0
    %8591 = vmatpush1.bf16.msra.mxu0 0
    %8592 = vmatprep.subr.bf16.mxu0 0
    %8593 = vmatpush1.bf16.msra.mxu0 0
    %8594 = vmatprep.subr.bf16.mxu0 0
    %8595 = vmatpush1.bf16.msra.mxu0 0
    %8596 = vmatprep.subr.bf16.mxu0 0
    %8597 = vmatpush1.bf16.msra.mxu0 0
    %8598 = vmatprep.subr.bf16.mxu0 0
    %8599 = vmatpush1.bf16.msra.mxu0 0
    %8600 = vmatprep.mubr.bf16.mxu0 0
    %8601 = vmatmul.mubr.bf16.gmra.mrb[0].mxu0 %v8268
    %v8602 = vpop.f32.mrb[0].mxu0
    %v8603 = vadd.f32 0.0, %v8602
    %v8604 = vpop.f32.mrb[0].mxu0
    %v8605 = vadd.f32 0.0, %v8604
    %v8606 = vpop.f32.mrb[0].mxu0
    %v8607 = vadd.f32 0.0, %v8606
    %v8608 = vpop.f32.mrb[0].mxu0
    %v8609 = vadd.f32 0.0, %v8608
    %8610 = vdwg.mxu0
    %8611 = vmatprep.subr.bf16.mxu0 0
    %8612 = vmatpush1.bf16.msra.mxu0 %v8449
    %8613 = vmatprep.subr.bf16.mxu0 0
    %8614 = vmatpush1.bf16.msra.mxu0 %v8454
    %8615 = vmatprep.subr.bf16.mxu0 0
    %8616 = vmatpush1.bf16.msra.mxu0 %v8459
    %8617 = vmatprep.subr.bf16.mxu0 0
    %8618 = vmatpush1.bf16.msra.mxu0 %v8464
    %8619 = vmatprep.subr.bf16.mxu0 0
    %8620 = vmatpush1.bf16.msra.mxu0 %v8469
    %8621 = vmatprep.subr.bf16.mxu0 0
    %8622 = vmatpush1.bf16.msra.mxu0 %v8474
    %8623 = vmatprep.subr.bf16.mxu0 0
    %8624 = vmatpush1.bf16.msra.mxu0 %v8479
    %8625 = vmatprep.subr.bf16.mxu0 0
    %8626 = vmatpush1.bf16.msra.mxu0 %v8484
    %8627 = vmatprep.subr.bf16.mxu0 0
    %8628 = vmatpush1.bf16.msra.mxu0 0
    %8629 = vmatprep.subr.bf16.mxu0 0
    %8630 = vmatpush1.bf16.msra.mxu0 0
    %8631 = vmatprep.subr.bf16.mxu0 0
    %8632 = vmatpush1.bf16.msra.mxu0 0
    %8633 = vmatprep.subr.bf16.mxu0 0
    %8634 = vmatpush1.bf16.msra.mxu0 0
    %8635 = vmatprep.subr.bf16.mxu0 0
    %8636 = vmatpush1.bf16.msra.mxu0 0
    %8637 = vmatprep.subr.bf16.mxu0 0
    %8638 = vmatpush1.bf16.msra.mxu0 0
    %8639 = vmatprep.subr.bf16.mxu0 0
    %8640 = vmatpush1.bf16.msra.mxu0 0
    %8641 = vmatprep.subr.bf16.mxu0 0
    %8642 = vmatpush1.bf16.msra.mxu0 0
    %8643 = vmatprep.mubr.bf16.mxu0 0
    %8644 = vmatmul.mubr.bf16.gmra.mrb[0].mxu0 %v8268
    %v8645 = vpop.f32.mrb[0].mxu0
    %v8646 = vadd.f32 0.0, %v8645
    %v8647 = vpop.f32.mrb[0].mxu0
    %v8648 = vpop.f32.mrb[0].mxu0
    %v8649 = vadd.f32 0.0, %v8648
    %v8650 = vpop.f32.mrb[0].mxu0
    %8651 = vdwg.mxu0
    %v8652 = vld [vmem:[%s9] sm:$0x1]
    %v8654 = vlaneseq
    %v8655 = vshrl.u32 %v8654, 7
    %v8656 = vsub.s32 0, %v8655
    %v8657 = vrot.slane %v8652, %v8656
    %v8659 = vadd.f32 %v8646, %v8657
    %v8660 = vadd.f32 %v8649, %v8657
    %s8661 = scalar_lea.vmem [#allocation13], 80
    %8662 = vst [vmem:[%s8661] sm:$0xff] %v8659
    %8663 = vst [vmem:[%s8661 + $0x8] sm:$0xff] %v8660
    %8664 = vmax.xlane.f32.xlu0 %v8659
    %v8665 = vpop.xlane.xlu0 %8664
    %8666 = vmax.xlane.f32.xlu0 %v8660
    %v8667 = vpop.xlane.xlu0 %8666
    %vm8668 = vcmp.eq.f32.partialorder %v8659, %v8665
    %vm8669 = vcmp.eq.f32.partialorder %v8660, %v8667
    %v8670 = vsel %vm8668, %v4601, 128
    %v8671 = vsel %vm8669, %v4601, 128
    %v8672 = vand.u32 %v8670, 65535
    %v8673 = vshra.s32 %v8670, 16
    %v8674 = vcvt.s32.f32 %v8672
    %v8675 = vcvt.s32.f32 %v8673
    %8676 = vmin.xlane.f32.xlu0 %v8675
    %v8677 = vpop.xlane.xlu0 %8676
    %vm8678 = vcmp.eq.f32.partialorder %v8675, %v8677
    %v8679 = vsel %vm8678, %v8674, inf
    %8680 = vmin.xlane.f32.xlu0 %v8679
    %v8681 = vpop.xlane.xlu0 %8680
    %v8682 = vcvt.f32.s32 %v8681
    %v8683 = vcvt.f32.s32 %v8677
    %v8684 = vshll.u32 %v8683, 16
    %v8685 = vadd.s32 %v8684, %v8682
    %v8686 = vand.u32 %v8671, 65535
    %v8687 = vshra.s32 %v8671, 16
    %v8688 = vcvt.s32.f32 %v8686
    %v8689 = vcvt.s32.f32 %v8687
    %8690 = vmin.xlane.f32.xlu0 %v8689
    %v8691 = vpop.xlane.xlu0 %8690
    %vm8692 = vcmp.eq.f32.partialorder %v8689, %v8691
    %v8693 = vsel %vm8692, %v8688, inf
    %8694 = vmin.xlane.f32.xlu0 %v8693
    %v8695 = vpop.xlane.xlu0 %8694
    %v8696 = vcvt.f32.s32 %v8695
    %v8697 = vcvt.f32.s32 %v8691
    %v8698 = vshll.u32 %v8697, 16
    %v8699 = vadd.s32 %v8698, %v8696
    %vm8700 = vcmp.eq.s32.totalorder %v4601, %v8685
    %vm8701 = vcmp.eq.s32.totalorder %v4601, %v8699
    %v8702 = vsel %vm8700, 1, 0
    %v8703 = vsel %vm8701, 1, 0
    %v8704 = vcvt.s32.f32 %v8702
    %v8705 = vcvt.s32.f32 %v8703
    %s8706 = scalar_lea.vmem %s5, 80
    %v8707 = vld [vmem:[%s8706] sm:$0xff]
    %v8708 = vld [vmem:[%s8706 + $0x8] sm:$0xff]
    %8709 = vset.pattern.permute.xlu0 0
    %8710 = vperm.xlu0 %8709, %v8707
    %v8711 = vpop.permute.xlu0 %8710
    %8712 = vset.pattern.permute.xlu0 0
    %8713 = vperm.xlu0 %8712, %v8708
    %v8714 = vpop.permute.xlu0 %8713
    %vm8715 = vcmp.eq.s32.totalorder %v4601, %v8711
    %vm8716 = vcmp.eq.s32.totalorder %v4601, %v8714
    %v8717 = vsel %vm8715, 1, 0
    %v8718 = vsel %vm8716, 1, 0
    %v8719 = vcvt.s32.f32 %v8717
    %v8720 = vcvt.s32.f32 %v8718
    %s8721 = sld [smem:[#allocation4 + $0x5]]
    %p8722 = scmp.ne.s32.totalorder %s8721, 0
    %s8723 = scalar_select %p8722, 1, 0
    %v8724 = vstv %s8723
    %vm8725 = vcmp.eq.s32.totalorder %v8724, 1
    %v8726 = vsel %vm8725, %v8719, %v8704
    %v8727 = vsel %vm8725, %v8720, %v8705
    %v8728 = vpack.c.bf16 %v8727, %v8726
    %v8729 = vld [vmem:[#allocation10] sm:$0xff]
    %v8730 = vld [vmem:[#allocation10 + $0x8] sm:$0xff]
    %v8731 = vld [vmem:[#allocation10 + $0x10] sm:$0xff]
    %v8732 = vld [vmem:[#allocation10 + $0x18] sm:$0xff]
    %v8733 = vld [vmem:[#allocation10 + $0x20] sm:$0xff]
    %v8734 = vld [vmem:[#allocation10 + $0x28] sm:$0xff]
    %v8735 = vld [vmem:[#allocation10 + $0x30] sm:$0xff]
    %v8736 = vld [vmem:[#allocation10 + $0x38] sm:$0xff]
    %v8737 = vld [vmem:[#allocation10 + $0x40] sm:$0xff]
    %v8738 = vld [vmem:[#allocation10 + $0x48] sm:$0xff]
    %v8739 = vld [vmem:[#allocation10 + $0x50] sm:$0xff]
    %v8740 = vld [vmem:[#allocation10 + $0x58] sm:$0xff]
    %v8741 = vld [vmem:[#allocation10 + $0x60] sm:$0xff]
    %v8742 = vld [vmem:[#allocation10 + $0x68] sm:$0xff]
    %v8743 = vld [vmem:[#allocation10 + $0x70] sm:$0xff]
    %v8744 = vld [vmem:[#allocation10 + $0x78] sm:$0xff]
    %v8745 = vld [vmem:[#allocation10 + $0x80] sm:$0xff]
    %v8746 = vld [vmem:[#allocation10 + $0x88] sm:$0xff]
    %v8747 = vld [vmem:[#allocation10 + $0x90] sm:$0xff]
    %v8748 = vld [vmem:[#allocation10 + $0x98] sm:$0xff]
    %v8749 = vld [vmem:[#allocation10 + $0xa0] sm:$0xff]
    %v8750 = vld [vmem:[#allocation10 + $0xa8] sm:$0xff]
    %v8751 = vld [vmem:[#allocation10 + $0xb0] sm:$0xff]
    %v8752 = vld [vmem:[#allocation10 + $0xb8] sm:$0xff]
    %v8753 = vld [vmem:[#allocation10 + $0xc0] sm:$0xff]
    %v8754 = vld [vmem:[#allocation10 + $0xc8] sm:$0xff]
    %v8755 = vld [vmem:[#allocation10 + $0xd0] sm:$0xff]
    %v8756 = vld [vmem:[#allocation10 + $0xd8] sm:$0xff]
    %v8757 = vld [vmem:[#allocation10 + $0xe0] sm:$0xff]
    %v8758 = vld [vmem:[#allocation10 + $0xe8] sm:$0xff]
    %v8759 = vld [vmem:[#allocation10 + $0xf0] sm:$0xff]
    %v8760 = vld [vmem:[#allocation10 + $0xf8] sm:$0xff]
    %v8761 = vld [vmem:[%s7] sm:$0xf]
    %v8763 = vlaneseq
    %v8764 = vshrl.u32 %v8763, 7
    %v8765 = vsub.s32 0, %v8764
    %v8766 = vrot.slane %v8761, %v8765
    %v8767 = vlaneseq
    %v8768 = vshrl.u32 %v8767, 7
    %v8769 = vsub.s32 1, %v8768
    %v8770 = vrot.slane %v8761, %v8769
    %v8771 = vlaneseq
    %v8772 = vshrl.u32 %v8771, 7
    %v8773 = vsub.s32 2, %v8772
    %v8774 = vrot.slane %v8761, %v8773
    %v8775 = vlaneseq
    %v8776 = vshrl.u32 %v8775, 7
    %v8777 = vsub.s32 3, %v8776
    %v8778 = vrot.slane %v8761, %v8777
    %v8815 = vunpack.c.l.b16 %v8729
    %v8816 = vunpack.c.h.b16 %v8729
    %v8817 = vunpack.c.l.b16 %v8730
    %v8818 = vunpack.c.h.b16 %v8730
    %v8819 = vunpack.c.l.b16 %v8731
    %v8820 = vunpack.c.h.b16 %v8731
    %v8821 = vunpack.c.l.b16 %v8732
    %v8822 = vunpack.c.h.b16 %v8732
    %v8823 = vunpack.c.l.b16 %v8733
    %v8824 = vunpack.c.h.b16 %v8733
    %v8825 = vunpack.c.l.b16 %v8734
    %v8826 = vunpack.c.h.b16 %v8734
    %v8827 = vunpack.c.l.b16 %v8735
    %v8828 = vunpack.c.h.b16 %v8735
    %v8829 = vunpack.c.l.b16 %v8736
    %v8830 = vunpack.c.h.b16 %v8736
    %v8831 = vunpack.c.l.b16 %v8737
    %v8832 = vunpack.c.h.b16 %v8737
    %v8833 = vunpack.c.l.b16 %v8738
    %v8834 = vunpack.c.h.b16 %v8738
    %v8835 = vunpack.c.l.b16 %v8739
    %v8836 = vunpack.c.h.b16 %v8739
    %v8837 = vunpack.c.l.b16 %v8740
    %v8838 = vunpack.c.h.b16 %v8740
    %v8839 = vunpack.c.l.b16 %v8741
    %v8840 = vunpack.c.h.b16 %v8741
    %v8841 = vunpack.c.l.b16 %v8742
    %v8842 = vunpack.c.h.b16 %v8742
    %v8843 = vunpack.c.l.b16 %v8743
    %v8844 = vunpack.c.h.b16 %v8743
    %v8845 = vunpack.c.l.b16 %v8744
    %v8846 = vunpack.c.h.b16 %v8744
    %v8847 = vunpack.c.l.b16 %v8745
    %v8848 = vunpack.c.h.b16 %v8745
    %v8849 = vunpack.c.l.b16 %v8746
    %v8850 = vunpack.c.h.b16 %v8746
    %v8851 = vunpack.c.l.b16 %v8747
    %v8852 = vunpack.c.h.b16 %v8747
    %v8853 = vunpack.c.l.b16 %v8748
    %v8854 = vunpack.c.h.b16 %v8748
    %v8855 = vunpack.c.l.b16 %v8749
    %v8856 = vunpack.c.h.b16 %v8749
    %v8857 = vunpack.c.l.b16 %v8750
    %v8858 = vunpack.c.h.b16 %v8750
    %v8859 = vunpack.c.l.b16 %v8751
    %v8860 = vunpack.c.h.b16 %v8751
    %v8861 = vunpack.c.l.b16 %v8752
    %v8862 = vunpack.c.h.b16 %v8752
    %v8863 = vunpack.c.l.b16 %v8753
    %v8864 = vunpack.c.h.b16 %v8753
    %v8865 = vunpack.c.l.b16 %v8754
    %v8866 = vunpack.c.h.b16 %v8754
    %v8867 = vunpack.c.l.b16 %v8755
    %v8868 = vunpack.c.h.b16 %v8755
    %v8869 = vunpack.c.l.b16 %v8756
    %v8870 = vunpack.c.h.b16 %v8756
    %v8871 = vunpack.c.l.b16 %v8757
    %v8872 = vunpack.c.h.b16 %v8757
    %v8873 = vunpack.c.l.b16 %v8758
    %v8874 = vunpack.c.h.b16 %v8758
    %v8875 = vunpack.c.l.b16 %v8759
    %v8876 = vunpack.c.h.b16 %v8759
    %v8877 = vunpack.c.l.b16 %v8760
    %v8878 = vunpack.c.h.b16 %v8760
    %v8879 = vpack.c.b16 %v8819, %v8815
    %v8880 = vpack.c.b16 %v8820, %v8816
    %v8881 = vpack.c.b16 %v8821, %v8817
    %v8882 = vpack.c.b16 %v8822, %v8818
    %v8883 = vpack.c.b16 %v8827, %v8823
    %v8884 = vpack.c.b16 %v8828, %v8824
    %v8885 = vpack.c.b16 %v8829, %v8825
    %v8886 = vpack.c.b16 %v8830, %v8826
    %v8887 = vpack.c.b16 %v8835, %v8831
    %v8888 = vpack.c.b16 %v8836, %v8832
    %v8889 = vpack.c.b16 %v8837, %v8833
    %v8890 = vpack.c.b16 %v8838, %v8834
    %v8891 = vpack.c.b16 %v8843, %v8839
    %v8892 = vpack.c.b16 %v8844, %v8840
    %v8893 = vpack.c.b16 %v8845, %v8841
    %v8894 = vpack.c.b16 %v8846, %v8842
    %v8895 = vpack.c.b16 %v8851, %v8847
    %v8896 = vpack.c.b16 %v8852, %v8848
    %v8897 = vpack.c.b16 %v8853, %v8849
    %v8898 = vpack.c.b16 %v8854, %v8850
    %v8899 = vpack.c.b16 %v8859, %v8855
    %v8900 = vpack.c.b16 %v8860, %v8856
    %v8901 = vpack.c.b16 %v8861, %v8857
    %v8902 = vpack.c.b16 %v8862, %v8858
    %v8903 = vpack.c.b16 %v8867, %v8863
    %v8904 = vpack.c.b16 %v8868, %v8864
    %v8905 = vpack.c.b16 %v8869, %v8865
    %v8906 = vpack.c.b16 %v8870, %v8866
    %v8907 = vpack.c.b16 %v8875, %v8871
    %v8908 = vpack.c.b16 %v8876, %v8872
    %v8909 = vpack.c.b16 %v8877, %v8873
    %v8910 = vpack.c.b16 %v8878, %v8874
    %8943 = vmatprep.subr.bf16.mxu0 %v8880
    %8944 = vmatpush1.bf16.msra.mxu0 %v8879
    %8945 = vmatprep.subr.bf16.mxu0 %v8884
    %8946 = vmatpush1.bf16.msra.mxu0 %v8883
    %8947 = vmatprep.subr.bf16.mxu0 %v8888
    %8948 = vmatpush1.bf16.msra.mxu0 %v8887
    %8949 = vmatprep.subr.bf16.mxu0 %v8892
    %8950 = vmatpush1.bf16.msra.mxu0 %v8891
    %8951 = vmatprep.subr.bf16.mxu0 %v8896
    %8952 = vmatpush1.bf16.msra.mxu0 %v8895
    %8953 = vmatprep.subr.bf16.mxu0 %v8900
    %8954 = vmatpush1.bf16.msra.mxu0 %v8899
    %8955 = vmatprep.subr.bf16.mxu0 %v8904
    %8956 = vmatpush1.bf16.msra.mxu0 %v8903
    %8957 = vmatprep.subr.bf16.mxu0 %v8908
    %8958 = vmatpush1.bf16.msra.mxu0 %v8907
    %8959 = vmatprep.subr.bf16.mxu0 0
    %8960 = vmatpush1.bf16.msra.mxu0 0
    %8961 = vmatprep.subr.bf16.mxu0 0
    %8962 = vmatpush1.bf16.msra.mxu0 0
    %8963 = vmatprep.subr.bf16.mxu0 0
    %8964 = vmatpush1.bf16.msra.mxu0 0
    %8965 = vmatprep.subr.bf16.mxu0 0
    %8966 = vmatpush1.bf16.msra.mxu0 0
    %8967 = vmatprep.subr.bf16.mxu0 0
    %8968 = vmatpush1.bf16.msra.mxu0 0
    %8969 = vmatprep.subr.bf16.mxu0 0
    %8970 = vmatpush1.bf16.msra.mxu0 0
    %8971 = vmatprep.subr.bf16.mxu0 0
    %8972 = vmatpush1.bf16.msra.mxu0 0
    %8973 = vmatprep.subr.bf16.mxu0 0
    %8974 = vmatpush1.bf16.msra.mxu0 0
    %8975 = vmatprep.mubr.bf16.mxu0 0
    %8976 = vmatmul.mubr.bf16.gmra.mrb[0].mxu0 %v8728
    %v8977 = vpop.f32.mrb[0].mxu0
    %v8978 = vadd.f32 %v8766, %v8977
    %v8979 = vpop.f32.mrb[0].mxu0
    %v8980 = vadd.f32 %v8770, %v8979
    %v8981 = vpop.f32.mrb[0].mxu0
    %v8982 = vadd.f32 %v8766, %v8981
    %v8983 = vpop.f32.mrb[0].mxu0
    %v8984 = vadd.f32 %v8770, %v8983
    %8985 = vdwg.mxu0
    %8986 = vmatprep.subr.bf16.mxu0 %v8882
    %8987 = vmatpush1.bf16.msra.mxu0 %v8881
    %8988 = vmatprep.subr.bf16.mxu0 %v8886
    %8989 = vmatpush1.bf16.msra.mxu0 %v8885
    %8990 = vmatprep.subr.bf16.mxu0 %v8890
    %8991 = vmatpush1.bf16.msra.mxu0 %v8889
    %8992 = vmatprep.subr.bf16.mxu0 %v8894
    %8993 = vmatpush1.bf16.msra.mxu0 %v8893
    %8994 = vmatprep.subr.bf16.mxu0 %v8898
    %8995 = vmatpush1.bf16.msra.mxu0 %v8897
    %8996 = vmatprep.subr.bf16.mxu0 %v8902
    %8997 = vmatpush1.bf16.msra.mxu0 %v8901
    %8998 = vmatprep.subr.bf16.mxu0 %v8906
    %8999 = vmatpush1.bf16.msra.mxu0 %v8905
    %9000 = vmatprep.subr.bf16.mxu0 %v8910
    %9001 = vmatpush1.bf16.msra.mxu0 %v8909
    %9002 = vmatprep.subr.bf16.mxu0 0
    %9003 = vmatpush1.bf16.msra.mxu0 0
    %9004 = vmatprep.subr.bf16.mxu0 0
    %9005 = vmatpush1.bf16.msra.mxu0 0
    %9006 = vmatprep.subr.bf16.mxu0 0
    %9007 = vmatpush1.bf16.msra.mxu0 0
    %9008 = vmatprep.subr.bf16.mxu0 0
    %9009 = vmatpush1.bf16.msra.mxu0 0
    %9010 = vmatprep.subr.bf16.mxu0 0
    %9011 = vmatpush1.bf16.msra.mxu0 0
    %9012 = vmatprep.subr.bf16.mxu0 0
    %9013 = vmatpush1.bf16.msra.mxu0 0
    %9014 = vmatprep.subr.bf16.mxu0 0
    %9015 = vmatpush1.bf16.msra.mxu0 0
    %9016 = vmatprep.subr.bf16.mxu0 0
    %9017 = vmatpush1.bf16.msra.mxu0 0
    %9018 = vmatprep.mubr.bf16.mxu0 0
    %9019 = vmatmul.mubr.bf16.gmra.mrb[0].mxu0 %v8728
    %v9020 = vpop.f32.mrb[0].mxu0
    %v9021 = vadd.f32 %v8774, %v9020
    %v9022 = vpop.f32.mrb[0].mxu0
    %v9023 = vadd.f32 %v8778, %v9022
    %v9024 = vpop.f32.mrb[0].mxu0
    %v9025 = vadd.f32 %v8774, %v9024
    %v9026 = vpop.f32.mrb[0].mxu0
    %v9027 = vadd.f32 %v8778, %v9026
    %9028 = vdwg.mxu0
    %v9029 = vadd.f32 %v8978, %v8560
    %v9030 = vadd.f32 %v8980, %v8562
    %v9031 = vadd.f32 %v9021, %v8603
    %v9032 = vadd.f32 %v9023, %v8605
    %v9033 = vadd.f32 %v8982, %v8564
    %v9034 = vadd.f32 %v8984, %v8566
    %v9035 = vadd.f32 %v9025, %v8607
    %v9036 = vadd.f32 %v9027, %v8609
    %v9037 = vmul.f32 %v9029, 0.5
    %v9038 = vmul.f32 %v9033, 0.5
    %v9039 = vtanh.pop %v9037
    %v9040 = vtanh.pop %v9038
    %v9041 = vmul.f32 %v9039, 0.5
    %v9042 = vmul.f32 %v9040, 0.5
    %v9043 = vadd.f32 %v9041, 0.5
    %v9044 = vadd.f32 %v9042, 0.5
    %v9045 = vmul.f32 %v9030, 0.5
    %v9046 = vmul.f32 %v9034, 0.5
    %v9047 = vtanh.pop %v9045
    %v9048 = vtanh.pop %v9046
    %v9049 = vmul.f32 %v9047, 0.5
    %v9050 = vmul.f32 %v9048, 0.5
    %v9051 = vadd.f32 %v9049, 0.5
    %v9052 = vadd.f32 %v9050, 0.5
    %v9053 = vtanh.pop %v9031
    %v9054 = vtanh.pop %v9035
    %v9055 = vmul.f32 %v9032, 0.5
    %v9056 = vmul.f32 %v9036, 0.5
    %v9057 = vtanh.pop %v9055
    %v9058 = vtanh.pop %v9056
    %v9059 = vmul.f32 %v9057, 0.5
    %v9060 = vmul.f32 %v9058, 0.5
    %v9061 = vadd.f32 %v9059, 0.5
    %v9062 = vadd.f32 %v9060, 0.5
    %v9063 = vmul.f32 %v9051, %v8262
    %v9064 = vmul.f32 %v9052, %v8263
    %v9065 = vmul.f32 %v9043, %v9053
    %v9066 = vmul.f32 %v9044, %v9054
    %v9067 = vadd.f32 %v9063, %v9065
    %v9068 = vadd.f32 %v9064, %v9066
    %v9069 = vtanh.pop %v9067
    %v9070 = vtanh.pop %v9068
    %v9071 = vmul.f32 %v9061, %v9069
    %v9072 = vmul.f32 %v9062, %v9070
    %v9073 = vpack.c.bf16 %v9072, %v9071
    %v9074 = vld [vmem:[#allocation11] sm:$0xff]
    %v9075 = vld [vmem:[#allocation11 + $0x8] sm:$0xff]
    %v9076 = vld [vmem:[#allocation11 + $0x10] sm:$0xf]
    %v9077 = vld [vmem:[#allocation11 + $0x14] sm:$0xff]
    %v9078 = vld [vmem:[#allocation11 + $0x1c] sm:$0xff]
    %v9079 = vld [vmem:[#allocation11 + $0x24] sm:$0xf]
    %v9080 = vld [vmem:[#allocation11 + $0x28] sm:$0xff]
    %v9081 = vld [vmem:[#allocation11 + $0x30] sm:$0xff]
    %v9082 = vld [vmem:[#allocation11 + $0x38] sm:$0xf]
    %v9083 = vld [vmem:[#allocation11 + $0x3c] sm:$0xff]
    %v9084 = vld [vmem:[#allocation11 + $0x44] sm:$0xff]
    %v9085 = vld [vmem:[#allocation11 + $0x4c] sm:$0xf]
    %v9086 = vld [vmem:[#allocation11 + $0x50] sm:$0xff]
    %v9087 = vld [vmem:[#allocation11 + $0x58] sm:$0xff]
    %v9088 = vld [vmem:[#allocation11 + $0x60] sm:$0xf]
    %v9089 = vld [vmem:[#allocation11 + $0x64] sm:$0xff]
    %v9090 = vld [vmem:[#allocation11 + $0x6c] sm:$0xff]
    %v9091 = vld [vmem:[#allocation11 + $0x74] sm:$0xf]
    %v9092 = vld [vmem:[#allocation11 + $0x78] sm:$0xff]
    %v9093 = vld [vmem:[#allocation11 + $0x80] sm:$0xff]
    %v9094 = vld [vmem:[#allocation11 + $0x88] sm:$0xf]
    %v9095 = vld [vmem:[#allocation11 + $0x8c] sm:$0xff]
    %v9096 = vld [vmem:[#allocation11 + $0x94] sm:$0xff]
    %v9097 = vld [vmem:[#allocation11 + $0x9c] sm:$0xf]
    %v9098 = vld [vmem:[#allocation11 + $0xa0] sm:$0xff]
    %v9099 = vld [vmem:[#allocation11 + $0xa8] sm:$0xff]
    %v9100 = vld [vmem:[#allocation11 + $0xb0] sm:$0xf]
    %v9101 = vld [vmem:[#allocation11 + $0xb4] sm:$0xff]
    %v9102 = vld [vmem:[#allocation11 + $0xbc] sm:$0xff]
    %v9103 = vld [vmem:[#allocation11 + $0xc4] sm:$0xf]
    %v9104 = vld [vmem:[#allocation11 + $0xc8] sm:$0xff]
    %v9105 = vld [vmem:[#allocation11 + $0xd0] sm:$0xff]
    %v9106 = vld [vmem:[#allocation11 + $0xd8] sm:$0xf]
    %v9107 = vld [vmem:[#allocation11 + $0xdc] sm:$0xff]
    %v9108 = vld [vmem:[#allocation11 + $0xe4] sm:$0xff]
    %v9109 = vld [vmem:[#allocation11 + $0xec] sm:$0xf]
    %v9110 = vld [vmem:[#allocation11 + $0xf0] sm:$0xff]
    %v9111 = vld [vmem:[#allocation11 + $0xf8] sm:$0xff]
    %v9112 = vld [vmem:[#allocation11 + $0x100] sm:$0xf]
    %v9113 = vld [vmem:[#allocation11 + $0x104] sm:$0xff]
    %v9114 = vld [vmem:[#allocation11 + $0x10c] sm:$0xff]
    %v9115 = vld [vmem:[#allocation11 + $0x114] sm:$0xf]
    %v9116 = vld [vmem:[#allocation11 + $0x118] sm:$0xff]
    %v9117 = vld [vmem:[#allocation11 + $0x120] sm:$0xff]
    %v9118 = vld [vmem:[#allocation11 + $0x128] sm:$0xf]
    %v9119 = vld [vmem:[#allocation11 + $0x12c] sm:$0xff]
    %v9120 = vld [vmem:[#allocation11 + $0x134] sm:$0xff]
    %v9121 = vld [vmem:[#allocation11 + $0x13c] sm:$0xf]
    %v9170 = vunpack.c.l.b16 %v9074
    %v9171 = vunpack.c.h.b16 %v9074
    %v9172 = vunpack.c.l.b16 %v9075
    %v9173 = vunpack.c.h.b16 %v9075
    %v9174 = vunpack.c.l.b16 %v9076
    %v9175 = vunpack.c.l.b16 %v9077
    %v9176 = vunpack.c.h.b16 %v9077
    %v9177 = vunpack.c.l.b16 %v9078
    %v9178 = vunpack.c.h.b16 %v9078
    %v9179 = vunpack.c.l.b16 %v9079
    %v9180 = vunpack.c.l.b16 %v9080
    %v9181 = vunpack.c.h.b16 %v9080
    %v9182 = vunpack.c.l.b16 %v9081
    %v9183 = vunpack.c.h.b16 %v9081
    %v9184 = vunpack.c.l.b16 %v9082
    %v9185 = vunpack.c.l.b16 %v9083
    %v9186 = vunpack.c.h.b16 %v9083
    %v9187 = vunpack.c.l.b16 %v9084
    %v9188 = vunpack.c.h.b16 %v9084
    %v9189 = vunpack.c.l.b16 %v9085
    %v9190 = vunpack.c.l.b16 %v9086
    %v9191 = vunpack.c.h.b16 %v9086
    %v9192 = vunpack.c.l.b16 %v9087
    %v9193 = vunpack.c.h.b16 %v9087
    %v9194 = vunpack.c.l.b16 %v9088
    %v9195 = vunpack.c.l.b16 %v9089
    %v9196 = vunpack.c.h.b16 %v9089
    %v9197 = vunpack.c.l.b16 %v9090
    %v9198 = vunpack.c.h.b16 %v9090
    %v9199 = vunpack.c.l.b16 %v9091
    %v9200 = vunpack.c.l.b16 %v9092
    %v9201 = vunpack.c.h.b16 %v9092
    %v9202 = vunpack.c.l.b16 %v9093
    %v9203 = vunpack.c.h.b16 %v9093
    %v9204 = vunpack.c.l.b16 %v9094
    %v9205 = vunpack.c.l.b16 %v9095
    %v9206 = vunpack.c.h.b16 %v9095
    %v9207 = vunpack.c.l.b16 %v9096
    %v9208 = vunpack.c.h.b16 %v9096
    %v9209 = vunpack.c.l.b16 %v9097
    %v9210 = vunpack.c.l.b16 %v9098
    %v9211 = vunpack.c.h.b16 %v9098
    %v9212 = vunpack.c.l.b16 %v9099
    %v9213 = vunpack.c.h.b16 %v9099
    %v9214 = vunpack.c.l.b16 %v9100
    %v9215 = vunpack.c.l.b16 %v9101
    %v9216 = vunpack.c.h.b16 %v9101
    %v9217 = vunpack.c.l.b16 %v9102
    %v9218 = vunpack.c.h.b16 %v9102
    %v9219 = vunpack.c.l.b16 %v9103
    %v9220 = vunpack.c.l.b16 %v9104
    %v9221 = vunpack.c.h.b16 %v9104
    %v9222 = vunpack.c.l.b16 %v9105
    %v9223 = vunpack.c.h.b16 %v9105
    %v9224 = vunpack.c.l.b16 %v9106
    %v9225 = vunpack.c.l.b16 %v9107
    %v9226 = vunpack.c.h.b16 %v9107
    %v9227 = vunpack.c.l.b16 %v9108
    %v9228 = vunpack.c.h.b16 %v9108
    %v9229 = vunpack.c.l.b16 %v9109
    %v9230 = vunpack.c.l.b16 %v9110
    %v9231 = vunpack.c.h.b16 %v9110
    %v9232 = vunpack.c.l.b16 %v9111
    %v9233 = vunpack.c.h.b16 %v9111
    %v9234 = vunpack.c.l.b16 %v9112
    %v9235 = vunpack.c.l.b16 %v9113
    %v9236 = vunpack.c.h.b16 %v9113
    %v9237 = vunpack.c.l.b16 %v9114
    %v9238 = vunpack.c.h.b16 %v9114
    %v9239 = vunpack.c.l.b16 %v9115
    %v9240 = vunpack.c.l.b16 %v9116
    %v9241 = vunpack.c.h.b16 %v9116
    %v9242 = vunpack.c.l.b16 %v9117
    %v9243 = vunpack.c.h.b16 %v9117
    %v9244 = vunpack.c.l.b16 %v9118
    %v9245 = vunpack.c.l.b16 %v9119
    %v9246 = vunpack.c.h.b16 %v9119
    %v9247 = vunpack.c.l.b16 %v9120
    %v9248 = vunpack.c.h.b16 %v9120
    %v9249 = vunpack.c.l.b16 %v9121
    %v9250 = vpack.c.b16 %v9175, %v9170
    %v9251 = vpack.c.b16 %v9176, %v9171
    %v9252 = vpack.c.b16 %v9177, %v9172
    %v9253 = vpack.c.b16 %v9178, %v9173
    %v9254 = vpack.c.b16 %v9179, %v9174
    %v9255 = vpack.c.b16 %v9185, %v9180
    %v9256 = vpack.c.b16 %v9186, %v9181
    %v9257 = vpack.c.b16 %v9187, %v9182
    %v9258 = vpack.c.b16 %v9188, %v9183
    %v9259 = vpack.c.b16 %v9189, %v9184
    %v9260 = vpack.c.b16 %v9195, %v9190
    %v9261 = vpack.c.b16 %v9196, %v9191
    %v9262 = vpack.c.b16 %v9197, %v9192
    %v9263 = vpack.c.b16 %v9198, %v9193
    %v9264 = vpack.c.b16 %v9199, %v9194
    %v9265 = vpack.c.b16 %v9205, %v9200
    %v9266 = vpack.c.b16 %v9206, %v9201
    %v9267 = vpack.c.b16 %v9207, %v9202
    %v9268 = vpack.c.b16 %v9208, %v9203
    %v9269 = vpack.c.b16 %v9209, %v9204
    %v9270 = vpack.c.b16 %v9215, %v9210
    %v9271 = vpack.c.b16 %v9216, %v9211
    %v9272 = vpack.c.b16 %v9217, %v9212
    %v9273 = vpack.c.b16 %v9218, %v9213
    %v9274 = vpack.c.b16 %v9219, %v9214
    %v9275 = vpack.c.b16 %v9225, %v9220
    %v9276 = vpack.c.b16 %v9226, %v9221
    %v9277 = vpack.c.b16 %v9227, %v9222
    %v9278 = vpack.c.b16 %v9228, %v9223
    %v9279 = vpack.c.b16 %v9229, %v9224
    %v9280 = vpack.c.b16 %v9235, %v9230
    %v9281 = vpack.c.b16 %v9236, %v9231
    %v9282 = vpack.c.b16 %v9237, %v9232
    %v9283 = vpack.c.b16 %v9238, %v9233
    %v9284 = vpack.c.b16 %v9239, %v9234
    %v9285 = vpack.c.b16 %v9245, %v9240
    %v9286 = vpack.c.b16 %v9246, %v9241
    %v9287 = vpack.c.b16 %v9247, %v9242
    %v9288 = vpack.c.b16 %v9248, %v9243
    %v9289 = vpack.c.b16 %v9249, %v9244
    %9330 = vmatprep.subr.bf16.mxu0 %v9251
    %9331 = vmatpush1.bf16.msra.mxu0 %v9250
    %9332 = vmatprep.subr.bf16.mxu0 %v9256
    %9333 = vmatpush1.bf16.msra.mxu0 %v9255
    %9334 = vmatprep.subr.bf16.mxu0 %v9261
    %9335 = vmatpush1.bf16.msra.mxu0 %v9260
    %9336 = vmatprep.subr.bf16.mxu0 %v9266
    %9337 = vmatpush1.bf16.msra.mxu0 %v9265
    %9338 = vmatprep.subr.bf16.mxu0 %v9271
    %9339 = vmatpush1.bf16.msra.mxu0 %v9270
    %9340 = vmatprep.subr.bf16.mxu0 %v9276
    %9341 = vmatpush1.bf16.msra.mxu0 %v9275
    %9342 = vmatprep.subr.bf16.mxu0 %v9281
    %9343 = vmatpush1.bf16.msra.mxu0 %v9280
    %9344 = vmatprep.subr.bf16.mxu0 %v9286
    %9345 = vmatpush1.bf16.msra.mxu0 %v9285
    %9346 = vmatprep.subr.bf16.mxu0 0
    %9347 = vmatpush1.bf16.msra.mxu0 0
    %9348 = vmatprep.subr.bf16.mxu0 0
    %9349 = vmatpush1.bf16.msra.mxu0 0
    %9350 = vmatprep.subr.bf16.mxu0 0
    %9351 = vmatpush1.bf16.msra.mxu0 0
    %9352 = vmatprep.subr.bf16.mxu0 0
    %9353 = vmatpush1.bf16.msra.mxu0 0
    %9354 = vmatprep.subr.bf16.mxu0 0
    %9355 = vmatpush1.bf16.msra.mxu0 0
    %9356 = vmatprep.subr.bf16.mxu0 0
    %9357 = vmatpush1.bf16.msra.mxu0 0
    %9358 = vmatprep.subr.bf16.mxu0 0
    %9359 = vmatpush1.bf16.msra.mxu0 0
    %9360 = vmatprep.subr.bf16.mxu0 0
    %9361 = vmatpush1.bf16.msra.mxu0 0
    %9362 = vmatprep.mubr.bf16.mxu0 0
    %9363 = vmatmul.mubr.bf16.gmra.mrb[0].mxu0 %v9073
    %v9364 = vpop.f32.mrb[0].mxu0
    %v9365 = vadd.f32 0.0, %v9364
    %v9366 = vpop.f32.mrb[0].mxu0
    %v9367 = vadd.f32 0.0, %v9366
    %v9368 = vpop.f32.mrb[0].mxu0
    %v9369 = vadd.f32 0.0, %v9368
    %v9370 = vpop.f32.mrb[0].mxu0
    %v9371 = vadd.f32 0.0, %v9370
    %9372 = vdwg.mxu0
    %9373 = vmatprep.subr.bf16.mxu0 %v9253
    %9374 = vmatpush1.bf16.msra.mxu0 %v9252
    %9375 = vmatprep.subr.bf16.mxu0 %v9258
    %9376 = vmatpush1.bf16.msra.mxu0 %v9257
    %9377 = vmatprep.subr.bf16.mxu0 %v9263
    %9378 = vmatpush1.bf16.msra.mxu0 %v9262
    %9379 = vmatprep.subr.bf16.mxu0 %v9268
    %9380 = vmatpush1.bf16.msra.mxu0 %v9267
    %9381 = vmatprep.subr.bf16.mxu0 %v9273
    %9382 = vmatpush1.bf16.msra.mxu0 %v9272
    %9383 = vmatprep.subr.bf16.mxu0 %v9278
    %9384 = vmatpush1.bf16.msra.mxu0 %v9277
    %9385 = vmatprep.subr.bf16.mxu0 %v9283
    %9386 = vmatpush1.bf16.msra.mxu0 %v9282
    %9387 = vmatprep.subr.bf16.mxu0 %v9288
    %9388 = vmatpush1.bf16.msra.mxu0 %v9287
    %9389 = vmatprep.subr.bf16.mxu0 0
    %9390 = vmatpush1.bf16.msra.mxu0 0
    %9391 = vmatprep.subr.bf16.mxu0 0
    %9392 = vmatpush1.bf16.msra.mxu0 0
    %9393 = vmatprep.subr.bf16.mxu0 0
    %9394 = vmatpush1.bf16.msra.mxu0 0
    %9395 = vmatprep.subr.bf16.mxu0 0
    %9396 = vmatpush1.bf16.msra.mxu0 0
    %9397 = vmatprep.subr.bf16.mxu0 0
    %9398 = vmatpush1.bf16.msra.mxu0 0
    %9399 = vmatprep.subr.bf16.mxu0 0
    %9400 = vmatpush1.bf16.msra.mxu0 0
    %9401 = vmatprep.subr.bf16.mxu0 0
    %9402 = vmatpush1.bf16.msra.mxu0 0
    %9403 = vmatprep.subr.bf16.mxu0 0
    %9404 = vmatpush1.bf16.msra.mxu0 0
    %9405 = vmatprep.mubr.bf16.mxu0 0
    %9406 = vmatmul.mubr.bf16.gmra.mrb[0].mxu0 %v9073
    %v9407 = vpop.f32.mrb[0].mxu0
    %v9408 = vadd.f32 0.0, %v9407
    %v9409 = vpop.f32.mrb[0].mxu0
    %v9410 = vadd.f32 0.0, %v9409
    %v9411 = vpop.f32.mrb[0].mxu0
    %v9412 = vadd.f32 0.0, %v9411
    %v9413 = vpop.f32.mrb[0].mxu0
    %v9414 = vadd.f32 0.0, %v9413
    %9415 = vdwg.mxu0
    %9416 = vmatprep.subr.bf16.mxu0 0
    %9417 = vmatpush1.bf16.msra.mxu0 %v9254
    %9418 = vmatprep.subr.bf16.mxu0 0
    %9419 = vmatpush1.bf16.msra.mxu0 %v9259
    %9420 = vmatprep.subr.bf16.mxu0 0
    %9421 = vmatpush1.bf16.msra.mxu0 %v9264
    %9422 = vmatprep.subr.bf16.mxu0 0
    %9423 = vmatpush1.bf16.msra.mxu0 %v9269
    %9424 = vmatprep.subr.bf16.mxu0 0
    %9425 = vmatpush1.bf16.msra.mxu0 %v9274
    %9426 = vmatprep.subr.bf16.mxu0 0
    %9427 = vmatpush1.bf16.msra.mxu0 %v9279
    %9428 = vmatprep.subr.bf16.mxu0 0
    %9429 = vmatpush1.bf16.msra.mxu0 %v9284
    %9430 = vmatprep.subr.bf16.mxu0 0
    %9431 = vmatpush1.bf16.msra.mxu0 %v9289
    %9432 = vmatprep.subr.bf16.mxu0 0
    %9433 = vmatpush1.bf16.msra.mxu0 0
    %9434 = vmatprep.subr.bf16.mxu0 0
    %9435 = vmatpush1.bf16.msra.mxu0 0
    %9436 = vmatprep.subr.bf16.mxu0 0
    %9437 = vmatpush1.bf16.msra.mxu0 0
    %9438 = vmatprep.subr.bf16.mxu0 0
    %9439 = vmatpush1.bf16.msra.mxu0 0
    %9440 = vmatprep.subr.bf16.mxu0 0
    %9441 = vmatpush1.bf16.msra.mxu0 0
    %9442 = vmatprep.subr.bf16.mxu0 0
    %9443 = vmatpush1.bf16.msra.mxu0 0
    %9444 = vmatprep.subr.bf16.mxu0 0
    %9445 = vmatpush1.bf16.msra.mxu0 0
    %9446 = vmatprep.subr.bf16.mxu0 0
    %9447 = vmatpush1.bf16.msra.mxu0 0
    %9448 = vmatprep.mubr.bf16.mxu0 0
    %9449 = vmatmul.mubr.bf16.gmra.mrb[0].mxu0 %v9073
    %v9450 = vpop.f32.mrb[0].mxu0
    %v9451 = vadd.f32 0.0, %v9450
    %v9452 = vpop.f32.mrb[0].mxu0
    %v9453 = vpop.f32.mrb[0].mxu0
    %v9454 = vadd.f32 0.0, %v9453
    %v9455 = vpop.f32.mrb[0].mxu0
    %9456 = vdwg.mxu0
    %v9457 = vld [vmem:[%s9] sm:$0x1]
    %v9459 = vlaneseq
    %v9460 = vshrl.u32 %v9459, 7
    %v9461 = vsub.s32 0, %v9460
    %v9462 = vrot.slane %v9457, %v9461
    %v9464 = vadd.f32 %v9451, %v9462
    %v9465 = vadd.f32 %v9454, %v9462
    %s9466 = scalar_lea.vmem [#allocation13], 96
    %9467 = vst [vmem:[%s9466] sm:$0xff] %v9464
    %9468 = vst [vmem:[%s9466 + $0x8] sm:$0xff] %v9465
    %9469 = vmax.xlane.f32.xlu0 %v9464
    %v9470 = vpop.xlane.xlu0 %9469
    %9471 = vmax.xlane.f32.xlu0 %v9465
    %v9472 = vpop.xlane.xlu0 %9471
    %vm9473 = vcmp.eq.f32.partialorder %v9464, %v9470
    %vm9474 = vcmp.eq.f32.partialorder %v9465, %v9472
    %v9475 = vsel %vm9473, %v4601, 128
    %v9476 = vsel %vm9474, %v4601, 128
    %v9477 = vand.u32 %v9475, 65535
    %v9478 = vshra.s32 %v9475, 16
    %v9479 = vcvt.s32.f32 %v9477
    %v9480 = vcvt.s32.f32 %v9478
    %9481 = vmin.xlane.f32.xlu0 %v9480
    %v9482 = vpop.xlane.xlu0 %9481
    %vm9483 = vcmp.eq.f32.partialorder %v9480, %v9482
    %v9484 = vsel %vm9483, %v9479, inf
    %9485 = vmin.xlane.f32.xlu0 %v9484
    %v9486 = vpop.xlane.xlu0 %9485
    %v9487 = vcvt.f32.s32 %v9486
    %v9488 = vcvt.f32.s32 %v9482
    %v9489 = vshll.u32 %v9488, 16
    %v9490 = vadd.s32 %v9489, %v9487
    %v9491 = vand.u32 %v9476, 65535
    %v9492 = vshra.s32 %v9476, 16
    %v9493 = vcvt.s32.f32 %v9491
    %v9494 = vcvt.s32.f32 %v9492
    %9495 = vmin.xlane.f32.xlu0 %v9494
    %v9496 = vpop.xlane.xlu0 %9495
    %vm9497 = vcmp.eq.f32.partialorder %v9494, %v9496
    %v9498 = vsel %vm9497, %v9493, inf
    %9499 = vmin.xlane.f32.xlu0 %v9498
    %v9500 = vpop.xlane.xlu0 %9499
    %v9501 = vcvt.f32.s32 %v9500
    %v9502 = vcvt.f32.s32 %v9496
    %v9503 = vshll.u32 %v9502, 16
    %v9504 = vadd.s32 %v9503, %v9501
    %vm9505 = vcmp.eq.s32.totalorder %v4601, %v9490
    %vm9506 = vcmp.eq.s32.totalorder %v4601, %v9504
    %v9507 = vsel %vm9505, 1, 0
    %v9508 = vsel %vm9506, 1, 0
    %v9509 = vcvt.s32.f32 %v9507
    %v9510 = vcvt.s32.f32 %v9508
    %s9511 = scalar_lea.vmem %s5, 96
    %v9512 = vld [vmem:[%s9511] sm:$0xff]
    %v9513 = vld [vmem:[%s9511 + $0x8] sm:$0xff]
    %9514 = vset.pattern.permute.xlu0 0
    %9515 = vperm.xlu0 %9514, %v9512
    %v9516 = vpop.permute.xlu0 %9515
    %9517 = vset.pattern.permute.xlu0 0
    %9518 = vperm.xlu0 %9517, %v9513
    %v9519 = vpop.permute.xlu0 %9518
    %vm9520 = vcmp.eq.s32.totalorder %v4601, %v9516
    %vm9521 = vcmp.eq.s32.totalorder %v4601, %v9519
    %v9522 = vsel %vm9520, 1, 0
    %v9523 = vsel %vm9521, 1, 0
    %v9524 = vcvt.s32.f32 %v9522
    %v9525 = vcvt.s32.f32 %v9523
    %s9526 = sld [smem:[#allocation4 + $0x6]]
    %p9527 = scmp.ne.s32.totalorder %s9526, 0
    %s9528 = scalar_select %p9527, 1, 0
    %v9529 = vstv %s9528
    %vm9530 = vcmp.eq.s32.totalorder %v9529, 1
    %v9531 = vsel %vm9530, %v9524, %v9509
    %v9532 = vsel %vm9530, %v9525, %v9510
    %v9533 = vpack.c.bf16 %v9532, %v9531
    %v9534 = vld [vmem:[#allocation10] sm:$0xff]
    %v9535 = vld [vmem:[#allocation10 + $0x8] sm:$0xff]
    %v9536 = vld [vmem:[#allocation10 + $0x10] sm:$0xff]
    %v9537 = vld [vmem:[#allocation10 + $0x18] sm:$0xff]
    %v9538 = vld [vmem:[#allocation10 + $0x20] sm:$0xff]
    %v9539 = vld [vmem:[#allocation10 + $0x28] sm:$0xff]
    %v9540 = vld [vmem:[#allocation10 + $0x30] sm:$0xff]
    %v9541 = vld [vmem:[#allocation10 + $0x38] sm:$0xff]
    %v9542 = vld [vmem:[#allocation10 + $0x40] sm:$0xff]
    %v9543 = vld [vmem:[#allocation10 + $0x48] sm:$0xff]
    %v9544 = vld [vmem:[#allocation10 + $0x50] sm:$0xff]
    %v9545 = vld [vmem:[#allocation10 + $0x58] sm:$0xff]
    %v9546 = vld [vmem:[#allocation10 + $0x60] sm:$0xff]
    %v9547 = vld [vmem:[#allocation10 + $0x68] sm:$0xff]
    %v9548 = vld [vmem:[#allocation10 + $0x70] sm:$0xff]
    %v9549 = vld [vmem:[#allocation10 + $0x78] sm:$0xff]
    %v9550 = vld [vmem:[#allocation10 + $0x80] sm:$0xff]
    %v9551 = vld [vmem:[#allocation10 + $0x88] sm:$0xff]
    %v9552 = vld [vmem:[#allocation10 + $0x90] sm:$0xff]
    %v9553 = vld [vmem:[#allocation10 + $0x98] sm:$0xff]
    %v9554 = vld [vmem:[#allocation10 + $0xa0] sm:$0xff]
    %v9555 = vld [vmem:[#allocation10 + $0xa8] sm:$0xff]
    %v9556 = vld [vmem:[#allocation10 + $0xb0] sm:$0xff]
    %v9557 = vld [vmem:[#allocation10 + $0xb8] sm:$0xff]
    %v9558 = vld [vmem:[#allocation10 + $0xc0] sm:$0xff]
    %v9559 = vld [vmem:[#allocation10 + $0xc8] sm:$0xff]
    %v9560 = vld [vmem:[#allocation10 + $0xd0] sm:$0xff]
    %v9561 = vld [vmem:[#allocation10 + $0xd8] sm:$0xff]
    %v9562 = vld [vmem:[#allocation10 + $0xe0] sm:$0xff]
    %v9563 = vld [vmem:[#allocation10 + $0xe8] sm:$0xff]
    %v9564 = vld [vmem:[#allocation10 + $0xf0] sm:$0xff]
    %v9565 = vld [vmem:[#allocation10 + $0xf8] sm:$0xff]
    %v9566 = vld [vmem:[%s7] sm:$0xf]
    %v9568 = vlaneseq
    %v9569 = vshrl.u32 %v9568, 7
    %v9570 = vsub.s32 0, %v9569
    %v9571 = vrot.slane %v9566, %v9570
    %v9572 = vlaneseq
    %v9573 = vshrl.u32 %v9572, 7
    %v9574 = vsub.s32 1, %v9573
    %v9575 = vrot.slane %v9566, %v9574
    %v9576 = vlaneseq
    %v9577 = vshrl.u32 %v9576, 7
    %v9578 = vsub.s32 2, %v9577
    %v9579 = vrot.slane %v9566, %v9578
    %v9580 = vlaneseq
    %v9581 = vshrl.u32 %v9580, 7
    %v9582 = vsub.s32 3, %v9581
    %v9583 = vrot.slane %v9566, %v9582
    %v9620 = vunpack.c.l.b16 %v9534
    %v9621 = vunpack.c.h.b16 %v9534
    %v9622 = vunpack.c.l.b16 %v9535
    %v9623 = vunpack.c.h.b16 %v9535
    %v9624 = vunpack.c.l.b16 %v9536
    %v9625 = vunpack.c.h.b16 %v9536
    %v9626 = vunpack.c.l.b16 %v9537
    %v9627 = vunpack.c.h.b16 %v9537
    %v9628 = vunpack.c.l.b16 %v9538
    %v9629 = vunpack.c.h.b16 %v9538
    %v9630 = vunpack.c.l.b16 %v9539
    %v9631 = vunpack.c.h.b16 %v9539
    %v9632 = vunpack.c.l.b16 %v9540
    %v9633 = vunpack.c.h.b16 %v9540
    %v9634 = vunpack.c.l.b16 %v9541
    %v9635 = vunpack.c.h.b16 %v9541
    %v9636 = vunpack.c.l.b16 %v9542
    %v9637 = vunpack.c.h.b16 %v9542
    %v9638 = vunpack.c.l.b16 %v9543
    %v9639 = vunpack.c.h.b16 %v9543
    %v9640 = vunpack.c.l.b16 %v9544
    %v9641 = vunpack.c.h.b16 %v9544
    %v9642 = vunpack.c.l.b16 %v9545
    %v9643 = vunpack.c.h.b16 %v9545
    %v9644 = vunpack.c.l.b16 %v9546
    %v9645 = vunpack.c.h.b16 %v9546
    %v9646 = vunpack.c.l.b16 %v9547
    %v9647 = vunpack.c.h.b16 %v9547
    %v9648 = vunpack.c.l.b16 %v9548
    %v9649 = vunpack.c.h.b16 %v9548
    %v9650 = vunpack.c.l.b16 %v9549
    %v9651 = vunpack.c.h.b16 %v9549
    %v9652 = vunpack.c.l.b16 %v9550
    %v9653 = vunpack.c.h.b16 %v9550
    %v9654 = vunpack.c.l.b16 %v9551
    %v9655 = vunpack.c.h.b16 %v9551
    %v9656 = vunpack.c.l.b16 %v9552
    %v9657 = vunpack.c.h.b16 %v9552
    %v9658 = vunpack.c.l.b16 %v9553
    %v9659 = vunpack.c.h.b16 %v9553
    %v9660 = vunpack.c.l.b16 %v9554
    %v9661 = vunpack.c.h.b16 %v9554
    %v9662 = vunpack.c.l.b16 %v9555
    %v9663 = vunpack.c.h.b16 %v9555
    %v9664 = vunpack.c.l.b16 %v9556
    %v9665 = vunpack.c.h.b16 %v9556
    %v9666 = vunpack.c.l.b16 %v9557
    %v9667 = vunpack.c.h.b16 %v9557
    %v9668 = vunpack.c.l.b16 %v9558
    %v9669 = vunpack.c.h.b16 %v9558
    %v9670 = vunpack.c.l.b16 %v9559
    %v9671 = vunpack.c.h.b16 %v9559
    %v9672 = vunpack.c.l.b16 %v9560
    %v9673 = vunpack.c.h.b16 %v9560
    %v9674 = vunpack.c.l.b16 %v9561
    %v9675 = vunpack.c.h.b16 %v9561
    %v9676 = vunpack.c.l.b16 %v9562
    %v9677 = vunpack.c.h.b16 %v9562
    %v9678 = vunpack.c.l.b16 %v9563
    %v9679 = vunpack.c.h.b16 %v9563
    %v9680 = vunpack.c.l.b16 %v9564
    %v9681 = vunpack.c.h.b16 %v9564
    %v9682 = vunpack.c.l.b16 %v9565
    %v9683 = vunpack.c.h.b16 %v9565
    %v9684 = vpack.c.b16 %v9624, %v9620
    %v9685 = vpack.c.b16 %v9625, %v9621
    %v9686 = vpack.c.b16 %v9626, %v9622
    %v9687 = vpack.c.b16 %v9627, %v9623
    %v9688 = vpack.c.b16 %v9632, %v9628
    %v9689 = vpack.c.b16 %v9633, %v9629
    %v9690 = vpack.c.b16 %v9634, %v9630
    %v9691 = vpack.c.b16 %v9635, %v9631
    %v9692 = vpack.c.b16 %v9640, %v9636
    %v9693 = vpack.c.b16 %v9641, %v9637
    %v9694 = vpack.c.b16 %v9642, %v9638
    %v9695 = vpack.c.b16 %v9643, %v9639
    %v9696 = vpack.c.b16 %v9648, %v9644
    %v9697 = vpack.c.b16 %v9649, %v9645
    %v9698 = vpack.c.b16 %v9650, %v9646
    %v9699 = vpack.c.b16 %v9651, %v9647
    %v9700 = vpack.c.b16 %v9656, %v9652
    %v9701 = vpack.c.b16 %v9657, %v9653
    %v9702 = vpack.c.b16 %v9658, %v9654
    %v9703 = vpack.c.b16 %v9659, %v9655
    %v9704 = vpack.c.b16 %v9664, %v9660
    %v9705 = vpack.c.b16 %v9665, %v9661
    %v9706 = vpack.c.b16 %v9666, %v9662
    %v9707 = vpack.c.b16 %v9667, %v9663
    %v9708 = vpack.c.b16 %v9672, %v9668
    %v9709 = vpack.c.b16 %v9673, %v9669
    %v9710 = vpack.c.b16 %v9674, %v9670
    %v9711 = vpack.c.b16 %v9675, %v9671
    %v9712 = vpack.c.b16 %v9680, %v9676
    %v9713 = vpack.c.b16 %v9681, %v9677
    %v9714 = vpack.c.b16 %v9682, %v9678
    %v9715 = vpack.c.b16 %v9683, %v9679
    %9748 = vmatprep.subr.bf16.mxu0 %v9685
    %9749 = vmatpush1.bf16.msra.mxu0 %v9684
    %9750 = vmatprep.subr.bf16.mxu0 %v9689
    %9751 = vmatpush1.bf16.msra.mxu0 %v9688
    %9752 = vmatprep.subr.bf16.mxu0 %v9693
    %9753 = vmatpush1.bf16.msra.mxu0 %v9692
    %9754 = vmatprep.subr.bf16.mxu0 %v9697
    %9755 = vmatpush1.bf16.msra.mxu0 %v9696
    %9756 = vmatprep.subr.bf16.mxu0 %v9701
    %9757 = vmatpush1.bf16.msra.mxu0 %v9700
    %9758 = vmatprep.subr.bf16.mxu0 %v9705
    %9759 = vmatpush1.bf16.msra.mxu0 %v9704
    %9760 = vmatprep.subr.bf16.mxu0 %v9709
    %9761 = vmatpush1.bf16.msra.mxu0 %v9708
    %9762 = vmatprep.subr.bf16.mxu0 %v9713
    %9763 = vmatpush1.bf16.msra.mxu0 %v9712
    %9764 = vmatprep.subr.bf16.mxu0 0
    %9765 = vmatpush1.bf16.msra.mxu0 0
    %9766 = vmatprep.subr.bf16.mxu0 0
    %9767 = vmatpush1.bf16.msra.mxu0 0
    %9768 = vmatprep.subr.bf16.mxu0 0
    %9769 = vmatpush1.bf16.msra.mxu0 0
    %9770 = vmatprep.subr.bf16.mxu0 0
    %9771 = vmatpush1.bf16.msra.mxu0 0
    %9772 = vmatprep.subr.bf16.mxu0 0
    %9773 = vmatpush1.bf16.msra.mxu0 0
    %9774 = vmatprep.subr.bf16.mxu0 0
    %9775 = vmatpush1.bf16.msra.mxu0 0
    %9776 = vmatprep.subr.bf16.mxu0 0
    %9777 = vmatpush1.bf16.msra.mxu0 0
    %9778 = vmatprep.subr.bf16.mxu0 0
    %9779 = vmatpush1.bf16.msra.mxu0 0
    %9780 = vmatprep.mubr.bf16.mxu0 0
    %9781 = vmatmul.mubr.bf16.gmra.mrb[0].mxu0 %v9533
    %v9782 = vpop.f32.mrb[0].mxu0
    %v9783 = vadd.f32 %v9571, %v9782
    %v9784 = vpop.f32.mrb[0].mxu0
    %v9785 = vadd.f32 %v9575, %v9784
    %v9786 = vpop.f32.mrb[0].mxu0
    %v9787 = vadd.f32 %v9571, %v9786
    %v9788 = vpop.f32.mrb[0].mxu0
    %v9789 = vadd.f32 %v9575, %v9788
    %9790 = vdwg.mxu0
    %9791 = vmatprep.subr.bf16.mxu0 %v9687
    %9792 = vmatpush1.bf16.msra.mxu0 %v9686
    %9793 = vmatprep.subr.bf16.mxu0 %v9691
    %9794 = vmatpush1.bf16.msra.mxu0 %v9690
    %9795 = vmatprep.subr.bf16.mxu0 %v9695
    %9796 = vmatpush1.bf16.msra.mxu0 %v9694
    %9797 = vmatprep.subr.bf16.mxu0 %v9699
    %9798 = vmatpush1.bf16.msra.mxu0 %v9698
    %9799 = vmatprep.subr.bf16.mxu0 %v9703
    %9800 = vmatpush1.bf16.msra.mxu0 %v9702
    %9801 = vmatprep.subr.bf16.mxu0 %v9707
    %9802 = vmatpush1.bf16.msra.mxu0 %v9706
    %9803 = vmatprep.subr.bf16.mxu0 %v9711
    %9804 = vmatpush1.bf16.msra.mxu0 %v9710
    %9805 = vmatprep.subr.bf16.mxu0 %v9715
    %9806 = vmatpush1.bf16.msra.mxu0 %v9714
    %9807 = vmatprep.subr.bf16.mxu0 0
    %9808 = vmatpush1.bf16.msra.mxu0 0
    %9809 = vmatprep.subr.bf16.mxu0 0
    %9810 = vmatpush1.bf16.msra.mxu0 0
    %9811 = vmatprep.subr.bf16.mxu0 0
    %9812 = vmatpush1.bf16.msra.mxu0 0
    %9813 = vmatprep.subr.bf16.mxu0 0
    %9814 = vmatpush1.bf16.msra.mxu0 0
    %9815 = vmatprep.subr.bf16.mxu0 0
    %9816 = vmatpush1.bf16.msra.mxu0 0
    %9817 = vmatprep.subr.bf16.mxu0 0
    %9818 = vmatpush1.bf16.msra.mxu0 0
    %9819 = vmatprep.subr.bf16.mxu0 0
    %9820 = vmatpush1.bf16.msra.mxu0 0
    %9821 = vmatprep.subr.bf16.mxu0 0
    %9822 = vmatpush1.bf16.msra.mxu0 0
    %9823 = vmatprep.mubr.bf16.mxu0 0
    %9824 = vmatmul.mubr.bf16.gmra.mrb[0].mxu0 %v9533
    %v9825 = vpop.f32.mrb[0].mxu0
    %v9826 = vadd.f32 %v9579, %v9825
    %v9827 = vpop.f32.mrb[0].mxu0
    %v9828 = vadd.f32 %v9583, %v9827
    %v9829 = vpop.f32.mrb[0].mxu0
    %v9830 = vadd.f32 %v9579, %v9829
    %v9831 = vpop.f32.mrb[0].mxu0
    %v9832 = vadd.f32 %v9583, %v9831
    %9833 = vdwg.mxu0
    %v9834 = vadd.f32 %v9783, %v9365
    %v9835 = vadd.f32 %v9785, %v9367
    %v9836 = vadd.f32 %v9826, %v9408
    %v9837 = vadd.f32 %v9828, %v9410
    %v9838 = vadd.f32 %v9787, %v9369
    %v9839 = vadd.f32 %v9789, %v9371
    %v9840 = vadd.f32 %v9830, %v9412
    %v9841 = vadd.f32 %v9832, %v9414
    %v9842 = vmul.f32 %v9834, 0.5
    %v9843 = vmul.f32 %v9838, 0.5
    %v9844 = vtanh.pop %v9842
    %v9845 = vtanh.pop %v9843
    %v9846 = vmul.f32 %v9844, 0.5
    %v9847 = vmul.f32 %v9845, 0.5
    %v9848 = vadd.f32 %v9846, 0.5
    %v9849 = vadd.f32 %v9847, 0.5
    %v9850 = vmul.f32 %v9835, 0.5
    %v9851 = vmul.f32 %v9839, 0.5
    %v9852 = vtanh.pop %v9850
    %v9853 = vtanh.pop %v9851
    %v9854 = vmul.f32 %v9852, 0.5
    %v9855 = vmul.f32 %v9853, 0.5
    %v9856 = vadd.f32 %v9854, 0.5
    %v9857 = vadd.f32 %v9855, 0.5
    %v9858 = vtanh.pop %v9836
    %v9859 = vtanh.pop %v9840
    %v9860 = vmul.f32 %v9837, 0.5
    %v9861 = vmul.f32 %v9841, 0.5
    %v9862 = vtanh.pop %v9860
    %v9863 = vtanh.pop %v9861
    %v9864 = vmul.f32 %v9862, 0.5
    %v9865 = vmul.f32 %v9863, 0.5
    %v9866 = vadd.f32 %v9864, 0.5
    %v9867 = vadd.f32 %v9865, 0.5
    %v9868 = vmul.f32 %v9856, %v9067
    %v9869 = vmul.f32 %v9857, %v9068
    %v9870 = vmul.f32 %v9848, %v9858
    %v9871 = vmul.f32 %v9849, %v9859
    %v9872 = vadd.f32 %v9868, %v9870
    %v9873 = vadd.f32 %v9869, %v9871
    %v9874 = vtanh.pop %v9872
    %v9875 = vtanh.pop %v9873
    %v9876 = vmul.f32 %v9866, %v9874
    %v9877 = vmul.f32 %v9867, %v9875
    %v9878 = vpack.c.bf16 %v9877, %v9876
    %v9879 = vld [vmem:[#allocation11 + $0x10] sm:$0xf]
    %v9880 = vld [vmem:[#allocation11 + $0x24] sm:$0xf]
    %v9881 = vld [vmem:[#allocation11 + $0x38] sm:$0xf]
    %v9882 = vld [vmem:[#allocation11 + $0x4c] sm:$0xf]
    %v9883 = vld [vmem:[#allocation11 + $0x60] sm:$0xf]
    %v9884 = vld [vmem:[#allocation11 + $0x74] sm:$0xf]
    %v9885 = vld [vmem:[#allocation11 + $0x88] sm:$0xf]
    %v9886 = vld [vmem:[#allocation11 + $0x9c] sm:$0xf]
    %v9887 = vld [vmem:[#allocation11 + $0xb0] sm:$0xf]
    %v9888 = vld [vmem:[#allocation11 + $0xc4] sm:$0xf]
    %v9889 = vld [vmem:[#allocation11 + $0xd8] sm:$0xf]
    %v9890 = vld [vmem:[#allocation11 + $0xec] sm:$0xf]
    %v9891 = vld [vmem:[#allocation11 + $0x100] sm:$0xf]
    %v9892 = vld [vmem:[#allocation11 + $0x114] sm:$0xf]
    %v9893 = vld [vmem:[#allocation11 + $0x128] sm:$0xf]
    %v9894 = vld [vmem:[#allocation11 + $0x13c] sm:$0xf]
    %v9911 = vunpack.c.l.b16 %v9879
    %v9912 = vunpack.c.l.b16 %v9880
    %v9913 = vunpack.c.l.b16 %v9881
    %v9914 = vunpack.c.l.b16 %v9882
    %v9915 = vunpack.c.l.b16 %v9883
    %v9916 = vunpack.c.l.b16 %v9884
    %v9917 = vunpack.c.l.b16 %v9885
    %v9918 = vunpack.c.l.b16 %v9886
    %v9919 = vunpack.c.l.b16 %v9887
    %v9920 = vunpack.c.l.b16 %v9888
    %v9921 = vunpack.c.l.b16 %v9889
    %v9922 = vunpack.c.l.b16 %v9890
    %v9923 = vunpack.c.l.b16 %v9891
    %v9924 = vunpack.c.l.b16 %v9892
    %v9925 = vunpack.c.l.b16 %v9893
    %v9926 = vunpack.c.l.b16 %v9894
    %v9927 = vpack.c.b16 %v9912, %v9911
    %v9928 = vpack.c.b16 %v9914, %v9913
    %v9929 = vpack.c.b16 %v9916, %v9915
    %v9930 = vpack.c.b16 %v9918, %v9917
    %v9931 = vpack.c.b16 %v9920, %v9919
    %v9932 = vpack.c.b16 %v9922, %v9921
    %v9933 = vpack.c.b16 %v9924, %v9923
    %v9934 = vpack.c.b16 %v9926, %v9925
    %9943 = vmatprep.subr.bf16.mxu0 0
    %9944 = vmatpush1.bf16.msra.mxu0 %v9927
    %9945 = vmatprep.subr.bf16.mxu0 0
    %9946 = vmatpush1.bf16.msra.mxu0 %v9928
    %9947 = vmatprep.subr.bf16.mxu0 0
    %9948 = vmatpush1.bf16.msra.mxu0 %v9929
    %9949 = vmatprep.subr.bf16.mxu0 0
    %9950 = vmatpush1.bf16.msra.mxu0 %v9930
    %9951 = vmatprep.subr.bf16.mxu0 0
    %9952 = vmatpush1.bf16.msra.mxu0 %v9931
    %9953 = vmatprep.subr.bf16.mxu0 0
    %9954 = vmatpush1.bf16.msra.mxu0 %v9932
    %9955 = vmatprep.subr.bf16.mxu0 0
    %9956 = vmatpush1.bf16.msra.mxu0 %v9933
    %9957 = vmatprep.subr.bf16.mxu0 0
    %9958 = vmatpush1.bf16.msra.mxu0 %v9934
    %9959 = vmatprep.subr.bf16.mxu0 0
    %9960 = vmatpush1.bf16.msra.mxu0 0
    %9961 = vmatprep.subr.bf16.mxu0 0
    %9962 = vmatpush1.bf16.msra.mxu0 0
    %9963 = vmatprep.subr.bf16.mxu0 0
    %9964 = vmatpush1.bf16.msra.mxu0 0
    %9965 = vmatprep.subr.bf16.mxu0 0
    %9966 = vmatpush1.bf16.msra.mxu0 0
    %9967 = vmatprep.subr.bf16.mxu0 0
    %9968 = vmatpush1.bf16.msra.mxu0 0
    %9969 = vmatprep.subr.bf16.mxu0 0
    %9970 = vmatpush1.bf16.msra.mxu0 0
    %9971 = vmatprep.subr.bf16.mxu0 0
    %9972 = vmatpush1.bf16.msra.mxu0 0
    %9973 = vmatprep.subr.bf16.mxu0 0
    %9974 = vmatpush1.bf16.msra.mxu0 0
    %9975 = vmatprep.mubr.bf16.mxu0 0
    %9976 = vmatmul.mubr.bf16.gmra.mrb[0].mxu0 %v9878
    %v9977 = vpop.f32.mrb[0].mxu0
    %v9978 = vadd.f32 0.0, %v9977
    %v9979 = vpop.f32.mrb[0].mxu0
    %v9980 = vpop.f32.mrb[0].mxu0
    %v9981 = vadd.f32 0.0, %v9980
    %v9982 = vpop.f32.mrb[0].mxu0
    %9983 = vdwg.mxu0
    %v9984 = vld [vmem:[%s9] sm:$0x1]
    %v9986 = vlaneseq
    %v9987 = vshrl.u32 %v9986, 7
    %v9988 = vsub.s32 0, %v9987
    %v9989 = vrot.slane %v9984, %v9988
    %v9991 = vadd.f32 %v9978, %v9989
    %v9992 = vadd.f32 %v9981, %v9989
    %s9993 = scalar_lea.vmem [#allocation13], 112
    %9994 = vst [vmem:[%s9993] sm:$0xff] %v9991
    %9995 = vst [vmem:[%s9993 + $0x8] sm:$0xff] %v9992
    // Predicated region
    $region54: #{tpu_custom_call.1} parent=1 // pred_check
      _
    $region55: #{tpu_custom_call.1} parent=1 // pred_check_branch
      %9997 = sbr.rel (0) target = $region57
    $region56: #{tpu_custom_call.1} parent=1 // pred_region
      %s9999 = ssub.s32 2048, 2048
      %10000 = vsyncadd [#allocation7], %s9999
      %s10001 = sshll.u32 [#allocation13], 4
      %s10002 = int_to_ptr.vmem [resolvable:$true] %s10001
      %10007 = dma.vmem_to_hbm [thread:$0]  %s10002, 2048, %s10, [#allocation7], 128, 128, 8
    $region57: #{tpu_custom_call.1} parent=1 // pred_fallthru
      _
    // Predicated region
    $region58: #{tpu_custom_call.1} parent=1 // pred_check
      _
    $region59: #{tpu_custom_call.1} parent=1 // pred_check_branch
      %10009 = sbr.rel (0) target = $region61
    $region60: #{tpu_custom_call.1} parent=1 // pred_region
      %10010 = dma.done [#allocation7], 2048
    $region61: #{tpu_custom_call.1} parent=1 // pred_fallthru
      _
    %10011 = vsyncpa [#allocation6], 1
    %10012 = vsyncpa [#allocation9], 1
    %10013 = vsyncpa [#allocation12], 1
    %10014 = vsyncpa [#allocation7], 1

</llo_original>
